<compile_context>
chip_gen: v7x
topology: tpu7x:2x2x1
jax: 0.10.0
libtpu: 0.0.40
codegen_flags: <defaults>
</compile_context>

<pallas_src>
import functools

import numpy as np
import jax
import jax.numpy as jnp
from jax.experimental import pallas as pl
from jax.experimental.pallas import tpu as pltpu

NUM_CLASSES = 10
# (in_planes, planes, stride) for num_blocks = [1, 1, 1]
BLOCK_CFG = [(16, 16, 1), (16, 32, 2), (32, 64, 2)]

GUARD = 128  # lane-aligned front/tail guard around each image's flat frame


def _round_up(v, m):
    return (v + m - 1) // m * m


def _frame_geom(h, w):
    """Padded-frame geometry for an HxW image: Hp=H+2, Wp=W+2, core length
    L=Hp*Wp padded up to Lp (multiple of 128), total lanes GUARD+Lp+GUARD."""
    hp, wp = h + 2, w + 2
    l = hp * wp
    lp = _round_up(l, 128)
    return hp, wp, l, lp, GUARD + lp + GUARD


# ---------------------------------------------------------------------------
# In-kernel helpers
# ---------------------------------------------------------------------------
def _im2col_from(read, col_ref, *, cin, wp, lp):
    """Write the 9 shifted lane slices of one image's guarded flat frame into
    the im2col scratch so the 3x3 conv becomes one K=9*cin MXU matmul.
    `read(start, length)` returns a [cin, length] bf16 lane slice."""
    for dh in range(3):
        for dw in range(3):
            tap = dh * 3 + dw
            off = (dh - 1) * wp + (dw - 1)
            col_ref[tap * cin:(tap + 1) * cin, :] = read(GUARD + off, lp)


# ---------------------------------------------------------------------------
# Kernels (one grid step == one image)
# ---------------------------------------------------------------------------
def _stem_kernel(x_ref, w_ref, b_ref, mask_ref, o_ref, pool_ref, col_ref,
                 *, cin, cout, wp, lp):
    # conv1 + BN1 (scale folded into w) + ReLU, tap-stacked single MXU matmul
    _im2col_from(lambda s, n: x_ref[0, :, s:s + n], col_ref,
                 cin=cin, wp=wp, lp=lp)
    acc = jnp.dot(w_ref[...], col_ref[...], preferred_element_type=jnp.float32)
    out = jnp.maximum(acc + b_ref[...], 0.0) * mask_ref[...]

    # fused per-image channel-sum (feeds the gate's global-average-pool)
    pool_ref[0] = jnp.sum(out, axis=1, keepdims=True)

    zg = jnp.zeros((cout, GUARD), o_ref.dtype)
    o_ref[0, :, :GUARD] = zg
    o_ref[0, :, GUARD + lp:] = zg
    o_ref[0, :, GUARD:GUARD + lp] = out.astype(o_ref.dtype)


def _block_kernel(*refs, cin, cout, wp1, lp1, wp2, lp2, downsample):
    if downsample:
        (x_ref, w1_ref, b1_ref, w2_ref, b2_ref, s_ref, p_ref, mask_ref,
         o_ref, pool_ref, col1_ref, mid_ref, col2_ref) = refs
    else:
        (x_ref, w1_ref, b1_ref, w2_ref, b2_ref, mask_ref,
         o_ref, pool_ref, col1_ref, mid_ref, col2_ref) = refs

    # ---- conv1 + BN1 (scale folded) + ReLU : single tap-stacked matmul ----
    _im2col_from(lambda s, n: x_ref[0, :, s:s + n], col1_ref,
                 cin=cin, wp=wp1, lp=lp1)
    acc1 = jnp.dot(w1_ref[...], col1_ref[...],
                   preferred_element_type=jnp.float32)
    mid = jnp.maximum(acc1 + b1_ref[...], 0.0)              # f32 [cout, lp1]

    # ---- reframe (and stride-2 subsample) into guarded frame-2 scratch ----
    if downsample:
        # Per-image selector: frame-2 borders / pad lanes have all-zero
        # columns, so mid2 comes out correctly zero-framed.
        # TODO(synk): conv1 is still evaluated at frame-1 resolution and then
        # subsampled; building the im2col only at stride-2 output positions
        # would cut conv1 MACs a further ~3x (secondary at these sizes).
        mid2 = jnp.dot(mid.astype(jnp.bfloat16), s_ref[...],
                       preferred_element_type=jnp.float32)  # [cout, lp2]
    else:
        mid2 = mid * mask_ref[...]                          # zero frame borders
    zg = jnp.zeros((cout, GUARD), mid_ref.dtype)
    mid_ref[:, :GUARD] = zg
    mid_ref[:, GUARD + lp2:] = zg
    mid_ref[:, GUARD:GUARD + lp2] = mid2.astype(mid_ref.dtype)

    # ---- conv2 + BN2 (scale folded) : single tap-stacked matmul ----
    _im2col_from(lambda s, n: mid_ref[:, s:s + n], col2_ref,
                 cin=cout, wp=wp2, lp=lp2)
    acc2 = jnp.dot(w2_ref[...], col2_ref[...],
                   preferred_element_type=jnp.float32)

    # ---- option 'A' shortcut ----
    x_core = x_ref[0, :, GUARD:GUARD + lp1]                 # bf16 [cin, lp1]
    if downsample:
        sc = jnp.dot(x_core, s_ref[...],
                     preferred_element_type=jnp.float32)    # x[:, ::2, ::2]
        res = jnp.dot(p_ref[...], sc.astype(jnp.bfloat16),
                      preferred_element_type=jnp.float32)   # channel zero-pad
    else:
        res = x_core.astype(jnp.float32)                    # identity shortcut

    out = jnp.maximum(acc2 + b2_ref[...] + res, 0.0) * mask_ref[...]

    # fused per-image channel-sum (next gate's GAP / final global avg-pool)
    pool_ref[0] = jnp.sum(out, axis=1, keepdims=True)

    zo = jnp.zeros((cout, GUARD), o_ref.dtype)
    o_ref[0, :, :GUARD] = zo
    o_ref[0, :, GUARD + lp2:] = zo
    o_ref[0, :, GUARD:GUARD + lp2] = out.astype(o_ref.dtype)


# ---------------------------------------------------------------------------
# pallas_call wrappers
# ---------------------------------------------------------------------------
def _batched_spec(shape):
    nd = len(shape)
    return pl.BlockSpec((1,) + tuple(shape[1:]),
                        lambda b, nd=nd: (b,) + (0,) * (nd - 1))


def _shared_spec(shape):
    nd = len(shape)
    return pl.BlockSpec(tuple(shape), lambda b, nd=nd: (0,) * nd)


def _pallas_conv_call(kernel, args, out_shapes, scratch, flops, grid_n):
    in_specs = ([_batched_spec(args[0].shape)]
                + [_shared_spec(a.shape) for a in args[1:]])
    out_specs = tuple(_batched_spec(s.shape) for s in out_shapes)
    bytes_accessed = sum(int(a.size) * a.dtype.itemsize for a in args)
    bytes_accessed += sum(int(np.prod(s.shape)) * np.dtype(s.dtype).itemsize
                          for s in out_shapes)
    return pl.pallas_call(
        kernel,
        out_shape=tuple(out_shapes),
        grid_spec=pltpu.PrefetchScalarGridSpec(
            num_scalar_prefetch=0,
            grid=(grid_n,),
            in_specs=in_specs,
            out_specs=out_specs,
            scratch_shapes=list(scratch)),
        compiler_params=pltpu.CompilerParams(
            dimension_semantics=("parallel",)),
        cost_estimate=pl.CostEstimate(flops=int(flops), transcendentals=0,
                                      bytes_accessed=int(bytes_accessed)),
    )(*args)


def stem_conv(x_flat, w, b, mask, *, n, cin, cout, wp, lp, wtot):
    kernel = functools.partial(_stem_kernel, cin=cin, cout=cout, wp=wp, lp=lp)
    out_shapes = (jax.ShapeDtypeStruct((n, cout, wtot), jnp.bfloat16),
                  jax.ShapeDtypeStruct((n, cout, 1), jnp.float32))
    scratch = [pltpu.VMEM((9 * cin, lp), jnp.bfloat16)]
    flops = 2 * n * cout * 9 * cin * lp
    return _pallas_conv_call(kernel, [x_flat, w, b, mask], out_shapes,
                             scratch, flops, n)


def basic_block(x_flat, w1, b1, w2, b2, mask2, sel=None, chanpad=None, *,
                n, cin, cout, wp1, lp1, wp2, lp2):
    downsample = sel is not None
    wtot2 = GUARD + lp2 + GUARD
    args = [x_flat, w1, b1, w2, b2]
    if downsample:
        args += [sel, chanpad]
    args.append(mask2)
    kernel = functools.partial(_block_kernel, cin=cin, cout=cout,
                               wp1=wp1, lp1=lp1, wp2=wp2, lp2=lp2,
                               downsample=downsample)
    out_shapes = (jax.ShapeDtypeStruct((n, cout, wtot2), jnp.bfloat16),
                  jax.ShapeDtypeStruct((n, cout, 1), jnp.float32))
    scratch = [pltpu.VMEM((9 * cin, lp1), jnp.bfloat16),
               pltpu.VMEM((cout, wtot2), jnp.bfloat16),
               pltpu.VMEM((9 * cout, lp2), jnp.bfloat16)]
    flops = 2 * n * (cout * 9 * cin * lp1 + cout * 9 * cout * lp2)
    if downsample:
        flops += 2 * n * ((cout + cin) * lp1 * lp2 + cout * cin * lp2)
    return _pallas_conv_call(kernel, args, out_shapes, scratch, flops, n)


# ---------------------------------------------------------------------------
# Host-side constant builders (numpy -> baked constants, no runtime scatter)
# ---------------------------------------------------------------------------
def _interior_mask(hp, wp, lp):
    m = np.zeros((hp, wp), np.float32)
    m[1:hp - 1, 1:wp - 1] = 1.0
    flat = np.zeros((1, lp), np.float32)
    flat[0, :hp * wp] = m.reshape(-1)
    return jnp.asarray(flat)


def _subsample_selector(hp1, wp1, lp1, hp2, wp2, lp2, stride):
    """Per-image 0/1 selector mapping frame-1 interior position
    (stride*h+1, stride*w+1) -> frame-2 interior position (h+1, w+1); frame-2
    borders / pad lanes are all-zero columns."""
    s = np.zeros((lp1, lp2), np.float32)
    for hh in range(hp2 - 2):
        for ww in range(wp2 - 2):
            src = (stride * hh + 1) * wp1 + (stride * ww + 1)
            dst = (hh + 1) * wp2 + (ww + 1)
            s[src, dst] = 1.0
    return jnp.asarray(s, jnp.bfloat16)


def _chanpad_matrix(cin, cout):
    """Option-'A' channel zero-pad (planes//4 on each side) as a 0/1 matrix."""
    pad = cout // 4
    p = np.zeros((cout, cin), np.float32)
    p[np.arange(cin) + pad, np.arange(cin)] = 1.0
    return jnp.asarray(p, jnp.bfloat16)


# ---------------------------------------------------------------------------
# JAX glue: layout plumbing and parameter folding
# ---------------------------------------------------------------------------
def _to_frames(x_nhwc, hp, wp, l, wtot):
    """[N,H,W,C] f32 -> bf16 [N, C, GUARD + Lp + GUARD] flat padded frames."""
    n, h, w, c = x_nhwc.shape
    xp = jnp.pad(x_nhwc, ((0, 0), (1, 1), (1, 1), (0, 0)))
    flat = jnp.transpose(xp, (0, 3, 1, 2)).reshape(n, c, l)
    flat = jnp.pad(flat, ((0, 0), (0, 0), (GUARD, wtot - GUARD - l)))
    return flat.astype(jnp.bfloat16)


def _fold_conv(w, bn_scale, bn_bias, cin_pad=None):
    """PyTorch [cout, cin, 3, 3] conv weight -> bf16 [cout, 9*cin] with the BN
    scale pre-folded in; bias returned as f32 [cout, 1]."""
    cout, cin = w.shape[0], w.shape[1]
    if cin_pad is not None and cin_pad > cin:
        w = jnp.pad(w, ((0, 0), (0, cin_pad - cin), (0, 0), (0, 0)))
        cin = cin_pad
    w = w * bn_scale.reshape(cout, 1, 1, 1)
    w_mat = jnp.transpose(w, (0, 2, 3, 1)).reshape(cout, 9 * cin)
    return (w_mat.astype(jnp.bfloat16),
            bn_bias.reshape(cout, 1).astype(jnp.float32))


def _bn_fold(channels, eps=1e-5):
    # TODO(synk): inference-mode BN with PyTorch-default running stats
    # (gamma=1, beta=0, mean=0, var=1); a trained checkpoint would supply these.
    gamma = jnp.ones((channels,), jnp.float32)
    beta = jnp.zeros((channels,), jnp.float32)
    mean = jnp.zeros((channels,), jnp.float32)
    var = jnp.ones((channels,), jnp.float32)
    scale = gamma / jnp.sqrt(var + eps)
    return scale, beta - mean * scale


def init_params(key):
    keys = iter(jax.random.split(key, 64))

    def kaiming(shape, fan_in):
        return jax.random.normal(next(keys), shape, jnp.float32) * jnp.sqrt(2.0 / fan_in)

    params = {}
    params['conv1_w'] = kaiming((16, 3, 3, 3), 3 * 9)
    params['bn1_scale'], params['bn1_bias'] = _bn_fold(16)

    blocks = []
    for (cin, cout, _stride) in BLOCK_CFG:
        bp = {
            'conv1_w': kaiming((cout, cin, 3, 3), cin * 9),
            'conv2_w': kaiming((cout, cout, 3, 3), cout * 9),
            'gate_w': kaiming((cin, 2), cin),
            'gate_b': jnp.zeros((2,), jnp.float32),
        }
        bp['bn1_scale'], bp['bn1_bias'] = _bn_fold(cout)
        bp['bn2_scale'], bp['bn2_bias'] = _bn_fold(cout)
        blocks.append(bp)
    params['blocks'] = blocks

    params['linear_w'] = kaiming((NUM_CLASSES, 64), 64)  # PyTorch Linear [out, in]
    params['linear_b'] = jnp.zeros((NUM_CLASSES,), jnp.float32)
    return params


# ---------------------------------------------------------------------------
# Full forward
# ---------------------------------------------------------------------------
def codinet_forward(x_nchw, params):
    x = jnp.transpose(x_nchw, (0, 2, 3, 1)).astype(jnp.float32)    # NCHW -> NHWC
    n, h, w, c = x.shape
    x = jnp.pad(x, ((0, 0), (0, 0), (0, 0), (0, 8 - c)))           # chans 3 -> 8
    hp, wp, l, lp, wtot = _frame_geom(h, w)
    act = _to_frames(x, hp, wp, l, wtot)

    w0, b0 = _fold_conv(params['conv1_w'], params['bn1_scale'],
                        params['bn1_bias'], cin_pad=8)
    mask = _interior_mask(hp, wp, lp)
    act, psum = stem_conv(act, w0, b0, mask, n=n, cin=8, cout=16,
                          wp=wp, lp=lp, wtot=wtot)
    pooled = psum[:, :, 0] / float(h * w)          # fused GAP of stem output

    probs = []
    cur_h, cur_w, cur_hp, cur_wp, cur_lp = h, w, hp, wp, lp
    for i, (cin, cout, stride) in enumerate(BLOCK_CFG):
        bp = params['blocks'][i]
        # TODO(synk): CoDiNet gate module definition not provided; using a
        # deterministic surrogate gate (GAP(input) -> Linear(Cin->2) -> softmax).
        prob = jax.nn.softmax(pooled @ bp['gate_w'] + bp['gate_b'], axis=-1)
        probs.append(prob.reshape(n, 2, 1, 1))

        w1, b1 = _fold_conv(bp['conv1_w'], bp['bn1_scale'], bp['bn1_bias'])
        w2, b2 = _fold_conv(bp['conv2_w'], bp['bn2_scale'], bp['bn2_bias'])

        if stride != 1 or cin != cout:
            h2 = (cur_h - 1) // stride + 1
            w2s = (cur_w - 1) // stride + 1
            hp2, wp2, _l2, lp2, _wtot2 = _frame_geom(h2, w2s)
            sel = _subsample_selector(cur_hp, cur_wp, cur_lp,
                                      hp2, wp2, lp2, stride)
            chanpad = _chanpad_matrix(cin, cout)
        else:
            h2, w2s, hp2, wp2, lp2 = cur_h, cur_w, cur_hp, cur_wp, cur_lp
            sel = chanpad = None
        mask2 = _interior_mask(hp2, wp2, lp2)
        act, psum = basic_block(act, w1, b1, w2, b2, mask2, sel, chanpad,
                                n=n, cin=cin, cout=cout,
                                wp1=cur_wp, lp1=cur_lp, wp2=wp2, lp2=lp2)
        pooled = psum[:, :, 0] / float(h2 * w2s)   # fused GAP of block output
        cur_h, cur_w, cur_hp, cur_wp, cur_lp = h2, w2s, hp2, wp2, lp2

    # F.avg_pool2d(out, out.size()[3]) + flatten already fused as `pooled`
    logits = pooled @ params['linear_w'].T + params['linear_b']    # [B, 10]
    gprob = jnp.stack(probs, axis=1)                               # [B, nblk, 2, 1, 1]
    return logits, gprob


if __name__ == "__main__":
    key = jax.random.PRNGKey(0)
    pkey, xkey = jax.random.split(key)
    params = init_params(pkey)

    # small CIFAR-like input: batch=2, channels=3, spatial=16 (NCHW)
    x = jax.random.normal(xkey, (2, 3, 16, 16), jnp.float32)

    fwd = jax.jit(codinet_forward)
    logits, gprob = fwd(x, params)
    jax.block_until_ready(logits)
    jax.block_until_ready(gprob)

    assert logits.shape == (2, NUM_CLASSES)
    assert gprob.shape == (2, len(BLOCK_CFG), 2, 1, 1)
    print("KERNEL_OK")
</pallas_src>

<mosaic_0001>
module attributes {stable_mosaic.version = 11 : i64} {
  func.func @_block_kernel(%arg0: i32, %arg1: memref<1x16x640xbf16, #tpu.memory_space<vmem>>, %arg2: memref<16x144xbf16, #tpu.memory_space<vmem>>, %arg3: memref<16x1xf32, #tpu.memory_space<vmem>>, %arg4: memref<16x144xbf16, #tpu.memory_space<vmem>>, %arg5: memref<16x1xf32, #tpu.memory_space<vmem>>, %arg6: memref<1x384xf32, #tpu.memory_space<vmem>>, %arg7: memref<1x16x640xbf16, #tpu.memory_space<vmem>>, %arg8: memref<1x16x1xf32, #tpu.memory_space<vmem>>, %arg9: memref<144x384xbf16, #tpu.memory_space<vmem>>, %arg10: memref<16x640xbf16, #tpu.memory_space<vmem>>, %arg11: memref<144x384xbf16, #tpu.memory_space<vmem>>) attributes {dimension_semantics = [#tpu.dimension_semantics<parallel>], iteration_bounds = array<i64: 2>, scalar_prefetch = 0 : i64, scratch_operands = 3 : i64, tpu.core_type = #tpu.core_type<tc>, window_params = [{transform_indices = @transform_0, window_bounds = array<i64: 1, 16, 640>}, {pipeline_mode = #tpu.pipeline_mode<synchronous>, transform_indices = @transform_1, window_bounds = array<i64: 16, 144>}, {pipeline_mode = #tpu.pipeline_mode<synchronous>, transform_indices = @transform_2, window_bounds = array<i64: 16, 1>}, {pipeline_mode = #tpu.pipeline_mode<synchronous>, transform_indices = @transform_3, window_bounds = array<i64: 16, 144>}, {pipeline_mode = #tpu.pipeline_mode<synchronous>, transform_indices = @transform_4, window_bounds = array<i64: 16, 1>}, {pipeline_mode = #tpu.pipeline_mode<synchronous>, transform_indices = @transform_5, window_bounds = array<i64: 1, 384>}, {transform_indices = @transform_6, window_bounds = array<i64: 1, 16, 640>}, {transform_indices = @transform_7, window_bounds = array<i64: 1, 16, 1>}]} {
    %c0 = arith.constant 0 : index
    %c0_0 = arith.constant 0 : index
    %c109 = arith.constant 109 : index
    %0 = vector.load %arg1[%c0, %c0_0, %c109] : memref<1x16x640xbf16, #tpu.memory_space<vmem>>, vector<1x16x384xbf16>
    %1 = vector.shape_cast %0 : vector<1x16x384xbf16> to vector<16x384xbf16>
    %c0_1 = arith.constant 0 : index
    %c0_2 = arith.constant 0 : index
    %2 = vector.load %arg9[%c0_1, %c0_2] : memref<144x384xbf16, #tpu.memory_space<vmem>>, vector<16x384xbf16>
    tpu.vector_store %arg9[%c0_1, %c0_2], %1 {strides = array<i32>} : memref<144x384xbf16, #tpu.memory_space<vmem>>, vector<16x384xbf16>,
    %c0_3 = arith.constant 0 : index
    %c0_4 = arith.constant 0 : index
    %c110 = arith.constant 110 : index
    %3 = vector.load %arg1[%c0_3, %c0_4, %c110] : memref<1x16x640xbf16, #tpu.memory_space<vmem>>, vector<1x16x384xbf16>
    %4 = vector.shape_cast %3 : vector<1x16x384xbf16> to vector<16x384xbf16>
    %c16 = arith.constant 16 : index
    %c0_5 = arith.constant 0 : index
    %5 = vector.load %arg9[%c16, %c0_5] : memref<144x384xbf16, #tpu.memory_space<vmem>>, vector<16x384xbf16>
    tpu.vector_store %arg9[%c16, %c0_5], %4 {strides = array<i32>} : memref<144x384xbf16, #tpu.memory_space<vmem>>, vector<16x384xbf16>,
    %c0_6 = arith.constant 0 : index
    %c0_7 = arith.constant 0 : index
    %c111 = arith.constant 111 : index
    %6 = vector.load %arg1[%c0_6, %c0_7, %c111] : memref<1x16x640xbf16, #tpu.memory_space<vmem>>, vector<1x16x384xbf16>
    %7 = vector.shape_cast %6 : vector<1x16x384xbf16> to vector<16x384xbf16>
    %c32 = arith.constant 32 : index
    %c0_8 = arith.constant 0 : index
    %8 = vector.load %arg9[%c32, %c0_8] : memref<144x384xbf16, #tpu.memory_space<vmem>>, vector<16x384xbf16>
    tpu.vector_store %arg9[%c32, %c0_8], %7 {strides = array<i32>} : memref<144x384xbf16, #tpu.memory_space<vmem>>, vector<16x384xbf16>,
    %c0_9 = arith.constant 0 : index
    %c0_10 = arith.constant 0 : index
    %c127 = arith.constant 127 : index
    %9 = vector.load %arg1[%c0_9, %c0_10, %c127] : memref<1x16x640xbf16, #tpu.memory_space<vmem>>, vector<1x16x384xbf16>
    %10 = vector.shape_cast %9 : vector<1x16x384xbf16> to vector<16x384xbf16>
    %c48 = arith.constant 48 : index
    %c0_11 = arith.constant 0 : index
    %11 = vector.load %arg9[%c48, %c0_11] : memref<144x384xbf16, #tpu.memory_space<vmem>>, vector<16x384xbf16>
    tpu.vector_store %arg9[%c48, %c0_11], %10 {strides = array<i32>} : memref<144x384xbf16, #tpu.memory_space<vmem>>, vector<16x384xbf16>,
    %c0_12 = arith.constant 0 : index
    %c0_13 = arith.constant 0 : index
    %c128 = arith.constant 128 : index
    %12 = vector.load %arg1[%c0_12, %c0_13, %c128] : memref<1x16x640xbf16, #tpu.memory_space<vmem>>, vector<1x16x384xbf16>
    %13 = vector.shape_cast %12 : vector<1x16x384xbf16> to vector<16x384xbf16>
    %c64 = arith.constant 64 : index
    %c0_14 = arith.constant 0 : index
    %14 = vector.load %arg9[%c64, %c0_14] : memref<144x384xbf16, #tpu.memory_space<vmem>>, vector<16x384xbf16>
    tpu.vector_store %arg9[%c64, %c0_14], %13 {strides = array<i32>} : memref<144x384xbf16, #tpu.memory_space<vmem>>, vector<16x384xbf16>,
    %c0_15 = arith.constant 0 : index
    %c0_16 = arith.constant 0 : index
    %c129 = arith.constant 129 : index
    %15 = vector.load %arg1[%c0_15, %c0_16, %c129] : memref<1x16x640xbf16, #tpu.memory_space<vmem>>, vector<1x16x384xbf16>
    %16 = vector.shape_cast %15 : vector<1x16x384xbf16> to vector<16x384xbf16>
    %c80 = arith.constant 80 : index
    %c0_17 = arith.constant 0 : index
    %17 = vector.load %arg9[%c80, %c0_17] : memref<144x384xbf16, #tpu.memory_space<vmem>>, vector<16x384xbf16>
    tpu.vector_store %arg9[%c80, %c0_17], %16 {strides = array<i32>} : memref<144x384xbf16, #tpu.memory_space<vmem>>, vector<16x384xbf16>,
    %c0_18 = arith.constant 0 : index
    %c0_19 = arith.constant 0 : index
    %c145 = arith.constant 145 : index
    %18 = vector.load %arg1[%c0_18, %c0_19, %c145] : memref<1x16x640xbf16, #tpu.memory_space<vmem>>, vector<1x16x384xbf16>
    %19 = vector.shape_cast %18 : vector<1x16x384xbf16> to vector<16x384xbf16>
    %c96 = arith.constant 96 : index
    %c0_20 = arith.constant 0 : index
    %20 = vector.load %arg9[%c96, %c0_20] : memref<144x384xbf16, #tpu.memory_space<vmem>>, vector<16x384xbf16>
    tpu.vector_store %arg9[%c96, %c0_20], %19 {strides = array<i32>} : memref<144x384xbf16, #tpu.memory_space<vmem>>, vector<16x384xbf16>,
    %c0_21 = arith.constant 0 : index
    %c0_22 = arith.constant 0 : index
    %c146 = arith.constant 146 : index
    %21 = vector.load %arg1[%c0_21, %c0_22, %c146] : memref<1x16x640xbf16, #tpu.memory_space<vmem>>, vector<1x16x384xbf16>
    %22 = vector.shape_cast %21 : vector<1x16x384xbf16> to vector<16x384xbf16>
    %c112 = arith.constant 112 : index
    %c0_23 = arith.constant 0 : index
    %23 = vector.load %arg9[%c112, %c0_23] : memref<144x384xbf16, #tpu.memory_space<vmem>>, vector<16x384xbf16>
    tpu.vector_store %arg9[%c112, %c0_23], %22 {strides = array<i32>} : memref<144x384xbf16, #tpu.memory_space<vmem>>, vector<16x384xbf16>,
    %c0_24 = arith.constant 0 : index
    %c0_25 = arith.constant 0 : index
    %c147 = arith.constant 147 : index
    %24 = vector.load %arg1[%c0_24, %c0_25, %c147] : memref<1x16x640xbf16, #tpu.memory_space<vmem>>, vector<1x16x384xbf16>
    %25 = vector.shape_cast %24 : vector<1x16x384xbf16> to vector<16x384xbf16>
    %c128_26 = arith.constant 128 : index
    %c0_27 = arith.constant 0 : index
    %26 = vector.load %arg9[%c128_26, %c0_27] : memref<144x384xbf16, #tpu.memory_space<vmem>>, vector<16x384xbf16>
    tpu.vector_store %arg9[%c128_26, %c0_27], %25 {strides = array<i32>} : memref<144x384xbf16, #tpu.memory_space<vmem>>, vector<16x384xbf16>,
    %c0_28 = arith.constant 0 : index
    %c0_29 = arith.constant 0 : index
    %27 = vector.load %arg2[%c0_28, %c0_29] : memref<16x144xbf16, #tpu.memory_space<vmem>>, vector<16x144xbf16>
    %c0_30 = arith.constant 0 : index
    %c0_31 = arith.constant 0 : index
    %28 = vector.load %arg9[%c0_30, %c0_31] : memref<144x384xbf16, #tpu.memory_space<vmem>>, vector<144x384xbf16>
    %cst = arith.constant dense<0.000000e+00> : vector<16x384xf32>
    %29 = tpu.matmul %27, %28, %cst {dimension_numbers = #tpu.dot_dimension_numbers<[1], [0], [0], [1], [0, 0, 1, 1], [], []>} : vector<16x144xbf16>, vector<144x384xbf16>, vector<16x384xf32> -> vector<16x384xf32>
    %c0_32 = arith.constant 0 : index
    %c0_33 = arith.constant 0 : index
    %30 = vector.load %arg3[%c0_32, %c0_33] : memref<16x1xf32, #tpu.memory_space<vmem>>, vector<16x1xf32>
    %31 = vector.broadcast %30 : vector<16x1xf32> to vector<16x384xf32>
    %32 = arith.addf %29, %31 : vector<16x384xf32>
    %cst_34 = arith.constant 0.000000e+00 : f32
    %33 = vector.broadcast %cst_34 : f32 to vector<16x384xf32>
    %34 = arith.maximumf %32, %33 : vector<16x384xf32>
    %c0_35 = arith.constant 0 : index
    %c0_36 = arith.constant 0 : index
    %35 = vector.load %arg6[%c0_35, %c0_36] : memref<1x384xf32, #tpu.memory_space<vmem>>, vector<1x384xf32>
    %36 = vector.broadcast %35 : vector<1x384xf32> to vector<16x384xf32>
    %37 = arith.mulf %34, %36 : vector<16x384xf32>
    %cst_37 = arith.constant 0.000000e+00 : bf16
    %38 = vector.broadcast %cst_37 : bf16 to vector<16x128xbf16>
    %c0_38 = arith.constant 0 : index
    %c0_39 = arith.constant 0 : index
    %39 = vector.load %arg10[%c0_38, %c0_39] : memref<16x640xbf16, #tpu.memory_space<vmem>>, vector<16x128xbf16>
    tpu.vector_store %arg10[%c0_38, %c0_39], %38 {strides = array<i32>} : memref<16x640xbf16, #tpu.memory_space<vmem>>, vector<16x128xbf16>,
    %c0_40 = arith.constant 0 : index
    %c512 = arith.constant 512 : index
    %40 = vector.load %arg10[%c0_40, %c512] : memref<16x640xbf16, #tpu.memory_space<vmem>>, vector<16x128xbf16>
    tpu.vector_store %arg10[%c0_40, %c512], %38 {strides = array<i32>} : memref<16x640xbf16, #tpu.memory_space<vmem>>, vector<16x128xbf16>,
    %41 = arith.truncf %37 : vector<16x384xf32> to vector<16x384xbf16>
    %c0_41 = arith.constant 0 : index
    %c128_42 = arith.constant 128 : index
    %42 = vector.load %arg10[%c0_41, %c128_42] : memref<16x640xbf16, #tpu.memory_space<vmem>>, vector<16x384xbf16>
    tpu.vector_store %arg10[%c0_41, %c128_42], %41 {strides = array<i32>} : memref<16x640xbf16, #tpu.memory_space<vmem>>, vector<16x384xbf16>,
    %c0_43 = arith.constant 0 : index
    %c109_44 = arith.constant 109 : index
    %43 = vector.load %arg10[%c0_43, %c109_44] : memref<16x640xbf16, #tpu.memory_space<vmem>>, vector<16x384xbf16>
    %c0_45 = arith.constant 0 : index
    %c0_46 = arith.constant 0 : index
    %44 = vector.load %arg11[%c0_45, %c0_46] : memref<144x384xbf16, #tpu.memory_space<vmem>>, vector<16x384xbf16>
    tpu.vector_store %arg11[%c0_45, %c0_46], %43 {strides = array<i32>} : memref<144x384xbf16, #tpu.memory_space<vmem>>, vector<16x384xbf16>,
    %c0_47 = arith.constant 0 : index
    %c110_48 = arith.constant 110 : index
    %45 = vector.load %arg10[%c0_47, %c110_48] : memref<16x640xbf16, #tpu.memory_space<vmem>>, vector<16x384xbf16>
    %c16_49 = arith.constant 16 : index
    %c0_50 = arith.constant 0 : index
    %46 = vector.load %arg11[%c16_49, %c0_50] : memref<144x384xbf16, #tpu.memory_space<vmem>>, vector<16x384xbf16>
    tpu.vector_store %arg11[%c16_49, %c0_50], %45 {strides = array<i32>} : memref<144x384xbf16, #tpu.memory_space<vmem>>, vector<16x384xbf16>,
    %c0_51 = arith.constant 0 : index
    %c111_52 = arith.constant 111 : index
    %47 = vector.load %arg10[%c0_51, %c111_52] : memref<16x640xbf16, #tpu.memory_space<vmem>>, vector<16x384xbf16>
    %c32_53 = arith.constant 32 : index
    %c0_54 = arith.constant 0 : index
    %48 = vector.load %arg11[%c32_53, %c0_54] : memref<144x384xbf16, #tpu.memory_space<vmem>>, vector<16x384xbf16>
    tpu.vector_store %arg11[%c32_53, %c0_54], %47 {strides = array<i32>} : memref<144x384xbf16, #tpu.memory_space<vmem>>, vector<16x384xbf16>,
    %c0_55 = arith.constant 0 : index
    %c127_56 = arith.constant 127 : index
    %49 = vector.load %arg10[%c0_55, %c127_56] : memref<16x640xbf16, #tpu.memory_space<vmem>>, vector<16x384xbf16>
    %c48_57 = arith.constant 48 : index
    %c0_58 = arith.constant 0 : index
    %50 = vector.load %arg11[%c48_57, %c0_58] : memref<144x384xbf16, #tpu.memory_space<vmem>>, vector<16x384xbf16>
    tpu.vector_store %arg11[%c48_57, %c0_58], %49 {strides = array<i32>} : memref<144x384xbf16, #tpu.memory_space<vmem>>, vector<16x384xbf16>,
    %c0_59 = arith.constant 0 : index
    %c128_60 = arith.constant 128 : index
    %51 = vector.load %arg10[%c0_59, %c128_60] : memref<16x640xbf16, #tpu.memory_space<vmem>>, vector<16x384xbf16>
    %c64_61 = arith.constant 64 : index
    %c0_62 = arith.constant 0 : index
    %52 = vector.load %arg11[%c64_61, %c0_62] : memref<144x384xbf16, #tpu.memory_space<vmem>>, vector<16x384xbf16>
    tpu.vector_store %arg11[%c64_61, %c0_62], %51 {strides = array<i32>} : memref<144x384xbf16, #tpu.memory_space<vmem>>, vector<16x384xbf16>,
    %c0_63 = arith.constant 0 : index
    %c129_64 = arith.constant 129 : index
    %53 = vector.load %arg10[%c0_63, %c129_64] : memref<16x640xbf16, #tpu.memory_space<vmem>>, vector<16x384xbf16>
    %c80_65 = arith.constant 80 : index
    %c0_66 = arith.constant 0 : index
    %54 = vector.load %arg11[%c80_65, %c0_66] : memref<144x384xbf16, #tpu.memory_space<vmem>>, vector<16x384xbf16>
    tpu.vector_store %arg11[%c80_65, %c0_66], %53 {strides = array<i32>} : memref<144x384xbf16, #tpu.memory_space<vmem>>, vector<16x384xbf16>,
    %c0_67 = arith.constant 0 : index
    %c145_68 = arith.constant 145 : index
    %55 = vector.load %arg10[%c0_67, %c145_68] : memref<16x640xbf16, #tpu.memory_space<vmem>>, vector<16x384xbf16>
    %c96_69 = arith.constant 96 : index
    %c0_70 = arith.constant 0 : index
    %56 = vector.load %arg11[%c96_69, %c0_70] : memref<144x384xbf16, #tpu.memory_space<vmem>>, vector<16x384xbf16>
    tpu.vector_store %arg11[%c96_69, %c0_70], %55 {strides = array<i32>} : memref<144x384xbf16, #tpu.memory_space<vmem>>, vector<16x384xbf16>,
    %c0_71 = arith.constant 0 : index
    %c146_72 = arith.constant 146 : index
    %57 = vector.load %arg10[%c0_71, %c146_72] : memref<16x640xbf16, #tpu.memory_space<vmem>>, vector<16x384xbf16>
    %c112_73 = arith.constant 112 : index
    %c0_74 = arith.constant 0 : index
    %58 = vector.load %arg11[%c112_73, %c0_74] : memref<144x384xbf16, #tpu.memory_space<vmem>>, vector<16x384xbf16>
    tpu.vector_store %arg11[%c112_73, %c0_74], %57 {strides = array<i32>} : memref<144x384xbf16, #tpu.memory_space<vmem>>, vector<16x384xbf16>,
    %c0_75 = arith.constant 0 : index
    %c147_76 = arith.constant 147 : index
    %59 = vector.load %arg10[%c0_75, %c147_76] : memref<16x640xbf16, #tpu.memory_space<vmem>>, vector<16x384xbf16>
    %c128_77 = arith.constant 128 : index
    %c0_78 = arith.constant 0 : index
    %60 = vector.load %arg11[%c128_77, %c0_78] : memref<144x384xbf16, #tpu.memory_space<vmem>>, vector<16x384xbf16>
    tpu.vector_store %arg11[%c128_77, %c0_78], %59 {strides = array<i32>} : memref<144x384xbf16, #tpu.memory_space<vmem>>, vector<16x384xbf16>,
    %c0_79 = arith.constant 0 : index
    %c0_80 = arith.constant 0 : index
    %61 = vector.load %arg4[%c0_79, %c0_80] : memref<16x144xbf16, #tpu.memory_space<vmem>>, vector<16x144xbf16>
    %c0_81 = arith.constant 0 : index
    %c0_82 = arith.constant 0 : index
    %62 = vector.load %arg11[%c0_81, %c0_82] : memref<144x384xbf16, #tpu.memory_space<vmem>>, vector<144x384xbf16>
    %cst_83 = arith.constant dense<0.000000e+00> : vector<16x384xf32>
    %63 = tpu.matmul %61, %62, %cst_83 {dimension_numbers = #tpu.dot_dimension_numbers<[1], [0], [0], [1], [0, 0, 1, 1], [], []>} : vector<16x144xbf16>, vector<144x384xbf16>, vector<16x384xf32> -> vector<16x384xf32>
    %c0_84 = arith.constant 0 : index
    %c0_85 = arith.constant 0 : index
    %c128_86 = arith.constant 128 : index
    %64 = vector.load %arg1[%c0_84, %c0_85, %c128_86] : memref<1x16x640xbf16, #tpu.memory_space<vmem>>, vector<1x16x384xbf16>
    %65 = vector.shape_cast %64 : vector<1x16x384xbf16> to vector<16x384xbf16>
    %66 = arith.extf %65 : vector<16x384xbf16> to vector<16x384xf32>
    %c0_87 = arith.constant 0 : index
    %c0_88 = arith.constant 0 : index
    %67 = vector.load %arg5[%c0_87, %c0_88] : memref<16x1xf32, #tpu.memory_space<vmem>>, vector<16x1xf32>
    %68 = vector.broadcast %67 : vector<16x1xf32> to vector<16x384xf32>
    %69 = arith.addf %63, %68 : vector<16x384xf32>
    %70 = arith.addf %69, %66 : vector<16x384xf32>
    %cst_89 = arith.constant 0.000000e+00 : f32
    %71 = vector.broadcast %cst_89 : f32 to vector<16x384xf32>
    %72 = arith.maximumf %70, %71 : vector<16x384xf32>
    %c0_90 = arith.constant 0 : index
    %c0_91 = arith.constant 0 : index
    %73 = vector.load %arg6[%c0_90, %c0_91] : memref<1x384xf32, #tpu.memory_space<vmem>>, vector<1x384xf32>
    %74 = vector.broadcast %73 : vector<1x384xf32> to vector<16x384xf32>
    %75 = arith.mulf %72, %74 : vector<16x384xf32>
    %cst_92 = arith.constant dense<0.000000e+00> : vector<16xf32>
    %76 = vector.multi_reduction <add>, %75, %cst_92 [1] : vector<16x384xf32> to vector<16xf32>
    %77 = vector.shape_cast %76 : vector<16xf32> to vector<16x1xf32>
    %c0_93 = arith.constant 0 : index
    %c0_94 = arith.constant 0 : index
    %c0_95 = arith.constant 0 : index
    %78 = vector.load %arg8[%c0_93, %c0_94, %c0_95] : memref<1x16x1xf32, #tpu.memory_space<vmem>>, vector<1x16x1xf32>
    %79 = vector.shape_cast %78 : vector<1x16x1xf32> to vector<16x1xf32>
    %80 = vector.shape_cast %77 : vector<16x1xf32> to vector<1x16x1xf32>
    tpu.vector_store %arg8[%c0_93, %c0_94, %c0_95], %80 {strides = array<i32>} : memref<1x16x1xf32, #tpu.memory_space<vmem>>, vector<1x16x1xf32>,
    %cst_96 = arith.constant 0.000000e+00 : bf16
    %81 = vector.broadcast %cst_96 : bf16 to vector<16x128xbf16>
    %c0_97 = arith.constant 0 : index
    %c0_98 = arith.constant 0 : index
    %c0_99 = arith.constant 0 : index
    %82 = vector.load %arg7[%c0_97, %c0_98, %c0_99] : memref<1x16x640xbf16, #tpu.memory_space<vmem>>, vector<1x16x128xbf16>
    %83 = vector.shape_cast %82 : vector<1x16x128xbf16> to vector<16x128xbf16>
    %84 = vector.shape_cast %81 : vector<16x128xbf16> to vector<1x16x128xbf16>
    tpu.vector_store %arg7[%c0_97, %c0_98, %c0_99], %84 {strides = array<i32>} : memref<1x16x640xbf16, #tpu.memory_space<vmem>>, vector<1x16x128xbf16>,
    %c0_100 = arith.constant 0 : index
    %c0_101 = arith.constant 0 : index
    %c512_102 = arith.constant 512 : index
    %85 = vector.load %arg7[%c0_100, %c0_101, %c512_102] : memref<1x16x640xbf16, #tpu.memory_space<vmem>>, vector<1x16x128xbf16>
    %86 = vector.shape_cast %85 : vector<1x16x128xbf16> to vector<16x128xbf16>
    %87 = vector.shape_cast %81 : vector<16x128xbf16> to vector<1x16x128xbf16>
    tpu.vector_store %arg7[%c0_100, %c0_101, %c512_102], %87 {strides = array<i32>} : memref<1x16x640xbf16, #tpu.memory_space<vmem>>, vector<1x16x128xbf16>,
    %88 = arith.truncf %75 : vector<16x384xf32> to vector<16x384xbf16>
    %c0_103 = arith.constant 0 : index
    %c0_104 = arith.constant 0 : index
    %c128_105 = arith.constant 128 : index
    %89 = vector.load %arg7[%c0_103, %c0_104, %c128_105] : memref<1x16x640xbf16, #tpu.memory_space<vmem>>, vector<1x16x384xbf16>
    %90 = vector.shape_cast %89 : vector<1x16x384xbf16> to vector<16x384xbf16>
    %91 = vector.shape_cast %88 : vector<16x384xbf16> to vector<1x16x384xbf16>
    tpu.vector_store %arg7[%c0_103, %c0_104, %c128_105], %91 {strides = array<i32>} : memref<1x16x640xbf16, #tpu.memory_space<vmem>>, vector<1x16x384xbf16>,
    return
  }
  func.func @transform_0(%arg0: i32) -> (i32, i32, i32) {
    %c0_i32 = arith.constant 0 : i32
    %c0_i32_0 = arith.constant 0 : i32
    %c0_i32_1 = arith.constant 0 : i32
    return %arg0, %c0_i32, %c0_i32_0 : i32, i32, i32
  }
  func.func @transform_1(%arg0: i32) -> (i32, i32) {
    %c0_i32 = arith.constant 0 : i32
    %c0_i32_0 = arith.constant 0 : i32
    %c0_i32_1 = arith.constant 0 : i32
    return %c0_i32, %c0_i32_0 : i32, i32
  }
  func.func @transform_2(%arg0: i32) -> (i32, i32) {
    %c0_i32 = arith.constant 0 : i32
    %c0_i32_0 = arith.constant 0 : i32
    %c0_i32_1 = arith.constant 0 : i32
    return %c0_i32, %c0_i32_0 : i32, i32
  }
  func.func @transform_3(%arg0: i32) -> (i32, i32) {
    %c0_i32 = arith.constant 0 : i32
    %c0_i32_0 = arith.constant 0 : i32
    %c0_i32_1 = arith.constant 0 : i32
    return %c0_i32, %c0_i32_0 : i32, i32
  }
  func.func @transform_4(%arg0: i32) -> (i32, i32) {
    %c0_i32 = arith.constant 0 : i32
    %c0_i32_0 = arith.constant 0 : i32
    %c0_i32_1 = arith.constant 0 : i32
    return %c0_i32, %c0_i32_0 : i32, i32
  }
  func.func @transform_5(%arg0: i32) -> (i32, i32) {
    %c0_i32 = arith.constant 0 : i32
    %c0_i32_0 = arith.constant 0 : i32
    %c0_i32_1 = arith.constant 0 : i32
    return %c0_i32, %c0_i32_0 : i32, i32
  }
  func.func @transform_6(%arg0: i32) -> (i32, i32, i32) {
    %c0_i32 = arith.constant 0 : i32
    %c0_i32_0 = arith.constant 0 : i32
    %c0_i32_1 = arith.constant 0 : i32
    return %arg0, %c0_i32, %c0_i32_0 : i32, i32, i32
  }
  func.func @transform_7(%arg0: i32) -> (i32, i32, i32) {
    %c0_i32 = arith.constant 0 : i32
    %c0_i32_0 = arith.constant 0 : i32
    %c0_i32_1 = arith.constant 0 : i32
    return %arg0, %c0_i32, %c0_i32_0 : i32, i32, i32
  }
}

module attributes {stable_mosaic.version = 11 : i64} {
  func.func @_stem_kernel(%arg0: i32, %arg1: memref<1x8x640xbf16, #tpu.memory_space<vmem>>, %arg2: memref<16x72xbf16, #tpu.memory_space<vmem>>, %arg3: memref<16x1xf32, #tpu.memory_space<vmem>>, %arg4: memref<1x384xf32, #tpu.memory_space<vmem>>, %arg5: memref<1x16x640xbf16, #tpu.memory_space<vmem>>, %arg6: memref<1x16x1xf32, #tpu.memory_space<vmem>>, %arg7: memref<72x384xbf16, #tpu.memory_space<vmem>>) attributes {dimension_semantics = [#tpu.dimension_semantics<parallel>], iteration_bounds = array<i64: 2>, scalar_prefetch = 0 : i64, scratch_operands = 1 : i64, tpu.core_type = #tpu.core_type<tc>, window_params = [{transform_indices = @transform_0, window_bounds = array<i64: 1, 8, 640>}, {pipeline_mode = #tpu.pipeline_mode<synchronous>, transform_indices = @transform_1, window_bounds = array<i64: 16, 72>}, {pipeline_mode = #tpu.pipeline_mode<synchronous>, transform_indices = @transform_2, window_bounds = array<i64: 16, 1>}, {pipeline_mode = #tpu.pipeline_mode<synchronous>, transform_indices = @transform_3, window_bounds = array<i64: 1, 384>}, {transform_indices = @transform_4, window_bounds = array<i64: 1, 16, 640>}, {transform_indices = @transform_5, window_bounds = array<i64: 1, 16, 1>}]} {
    %c0 = arith.constant 0 : index
    %c0_0 = arith.constant 0 : index
    %c109 = arith.constant 109 : index
    %0 = vector.load %arg1[%c0, %c0_0, %c109] : memref<1x8x640xbf16, #tpu.memory_space<vmem>>, vector<1x8x384xbf16>
    %1 = vector.shape_cast %0 : vector<1x8x384xbf16> to vector<8x384xbf16>
    %c0_1 = arith.constant 0 : index
    %c0_2 = arith.constant 0 : index
    %2 = vector.load %arg7[%c0_1, %c0_2] : memref<72x384xbf16, #tpu.memory_space<vmem>>, vector<8x384xbf16>
    tpu.vector_store %arg7[%c0_1, %c0_2], %1 {strides = array<i32>} : memref<72x384xbf16, #tpu.memory_space<vmem>>, vector<8x384xbf16>,
    %c0_3 = arith.constant 0 : index
    %c0_4 = arith.constant 0 : index
    %c110 = arith.constant 110 : index
    %3 = vector.load %arg1[%c0_3, %c0_4, %c110] : memref<1x8x640xbf16, #tpu.memory_space<vmem>>, vector<1x8x384xbf16>
    %4 = vector.shape_cast %3 : vector<1x8x384xbf16> to vector<8x384xbf16>
    %c8 = arith.constant 8 : index
    %c0_5 = arith.constant 0 : index
    %5 = vector.load %arg7[%c8, %c0_5] : memref<72x384xbf16, #tpu.memory_space<vmem>>, vector<8x384xbf16>
    tpu.vector_store %arg7[%c8, %c0_5], %4 {strides = array<i32>} : memref<72x384xbf16, #tpu.memory_space<vmem>>, vector<8x384xbf16>,
    %c0_6 = arith.constant 0 : index
    %c0_7 = arith.constant 0 : index
    %c111 = arith.constant 111 : index
    %6 = vector.load %arg1[%c0_6, %c0_7, %c111] : memref<1x8x640xbf16, #tpu.memory_space<vmem>>, vector<1x8x384xbf16>
    %7 = vector.shape_cast %6 : vector<1x8x384xbf16> to vector<8x384xbf16>
    %c16 = arith.constant 16 : index
    %c0_8 = arith.constant 0 : index
    %8 = vector.load %arg7[%c16, %c0_8] : memref<72x384xbf16, #tpu.memory_space<vmem>>, vector<8x384xbf16>
    tpu.vector_store %arg7[%c16, %c0_8], %7 {strides = array<i32>} : memref<72x384xbf16, #tpu.memory_space<vmem>>, vector<8x384xbf16>,
    %c0_9 = arith.constant 0 : index
    %c0_10 = arith.constant 0 : index
    %c127 = arith.constant 127 : index
    %9 = vector.load %arg1[%c0_9, %c0_10, %c127] : memref<1x8x640xbf16, #tpu.memory_space<vmem>>, vector<1x8x384xbf16>
    %10 = vector.shape_cast %9 : vector<1x8x384xbf16> to vector<8x384xbf16>
    %c24 = arith.constant 24 : index
    %c0_11 = arith.constant 0 : index
    %11 = vector.load %arg7[%c24, %c0_11] : memref<72x384xbf16, #tpu.memory_space<vmem>>, vector<8x384xbf16>
    tpu.vector_store %arg7[%c24, %c0_11], %10 {strides = array<i32>} : memref<72x384xbf16, #tpu.memory_space<vmem>>, vector<8x384xbf16>,
    %c0_12 = arith.constant 0 : index
    %c0_13 = arith.constant 0 : index
    %c128 = arith.constant 128 : index
    %12 = vector.load %arg1[%c0_12, %c0_13, %c128] : memref<1x8x640xbf16, #tpu.memory_space<vmem>>, vector<1x8x384xbf16>
    %13 = vector.shape_cast %12 : vector<1x8x384xbf16> to vector<8x384xbf16>
    %c32 = arith.constant 32 : index
    %c0_14 = arith.constant 0 : index
    %14 = vector.load %arg7[%c32, %c0_14] : memref<72x384xbf16, #tpu.memory_space<vmem>>, vector<8x384xbf16>
    tpu.vector_store %arg7[%c32, %c0_14], %13 {strides = array<i32>} : memref<72x384xbf16, #tpu.memory_space<vmem>>, vector<8x384xbf16>,
    %c0_15 = arith.constant 0 : index
    %c0_16 = arith.constant 0 : index
    %c129 = arith.constant 129 : index
    %15 = vector.load %arg1[%c0_15, %c0_16, %c129] : memref<1x8x640xbf16, #tpu.memory_space<vmem>>, vector<1x8x384xbf16>
    %16 = vector.shape_cast %15 : vector<1x8x384xbf16> to vector<8x384xbf16>
    %c40 = arith.constant 40 : index
    %c0_17 = arith.constant 0 : index
    %17 = vector.load %arg7[%c40, %c0_17] : memref<72x384xbf16, #tpu.memory_space<vmem>>, vector<8x384xbf16>
    tpu.vector_store %arg7[%c40, %c0_17], %16 {strides = array<i32>} : memref<72x384xbf16, #tpu.memory_space<vmem>>, vector<8x384xbf16>,
    %c0_18 = arith.constant 0 : index
    %c0_19 = arith.constant 0 : index
    %c145 = arith.constant 145 : index
    %18 = vector.load %arg1[%c0_18, %c0_19, %c145] : memref<1x8x640xbf16, #tpu.memory_space<vmem>>, vector<1x8x384xbf16>
    %19 = vector.shape_cast %18 : vector<1x8x384xbf16> to vector<8x384xbf16>
    %c48 = arith.constant 48 : index
    %c0_20 = arith.constant 0 : index
    %20 = vector.load %arg7[%c48, %c0_20] : memref<72x384xbf16, #tpu.memory_space<vmem>>, vector<8x384xbf16>
    tpu.vector_store %arg7[%c48, %c0_20], %19 {strides = array<i32>} : memref<72x384xbf16, #tpu.memory_space<vmem>>, vector<8x384xbf16>,
    %c0_21 = arith.constant 0 : index
    %c0_22 = arith.constant 0 : index
    %c146 = arith.constant 146 : index
    %21 = vector.load %arg1[%c0_21, %c0_22, %c146] : memref<1x8x640xbf16, #tpu.memory_space<vmem>>, vector<1x8x384xbf16>
    %22 = vector.shape_cast %21 : vector<1x8x384xbf16> to vector<8x384xbf16>
    %c56 = arith.constant 56 : index
    %c0_23 = arith.constant 0 : index
    %23 = vector.load %arg7[%c56, %c0_23] : memref<72x384xbf16, #tpu.memory_space<vmem>>, vector<8x384xbf16>
    tpu.vector_store %arg7[%c56, %c0_23], %22 {strides = array<i32>} : memref<72x384xbf16, #tpu.memory_space<vmem>>, vector<8x384xbf16>,
    %c0_24 = arith.constant 0 : index
    %c0_25 = arith.constant 0 : index
    %c147 = arith.constant 147 : index
    %24 = vector.load %arg1[%c0_24, %c0_25, %c147] : memref<1x8x640xbf16, #tpu.memory_space<vmem>>, vector<1x8x384xbf16>
    %25 = vector.shape_cast %24 : vector<1x8x384xbf16> to vector<8x384xbf16>
    %c64 = arith.constant 64 : index
    %c0_26 = arith.constant 0 : index
    %26 = vector.load %arg7[%c64, %c0_26] : memref<72x384xbf16, #tpu.memory_space<vmem>>, vector<8x384xbf16>
    tpu.vector_store %arg7[%c64, %c0_26], %25 {strides = array<i32>} : memref<72x384xbf16, #tpu.memory_space<vmem>>, vector<8x384xbf16>,
    %c0_27 = arith.constant 0 : index
    %c0_28 = arith.constant 0 : index
    %27 = vector.load %arg2[%c0_27, %c0_28] : memref<16x72xbf16, #tpu.memory_space<vmem>>, vector<16x72xbf16>
    %c0_29 = arith.constant 0 : index
    %c0_30 = arith.constant 0 : index
    %28 = vector.load %arg7[%c0_29, %c0_30] : memref<72x384xbf16, #tpu.memory_space<vmem>>, vector<72x384xbf16>
    %cst = arith.constant dense<0.000000e+00> : vector<16x384xf32>
    %29 = tpu.matmul %27, %28, %cst {dimension_numbers = #tpu.dot_dimension_numbers<[1], [0], [0], [1], [0, 0, 1, 1], [], []>} : vector<16x72xbf16>, vector<72x384xbf16>, vector<16x384xf32> -> vector<16x384xf32>
    %c0_31 = arith.constant 0 : index
    %c0_32 = arith.constant 0 : index
    %30 = vector.load %arg3[%c0_31, %c0_32] : memref<16x1xf32, #tpu.memory_space<vmem>>, vector<16x1xf32>
    %31 = vector.broadcast %30 : vector<16x1xf32> to vector<16x384xf32>
    %32 = arith.addf %29, %31 : vector<16x384xf32>
    %cst_33 = arith.constant 0.000000e+00 : f32
    %33 = vector.broadcast %cst_33 : f32 to vector<16x384xf32>
    %34 = arith.maximumf %32, %33 : vector<16x384xf32>
    %c0_34 = arith.constant 0 : index
    %c0_35 = arith.constant 0 : index
    %35 = vector.load %arg4[%c0_34, %c0_35] : memref<1x384xf32, #tpu.memory_space<vmem>>, vector<1x384xf32>
    %36 = vector.broadcast %35 : vector<1x384xf32> to vector<16x384xf32>
    %37 = arith.mulf %34, %36 : vector<16x384xf32>
    %cst_36 = arith.constant dense<0.000000e+00> : vector<16xf32>
    %38 = vector.multi_reduction <add>, %37, %cst_36 [1] : vector<16x384xf32> to vector<16xf32>
    %39 = vector.shape_cast %38 : vector<16xf32> to vector<16x1xf32>
    %c0_37 = arith.constant 0 : index
    %c0_38 = arith.constant 0 : index
    %c0_39 = arith.constant 0 : index
    %40 = vector.load %arg6[%c0_37, %c0_38, %c0_39] : memref<1x16x1xf32, #tpu.memory_space<vmem>>, vector<1x16x1xf32>
    %41 = vector.shape_cast %40 : vector<1x16x1xf32> to vector<16x1xf32>
    %42 = vector.shape_cast %39 : vector<16x1xf32> to vector<1x16x1xf32>
    tpu.vector_store %arg6[%c0_37, %c0_38, %c0_39], %42 {strides = array<i32>} : memref<1x16x1xf32, #tpu.memory_space<vmem>>, vector<1x16x1xf32>,
    %cst_40 = arith.constant 0.000000e+00 : bf16
    %43 = vector.broadcast %cst_40 : bf16 to vector<16x128xbf16>
    %c0_41 = arith.constant 0 : index
    %c0_42 = arith.constant 0 : index
    %c0_43 = arith.constant 0 : index
    %44 = vector.load %arg5[%c0_41, %c0_42, %c0_43] : memref<1x16x640xbf16, #tpu.memory_space<vmem>>, vector<1x16x128xbf16>
    %45 = vector.shape_cast %44 : vector<1x16x128xbf16> to vector<16x128xbf16>
    %46 = vector.shape_cast %43 : vector<16x128xbf16> to vector<1x16x128xbf16>
    tpu.vector_store %arg5[%c0_41, %c0_42, %c0_43], %46 {strides = array<i32>} : memref<1x16x640xbf16, #tpu.memory_space<vmem>>, vector<1x16x128xbf16>,
    %c0_44 = arith.constant 0 : index
    %c0_45 = arith.constant 0 : index
    %c512 = arith.constant 512 : index
    %47 = vector.load %arg5[%c0_44, %c0_45, %c512] : memref<1x16x640xbf16, #tpu.memory_space<vmem>>, vector<1x16x128xbf16>
    %48 = vector.shape_cast %47 : vector<1x16x128xbf16> to vector<16x128xbf16>
    %49 = vector.shape_cast %43 : vector<16x128xbf16> to vector<1x16x128xbf16>
    tpu.vector_store %arg5[%c0_44, %c0_45, %c512], %49 {strides = array<i32>} : memref<1x16x640xbf16, #tpu.memory_space<vmem>>, vector<1x16x128xbf16>,
    %50 = arith.truncf %37 : vector<16x384xf32> to vector<16x384xbf16>
    %c0_46 = arith.constant 0 : index
    %c0_47 = arith.constant 0 : index
    %c128_48 = arith.constant 128 : index
    %51 = vector.load %arg5[%c0_46, %c0_47, %c128_48] : memref<1x16x640xbf16, #tpu.memory_space<vmem>>, vector<1x16x384xbf16>
    %52 = vector.shape_cast %51 : vector<1x16x384xbf16> to vector<16x384xbf16>
    %53 = vector.shape_cast %50 : vector<16x384xbf16> to vector<1x16x384xbf16>
    tpu.vector_store %arg5[%c0_46, %c0_47, %c128_48], %53 {strides = array<i32>} : memref<1x16x640xbf16, #tpu.memory_space<vmem>>, vector<1x16x384xbf16>,
    return
  }
  func.func @transform_0(%arg0: i32) -> (i32, i32, i32) {
    %c0_i32 = arith.constant 0 : i32
    %c0_i32_0 = arith.constant 0 : i32
    %c0_i32_1 = arith.constant 0 : i32
    return %arg0, %c0_i32, %c0_i32_0 : i32, i32, i32
  }
  func.func @transform_1(%arg0: i32) -> (i32, i32) {
    %c0_i32 = arith.constant 0 : i32
    %c0_i32_0 = arith.constant 0 : i32
    %c0_i32_1 = arith.constant 0 : i32
    return %c0_i32, %c0_i32_0 : i32, i32
  }
  func.func @transform_2(%arg0: i32) -> (i32, i32) {
    %c0_i32 = arith.constant 0 : i32
    %c0_i32_0 = arith.constant 0 : i32
    %c0_i32_1 = arith.constant 0 : i32
    return %c0_i32, %c0_i32_0 : i32, i32
  }
  func.func @transform_3(%arg0: i32) -> (i32, i32) {
    %c0_i32 = arith.constant 0 : i32
    %c0_i32_0 = arith.constant 0 : i32
    %c0_i32_1 = arith.constant 0 : i32
    return %c0_i32, %c0_i32_0 : i32, i32
  }
  func.func @transform_4(%arg0: i32) -> (i32, i32, i32) {
    %c0_i32 = arith.constant 0 : i32
    %c0_i32_0 = arith.constant 0 : i32
    %c0_i32_1 = arith.constant 0 : i32
    return %arg0, %c0_i32, %c0_i32_0 : i32, i32, i32
  }
  func.func @transform_5(%arg0: i32) -> (i32, i32, i32) {
    %c0_i32 = arith.constant 0 : i32
    %c0_i32_0 = arith.constant 0 : i32
    %c0_i32_1 = arith.constant 0 : i32
    return %arg0, %c0_i32, %c0_i32_0 : i32, i32, i32
  }
}

module attributes {stable_mosaic.version = 11 : i64} {
  func.func @_block_kernel(%arg0: i32, %arg1: memref<1x16x640xbf16, #tpu.memory_space<vmem>>, %arg2: memref<32x144xbf16, #tpu.memory_space<vmem>>, %arg3: memref<32x1xf32, #tpu.memory_space<vmem>>, %arg4: memref<32x288xbf16, #tpu.memory_space<vmem>>, %arg5: memref<32x1xf32, #tpu.memory_space<vmem>>, %arg6: memref<384x128xbf16, #tpu.memory_space<vmem>>, %arg7: memref<32x16xbf16, #tpu.memory_space<vmem>>, %arg8: memref<1x128xf32, #tpu.memory_space<vmem>>, %arg9: memref<1x32x384xbf16, #tpu.memory_space<vmem>>, %arg10: memref<1x32x1xf32, #tpu.memory_space<vmem>>, %arg11: memref<144x384xbf16, #tpu.memory_space<vmem>>, %arg12: memref<32x384xbf16, #tpu.memory_space<vmem>>, %arg13: memref<288x128xbf16, #tpu.memory_space<vmem>>) attributes {dimension_semantics = [#tpu.dimension_semantics<parallel>], iteration_bounds = array<i64: 2>, scalar_prefetch = 0 : i64, scratch_operands = 3 : i64, tpu.core_type = #tpu.core_type<tc>, window_params = [{transform_indices = @transform_0, window_bounds = array<i64: 1, 16, 640>}, {pipeline_mode = #tpu.pipeline_mode<synchronous>, transform_indices = @transform_1, window_bounds = array<i64: 32, 144>}, {pipeline_mode = #tpu.pipeline_mode<synchronous>, transform_indices = @transform_2, window_bounds = array<i64: 32, 1>}, {pipeline_mode = #tpu.pipeline_mode<synchronous>, transform_indices = @transform_3, window_bounds = array<i64: 32, 288>}, {pipeline_mode = #tpu.pipeline_mode<synchronous>, transform_indices = @transform_4, window_bounds = array<i64: 32, 1>}, {pipeline_mode = #tpu.pipeline_mode<synchronous>, transform_indices = @transform_5, window_bounds = array<i64: 384, 128>}, {pipeline_mode = #tpu.pipeline_mode<synchronous>, transform_indices = @transform_6, window_bounds = array<i64: 32, 16>}, {pipeline_mode = #tpu.pipeline_mode<synchronous>, transform_indices = @transform_7, window_bounds = array<i64: 1, 128>}, {transform_indices = @transform_8, window_bounds = array<i64: 1, 32, 384>}, {transform_indices = @transform_9, window_bounds = array<i64: 1, 32, 1>}]} {
    %c0 = arith.constant 0 : index
    %c0_0 = arith.constant 0 : index
    %c109 = arith.constant 109 : index
    %0 = vector.load %arg1[%c0, %c0_0, %c109] : memref<1x16x640xbf16, #tpu.memory_space<vmem>>, vector<1x16x384xbf16>
    %1 = vector.shape_cast %0 : vector<1x16x384xbf16> to vector<16x384xbf16>
    %c0_1 = arith.constant 0 : index
    %c0_2 = arith.constant 0 : index
    %2 = vector.load %arg11[%c0_1, %c0_2] : memref<144x384xbf16, #tpu.memory_space<vmem>>, vector<16x384xbf16>
    tpu.vector_store %arg11[%c0_1, %c0_2], %1 {strides = array<i32>} : memref<144x384xbf16, #tpu.memory_space<vmem>>, vector<16x384xbf16>,
    %c0_3 = arith.constant 0 : index
    %c0_4 = arith.constant 0 : index
    %c110 = arith.constant 110 : index
    %3 = vector.load %arg1[%c0_3, %c0_4, %c110] : memref<1x16x640xbf16, #tpu.memory_space<vmem>>, vector<1x16x384xbf16>
    %4 = vector.shape_cast %3 : vector<1x16x384xbf16> to vector<16x384xbf16>
    %c16 = arith.constant 16 : index
    %c0_5 = arith.constant 0 : index
    %5 = vector.load %arg11[%c16, %c0_5] : memref<144x384xbf16, #tpu.memory_space<vmem>>, vector<16x384xbf16>
    tpu.vector_store %arg11[%c16, %c0_5], %4 {strides = array<i32>} : memref<144x384xbf16, #tpu.memory_space<vmem>>, vector<16x384xbf16>,
    %c0_6 = arith.constant 0 : index
    %c0_7 = arith.constant 0 : index
    %c111 = arith.constant 111 : index
    %6 = vector.load %arg1[%c0_6, %c0_7, %c111] : memref<1x16x640xbf16, #tpu.memory_space<vmem>>, vector<1x16x384xbf16>
    %7 = vector.shape_cast %6 : vector<1x16x384xbf16> to vector<16x384xbf16>
    %c32 = arith.constant 32 : index
    %c0_8 = arith.constant 0 : index
    %8 = vector.load %arg11[%c32, %c0_8] : memref<144x384xbf16, #tpu.memory_space<vmem>>, vector<16x384xbf16>
    tpu.vector_store %arg11[%c32, %c0_8], %7 {strides = array<i32>} : memref<144x384xbf16, #tpu.memory_space<vmem>>, vector<16x384xbf16>,
    %c0_9 = arith.constant 0 : index
    %c0_10 = arith.constant 0 : index
    %c127 = arith.constant 127 : index
    %9 = vector.load %arg1[%c0_9, %c0_10, %c127] : memref<1x16x640xbf16, #tpu.memory_space<vmem>>, vector<1x16x384xbf16>
    %10 = vector.shape_cast %9 : vector<1x16x384xbf16> to vector<16x384xbf16>
    %c48 = arith.constant 48 : index
    %c0_11 = arith.constant 0 : index
    %11 = vector.load %arg11[%c48, %c0_11] : memref<144x384xbf16, #tpu.memory_space<vmem>>, vector<16x384xbf16>
    tpu.vector_store %arg11[%c48, %c0_11], %10 {strides = array<i32>} : memref<144x384xbf16, #tpu.memory_space<vmem>>, vector<16x384xbf16>,
    %c0_12 = arith.constant 0 : index
    %c0_13 = arith.constant 0 : index
    %c128 = arith.constant 128 : index
    %12 = vector.load %arg1[%c0_12, %c0_13, %c128] : memref<1x16x640xbf16, #tpu.memory_space<vmem>>, vector<1x16x384xbf16>
    %13 = vector.shape_cast %12 : vector<1x16x384xbf16> to vector<16x384xbf16>
    %c64 = arith.constant 64 : index
    %c0_14 = arith.constant 0 : index
    %14 = vector.load %arg11[%c64, %c0_14] : memref<144x384xbf16, #tpu.memory_space<vmem>>, vector<16x384xbf16>
    tpu.vector_store %arg11[%c64, %c0_14], %13 {strides = array<i32>} : memref<144x384xbf16, #tpu.memory_space<vmem>>, vector<16x384xbf16>,
    %c0_15 = arith.constant 0 : index
    %c0_16 = arith.constant 0 : index
    %c129 = arith.constant 129 : index
    %15 = vector.load %arg1[%c0_15, %c0_16, %c129] : memref<1x16x640xbf16, #tpu.memory_space<vmem>>, vector<1x16x384xbf16>
    %16 = vector.shape_cast %15 : vector<1x16x384xbf16> to vector<16x384xbf16>
    %c80 = arith.constant 80 : index
    %c0_17 = arith.constant 0 : index
    %17 = vector.load %arg11[%c80, %c0_17] : memref<144x384xbf16, #tpu.memory_space<vmem>>, vector<16x384xbf16>
    tpu.vector_store %arg11[%c80, %c0_17], %16 {strides = array<i32>} : memref<144x384xbf16, #tpu.memory_space<vmem>>, vector<16x384xbf16>,
    %c0_18 = arith.constant 0 : index
    %c0_19 = arith.constant 0 : index
    %c145 = arith.constant 145 : index
    %18 = vector.load %arg1[%c0_18, %c0_19, %c145] : memref<1x16x640xbf16, #tpu.memory_space<vmem>>, vector<1x16x384xbf16>
    %19 = vector.shape_cast %18 : vector<1x16x384xbf16> to vector<16x384xbf16>
    %c96 = arith.constant 96 : index
    %c0_20 = arith.constant 0 : index
    %20 = vector.load %arg11[%c96, %c0_20] : memref<144x384xbf16, #tpu.memory_space<vmem>>, vector<16x384xbf16>
    tpu.vector_store %arg11[%c96, %c0_20], %19 {strides = array<i32>} : memref<144x384xbf16, #tpu.memory_space<vmem>>, vector<16x384xbf16>,
    %c0_21 = arith.constant 0 : index
    %c0_22 = arith.constant 0 : index
    %c146 = arith.constant 146 : index
    %21 = vector.load %arg1[%c0_21, %c0_22, %c146] : memref<1x16x640xbf16, #tpu.memory_space<vmem>>, vector<1x16x384xbf16>
    %22 = vector.shape_cast %21 : vector<1x16x384xbf16> to vector<16x384xbf16>
    %c112 = arith.constant 112 : index
    %c0_23 = arith.constant 0 : index
    %23 = vector.load %arg11[%c112, %c0_23] : memref<144x384xbf16, #tpu.memory_space<vmem>>, vector<16x384xbf16>
    tpu.vector_store %arg11[%c112, %c0_23], %22 {strides = array<i32>} : memref<144x384xbf16, #tpu.memory_space<vmem>>, vector<16x384xbf16>,
    %c0_24 = arith.constant 0 : index
    %c0_25 = arith.constant 0 : index
    %c147 = arith.constant 147 : index
    %24 = vector.load %arg1[%c0_24, %c0_25, %c147] : memref<1x16x640xbf16, #tpu.memory_space<vmem>>, vector<1x16x384xbf16>
    %25 = vector.shape_cast %24 : vector<1x16x384xbf16> to vector<16x384xbf16>
    %c128_26 = arith.constant 128 : index
    %c0_27 = arith.constant 0 : index
    %26 = vector.load %arg11[%c128_26, %c0_27] : memref<144x384xbf16, #tpu.memory_space<vmem>>, vector<16x384xbf16>
    tpu.vector_store %arg11[%c128_26, %c0_27], %25 {strides = array<i32>} : memref<144x384xbf16, #tpu.memory_space<vmem>>, vector<16x384xbf16>,
    %c0_28 = arith.constant 0 : index
    %c0_29 = arith.constant 0 : index
    %27 = vector.load %arg2[%c0_28, %c0_29] : memref<32x144xbf16, #tpu.memory_space<vmem>>, vector<32x144xbf16>
    %c0_30 = arith.constant 0 : index
    %c0_31 = arith.constant 0 : index
    %28 = vector.load %arg11[%c0_30, %c0_31] : memref<144x384xbf16, #tpu.memory_space<vmem>>, vector<144x384xbf16>
    %cst = arith.constant dense<0.000000e+00> : vector<32x384xf32>
    %29 = tpu.matmul %27, %28, %cst {dimension_numbers = #tpu.dot_dimension_numbers<[1], [0], [0], [1], [0, 0, 1, 1], [], []>} : vector<32x144xbf16>, vector<144x384xbf16>, vector<32x384xf32> -> vector<32x384xf32>
    %c0_32 = arith.constant 0 : index
    %c0_33 = arith.constant 0 : index
    %30 = vector.load %arg3[%c0_32, %c0_33] : memref<32x1xf32, #tpu.memory_space<vmem>>, vector<32x1xf32>
    %31 = vector.broadcast %30 : vector<32x1xf32> to vector<32x384xf32>
    %32 = arith.addf %29, %31 : vector<32x384xf32>
    %cst_34 = arith.constant 0.000000e+00 : f32
    %33 = vector.broadcast %cst_34 : f32 to vector<32x384xf32>
    %34 = arith.maximumf %32, %33 : vector<32x384xf32>
    %35 = arith.truncf %34 : vector<32x384xf32> to vector<32x384xbf16>
    %c0_35 = arith.constant 0 : index
    %c0_36 = arith.constant 0 : index
    %36 = vector.load %arg6[%c0_35, %c0_36] : memref<384x128xbf16, #tpu.memory_space<vmem>>, vector<384x128xbf16>
    %cst_37 = arith.constant dense<0.000000e+00> : vector<32x128xf32>
    %37 = tpu.matmul %35, %36, %cst_37 {dimension_numbers = #tpu.dot_dimension_numbers<[1], [0], [0], [1], [0, 0, 1, 1], [], []>} : vector<32x384xbf16>, vector<384x128xbf16>, vector<32x128xf32> -> vector<32x128xf32>
    %cst_38 = arith.constant 0.000000e+00 : bf16
    %38 = vector.broadcast %cst_38 : bf16 to vector<32x128xbf16>
    %c0_39 = arith.constant 0 : index
    %c0_40 = arith.constant 0 : index
    %39 = vector.load %arg12[%c0_39, %c0_40] : memref<32x384xbf16, #tpu.memory_space<vmem>>, vector<32x128xbf16>
    tpu.vector_store %arg12[%c0_39, %c0_40], %38 {strides = array<i32>} : memref<32x384xbf16, #tpu.memory_space<vmem>>, vector<32x128xbf16>,
    %c0_41 = arith.constant 0 : index
    %c256 = arith.constant 256 : index
    %40 = vector.load %arg12[%c0_41, %c256] : memref<32x384xbf16, #tpu.memory_space<vmem>>, vector<32x128xbf16>
    tpu.vector_store %arg12[%c0_41, %c256], %38 {strides = array<i32>} : memref<32x384xbf16, #tpu.memory_space<vmem>>, vector<32x128xbf16>,
    %41 = arith.truncf %37 : vector<32x128xf32> to vector<32x128xbf16>
    %c0_42 = arith.constant 0 : index
    %c128_43 = arith.constant 128 : index
    %42 = vector.load %arg12[%c0_42, %c128_43] : memref<32x384xbf16, #tpu.memory_space<vmem>>, vector<32x128xbf16>
    tpu.vector_store %arg12[%c0_42, %c128_43], %41 {strides = array<i32>} : memref<32x384xbf16, #tpu.memory_space<vmem>>, vector<32x128xbf16>,
    %c0_44 = arith.constant 0 : index
    %c117 = arith.constant 117 : index
    %43 = vector.load %arg12[%c0_44, %c117] : memref<32x384xbf16, #tpu.memory_space<vmem>>, vector<32x128xbf16>
    %c0_45 = arith.constant 0 : index
    %c0_46 = arith.constant 0 : index
    %44 = vector.load %arg13[%c0_45, %c0_46] : memref<288x128xbf16, #tpu.memory_space<vmem>>, vector<32x128xbf16>
    tpu.vector_store %arg13[%c0_45, %c0_46], %43 {strides = array<i32>} : memref<288x128xbf16, #tpu.memory_space<vmem>>, vector<32x128xbf16>,
    %c0_47 = arith.constant 0 : index
    %c118 = arith.constant 118 : index
    %45 = vector.load %arg12[%c0_47, %c118] : memref<32x384xbf16, #tpu.memory_space<vmem>>, vector<32x128xbf16>
    %c32_48 = arith.constant 32 : index
    %c0_49 = arith.constant 0 : index
    %46 = vector.load %arg13[%c32_48, %c0_49] : memref<288x128xbf16, #tpu.memory_space<vmem>>, vector<32x128xbf16>
    tpu.vector_store %arg13[%c32_48, %c0_49], %45 {strides = array<i32>} : memref<288x128xbf16, #tpu.memory_space<vmem>>, vector<32x128xbf16>,
    %c0_50 = arith.constant 0 : index
    %c119 = arith.constant 119 : index
    %47 = vector.load %arg12[%c0_50, %c119] : memref<32x384xbf16, #tpu.memory_space<vmem>>, vector<32x128xbf16>
    %c64_51 = arith.constant 64 : index
    %c0_52 = arith.constant 0 : index
    %48 = vector.load %arg13[%c64_51, %c0_52] : memref<288x128xbf16, #tpu.memory_space<vmem>>, vector<32x128xbf16>
    tpu.vector_store %arg13[%c64_51, %c0_52], %47 {strides = array<i32>} : memref<288x128xbf16, #tpu.memory_space<vmem>>, vector<32x128xbf16>,
    %c0_53 = arith.constant 0 : index
    %c127_54 = arith.constant 127 : index
    %49 = vector.load %arg12[%c0_53, %c127_54] : memref<32x384xbf16, #tpu.memory_space<vmem>>, vector<32x128xbf16>
    %c96_55 = arith.constant 96 : index
    %c0_56 = arith.constant 0 : index
    %50 = vector.load %arg13[%c96_55, %c0_56] : memref<288x128xbf16, #tpu.memory_space<vmem>>, vector<32x128xbf16>
    tpu.vector_store %arg13[%c96_55, %c0_56], %49 {strides = array<i32>} : memref<288x128xbf16, #tpu.memory_space<vmem>>, vector<32x128xbf16>,
    %c0_57 = arith.constant 0 : index
    %c128_58 = arith.constant 128 : index
    %51 = vector.load %arg12[%c0_57, %c128_58] : memref<32x384xbf16, #tpu.memory_space<vmem>>, vector<32x128xbf16>
    %c128_59 = arith.constant 128 : index
    %c0_60 = arith.constant 0 : index
    %52 = vector.load %arg13[%c128_59, %c0_60] : memref<288x128xbf16, #tpu.memory_space<vmem>>, vector<32x128xbf16>
    tpu.vector_store %arg13[%c128_59, %c0_60], %51 {strides = array<i32>} : memref<288x128xbf16, #tpu.memory_space<vmem>>, vector<32x128xbf16>,
    %c0_61 = arith.constant 0 : index
    %c129_62 = arith.constant 129 : index
    %53 = vector.load %arg12[%c0_61, %c129_62] : memref<32x384xbf16, #tpu.memory_space<vmem>>, vector<32x128xbf16>
    %c160 = arith.constant 160 : index
    %c0_63 = arith.constant 0 : index
    %54 = vector.load %arg13[%c160, %c0_63] : memref<288x128xbf16, #tpu.memory_space<vmem>>, vector<32x128xbf16>
    tpu.vector_store %arg13[%c160, %c0_63], %53 {strides = array<i32>} : memref<288x128xbf16, #tpu.memory_space<vmem>>, vector<32x128xbf16>,
    %c0_64 = arith.constant 0 : index
    %c137 = arith.constant 137 : index
    %55 = vector.load %arg12[%c0_64, %c137] : memref<32x384xbf16, #tpu.memory_space<vmem>>, vector<32x128xbf16>
    %c192 = arith.constant 192 : index
    %c0_65 = arith.constant 0 : index
    %56 = vector.load %arg13[%c192, %c0_65] : memref<288x128xbf16, #tpu.memory_space<vmem>>, vector<32x128xbf16>
    tpu.vector_store %arg13[%c192, %c0_65], %55 {strides = array<i32>} : memref<288x128xbf16, #tpu.memory_space<vmem>>, vector<32x128xbf16>,
    %c0_66 = arith.constant 0 : index
    %c138 = arith.constant 138 : index
    %57 = vector.load %arg12[%c0_66, %c138] : memref<32x384xbf16, #tpu.memory_space<vmem>>, vector<32x128xbf16>
    %c224 = arith.constant 224 : index
    %c0_67 = arith.constant 0 : index
    %58 = vector.load %arg13[%c224, %c0_67] : memref<288x128xbf16, #tpu.memory_space<vmem>>, vector<32x128xbf16>
    tpu.vector_store %arg13[%c224, %c0_67], %57 {strides = array<i32>} : memref<288x128xbf16, #tpu.memory_space<vmem>>, vector<32x128xbf16>,
    %c0_68 = arith.constant 0 : index
    %c139 = arith.constant 139 : index
    %59 = vector.load %arg12[%c0_68, %c139] : memref<32x384xbf16, #tpu.memory_space<vmem>>, vector<32x128xbf16>
    %c256_69 = arith.constant 256 : index
    %c0_70 = arith.constant 0 : index
    %60 = vector.load %arg13[%c256_69, %c0_70] : memref<288x128xbf16, #tpu.memory_space<vmem>>, vector<32x128xbf16>
    tpu.vector_store %arg13[%c256_69, %c0_70], %59 {strides = array<i32>} : memref<288x128xbf16, #tpu.memory_space<vmem>>, vector<32x128xbf16>,
    %c0_71 = arith.constant 0 : index
    %c0_72 = arith.constant 0 : index
    %61 = vector.load %arg4[%c0_71, %c0_72] : memref<32x288xbf16, #tpu.memory_space<vmem>>, vector<32x288xbf16>
    %c0_73 = arith.constant 0 : index
    %c0_74 = arith.constant 0 : index
    %62 = vector.load %arg13[%c0_73, %c0_74] : memref<288x128xbf16, #tpu.memory_space<vmem>>, vector<288x128xbf16>
    %cst_75 = arith.constant dense<0.000000e+00> : vector<32x128xf32>
    %63 = tpu.matmul %61, %62, %cst_75 {dimension_numbers = #tpu.dot_dimension_numbers<[1], [0], [0], [1], [0, 0, 1, 1], [], []>} : vector<32x288xbf16>, vector<288x128xbf16>, vector<32x128xf32> -> vector<32x128xf32>
    %c0_76 = arith.constant 0 : index
    %c0_77 = arith.constant 0 : index
    %c128_78 = arith.constant 128 : index
    %64 = vector.load %arg1[%c0_76, %c0_77, %c128_78] : memref<1x16x640xbf16, #tpu.memory_space<vmem>>, vector<1x16x384xbf16>
    %65 = vector.shape_cast %64 : vector<1x16x384xbf16> to vector<16x384xbf16>
    %c0_79 = arith.constant 0 : index
    %c0_80 = arith.constant 0 : index
    %66 = vector.load %arg6[%c0_79, %c0_80] : memref<384x128xbf16, #tpu.memory_space<vmem>>, vector<384x128xbf16>
    %cst_81 = arith.constant dense<0.000000e+00> : vector<16x128xf32>
    %67 = tpu.matmul %65, %66, %cst_81 {dimension_numbers = #tpu.dot_dimension_numbers<[1], [0], [0], [1], [0, 0, 1, 1], [], []>} : vector<16x384xbf16>, vector<384x128xbf16>, vector<16x128xf32> -> vector<16x128xf32>
    %c0_82 = arith.constant 0 : index
    %c0_83 = arith.constant 0 : index
    %68 = vector.load %arg7[%c0_82, %c0_83] : memref<32x16xbf16, #tpu.memory_space<vmem>>, vector<32x16xbf16>
    %69 = arith.truncf %67 : vector<16x128xf32> to vector<16x128xbf16>
    %cst_84 = arith.constant dense<0.000000e+00> : vector<32x128xf32>
    %70 = tpu.matmul %68, %69, %cst_84 {dimension_numbers = #tpu.dot_dimension_numbers<[1], [0], [0], [1], [0, 0, 1, 1], [], []>} : vector<32x16xbf16>, vector<16x128xbf16>, vector<32x128xf32> -> vector<32x128xf32>
    %c0_85 = arith.constant 0 : index
    %c0_86 = arith.constant 0 : index
    %71 = vector.load %arg5[%c0_85, %c0_86] : memref<32x1xf32, #tpu.memory_space<vmem>>, vector<32x1xf32>
    %72 = vector.broadcast %71 : vector<32x1xf32> to vector<32x128xf32>
    %73 = arith.addf %63, %72 : vector<32x128xf32>
    %74 = arith.addf %73, %70 : vector<32x128xf32>
    %cst_87 = arith.constant 0.000000e+00 : f32
    %75 = vector.broadcast %cst_87 : f32 to vector<32x128xf32>
    %76 = arith.maximumf %74, %75 : vector<32x128xf32>
    %c0_88 = arith.constant 0 : index
    %c0_89 = arith.constant 0 : index
    %77 = vector.load %arg8[%c0_88, %c0_89] : memref<1x128xf32, #tpu.memory_space<vmem>>, vector<1x128xf32>
    %78 = vector.broadcast %77 : vector<1x128xf32> to vector<32x128xf32>
    %79 = arith.mulf %76, %78 : vector<32x128xf32>
    %cst_90 = arith.constant dense<0.000000e+00> : vector<32xf32>
    %80 = vector.multi_reduction <add>, %79, %cst_90 [1] : vector<32x128xf32> to vector<32xf32>
    %81 = vector.shape_cast %80 : vector<32xf32> to vector<32x1xf32>
    %c0_91 = arith.constant 0 : index
    %c0_92 = arith.constant 0 : index
    %c0_93 = arith.constant 0 : index
    %82 = vector.load %arg10[%c0_91, %c0_92, %c0_93] : memref<1x32x1xf32, #tpu.memory_space<vmem>>, vector<1x32x1xf32>
    %83 = vector.shape_cast %82 : vector<1x32x1xf32> to vector<32x1xf32>
    %84 = vector.shape_cast %81 : vector<32x1xf32> to vector<1x32x1xf32>
    tpu.vector_store %arg10[%c0_91, %c0_92, %c0_93], %84 {strides = array<i32>} : memref<1x32x1xf32, #tpu.memory_space<vmem>>, vector<1x32x1xf32>,
    %cst_94 = arith.constant 0.000000e+00 : bf16
    %85 = vector.broadcast %cst_94 : bf16 to vector<32x128xbf16>
    %c0_95 = arith.constant 0 : index
    %c0_96 = arith.constant 0 : index
    %c0_97 = arith.constant 0 : index
    %86 = vector.load %arg9[%c0_95, %c0_96, %c0_97] : memref<1x32x384xbf16, #tpu.memory_space<vmem>>, vector<1x32x128xbf16>
    %87 = vector.shape_cast %86 : vector<1x32x128xbf16> to vector<32x128xbf16>
    %88 = vector.shape_cast %85 : vector<32x128xbf16> to vector<1x32x128xbf16>
    tpu.vector_store %arg9[%c0_95, %c0_96, %c0_97], %88 {strides = array<i32>} : memref<1x32x384xbf16, #tpu.memory_space<vmem>>, vector<1x32x128xbf16>,
    %c0_98 = arith.constant 0 : index
    %c0_99 = arith.constant 0 : index
    %c256_100 = arith.constant 256 : index
    %89 = vector.load %arg9[%c0_98, %c0_99, %c256_100] : memref<1x32x384xbf16, #tpu.memory_space<vmem>>, vector<1x32x128xbf16>
    %90 = vector.shape_cast %89 : vector<1x32x128xbf16> to vector<32x128xbf16>
    %91 = vector.shape_cast %85 : vector<32x128xbf16> to vector<1x32x128xbf16>
    tpu.vector_store %arg9[%c0_98, %c0_99, %c256_100], %91 {strides = array<i32>} : memref<1x32x384xbf16, #tpu.memory_space<vmem>>, vector<1x32x128xbf16>,
    %92 = arith.truncf %79 : vector<32x128xf32> to vector<32x128xbf16>
    %c0_101 = arith.constant 0 : index
    %c0_102 = arith.constant 0 : index
    %c128_103 = arith.constant 128 : index
    %93 = vector.load %arg9[%c0_101, %c0_102, %c128_103] : memref<1x32x384xbf16, #tpu.memory_space<vmem>>, vector<1x32x128xbf16>
    %94 = vector.shape_cast %93 : vector<1x32x128xbf16> to vector<32x128xbf16>
    %95 = vector.shape_cast %92 : vector<32x128xbf16> to vector<1x32x128xbf16>
    tpu.vector_store %arg9[%c0_101, %c0_102, %c128_103], %95 {strides = array<i32>} : memref<1x32x384xbf16, #tpu.memory_space<vmem>>, vector<1x32x128xbf16>,
    return
  }
  func.func @transform_0(%arg0: i32) -> (i32, i32, i32) {
    %c0_i32 = arith.constant 0 : i32
    %c0_i32_0 = arith.constant 0 : i32
    %c0_i32_1 = arith.constant 0 : i32
    return %arg0, %c0_i32, %c0_i32_0 : i32, i32, i32
  }
  func.func @transform_1(%arg0: i32) -> (i32, i32) {
    %c0_i32 = arith.constant 0 : i32
    %c0_i32_0 = arith.constant 0 : i32
    %c0_i32_1 = arith.constant 0 : i32
    return %c0_i32, %c0_i32_0 : i32, i32
  }
  func.func @transform_2(%arg0: i32) -> (i32, i32) {
    %c0_i32 = arith.constant 0 : i32
    %c0_i32_0 = arith.constant 0 : i32
    %c0_i32_1 = arith.constant 0 : i32
    return %c0_i32, %c0_i32_0 : i32, i32
  }
  func.func @transform_3(%arg0: i32) -> (i32, i32) {
    %c0_i32 = arith.constant 0 : i32
    %c0_i32_0 = arith.constant 0 : i32
    %c0_i32_1 = arith.constant 0 : i32
    return %c0_i32, %c0_i32_0 : i32, i32
  }
  func.func @transform_4(%arg0: i32) -> (i32, i32) {
    %c0_i32 = arith.constant 0 : i32
    %c0_i32_0 = arith.constant 0 : i32
    %c0_i32_1 = arith.constant 0 : i32
    return %c0_i32, %c0_i32_0 : i32, i32
  }
  func.func @transform_5(%arg0: i32) -> (i32, i32) {
    %c0_i32 = arith.constant 0 : i32
    %c0_i32_0 = arith.constant 0 : i32
    %c0_i32_1 = arith.constant 0 : i32
    return %c0_i32, %c0_i32_0 : i32, i32
  }
  func.func @transform_6(%arg0: i32) -> (i32, i32) {
    %c0_i32 = arith.constant 0 : i32
    %c0_i32_0 = arith.constant 0 : i32
    %c0_i32_1 = arith.constant 0 : i32
    return %c0_i32, %c0_i32_0 : i32, i32
  }
  func.func @transform_7(%arg0: i32) -> (i32, i32) {
    %c0_i32 = arith.constant 0 : i32
    %c0_i32_0 = arith.constant 0 : i32
    %c0_i32_1 = arith.constant 0 : i32
    return %c0_i32, %c0_i32_0 : i32, i32
  }
  func.func @transform_8(%arg0: i32) -> (i32, i32, i32) {
    %c0_i32 = arith.constant 0 : i32
    %c0_i32_0 = arith.constant 0 : i32
    %c0_i32_1 = arith.constant 0 : i32
    return %arg0, %c0_i32, %c0_i32_0 : i32, i32, i32
  }
  func.func @transform_9(%arg0: i32) -> (i32, i32, i32) {
    %c0_i32 = arith.constant 0 : i32
    %c0_i32_0 = arith.constant 0 : i32
    %c0_i32_1 = arith.constant 0 : i32
    return %arg0, %c0_i32, %c0_i32_0 : i32, i32, i32
  }
}

module attributes {stable_mosaic.version = 11 : i64} {
  func.func @_block_kernel(%arg0: i32, %arg1: memref<1x32x384xbf16, #tpu.memory_space<vmem>>, %arg2: memref<64x288xbf16, #tpu.memory_space<vmem>>, %arg3: memref<64x1xf32, #tpu.memory_space<vmem>>, %arg4: memref<64x576xbf16, #tpu.memory_space<vmem>>, %arg5: memref<64x1xf32, #tpu.memory_space<vmem>>, %arg6: memref<128x128xbf16, #tpu.memory_space<vmem>>, %arg7: memref<64x32xbf16, #tpu.memory_space<vmem>>, %arg8: memref<1x128xf32, #tpu.memory_space<vmem>>, %arg9: memref<1x64x384xbf16, #tpu.memory_space<vmem>>, %arg10: memref<1x64x1xf32, #tpu.memory_space<vmem>>, %arg11: memref<288x128xbf16, #tpu.memory_space<vmem>>, %arg12: memref<64x384xbf16, #tpu.memory_space<vmem>>, %arg13: memref<576x128xbf16, #tpu.memory_space<vmem>>) attributes {dimension_semantics = [#tpu.dimension_semantics<parallel>], iteration_bounds = array<i64: 2>, scalar_prefetch = 0 : i64, scratch_operands = 3 : i64, tpu.core_type = #tpu.core_type<tc>, window_params = [{transform_indices = @transform_0, window_bounds = array<i64: 1, 32, 384>}, {pipeline_mode = #tpu.pipeline_mode<synchronous>, transform_indices = @transform_1, window_bounds = array<i64: 64, 288>}, {pipeline_mode = #tpu.pipeline_mode<synchronous>, transform_indices = @transform_2, window_bounds = array<i64: 64, 1>}, {pipeline_mode = #tpu.pipeline_mode<synchronous>, transform_indices = @transform_3, window_bounds = array<i64: 64, 576>}, {pipeline_mode = #tpu.pipeline_mode<synchronous>, transform_indices = @transform_4, window_bounds = array<i64: 64, 1>}, {pipeline_mode = #tpu.pipeline_mode<synchronous>, transform_indices = @transform_5, window_bounds = array<i64: 128, 128>}, {pipeline_mode = #tpu.pipeline_mode<synchronous>, transform_indices = @transform_6, window_bounds = array<i64: 64, 32>}, {pipeline_mode = #tpu.pipeline_mode<synchronous>, transform_indices = @transform_7, window_bounds = array<i64: 1, 128>}, {transform_indices = @transform_8, window_bounds = array<i64: 1, 64, 384>}, {transform_indices = @transform_9, window_bounds = array<i64: 1, 64, 1>}]} {
    %c0 = arith.constant 0 : index
    %c0_0 = arith.constant 0 : index
    %c117 = arith.constant 117 : index
    %0 = vector.load %arg1[%c0, %c0_0, %c117] : memref<1x32x384xbf16, #tpu.memory_space<vmem>>, vector<1x32x128xbf16>
    %1 = vector.shape_cast %0 : vector<1x32x128xbf16> to vector<32x128xbf16>
    %c0_1 = arith.constant 0 : index
    %c0_2 = arith.constant 0 : index
    %2 = vector.load %arg11[%c0_1, %c0_2] : memref<288x128xbf16, #tpu.memory_space<vmem>>, vector<32x128xbf16>
    tpu.vector_store %arg11[%c0_1, %c0_2], %1 {strides = array<i32>} : memref<288x128xbf16, #tpu.memory_space<vmem>>, vector<32x128xbf16>,
    %c0_3 = arith.constant 0 : index
    %c0_4 = arith.constant 0 : index
    %c118 = arith.constant 118 : index
    %3 = vector.load %arg1[%c0_3, %c0_4, %c118] : memref<1x32x384xbf16, #tpu.memory_space<vmem>>, vector<1x32x128xbf16>
    %4 = vector.shape_cast %3 : vector<1x32x128xbf16> to vector<32x128xbf16>
    %c32 = arith.constant 32 : index
    %c0_5 = arith.constant 0 : index
    %5 = vector.load %arg11[%c32, %c0_5] : memref<288x128xbf16, #tpu.memory_space<vmem>>, vector<32x128xbf16>
    tpu.vector_store %arg11[%c32, %c0_5], %4 {strides = array<i32>} : memref<288x128xbf16, #tpu.memory_space<vmem>>, vector<32x128xbf16>,
    %c0_6 = arith.constant 0 : index
    %c0_7 = arith.constant 0 : index
    %c119 = arith.constant 119 : index
    %6 = vector.load %arg1[%c0_6, %c0_7, %c119] : memref<1x32x384xbf16, #tpu.memory_space<vmem>>, vector<1x32x128xbf16>
    %7 = vector.shape_cast %6 : vector<1x32x128xbf16> to vector<32x128xbf16>
    %c64 = arith.constant 64 : index
    %c0_8 = arith.constant 0 : index
    %8 = vector.load %arg11[%c64, %c0_8] : memref<288x128xbf16, #tpu.memory_space<vmem>>, vector<32x128xbf16>
    tpu.vector_store %arg11[%c64, %c0_8], %7 {strides = array<i32>} : memref<288x128xbf16, #tpu.memory_space<vmem>>, vector<32x128xbf16>,
    %c0_9 = arith.constant 0 : index
    %c0_10 = arith.constant 0 : index
    %c127 = arith.constant 127 : index
    %9 = vector.load %arg1[%c0_9, %c0_10, %c127] : memref<1x32x384xbf16, #tpu.memory_space<vmem>>, vector<1x32x128xbf16>
    %10 = vector.shape_cast %9 : vector<1x32x128xbf16> to vector<32x128xbf16>
    %c96 = arith.constant 96 : index
    %c0_11 = arith.constant 0 : index
    %11 = vector.load %arg11[%c96, %c0_11] : memref<288x128xbf16, #tpu.memory_space<vmem>>, vector<32x128xbf16>
    tpu.vector_store %arg11[%c96, %c0_11], %10 {strides = array<i32>} : memref<288x128xbf16, #tpu.memory_space<vmem>>, vector<32x128xbf16>,
    %c0_12 = arith.constant 0 : index
    %c0_13 = arith.constant 0 : index
    %c128 = arith.constant 128 : index
    %12 = vector.load %arg1[%c0_12, %c0_13, %c128] : memref<1x32x384xbf16, #tpu.memory_space<vmem>>, vector<1x32x128xbf16>
    %13 = vector.shape_cast %12 : vector<1x32x128xbf16> to vector<32x128xbf16>
    %c128_14 = arith.constant 128 : index
    %c0_15 = arith.constant 0 : index
    %14 = vector.load %arg11[%c128_14, %c0_15] : memref<288x128xbf16, #tpu.memory_space<vmem>>, vector<32x128xbf16>
    tpu.vector_store %arg11[%c128_14, %c0_15], %13 {strides = array<i32>} : memref<288x128xbf16, #tpu.memory_space<vmem>>, vector<32x128xbf16>,
    %c0_16 = arith.constant 0 : index
    %c0_17 = arith.constant 0 : index
    %c129 = arith.constant 129 : index
    %15 = vector.load %arg1[%c0_16, %c0_17, %c129] : memref<1x32x384xbf16, #tpu.memory_space<vmem>>, vector<1x32x128xbf16>
    %16 = vector.shape_cast %15 : vector<1x32x128xbf16> to vector<32x128xbf16>
    %c160 = arith.constant 160 : index
    %c0_18 = arith.constant 0 : index
    %17 = vector.load %arg11[%c160, %c0_18] : memref<288x128xbf16, #tpu.memory_space<vmem>>, vector<32x128xbf16>
    tpu.vector_store %arg11[%c160, %c0_18], %16 {strides = array<i32>} : memref<288x128xbf16, #tpu.memory_space<vmem>>, vector<32x128xbf16>,
    %c0_19 = arith.constant 0 : index
    %c0_20 = arith.constant 0 : index
    %c137 = arith.constant 137 : index
    %18 = vector.load %arg1[%c0_19, %c0_20, %c137] : memref<1x32x384xbf16, #tpu.memory_space<vmem>>, vector<1x32x128xbf16>
    %19 = vector.shape_cast %18 : vector<1x32x128xbf16> to vector<32x128xbf16>
    %c192 = arith.constant 192 : index
    %c0_21 = arith.constant 0 : index
    %20 = vector.load %arg11[%c192, %c0_21] : memref<288x128xbf16, #tpu.memory_space<vmem>>, vector<32x128xbf16>
    tpu.vector_store %arg11[%c192, %c0_21], %19 {strides = array<i32>} : memref<288x128xbf16, #tpu.memory_space<vmem>>, vector<32x128xbf16>,
    %c0_22 = arith.constant 0 : index
    %c0_23 = arith.constant 0 : index
    %c138 = arith.constant 138 : index
    %21 = vector.load %arg1[%c0_22, %c0_23, %c138] : memref<1x32x384xbf16, #tpu.memory_space<vmem>>, vector<1x32x128xbf16>
    %22 = vector.shape_cast %21 : vector<1x32x128xbf16> to vector<32x128xbf16>
    %c224 = arith.constant 224 : index
    %c0_24 = arith.constant 0 : index
    %23 = vector.load %arg11[%c224, %c0_24] : memref<288x128xbf16, #tpu.memory_space<vmem>>, vector<32x128xbf16>
    tpu.vector_store %arg11[%c224, %c0_24], %22 {strides = array<i32>} : memref<288x128xbf16, #tpu.memory_space<vmem>>, vector<32x128xbf16>,
    %c0_25 = arith.constant 0 : index
    %c0_26 = arith.constant 0 : index
    %c139 = arith.constant 139 : index
    %24 = vector.load %arg1[%c0_25, %c0_26, %c139] : memref<1x32x384xbf16, #tpu.memory_space<vmem>>, vector<1x32x128xbf16>
    %25 = vector.shape_cast %24 : vector<1x32x128xbf16> to vector<32x128xbf16>
    %c256 = arith.constant 256 : index
    %c0_27 = arith.constant 0 : index
    %26 = vector.load %arg11[%c256, %c0_27] : memref<288x128xbf16, #tpu.memory_space<vmem>>, vector<32x128xbf16>
    tpu.vector_store %arg11[%c256, %c0_27], %25 {strides = array<i32>} : memref<288x128xbf16, #tpu.memory_space<vmem>>, vector<32x128xbf16>,
    %c0_28 = arith.constant 0 : index
    %c0_29 = arith.constant 0 : index
    %27 = vector.load %arg2[%c0_28, %c0_29] : memref<64x288xbf16, #tpu.memory_space<vmem>>, vector<64x288xbf16>
    %c0_30 = arith.constant 0 : index
    %c0_31 = arith.constant 0 : index
    %28 = vector.load %arg11[%c0_30, %c0_31] : memref<288x128xbf16, #tpu.memory_space<vmem>>, vector<288x128xbf16>
    %cst = arith.constant dense<0.000000e+00> : vector<64x128xf32>
    %29 = tpu.matmul %27, %28, %cst {dimension_numbers = #tpu.dot_dimension_numbers<[1], [0], [0], [1], [0, 0, 1, 1], [], []>} : vector<64x288xbf16>, vector<288x128xbf16>, vector<64x128xf32> -> vector<64x128xf32>
    %c0_32 = arith.constant 0 : index
    %c0_33 = arith.constant 0 : index
    %30 = vector.load %arg3[%c0_32, %c0_33] : memref<64x1xf32, #tpu.memory_space<vmem>>, vector<64x1xf32>
    %31 = vector.broadcast %30 : vector<64x1xf32> to vector<64x128xf32>
    %32 = arith.addf %29, %31 : vector<64x128xf32>
    %cst_34 = arith.constant 0.000000e+00 : f32
    %33 = vector.broadcast %cst_34 : f32 to vector<64x128xf32>
    %34 = arith.maximumf %32, %33 : vector<64x128xf32>
    %35 = arith.truncf %34 : vector<64x128xf32> to vector<64x128xbf16>
    %c0_35 = arith.constant 0 : index
    %c0_36 = arith.constant 0 : index
    %36 = vector.load %arg6[%c0_35, %c0_36] : memref<128x128xbf16, #tpu.memory_space<vmem>>, vector<128x128xbf16>
    %cst_37 = arith.constant dense<0.000000e+00> : vector<64x128xf32>
    %37 = tpu.matmul %35, %36, %cst_37 {dimension_numbers = #tpu.dot_dimension_numbers<[1], [0], [0], [1], [0, 0, 1, 1], [], []>} : vector<64x128xbf16>, vector<128x128xbf16>, vector<64x128xf32> -> vector<64x128xf32>
    %cst_38 = arith.constant 0.000000e+00 : bf16
    %38 = vector.broadcast %cst_38 : bf16 to vector<64x128xbf16>
    %c0_39 = arith.constant 0 : index
    %c0_40 = arith.constant 0 : index
    %39 = vector.load %arg12[%c0_39, %c0_40] : memref<64x384xbf16, #tpu.memory_space<vmem>>, vector<64x128xbf16>
    tpu.vector_store %arg12[%c0_39, %c0_40], %38 {strides = array<i32>} : memref<64x384xbf16, #tpu.memory_space<vmem>>, vector<64x128xbf16>,
    %c0_41 = arith.constant 0 : index
    %c256_42 = arith.constant 256 : index
    %40 = vector.load %arg12[%c0_41, %c256_42] : memref<64x384xbf16, #tpu.memory_space<vmem>>, vector<64x128xbf16>
    tpu.vector_store %arg12[%c0_41, %c256_42], %38 {strides = array<i32>} : memref<64x384xbf16, #tpu.memory_space<vmem>>, vector<64x128xbf16>,
    %41 = arith.truncf %37 : vector<64x128xf32> to vector<64x128xbf16>
    %c0_43 = arith.constant 0 : index
    %c128_44 = arith.constant 128 : index
    %42 = vector.load %arg12[%c0_43, %c128_44] : memref<64x384xbf16, #tpu.memory_space<vmem>>, vector<64x128xbf16>
    tpu.vector_store %arg12[%c0_43, %c128_44], %41 {strides = array<i32>} : memref<64x384xbf16, #tpu.memory_space<vmem>>, vector<64x128xbf16>,
    %c0_45 = arith.constant 0 : index
    %c121 = arith.constant 121 : index
    %43 = vector.load %arg12[%c0_45, %c121] : memref<64x384xbf16, #tpu.memory_space<vmem>>, vector<64x128xbf16>
    %c0_46 = arith.constant 0 : index
    %c0_47 = arith.constant 0 : index
    %44 = vector.load %arg13[%c0_46, %c0_47] : memref<576x128xbf16, #tpu.memory_space<vmem>>, vector<64x128xbf16>
    tpu.vector_store %arg13[%c0_46, %c0_47], %43 {strides = array<i32>} : memref<576x128xbf16, #tpu.memory_space<vmem>>, vector<64x128xbf16>,
    %c0_48 = arith.constant 0 : index
    %c122 = arith.constant 122 : index
    %45 = vector.load %arg12[%c0_48, %c122] : memref<64x384xbf16, #tpu.memory_space<vmem>>, vector<64x128xbf16>
    %c64_49 = arith.constant 64 : index
    %c0_50 = arith.constant 0 : index
    %46 = vector.load %arg13[%c64_49, %c0_50] : memref<576x128xbf16, #tpu.memory_space<vmem>>, vector<64x128xbf16>
    tpu.vector_store %arg13[%c64_49, %c0_50], %45 {strides = array<i32>} : memref<576x128xbf16, #tpu.memory_space<vmem>>, vector<64x128xbf16>,
    %c0_51 = arith.constant 0 : index
    %c123 = arith.constant 123 : index
    %47 = vector.load %arg12[%c0_51, %c123] : memref<64x384xbf16, #tpu.memory_space<vmem>>, vector<64x128xbf16>
    %c128_52 = arith.constant 128 : index
    %c0_53 = arith.constant 0 : index
    %48 = vector.load %arg13[%c128_52, %c0_53] : memref<576x128xbf16, #tpu.memory_space<vmem>>, vector<64x128xbf16>
    tpu.vector_store %arg13[%c128_52, %c0_53], %47 {strides = array<i32>} : memref<576x128xbf16, #tpu.memory_space<vmem>>, vector<64x128xbf16>,
    %c0_54 = arith.constant 0 : index
    %c127_55 = arith.constant 127 : index
    %49 = vector.load %arg12[%c0_54, %c127_55] : memref<64x384xbf16, #tpu.memory_space<vmem>>, vector<64x128xbf16>
    %c192_56 = arith.constant 192 : index
    %c0_57 = arith.constant 0 : index
    %50 = vector.load %arg13[%c192_56, %c0_57] : memref<576x128xbf16, #tpu.memory_space<vmem>>, vector<64x128xbf16>
    tpu.vector_store %arg13[%c192_56, %c0_57], %49 {strides = array<i32>} : memref<576x128xbf16, #tpu.memory_space<vmem>>, vector<64x128xbf16>,
    %c0_58 = arith.constant 0 : index
    %c128_59 = arith.constant 128 : index
    %51 = vector.load %arg12[%c0_58, %c128_59] : memref<64x384xbf16, #tpu.memory_space<vmem>>, vector<64x128xbf16>
    %c256_60 = arith.constant 256 : index
    %c0_61 = arith.constant 0 : index
    %52 = vector.load %arg13[%c256_60, %c0_61] : memref<576x128xbf16, #tpu.memory_space<vmem>>, vector<64x128xbf16>
    tpu.vector_store %arg13[%c256_60, %c0_61], %51 {strides = array<i32>} : memref<576x128xbf16, #tpu.memory_space<vmem>>, vector<64x128xbf16>,
    %c0_62 = arith.constant 0 : index
    %c129_63 = arith.constant 129 : index
    %53 = vector.load %arg12[%c0_62, %c129_63] : memref<64x384xbf16, #tpu.memory_space<vmem>>, vector<64x128xbf16>
    %c320 = arith.constant 320 : index
    %c0_64 = arith.constant 0 : index
    %54 = vector.load %arg13[%c320, %c0_64] : memref<576x128xbf16, #tpu.memory_space<vmem>>, vector<64x128xbf16>
    tpu.vector_store %arg13[%c320, %c0_64], %53 {strides = array<i32>} : memref<576x128xbf16, #tpu.memory_space<vmem>>, vector<64x128xbf16>,
    %c0_65 = arith.constant 0 : index
    %c133 = arith.constant 133 : index
    %55 = vector.load %arg12[%c0_65, %c133] : memref<64x384xbf16, #tpu.memory_space<vmem>>, vector<64x128xbf16>
    %c384 = arith.constant 384 : index
    %c0_66 = arith.constant 0 : index
    %56 = vector.load %arg13[%c384, %c0_66] : memref<576x128xbf16, #tpu.memory_space<vmem>>, vector<64x128xbf16>
    tpu.vector_store %arg13[%c384, %c0_66], %55 {strides = array<i32>} : memref<576x128xbf16, #tpu.memory_space<vmem>>, vector<64x128xbf16>,
    %c0_67 = arith.constant 0 : index
    %c134 = arith.constant 134 : index
    %57 = vector.load %arg12[%c0_67, %c134] : memref<64x384xbf16, #tpu.memory_space<vmem>>, vector<64x128xbf16>
    %c448 = arith.constant 448 : index
    %c0_68 = arith.constant 0 : index
    %58 = vector.load %arg13[%c448, %c0_68] : memref<576x128xbf16, #tpu.memory_space<vmem>>, vector<64x128xbf16>
    tpu.vector_store %arg13[%c448, %c0_68], %57 {strides = array<i32>} : memref<576x128xbf16, #tpu.memory_space<vmem>>, vector<64x128xbf16>,
    %c0_69 = arith.constant 0 : index
    %c135 = arith.constant 135 : index
    %59 = vector.load %arg12[%c0_69, %c135] : memref<64x384xbf16, #tpu.memory_space<vmem>>, vector<64x128xbf16>
    %c512 = arith.constant 512 : index
    %c0_70 = arith.constant 0 : index
    %60 = vector.load %arg13[%c512, %c0_70] : memref<576x128xbf16, #tpu.memory_space<vmem>>, vector<64x128xbf16>
    tpu.vector_store %arg13[%c512, %c0_70], %59 {strides = array<i32>} : memref<576x128xbf16, #tpu.memory_space<vmem>>, vector<64x128xbf16>,
    %c0_71 = arith.constant 0 : index
    %c0_72 = arith.constant 0 : index
    %61 = vector.load %arg4[%c0_71, %c0_72] : memref<64x576xbf16, #tpu.memory_space<vmem>>, vector<64x576xbf16>
    %c0_73 = arith.constant 0 : index
    %c0_74 = arith.constant 0 : index
    %62 = vector.load %arg13[%c0_73, %c0_74] : memref<576x128xbf16, #tpu.memory_space<vmem>>, vector<576x128xbf16>
    %cst_75 = arith.constant dense<0.000000e+00> : vector<64x128xf32>
    %63 = tpu.matmul %61, %62, %cst_75 {dimension_numbers = #tpu.dot_dimension_numbers<[1], [0], [0], [1], [0, 0, 1, 1], [], []>} : vector<64x576xbf16>, vector<576x128xbf16>, vector<64x128xf32> -> vector<64x128xf32>
    %c0_76 = arith.constant 0 : index
    %c0_77 = arith.constant 0 : index
    %c128_78 = arith.constant 128 : index
    %64 = vector.load %arg1[%c0_76, %c0_77, %c128_78] : memref<1x32x384xbf16, #tpu.memory_space<vmem>>, vector<1x32x128xbf16>
    %65 = vector.shape_cast %64 : vector<1x32x128xbf16> to vector<32x128xbf16>
    %c0_79 = arith.constant 0 : index
    %c0_80 = arith.constant 0 : index
    %66 = vector.load %arg6[%c0_79, %c0_80] : memref<128x128xbf16, #tpu.memory_space<vmem>>, vector<128x128xbf16>
    %cst_81 = arith.constant dense<0.000000e+00> : vector<32x128xf32>
    %67 = tpu.matmul %65, %66, %cst_81 {dimension_numbers = #tpu.dot_dimension_numbers<[1], [0], [0], [1], [0, 0, 1, 1], [], []>} : vector<32x128xbf16>, vector<128x128xbf16>, vector<32x128xf32> -> vector<32x128xf32>
    %c0_82 = arith.constant 0 : index
    %c0_83 = arith.constant 0 : index
    %68 = vector.load %arg7[%c0_82, %c0_83] : memref<64x32xbf16, #tpu.memory_space<vmem>>, vector<64x32xbf16>
    %69 = arith.truncf %67 : vector<32x128xf32> to vector<32x128xbf16>
    %cst_84 = arith.constant dense<0.000000e+00> : vector<64x128xf32>
    %70 = tpu.matmul %68, %69, %cst_84 {dimension_numbers = #tpu.dot_dimension_numbers<[1], [0], [0], [1], [0, 0, 1, 1], [], []>} : vector<64x32xbf16>, vector<32x128xbf16>, vector<64x128xf32> -> vector<64x128xf32>
    %c0_85 = arith.constant 0 : index
    %c0_86 = arith.constant 0 : index
    %71 = vector.load %arg5[%c0_85, %c0_86] : memref<64x1xf32, #tpu.memory_space<vmem>>, vector<64x1xf32>
    %72 = vector.broadcast %71 : vector<64x1xf32> to vector<64x128xf32>
    %73 = arith.addf %63, %72 : vector<64x128xf32>
    %74 = arith.addf %73, %70 : vector<64x128xf32>
    %cst_87 = arith.constant 0.000000e+00 : f32
    %75 = vector.broadcast %cst_87 : f32 to vector<64x128xf32>
    %76 = arith.maximumf %74, %75 : vector<64x128xf32>
    %c0_88 = arith.constant 0 : index
    %c0_89 = arith.constant 0 : index
    %77 = vector.load %arg8[%c0_88, %c0_89] : memref<1x128xf32, #tpu.memory_space<vmem>>, vector<1x128xf32>
    %78 = vector.broadcast %77 : vector<1x128xf32> to vector<64x128xf32>
    %79 = arith.mulf %76, %78 : vector<64x128xf32>
    %cst_90 = arith.constant dense<0.000000e+00> : vector<64xf32>
    %80 = vector.multi_reduction <add>, %79, %cst_90 [1] : vector<64x128xf32> to vector<64xf32>
    %81 = vector.shape_cast %80 : vector<64xf32> to vector<64x1xf32>
    %c0_91 = arith.constant 0 : index
    %c0_92 = arith.constant 0 : index
    %c0_93 = arith.constant 0 : index
    %82 = vector.load %arg10[%c0_91, %c0_92, %c0_93] : memref<1x64x1xf32, #tpu.memory_space<vmem>>, vector<1x64x1xf32>
    %83 = vector.shape_cast %82 : vector<1x64x1xf32> to vector<64x1xf32>
    %84 = vector.shape_cast %81 : vector<64x1xf32> to vector<1x64x1xf32>
    tpu.vector_store %arg10[%c0_91, %c0_92, %c0_93], %84 {strides = array<i32>} : memref<1x64x1xf32, #tpu.memory_space<vmem>>, vector<1x64x1xf32>,
    %cst_94 = arith.constant 0.000000e+00 : bf16
    %85 = vector.broadcast %cst_94 : bf16 to vector<64x128xbf16>
    %c0_95 = arith.constant 0 : index
    %c0_96 = arith.constant 0 : index
    %c0_97 = arith.constant 0 : index
    %86 = vector.load %arg9[%c0_95, %c0_96, %c0_97] : memref<1x64x384xbf16, #tpu.memory_space<vmem>>, vector<1x64x128xbf16>
    %87 = vector.shape_cast %86 : vector<1x64x128xbf16> to vector<64x128xbf16>
    %88 = vector.shape_cast %85 : vector<64x128xbf16> to vector<1x64x128xbf16>
    tpu.vector_store %arg9[%c0_95, %c0_96, %c0_97], %88 {strides = array<i32>} : memref<1x64x384xbf16, #tpu.memory_space<vmem>>, vector<1x64x128xbf16>,
    %c0_98 = arith.constant 0 : index
    %c0_99 = arith.constant 0 : index
    %c256_100 = arith.constant 256 : index
    %89 = vector.load %arg9[%c0_98, %c0_99, %c256_100] : memref<1x64x384xbf16, #tpu.memory_space<vmem>>, vector<1x64x128xbf16>
    %90 = vector.shape_cast %89 : vector<1x64x128xbf16> to vector<64x128xbf16>
    %91 = vector.shape_cast %85 : vector<64x128xbf16> to vector<1x64x128xbf16>
    tpu.vector_store %arg9[%c0_98, %c0_99, %c256_100], %91 {strides = array<i32>} : memref<1x64x384xbf16, #tpu.memory_space<vmem>>, vector<1x64x128xbf16>,
    %92 = arith.truncf %79 : vector<64x128xf32> to vector<64x128xbf16>
    %c0_101 = arith.constant 0 : index
    %c0_102 = arith.constant 0 : index
    %c128_103 = arith.constant 128 : index
    %93 = vector.load %arg9[%c0_101, %c0_102, %c128_103] : memref<1x64x384xbf16, #tpu.memory_space<vmem>>, vector<1x64x128xbf16>
    %94 = vector.shape_cast %93 : vector<1x64x128xbf16> to vector<64x128xbf16>
    %95 = vector.shape_cast %92 : vector<64x128xbf16> to vector<1x64x128xbf16>
    tpu.vector_store %arg9[%c0_101, %c0_102, %c128_103], %95 {strides = array<i32>} : memref<1x64x384xbf16, #tpu.memory_space<vmem>>, vector<1x64x128xbf16>,
    return
  }
  func.func @transform_0(%arg0: i32) -> (i32, i32, i32) {
    %c0_i32 = arith.constant 0 : i32
    %c0_i32_0 = arith.constant 0 : i32
    %c0_i32_1 = arith.constant 0 : i32
    return %arg0, %c0_i32, %c0_i32_0 : i32, i32, i32
  }
  func.func @transform_1(%arg0: i32) -> (i32, i32) {
    %c0_i32 = arith.constant 0 : i32
    %c0_i32_0 = arith.constant 0 : i32
    %c0_i32_1 = arith.constant 0 : i32
    return %c0_i32, %c0_i32_0 : i32, i32
  }
  func.func @transform_2(%arg0: i32) -> (i32, i32) {
    %c0_i32 = arith.constant 0 : i32
    %c0_i32_0 = arith.constant 0 : i32
    %c0_i32_1 = arith.constant 0 : i32
    return %c0_i32, %c0_i32_0 : i32, i32
  }
  func.func @transform_3(%arg0: i32) -> (i32, i32) {
    %c0_i32 = arith.constant 0 : i32
    %c0_i32_0 = arith.constant 0 : i32
    %c0_i32_1 = arith.constant 0 : i32
    return %c0_i32, %c0_i32_0 : i32, i32
  }
  func.func @transform_4(%arg0: i32) -> (i32, i32) {
    %c0_i32 = arith.constant 0 : i32
    %c0_i32_0 = arith.constant 0 : i32
    %c0_i32_1 = arith.constant 0 : i32
    return %c0_i32, %c0_i32_0 : i32, i32
  }
  func.func @transform_5(%arg0: i32) -> (i32, i32) {
    %c0_i32 = arith.constant 0 : i32
    %c0_i32_0 = arith.constant 0 : i32
    %c0_i32_1 = arith.constant 0 : i32
    return %c0_i32, %c0_i32_0 : i32, i32
  }
  func.func @transform_6(%arg0: i32) -> (i32, i32) {
    %c0_i32 = arith.constant 0 : i32
    %c0_i32_0 = arith.constant 0 : i32
    %c0_i32_1 = arith.constant 0 : i32
    return %c0_i32, %c0_i32_0 : i32, i32
  }
  func.func @transform_7(%arg0: i32) -> (i32, i32) {
    %c0_i32 = arith.constant 0 : i32
    %c0_i32_0 = arith.constant 0 : i32
    %c0_i32_1 = arith.constant 0 : i32
    return %c0_i32, %c0_i32_0 : i32, i32
  }
  func.func @transform_8(%arg0: i32) -> (i32, i32, i32) {
    %c0_i32 = arith.constant 0 : i32
    %c0_i32_0 = arith.constant 0 : i32
    %c0_i32_1 = arith.constant 0 : i32
    return %arg0, %c0_i32, %c0_i32_0 : i32, i32, i32
  }
  func.func @transform_9(%arg0: i32) -> (i32, i32, i32) {
    %c0_i32 = arith.constant 0 : i32
    %c0_i32_0 = arith.constant 0 : i32
    %c0_i32_1 = arith.constant 0 : i32
    return %arg0, %c0_i32, %c0_i32_0 : i32, i32, i32
  }
}

</mosaic_0001>

<llo_original>
// kernel: codinet_forward.4
$region0: #{codinet_forward.4}
  #allocation0 [shape = 'u32[]', space=smem, size = 0x4, offset = 0x4, fixed_abs, tag = 'smem constant byte address 0x4 - core index']
  #allocation1 [shape = 'u32[144,128]{1,0:T(1,128)}', space=vmem, size = 0x12000, scoped, tag = 'internal scratch']
  #allocation2 [shape = 'bf16[72,384]{1,0:T(8,128)(2,1)}', space=vmem, size = 0xd800, scoped, tag = 'scratch operand']
  %s0 = inlined_call_operand.vmem [shape: bf16[2,8,640], index: 0, kind: input, shape index: {}]
  %s1 = inlined_call_operand.vmem [shape: bf16[16,72], index: 1, kind: input, shape index: {}]
  %s2 = inlined_call_operand.vmem [shape: f32[16,1], index: 2, kind: input, shape index: {}]
  %s3 = inlined_call_operand.vmem [shape: f32[1,384], index: 3, kind: input, shape index: {}]
  %s4 = inlined_call_operand.vmem [shape: bf16[2,16,640], index: 4, kind: output, shape index: {0}]
  %s5 = inlined_call_operand.vmem [shape: f32[2,16,1], index: 5, kind: output, shape index: {1}]
  %6 = xla_tuple %s4, %s5
  %s7 = sld [smem:[#allocation0]]
  $region57: #{codinet_forward.4} parent=0
    _
  %s9 = ssub.s32 1, %s7
  %s10 = scalar_select 0, %s9, %s7
  loop: start=0, step=1, limit=4
  $region2: #{codinet_forward.4} parent=0 // loop_pre_header
    _
  $region3: #{codinet_forward.4} parent=0 // loop_header
    %s12 = sphi 0, %s16
    %p13 = scmp.ge.s32.totalorder %s12, 4
    %s22 = sphi 0, %s24
    %s25 = sphi 0, %s22
    %s26 = sphi 0, %s25
    %s42 = sphi 0, %s26
    %s46 = sphi 0, %s46
    %s48 = sphi 0, %s46
    %s49 = sphi 0, %s48
    %s63 = sphi 0, %s49
    %s67 = sphi 0, %s67
    %s69 = sphi 0, %s67
    %s70 = sphi 0, %s69
    %s84 = sphi 0, %s70
    %s88 = sphi 0, %s88
    %s90 = sphi 0, %s88
    %s91 = sphi 0, %s90
    %s105 = sphi 0, %s91
    %s111 = sphi 0, %s113
    %s114 = sphi 0, %s111
    %s115 = sphi 0, %s114
    %s131 = sphi 0, %s115
    %s137 = sphi 0, %s139
    %s140 = sphi 0, %s137
    %s141 = sphi 0, %s140
    %s157 = sphi 0, %s141
  $region4: #{codinet_forward.4} parent=0 // loop_header_branch
    %15 = sbr.rel (%p13) target = $region8
  $region5: #{codinet_forward.4} parent=0 // loop_body
    %s17 = ssub.s32 %s12, 1
    %s18 = ssub.s32 %s12, 2
    %s19 = sadd.s32 %s12, 1
    %s20 = ssub.s32 %s12, %s19
    %p21 = scmp.eq.s32.totalorder %s20, 0
    %s23 = sadd.s32 %s22, 1
    %s24 = scalar_select %p21, %s22, %s23
    %p27 = pneg %p21
    %p28 = scmp.eq.s32.totalorder %s12, 1
    %p29 = por %p27, %p28
    %p30 = scmp.ne.s32.totalorder %s22, %s25
    %p31 = scmp.eq.s32.totalorder %s12, 0
    %p32 = por %p30, %p31
    %p33 = scmp.ne.s32.totalorder %s22, %s25
    %p34 = scmp.eq.s32.totalorder %s17, 1
    %p35 = por %p33, %p34
    %p36 = scmp.ne.s32.totalorder %s25, %s26
    %p37 = scmp.eq.s32.totalorder %s17, 0
    %p38 = por %p36, %p37
    %p39 = scmp.ne.s32.totalorder %s25, %s26
    %p40 = scmp.eq.s32.totalorder %s18, 1
    %p41 = por %p39, %p40
    %p43 = scmp.ne.s32.totalorder %s26, %s42
    %p44 = scmp.eq.s32.totalorder %s18, 0
    %p45 = por %p43, %p44
    %s47 = sadd.s32 %s46, 1
    %p50 = scmp.eq.s32.totalorder %s12, 1
    %p51 = scmp.ne.s32.totalorder %s46, %s48
    %p52 = scmp.eq.s32.totalorder %s12, 0
    %p53 = por %p51, %p52
    %p54 = scmp.ne.s32.totalorder %s46, %s48
    %p55 = scmp.eq.s32.totalorder %s17, 1
    %p56 = por %p54, %p55
    %p57 = scmp.ne.s32.totalorder %s48, %s49
    %p58 = scmp.eq.s32.totalorder %s17, 0
    %p59 = por %p57, %p58
    %p60 = scmp.ne.s32.totalorder %s48, %s49
    %p61 = scmp.eq.s32.totalorder %s18, 1
    %p62 = por %p60, %p61
    %p64 = scmp.ne.s32.totalorder %s49, %s63
    %p65 = scmp.eq.s32.totalorder %s18, 0
    %p66 = por %p64, %p65
    %s68 = sadd.s32 %s67, 1
    %p71 = scmp.eq.s32.totalorder %s12, 1
    %p72 = scmp.ne.s32.totalorder %s67, %s69
    %p73 = scmp.eq.s32.totalorder %s12, 0
    %p74 = por %p72, %p73
    %p75 = scmp.ne.s32.totalorder %s67, %s69
    %p76 = scmp.eq.s32.totalorder %s17, 1
    %p77 = por %p75, %p76
    %p78 = scmp.ne.s32.totalorder %s69, %s70
    %p79 = scmp.eq.s32.totalorder %s17, 0
    %p80 = por %p78, %p79
    %p81 = scmp.ne.s32.totalorder %s69, %s70
    %p82 = scmp.eq.s32.totalorder %s18, 1
    %p83 = por %p81, %p82
    %p85 = scmp.ne.s32.totalorder %s70, %s84
    %p86 = scmp.eq.s32.totalorder %s18, 0
    %p87 = por %p85, %p86
    %s89 = sadd.s32 %s88, 1
    %p92 = scmp.eq.s32.totalorder %s12, 1
    %p93 = scmp.ne.s32.totalorder %s88, %s90
    %p94 = scmp.eq.s32.totalorder %s12, 0
    %p95 = por %p93, %p94
    %p96 = scmp.ne.s32.totalorder %s88, %s90
    %p97 = scmp.eq.s32.totalorder %s17, 1
    %p98 = por %p96, %p97
    %p99 = scmp.ne.s32.totalorder %s90, %s91
    %p100 = scmp.eq.s32.totalorder %s17, 0
    %p101 = por %p99, %p100
    %p102 = scmp.ne.s32.totalorder %s90, %s91
    %p103 = scmp.eq.s32.totalorder %s18, 1
    %p104 = por %p102, %p103
    %p106 = scmp.ne.s32.totalorder %s91, %s105
    %p107 = scmp.eq.s32.totalorder %s18, 0
    %p108 = por %p106, %p107
    %s109 = ssub.s32 %s12, %s19
    %p110 = scmp.eq.s32.totalorder %s109, 0
    %s112 = sadd.s32 %s111, 1
    %s113 = scalar_select %p110, %s111, %s112
    %p116 = pneg %p110
    %p117 = scmp.eq.s32.totalorder %s12, 1
    %p118 = por %p116, %p117
    %p119 = scmp.ne.s32.totalorder %s111, %s114
    %p120 = scmp.eq.s32.totalorder %s12, 0
    %p121 = por %p119, %p120
    %p122 = scmp.ne.s32.totalorder %s111, %s114
    %p123 = scmp.eq.s32.totalorder %s17, 1
    %p124 = por %p122, %p123
    %p125 = scmp.ne.s32.totalorder %s114, %s115
    %p126 = scmp.eq.s32.totalorder %s17, 0
    %p127 = por %p125, %p126
    %p128 = scmp.ne.s32.totalorder %s114, %s115
    %p129 = scmp.eq.s32.totalorder %s18, 1
    %p130 = por %p128, %p129
    %p132 = scmp.ne.s32.totalorder %s115, %s131
    %p133 = scmp.eq.s32.totalorder %s18, 0
    %p134 = por %p132, %p133
    %s135 = ssub.s32 %s12, %s19
    %p136 = scmp.eq.s32.totalorder %s135, 0
    %s138 = sadd.s32 %s137, 1
    %s139 = scalar_select %p136, %s137, %s138
    %p142 = pneg %p136
    %p143 = scmp.eq.s32.totalorder %s12, 1
    %p144 = por %p142, %p143
    %p145 = scmp.ne.s32.totalorder %s137, %s140
    %p146 = scmp.eq.s32.totalorder %s12, 0
    %p147 = por %p145, %p146
    %p148 = scmp.ne.s32.totalorder %s137, %s140
    %p149 = scmp.eq.s32.totalorder %s17, 1
    %p150 = por %p148, %p149
    %p151 = scmp.ne.s32.totalorder %s140, %s141
    %p152 = scmp.eq.s32.totalorder %s17, 0
    %p153 = por %p151, %p152
    %p154 = scmp.ne.s32.totalorder %s140, %s141
    %p155 = scmp.eq.s32.totalorder %s18, 1
    %p156 = por %p154, %p155
    %p158 = scmp.ne.s32.totalorder %s141, %s157
    %p159 = scmp.eq.s32.totalorder %s18, 0
    %p160 = por %p158, %p159
    %p161 = scmp.le.s32.totalorder 1, %s12
    %p162 = scmp.lt.s32.totalorder %s12, 3
    %p163 = pnand %p161, %p162
    %p164 = pneg %p163
    // Predicated region
    $region9: #{codinet_forward.4} parent=5 // pred_check
      _
    $region10: #{codinet_forward.4} parent=5 // pred_check_branch
      %166 = sbr.rel (%p163) target = $region12
    $region11: #{codinet_forward.4} parent=5 // pred_region
      %s167 = ssub.s32 %s12, 1
      // Predicated region
      $region13: #{codinet_forward.4} parent=11 // pred_check
        %p168 = pneg %p59
      $region14: #{codinet_forward.4} parent=11 // pred_check_branch
        %170 = sbr.rel (%p168) target = $region16
      $region15: #{codinet_forward.4} parent=11 // pred_region
        _
      $region16: #{codinet_forward.4} parent=11 // pred_fallthru
        _
      // Predicated region
      $region17: #{codinet_forward.4} parent=11 // pred_check
        %p171 = pneg %p80
      $region18: #{codinet_forward.4} parent=11 // pred_check_branch
        %173 = sbr.rel (%p171) target = $region20
      $region19: #{codinet_forward.4} parent=11 // pred_region
        _
      $region20: #{codinet_forward.4} parent=11 // pred_fallthru
        _
      // Predicated region
      $region21: #{codinet_forward.4} parent=11 // pred_check
        %p174 = pneg %p101
      $region22: #{codinet_forward.4} parent=11 // pred_check_branch
        %176 = sbr.rel (%p174) target = $region24
      $region23: #{codinet_forward.4} parent=11 // pred_region
        _
      $region24: #{codinet_forward.4} parent=11 // pred_fallthru
        _
    $region12: #{codinet_forward.4} parent=5 // pred_fallthru
      _
    %p177 = scmp.lt.s32.totalorder %s12, 2
    // Predicated region
    $region25: #{codinet_forward.4} parent=5 // pred_check
      %p178 = pneg %p177
    $region26: #{codinet_forward.4} parent=5 // pred_check_branch
      %180 = sbr.rel (%p178) target = $region28
    $region27: #{codinet_forward.4} parent=5 // pred_region
      // Predicated region
      $region29: #{codinet_forward.4} parent=27 // pred_check
        %p181 = pneg %p32
      $region30: #{codinet_forward.4} parent=27 // pred_check_branch
        %183 = sbr.rel (%p181) target = $region32
      $region31: #{codinet_forward.4} parent=27 // pred_region
        %p184 = scmp.lt.s32.totalorder %s12, 1
        %s185 = scalar_select %p184, %s12, 1
        %s186 = smul.addr %s185, 5
        %s187 = smul.addr %s186, 4
        %s188 = scalar_lea.vmem %s0, %s187
      $region32: #{codinet_forward.4} parent=27 // pred_fallthru
        _
    $region28: #{codinet_forward.4} parent=5 // pred_fallthru
      _
    %p189 = scmp.le.s32.totalorder 1, %s12
    %p190 = scmp.lt.s32.totalorder %s12, 3
    %p191 = pnand %p189, %p190
    %p192 = pneg %p191
    // Predicated region
    $region33: #{codinet_forward.4} parent=5 // pred_check
      _
    $region34: #{codinet_forward.4} parent=5 // pred_check_branch
      %194 = sbr.rel (%p191) target = $region36
    $region35: #{codinet_forward.4} parent=5 // pred_region
      %s195 = ssub.s32 %s12, 1
      %p196 = scmp.lt.s32.totalorder %s17, 1
      %s197 = scalar_select %p196, %s17, 1
      %s198 = smul.addr %s197, 5
      %s199 = smul.addr %s198, 4
      %s200 = scalar_lea.vmem %s0, %s199
      %p201 = pneg %p38
      %p202 = pneg %p35
      %p203 = pneg %p59
      %p204 = pneg %p56
      %p205 = pneg %p80
      %p206 = pneg %p77
      %p207 = pneg %p101
      %p208 = pneg %p98
      %p209 = pneg %p127
      %p210 = pneg %p124
      %p211 = scmp.lt.s32.totalorder %s17, 1
      %s212 = scalar_select %p211, %s17, 1
      %s213 = smul.addr %s212, 10
      %s214 = smul.addr %s213, 4
      %s215 = scalar_lea.vmem %s4, %s214
      %p216 = pneg %p153
      %p217 = pneg %p150
      %p218 = scmp.lt.s32.totalorder %s17, 1
      %s219 = scalar_select %p218, %s17, 1
      %s220 = smul.addr %s219, 2
      %s221 = smul.addr %s220, 8
      %s222 = scalar_lea.vmem %s5, %s221
      %p223 = scmp.lt.s32.totalorder %s17, 1
      %s224 = scalar_select %p223, %s17, 1
      %s225 = smul.addr %s224, 5
      %s226 = smul.addr %s225, 4
      %s227 = scalar_lea.vmem %s0, %s226
      %p228 = scmp.lt.s32.totalorder %s17, 1
      %s229 = scalar_select %p228, %s17, 1
      %s230 = smul.addr %s229, 10
      %s231 = smul.addr %s230, 4
      %s232 = scalar_lea.vmem %s4, %s231
      %p233 = scmp.lt.s32.totalorder %s17, 1
      %s234 = scalar_select %p233, %s17, 1
      %s235 = smul.addr %s234, 2
      %s236 = smul.addr %s235, 8
      %s237 = scalar_lea.vmem %s5, %s236
      %v239 = vld [vmem:[%s227] sm:$0xff]
      %v240 = vld [vmem:[%s227 + $0x8] sm:$0xff]
      %243 = vrot.lane.b32.xlu0 %v239, 19
      %v244 = vpop.permute.xlu0 %243
      %245 = vrot.lane.b32.xlu0 %v240, 19
      %v246 = vpop.permute.xlu0 %245
      %v247 = vrot.slane %v244, 4
      %v248 = vrot.slane %v246, 4
      %vm249 = vcmask 1043456
      %v250 = vsel %vm249, %v247, %v248
      %vm251 = vcmask 154624
      %v252 = vsel %vm251, %v244, %v250
      %v253 = vsel %vm251, %v246, %v248
      %256 = vst [vmem:[#allocation2] sm:$0xff] %v252
      %257 = vst [vmem:[#allocation2 + $0x8] sm:$0xf] %v253
      %v258 = vld [vmem:[%s227] sm:$0xff]
      %v259 = vld [vmem:[%s227 + $0x8] sm:$0xff]
      %262 = vrot.lane.b32.xlu0 %v258, 18
      %v263 = vpop.permute.xlu0 %262
      %264 = vrot.lane.b32.xlu0 %v259, 18
      %v265 = vpop.permute.xlu0 %264
      %v266 = vrot.slane %v263, 4
      %v267 = vrot.slane %v265, 4
      %v268 = vsel %vm249, %v266, %v267
      %vm269 = vcmask 146432
      %v270 = vsel %vm269, %v263, %v268
      %v271 = vsel %vm269, %v265, %v267
      %274 = vst [vmem:[#allocation2 + $0xc] sm:$0xff] %v270
      %275 = vst [vmem:[#allocation2 + $0x14] sm:$0xf] %v271
      %v276 = vld [vmem:[%s227] sm:$0xff]
      %v277 = vld [vmem:[%s227 + $0x8] sm:$0xff]
      %280 = vrot.lane.b32.xlu0 %v276, 17
      %v281 = vpop.permute.xlu0 %280
      %282 = vrot.lane.b32.xlu0 %v277, 17
      %v283 = vpop.permute.xlu0 %282
      %v284 = vrot.slane %v281, 4
      %v285 = vrot.slane %v283, 4
      %v286 = vsel %vm249, %v284, %v285
      %vm287 = vcmask 138240
      %v288 = vsel %vm287, %v281, %v286
      %v289 = vsel %vm287, %v283, %v285
      %292 = vst [vmem:[#allocation2 + $0x18] sm:$0xff] %v288
      %293 = vst [vmem:[#allocation2 + $0x20] sm:$0xf] %v289
      %v294 = vld [vmem:[%s227] sm:$0xff]
      %v295 = vld [vmem:[%s227 + $0x8] sm:$0xff]
      %298 = vrot.lane.b32.xlu0 %v294, 1
      %v299 = vpop.permute.xlu0 %298
      %300 = vrot.lane.b32.xlu0 %v295, 1
      %v301 = vpop.permute.xlu0 %300
      %v302 = vrot.slane %v299, 4
      %v303 = vrot.slane %v301, 4
      %v304 = vsel %vm249, %v302, %v303
      %vm305 = vcmask 7168
      %v306 = vsel %vm305, %v299, %v304
      %v307 = vsel %vm305, %v301, %v303
      %310 = vst [vmem:[#allocation2 + $0x24] sm:$0xff] %v306
      %311 = vst [vmem:[#allocation2 + $0x2c] sm:$0xf] %v307
      %v312 = vld [vmem:[%s227 + $0x4] sm:$0xff]
      %v313 = vld [vmem:[%s227 + $0xc] sm:$0xf]
      %314 = vst [vmem:[#allocation2 + $0x30] sm:$0xff] %v312
      %315 = vst [vmem:[#allocation2 + $0x38] sm:$0xf] %v313
      %v316 = vld [vmem:[%s227 + $0x4] sm:$0xff]
      %v317 = vld [vmem:[%s227 + $0xc] sm:$0xff]
      %320 = vrot.lane.b32.xlu0 %v316, 127
      %v321 = vpop.permute.xlu0 %320
      %322 = vrot.lane.b32.xlu0 %v317, 127
      %v323 = vpop.permute.xlu0 %322
      %v324 = vrot.slane %v321, 4
      %v325 = vrot.slane %v323, 4
      %v326 = vsel %vm249, %v324, %v325
      %vm327 = vcmask 1039360
      %v328 = vsel %vm327, %v321, %v326
      %v329 = vsel %vm327, %v323, %v325
      %332 = vst [vmem:[#allocation2 + $0x3c] sm:$0xff] %v328
      %333 = vst [vmem:[#allocation2 + $0x44] sm:$0xf] %v329
      %v334 = vld [vmem:[%s227 + $0x4] sm:$0xff]
      %v335 = vld [vmem:[%s227 + $0xc] sm:$0xff]
      %338 = vrot.lane.b32.xlu0 %v334, 111
      %v339 = vpop.permute.xlu0 %338
      %340 = vrot.lane.b32.xlu0 %v335, 111
      %v341 = vpop.permute.xlu0 %340
      %v342 = vrot.slane %v339, 4
      %v343 = vrot.slane %v341, 4
      %v344 = vsel %vm249, %v342, %v343
      %vm345 = vcmask 908288
      %v346 = vsel %vm345, %v339, %v344
      %v347 = vsel %vm345, %v341, %v343
      %350 = vst [vmem:[#allocation2 + $0x48] sm:$0xff] %v346
      %351 = vst [vmem:[#allocation2 + $0x50] sm:$0xf] %v347
      %v352 = vld [vmem:[%s227 + $0x4] sm:$0xff]
      %v353 = vld [vmem:[%s227 + $0xc] sm:$0xff]
      %356 = vrot.lane.b32.xlu0 %v352, 110
      %v357 = vpop.permute.xlu0 %356
      %358 = vrot.lane.b32.xlu0 %v353, 110
      %v359 = vpop.permute.xlu0 %358
      %v360 = vrot.slane %v357, 4
      %v361 = vrot.slane %v359, 4
      %v362 = vsel %vm249, %v360, %v361
      %vm363 = vcmask 900096
      %v364 = vsel %vm363, %v357, %v362
      %v365 = vsel %vm363, %v359, %v361
      %368 = vst [vmem:[#allocation2 + $0x54] sm:$0xff] %v364
      %369 = vst [vmem:[#allocation2 + $0x5c] sm:$0xf] %v365
      %v370 = vld [vmem:[%s227 + $0x4] sm:$0xff]
      %v371 = vld [vmem:[%s227 + $0xc] sm:$0xff]
      %374 = vrot.lane.b32.xlu0 %v370, 109
      %v375 = vpop.permute.xlu0 %374
      %376 = vrot.lane.b32.xlu0 %v371, 109
      %v377 = vpop.permute.xlu0 %376
      %v378 = vrot.slane %v375, 4
      %v379 = vrot.slane %v377, 4
      %v380 = vsel %vm249, %v378, %v379
      %vm381 = vcmask 891904
      %v382 = vsel %vm381, %v375, %v380
      %v383 = vsel %vm381, %v377, %v379
      %386 = vst [vmem:[#allocation2 + $0x60] sm:$0xff] %v382
      %387 = vst [vmem:[#allocation2 + $0x68] sm:$0xf] %v383
      %v388 = vld [vmem:[%s1] sm:$0xf]
      %v389 = vld [vmem:[%s1 + $0x4] sm:$0xf]
      %v390 = vld [vmem:[#allocation2] sm:$0xff]
      %v391 = vld [vmem:[#allocation2 + $0x8] sm:$0xf]
      %v392 = vld [vmem:[#allocation2 + $0xc] sm:$0xff]
      %v393 = vld [vmem:[#allocation2 + $0x14] sm:$0xf]
      %v394 = vld [vmem:[#allocation2 + $0x18] sm:$0xff]
      %v395 = vld [vmem:[#allocation2 + $0x20] sm:$0xf]
      %v396 = vld [vmem:[#allocation2 + $0x24] sm:$0xff]
      %v397 = vld [vmem:[#allocation2 + $0x2c] sm:$0xf]
      %v398 = vld [vmem:[#allocation2 + $0x30] sm:$0xff]
      %v399 = vld [vmem:[#allocation2 + $0x38] sm:$0xf]
      %v400 = vld [vmem:[#allocation2 + $0x3c] sm:$0xff]
      %v401 = vld [vmem:[#allocation2 + $0x44] sm:$0xf]
      %v402 = vld [vmem:[#allocation2 + $0x48] sm:$0xff]
      %v403 = vld [vmem:[#allocation2 + $0x50] sm:$0xf]
      %v404 = vld [vmem:[#allocation2 + $0x54] sm:$0xff]
      %v405 = vld [vmem:[#allocation2 + $0x5c] sm:$0xf]
      %v406 = vld [vmem:[#allocation2 + $0x60] sm:$0xff]
      %v407 = vld [vmem:[#allocation2 + $0x68] sm:$0xf]
      %v408 = vld [vmem:[%s2] sm:$0xff]
      %v409 = vld [vmem:[%s2 + $0x8] sm:$0xff]
      %411 = vset.pattern.permute.xlu0 0
      %412 = vperm.xlu0 %411, %v408
      %v413 = vpop.permute.xlu0 %412
      %416 = vset.pattern.permute.xlu0 0
      %417 = vperm.xlu0 %416, %v409
      %v418 = vpop.permute.xlu0 %417
      %v422 = vunpack.c.l.b16 %v388
      %v423 = vunpack.c.l.b16 %v389
      %v424 = vpack.c.b16 %v423, %v422
      %v443 = vunpack.c.l.b16 %v390
      %v444 = vunpack.c.h.b16 %v390
      %v445 = vunpack.c.l.b16 %v391
      %v446 = vunpack.c.l.b16 %v392
      %v447 = vunpack.c.h.b16 %v392
      %v448 = vunpack.c.l.b16 %v393
      %v449 = vunpack.c.l.b16 %v394
      %v450 = vunpack.c.h.b16 %v394
      %v451 = vunpack.c.l.b16 %v395
      %v452 = vunpack.c.l.b16 %v396
      %v453 = vunpack.c.h.b16 %v396
      %v454 = vunpack.c.l.b16 %v397
      %v455 = vunpack.c.l.b16 %v398
      %v456 = vunpack.c.h.b16 %v398
      %v457 = vunpack.c.l.b16 %v399
      %v458 = vunpack.c.l.b16 %v400
      %v459 = vunpack.c.h.b16 %v400
      %v460 = vunpack.c.l.b16 %v401
      %v461 = vunpack.c.l.b16 %v402
      %v462 = vunpack.c.h.b16 %v402
      %v463 = vunpack.c.l.b16 %v403
      %v464 = vunpack.c.l.b16 %v404
      %v465 = vunpack.c.h.b16 %v404
      %v466 = vunpack.c.l.b16 %v405
      %v467 = vunpack.c.l.b16 %v406
      %v468 = vunpack.c.h.b16 %v406
      %v469 = vunpack.c.l.b16 %v407
      %v470 = vpack.c.b16 %v446, %v443
      %v471 = vpack.c.b16 %v447, %v444
      %v472 = vpack.c.b16 %v448, %v445
      %v473 = vpack.c.b16 %v452, %v449
      %v474 = vpack.c.b16 %v453, %v450
      %v475 = vpack.c.b16 %v454, %v451
      %v476 = vpack.c.b16 %v458, %v455
      %v477 = vpack.c.b16 %v459, %v456
      %v478 = vpack.c.b16 %v460, %v457
      %v479 = vpack.c.b16 %v464, %v461
      %v480 = vpack.c.b16 %v465, %v462
      %v481 = vpack.c.b16 %v466, %v463
      %v482 = vpack.c.b16 %v467, %v467
      %v483 = vpack.c.b16 %v468, %v468
      %v484 = vpack.c.b16 %v469, %v469
      %vm497 = vcmask 588800
      %v499 = vsel %vm497, %v424, 0
      %vm501 = vcmask 1043456
      %v503 = vsel %vm501, %v482, 0
      %v506 = vsel %vm501, %v483, 0
      %v509 = vsel %vm501, %v484, 0
      %511 = vmatprep.subr.bf16.mxu0 %v471
      %512 = vmatpush1.bf16.msra.mxu0 %v470
      %513 = vmatprep.subr.bf16.mxu0 %v474
      %514 = vmatpush1.bf16.msra.mxu0 %v473
      %515 = vmatprep.subr.bf16.mxu0 %v477
      %516 = vmatpush1.bf16.msra.mxu0 %v476
      %517 = vmatprep.subr.bf16.mxu0 %v480
      %518 = vmatpush1.bf16.msra.mxu0 %v479
      %519 = vmatprep.subr.bf16.mxu0 %v506
      %520 = vmatpush1.bf16.msra.mxu0 %v503
      %521 = vmatprep.subr.bf16.mxu0 0
      %522 = vmatpush1.bf16.msra.mxu0 0
      %523 = vmatprep.subr.bf16.mxu0 0
      %524 = vmatpush1.bf16.msra.mxu0 0
      %525 = vmatprep.subr.bf16.mxu0 0
      %526 = vmatpush1.bf16.msra.mxu0 0
      %527 = vmatprep.subr.bf16.mxu0 0
      %528 = vmatpush1.bf16.msra.mxu0 0
      %529 = vmatprep.subr.bf16.mxu0 0
      %530 = vmatpush1.bf16.msra.mxu0 0
      %531 = vmatprep.subr.bf16.mxu0 0
      %532 = vmatpush1.bf16.msra.mxu0 0
      %533 = vmatprep.subr.bf16.mxu0 0
      %534 = vmatpush1.bf16.msra.mxu0 0
      %535 = vmatprep.subr.bf16.mxu0 0
      %536 = vmatpush1.bf16.msra.mxu0 0
      %537 = vmatprep.subr.bf16.mxu0 0
      %538 = vmatpush1.bf16.msra.mxu0 0
      %539 = vmatprep.subr.bf16.mxu0 0
      %540 = vmatpush1.bf16.msra.mxu0 0
      %541 = vmatprep.subr.bf16.mxu0 0
      %542 = vmatpush1.bf16.msra.mxu0 0
      %543 = vmatprep.mubr.bf16.mxu0 0
      %544 = vmatmul.mubr.bf16.gmra.mrb[0].mxu0 %v499
      %v545 = vpop.f32.mrb[0].mxu0
      %v546 = vadd.f32 %v413, %v545
      %v547 = vpop.f32.mrb[0].mxu0
      %v548 = vadd.f32 %v413, %v547
      %v549 = vpop.f32.mrb[0].mxu0
      %v550 = vadd.f32 %v418, %v549
      %v551 = vpop.f32.mrb[0].mxu0
      %v552 = vadd.f32 %v418, %v551
      %553 = vdwg.mxu0
      %554 = vmatprep.subr.bf16.mxu0 0
      %555 = vmatpush1.bf16.msra.mxu0 %v472
      %556 = vmatprep.subr.bf16.mxu0 0
      %557 = vmatpush1.bf16.msra.mxu0 %v475
      %558 = vmatprep.subr.bf16.mxu0 0
      %559 = vmatpush1.bf16.msra.mxu0 %v478
      %560 = vmatprep.subr.bf16.mxu0 0
      %561 = vmatpush1.bf16.msra.mxu0 %v481
      %562 = vmatprep.subr.bf16.mxu0 0
      %563 = vmatpush1.bf16.msra.mxu0 %v509
      %564 = vmatprep.subr.bf16.mxu0 0
      %565 = vmatpush1.bf16.msra.mxu0 0
      %566 = vmatprep.subr.bf16.mxu0 0
      %567 = vmatpush1.bf16.msra.mxu0 0
      %568 = vmatprep.subr.bf16.mxu0 0
      %569 = vmatpush1.bf16.msra.mxu0 0
      %570 = vmatprep.subr.bf16.mxu0 0
      %571 = vmatpush1.bf16.msra.mxu0 0
      %572 = vmatprep.subr.bf16.mxu0 0
      %573 = vmatpush1.bf16.msra.mxu0 0
      %574 = vmatprep.subr.bf16.mxu0 0
      %575 = vmatpush1.bf16.msra.mxu0 0
      %576 = vmatprep.subr.bf16.mxu0 0
      %577 = vmatpush1.bf16.msra.mxu0 0
      %578 = vmatprep.subr.bf16.mxu0 0
      %579 = vmatpush1.bf16.msra.mxu0 0
      %580 = vmatprep.subr.bf16.mxu0 0
      %581 = vmatpush1.bf16.msra.mxu0 0
      %582 = vmatprep.subr.bf16.mxu0 0
      %583 = vmatpush1.bf16.msra.mxu0 0
      %584 = vmatprep.subr.bf16.mxu0 0
      %585 = vmatpush1.bf16.msra.mxu0 0
      %586 = vmatprep.mubr.bf16.mxu0 0
      %587 = vmatmul.mubr.bf16.gmra.mrb[0].mxu0 %v499
      %v588 = vpop.f32.mrb[0].mxu0
      %v589 = vadd.f32 %v413, %v588
      %v590 = vpop.f32.mrb[0].mxu0
      %v591 = vpop.f32.mrb[0].mxu0
      %v592 = vadd.f32 %v418, %v591
      %v593 = vpop.f32.mrb[0].mxu0
      %594 = vdwg.mxu0
      %v595 = vmax.f32 %v546, 0.0
      %v596 = vmax.f32 %v548, 0.0
      %v597 = vmax.f32 %v589, 0.0
      %v598 = vmax.f32 %v550, 0.0
      %v599 = vmax.f32 %v552, 0.0
      %v600 = vmax.f32 %v592, 0.0
      %v601 = vld [vmem:[%s3] sm:$0x7]
      %v603 = vlaneseq
      %v604 = vshrl.u32 %v603, 7
      %v605 = vsub.s32 0, %v604
      %v606 = vrot.slane %v601, %v605
      %v607 = vlaneseq
      %v608 = vshrl.u32 %v607, 7
      %v609 = vsub.s32 1, %v608
      %v610 = vrot.slane %v601, %v609
      %v611 = vlaneseq
      %v612 = vshrl.u32 %v611, 7
      %v613 = vsub.s32 2, %v612
      %v614 = vrot.slane %v601, %v613
      %v618 = vmul.f32 %v595, %v606
      %v619 = vmul.f32 %v596, %v610
      %v620 = vmul.f32 %v597, %v614
      %v621 = vmul.f32 %v598, %v606
      %v622 = vmul.f32 %v599, %v610
      %v623 = vmul.f32 %v600, %v614
      %v624 = vadd.f32 %v618, %v619
      %v625 = vadd.f32 %v624, %v620
      %626 = vadd.xlane.f32.xlu0 %v625
      %v627 = vpop.xlane.xlu0 %626
      %v628 = vadd.f32 %v621, %v622
      %v629 = vadd.f32 %v628, %v623
      %630 = vadd.xlane.f32.xlu0 %v629
      %v631 = vpop.xlane.xlu0 %630
      %vm632 = vcmask 7168
      %633 = vst.msk [vmem:[%s237] sm:$0xff] %vm632, %v627
      %634 = vst.msk [vmem:[%s237 + $0x8] sm:$0xff] %vm632, %v631
      %635 = vst [vmem:[%s232] sm:$0xf] 0
      %636 = vst [vmem:[%s232 + $0x14] sm:$0xf] 0
      %637 = vst [vmem:[%s232 + $0x10] sm:$0xf] 0
      %638 = vst [vmem:[%s232 + $0x24] sm:$0xf] 0
      %v639 = vpack.c.bf16 %v621, %v618
      %v640 = vpack.c.bf16 %v622, %v619
      %v641 = vpack.c.bf16 %v623, %v620
      %v645 = vunpack.c.l.b16 %v639
      %v646 = vunpack.c.l.b16 %v640
      %v647 = vunpack.c.l.b16 %v641
      %v648 = vunpack.c.h.b16 %v639
      %v649 = vunpack.c.h.b16 %v640
      %v650 = vunpack.c.h.b16 %v641
      %v651 = vpack.c.b16 %v646, %v645
      %v652 = vpack.c.b16 %v647, %v647
      %v653 = vpack.c.b16 %v649, %v648
      %v654 = vpack.c.b16 %v650, %v650
      %659 = vst [vmem:[%s232 + $0x4] sm:$0xff] %v651
      %660 = vst [vmem:[%s232 + $0xc] sm:$0xf] %v652
      %661 = vst [vmem:[%s232 + $0x18] sm:$0xff] %v653
      %662 = vst [vmem:[%s232 + $0x20] sm:$0xf] %v654
      %p663 = scmp.lt.s32.totalorder %s17, 1
      %s664 = scalar_select %p663, %s17, 1
      %s665 = smul.addr %s664, 10
      %s666 = smul.addr %s665, 4
      %s667 = scalar_lea.vmem %s4, %s666
      %p668 = scmp.lt.s32.totalorder %s17, 1
      %s669 = scalar_select %p668, %s17, 1
      %s670 = smul.addr %s669, 2
      %s671 = smul.addr %s670, 8
      %s672 = scalar_lea.vmem %s5, %s671
      // Predicated region
      $region37: #{codinet_forward.4} parent=35 // pred_check
        %p673 = pneg %p124
      $region38: #{codinet_forward.4} parent=35 // pred_check_branch
        %675 = sbr.rel (%p673) target = $region40
      $region39: #{codinet_forward.4} parent=35 // pred_region
        _
      $region40: #{codinet_forward.4} parent=35 // pred_fallthru
        _
      // Predicated region
      $region41: #{codinet_forward.4} parent=35 // pred_check
        %p676 = pneg %p150
      $region42: #{codinet_forward.4} parent=35 // pred_check_branch
        %678 = sbr.rel (%p676) target = $region44
      $region43: #{codinet_forward.4} parent=35 // pred_region
        _
      $region44: #{codinet_forward.4} parent=35 // pred_fallthru
        _
    $region36: #{codinet_forward.4} parent=5 // pred_fallthru
      _
    %p679 = scmp.le.s32.totalorder 2, %s12
    // Predicated region
    $region45: #{codinet_forward.4} parent=5 // pred_check
      %p680 = pneg %p679
    $region46: #{codinet_forward.4} parent=5 // pred_check_branch
      %682 = sbr.rel (%p680) target = $region48
    $region47: #{codinet_forward.4} parent=5 // pred_region
      %s683 = ssub.s32 %s12, 2
      // Predicated region
      $region49: #{codinet_forward.4} parent=47 // pred_check
        %p684 = pneg %p130
      $region50: #{codinet_forward.4} parent=47 // pred_check_branch
        %686 = sbr.rel (%p684) target = $region52
      $region51: #{codinet_forward.4} parent=47 // pred_region
        %p687 = scmp.lt.s32.totalorder %s18, 1
        %s688 = scalar_select %p687, %s18, 1
        %s689 = smul.addr %s688, 10
        %s690 = smul.addr %s689, 4
        %s691 = scalar_lea.vmem %s4, %s690
      $region52: #{codinet_forward.4} parent=47 // pred_fallthru
        _
      // Predicated region
      $region53: #{codinet_forward.4} parent=47 // pred_check
        %p692 = pneg %p156
      $region54: #{codinet_forward.4} parent=47 // pred_check_branch
        %694 = sbr.rel (%p692) target = $region56
      $region55: #{codinet_forward.4} parent=47 // pred_region
        %p695 = scmp.lt.s32.totalorder %s18, 1
        %s696 = scalar_select %p695, %s18, 1
        %s697 = smul.addr %s696, 2
        %s698 = smul.addr %s697, 8
        %s699 = scalar_lea.vmem %s5, %s698
      $region56: #{codinet_forward.4} parent=47 // pred_fallthru
        _
    $region48: #{codinet_forward.4} parent=5 // pred_fallthru
      _
  $region6: #{codinet_forward.4} parent=0 // loop_footer
    %s16 = sadd.s32 1, %s12
  $region7: #{codinet_forward.4} parent=0 // loop_footer_branch
    %11 = sbr.rel target = $region3
  $region8: #{codinet_forward.4} parent=0 // loop_exit
    _

// kernel: codinet_forward.5
$region0: #{codinet_forward.5}
  #allocation0 [shape = 'u32[]', space=smem, size = 0x4, offset = 0x4, fixed_abs, tag = 'smem constant byte address 0x4 - core index']
  #allocation1 [shape = 'u32[144,128]{1,0:T(1,128)}', space=vmem, size = 0x12000, scoped, tag = 'internal scratch']
  #allocation2 [shape = 'bf16[144,384]{1,0:T(16,128)(2,1)}', space=vmem, size = 0x1b000, scoped, tag = 'scratch operand']
  #allocation3 [shape = 'bf16[16,640]{1,0:T(16,128)(2,1)}', space=vmem, size = 0x5000, scoped, tag = 'scratch operand']
  #allocation4 [shape = 'bf16[144,384]{1,0:T(16,128)(2,1)}', space=vmem, size = 0x1b000, scoped, tag = 'scratch operand']
  %s0 = inlined_call_operand.vmem [shape: bf16[2,16,640], index: 0, kind: input, shape index: {}]
  %s1 = inlined_call_operand.vmem [shape: bf16[16,144], index: 1, kind: input, shape index: {}]
  %s2 = inlined_call_operand.vmem [shape: f32[16,1], index: 2, kind: input, shape index: {}]
  %s3 = inlined_call_operand.vmem [shape: bf16[16,144], index: 3, kind: input, shape index: {}]
  %s4 = inlined_call_operand.vmem [shape: f32[16,1], index: 4, kind: input, shape index: {}]
  %s5 = inlined_call_operand.vmem [shape: f32[1,384], index: 5, kind: input, shape index: {}]
  %s6 = inlined_call_operand.vmem [shape: bf16[2,16,640], index: 6, kind: output, shape index: {0}]
  %s7 = inlined_call_operand.vmem [shape: f32[2,16,1], index: 7, kind: output, shape index: {1}]
  %8 = xla_tuple %s6, %s7
  %s9 = sld [smem:[#allocation0]]
  $region65: #{codinet_forward.5} parent=0
    _
  %s11 = ssub.s32 1, %s9
  %s12 = scalar_select 0, %s11, %s9
  loop: start=0, step=1, limit=4
  $region2: #{codinet_forward.5} parent=0 // loop_pre_header
    _
  $region3: #{codinet_forward.5} parent=0 // loop_header
    %s14 = sphi 0, %s18
    %p15 = scmp.ge.s32.totalorder %s14, 4
    %s24 = sphi 0, %s26
    %s27 = sphi 0, %s24
    %s28 = sphi 0, %s27
    %s44 = sphi 0, %s28
    %s48 = sphi 0, %s48
    %s50 = sphi 0, %s48
    %s51 = sphi 0, %s50
    %s65 = sphi 0, %s51
    %s69 = sphi 0, %s69
    %s71 = sphi 0, %s69
    %s72 = sphi 0, %s71
    %s86 = sphi 0, %s72
    %s90 = sphi 0, %s90
    %s92 = sphi 0, %s90
    %s93 = sphi 0, %s92
    %s107 = sphi 0, %s93
    %s111 = sphi 0, %s111
    %s113 = sphi 0, %s111
    %s114 = sphi 0, %s113
    %s128 = sphi 0, %s114
    %s132 = sphi 0, %s132
    %s134 = sphi 0, %s132
    %s135 = sphi 0, %s134
    %s149 = sphi 0, %s135
    %s155 = sphi 0, %s157
    %s158 = sphi 0, %s155
    %s159 = sphi 0, %s158
    %s175 = sphi 0, %s159
    %s181 = sphi 0, %s183
    %s184 = sphi 0, %s181
    %s185 = sphi 0, %s184
    %s201 = sphi 0, %s185
  $region4: #{codinet_forward.5} parent=0 // loop_header_branch
    %17 = sbr.rel (%p15) target = $region8
  $region5: #{codinet_forward.5} parent=0 // loop_body
    %s19 = ssub.s32 %s14, 1
    %s20 = ssub.s32 %s14, 2
    %s21 = sadd.s32 %s14, 1
    %s22 = ssub.s32 %s14, %s21
    %p23 = scmp.eq.s32.totalorder %s22, 0
    %s25 = sadd.s32 %s24, 1
    %s26 = scalar_select %p23, %s24, %s25
    %p29 = pneg %p23
    %p30 = scmp.eq.s32.totalorder %s14, 1
    %p31 = por %p29, %p30
    %p32 = scmp.ne.s32.totalorder %s24, %s27
    %p33 = scmp.eq.s32.totalorder %s14, 0
    %p34 = por %p32, %p33
    %p35 = scmp.ne.s32.totalorder %s24, %s27
    %p36 = scmp.eq.s32.totalorder %s19, 1
    %p37 = por %p35, %p36
    %p38 = scmp.ne.s32.totalorder %s27, %s28
    %p39 = scmp.eq.s32.totalorder %s19, 0
    %p40 = por %p38, %p39
    %p41 = scmp.ne.s32.totalorder %s27, %s28
    %p42 = scmp.eq.s32.totalorder %s20, 1
    %p43 = por %p41, %p42
    %p45 = scmp.ne.s32.totalorder %s28, %s44
    %p46 = scmp.eq.s32.totalorder %s20, 0
    %p47 = por %p45, %p46
    %s49 = sadd.s32 %s48, 1
    %p52 = scmp.eq.s32.totalorder %s14, 1
    %p53 = scmp.ne.s32.totalorder %s48, %s50
    %p54 = scmp.eq.s32.totalorder %s14, 0
    %p55 = por %p53, %p54
    %p56 = scmp.ne.s32.totalorder %s48, %s50
    %p57 = scmp.eq.s32.totalorder %s19, 1
    %p58 = por %p56, %p57
    %p59 = scmp.ne.s32.totalorder %s50, %s51
    %p60 = scmp.eq.s32.totalorder %s19, 0
    %p61 = por %p59, %p60
    %p62 = scmp.ne.s32.totalorder %s50, %s51
    %p63 = scmp.eq.s32.totalorder %s20, 1
    %p64 = por %p62, %p63
    %p66 = scmp.ne.s32.totalorder %s51, %s65
    %p67 = scmp.eq.s32.totalorder %s20, 0
    %p68 = por %p66, %p67
    %s70 = sadd.s32 %s69, 1
    %p73 = scmp.eq.s32.totalorder %s14, 1
    %p74 = scmp.ne.s32.totalorder %s69, %s71
    %p75 = scmp.eq.s32.totalorder %s14, 0
    %p76 = por %p74, %p75
    %p77 = scmp.ne.s32.totalorder %s69, %s71
    %p78 = scmp.eq.s32.totalorder %s19, 1
    %p79 = por %p77, %p78
    %p80 = scmp.ne.s32.totalorder %s71, %s72
    %p81 = scmp.eq.s32.totalorder %s19, 0
    %p82 = por %p80, %p81
    %p83 = scmp.ne.s32.totalorder %s71, %s72
    %p84 = scmp.eq.s32.totalorder %s20, 1
    %p85 = por %p83, %p84
    %p87 = scmp.ne.s32.totalorder %s72, %s86
    %p88 = scmp.eq.s32.totalorder %s20, 0
    %p89 = por %p87, %p88
    %s91 = sadd.s32 %s90, 1
    %p94 = scmp.eq.s32.totalorder %s14, 1
    %p95 = scmp.ne.s32.totalorder %s90, %s92
    %p96 = scmp.eq.s32.totalorder %s14, 0
    %p97 = por %p95, %p96
    %p98 = scmp.ne.s32.totalorder %s90, %s92
    %p99 = scmp.eq.s32.totalorder %s19, 1
    %p100 = por %p98, %p99
    %p101 = scmp.ne.s32.totalorder %s92, %s93
    %p102 = scmp.eq.s32.totalorder %s19, 0
    %p103 = por %p101, %p102
    %p104 = scmp.ne.s32.totalorder %s92, %s93
    %p105 = scmp.eq.s32.totalorder %s20, 1
    %p106 = por %p104, %p105
    %p108 = scmp.ne.s32.totalorder %s93, %s107
    %p109 = scmp.eq.s32.totalorder %s20, 0
    %p110 = por %p108, %p109
    %s112 = sadd.s32 %s111, 1
    %p115 = scmp.eq.s32.totalorder %s14, 1
    %p116 = scmp.ne.s32.totalorder %s111, %s113
    %p117 = scmp.eq.s32.totalorder %s14, 0
    %p118 = por %p116, %p117
    %p119 = scmp.ne.s32.totalorder %s111, %s113
    %p120 = scmp.eq.s32.totalorder %s19, 1
    %p121 = por %p119, %p120
    %p122 = scmp.ne.s32.totalorder %s113, %s114
    %p123 = scmp.eq.s32.totalorder %s19, 0
    %p124 = por %p122, %p123
    %p125 = scmp.ne.s32.totalorder %s113, %s114
    %p126 = scmp.eq.s32.totalorder %s20, 1
    %p127 = por %p125, %p126
    %p129 = scmp.ne.s32.totalorder %s114, %s128
    %p130 = scmp.eq.s32.totalorder %s20, 0
    %p131 = por %p129, %p130
    %s133 = sadd.s32 %s132, 1
    %p136 = scmp.eq.s32.totalorder %s14, 1
    %p137 = scmp.ne.s32.totalorder %s132, %s134
    %p138 = scmp.eq.s32.totalorder %s14, 0
    %p139 = por %p137, %p138
    %p140 = scmp.ne.s32.totalorder %s132, %s134
    %p141 = scmp.eq.s32.totalorder %s19, 1
    %p142 = por %p140, %p141
    %p143 = scmp.ne.s32.totalorder %s134, %s135
    %p144 = scmp.eq.s32.totalorder %s19, 0
    %p145 = por %p143, %p144
    %p146 = scmp.ne.s32.totalorder %s134, %s135
    %p147 = scmp.eq.s32.totalorder %s20, 1
    %p148 = por %p146, %p147
    %p150 = scmp.ne.s32.totalorder %s135, %s149
    %p151 = scmp.eq.s32.totalorder %s20, 0
    %p152 = por %p150, %p151
    %s153 = ssub.s32 %s14, %s21
    %p154 = scmp.eq.s32.totalorder %s153, 0
    %s156 = sadd.s32 %s155, 1
    %s157 = scalar_select %p154, %s155, %s156
    %p160 = pneg %p154
    %p161 = scmp.eq.s32.totalorder %s14, 1
    %p162 = por %p160, %p161
    %p163 = scmp.ne.s32.totalorder %s155, %s158
    %p164 = scmp.eq.s32.totalorder %s14, 0
    %p165 = por %p163, %p164
    %p166 = scmp.ne.s32.totalorder %s155, %s158
    %p167 = scmp.eq.s32.totalorder %s19, 1
    %p168 = por %p166, %p167
    %p169 = scmp.ne.s32.totalorder %s158, %s159
    %p170 = scmp.eq.s32.totalorder %s19, 0
    %p171 = por %p169, %p170
    %p172 = scmp.ne.s32.totalorder %s158, %s159
    %p173 = scmp.eq.s32.totalorder %s20, 1
    %p174 = por %p172, %p173
    %p176 = scmp.ne.s32.totalorder %s159, %s175
    %p177 = scmp.eq.s32.totalorder %s20, 0
    %p178 = por %p176, %p177
    %s179 = ssub.s32 %s14, %s21
    %p180 = scmp.eq.s32.totalorder %s179, 0
    %s182 = sadd.s32 %s181, 1
    %s183 = scalar_select %p180, %s181, %s182
    %p186 = pneg %p180
    %p187 = scmp.eq.s32.totalorder %s14, 1
    %p188 = por %p186, %p187
    %p189 = scmp.ne.s32.totalorder %s181, %s184
    %p190 = scmp.eq.s32.totalorder %s14, 0
    %p191 = por %p189, %p190
    %p192 = scmp.ne.s32.totalorder %s181, %s184
    %p193 = scmp.eq.s32.totalorder %s19, 1
    %p194 = por %p192, %p193
    %p195 = scmp.ne.s32.totalorder %s184, %s185
    %p196 = scmp.eq.s32.totalorder %s19, 0
    %p197 = por %p195, %p196
    %p198 = scmp.ne.s32.totalorder %s184, %s185
    %p199 = scmp.eq.s32.totalorder %s20, 1
    %p200 = por %p198, %p199
    %p202 = scmp.ne.s32.totalorder %s185, %s201
    %p203 = scmp.eq.s32.totalorder %s20, 0
    %p204 = por %p202, %p203
    %p205 = scmp.le.s32.totalorder 1, %s14
    %p206 = scmp.lt.s32.totalorder %s14, 3
    %p207 = pnand %p205, %p206
    %p208 = pneg %p207
    // Predicated region
    $region9: #{codinet_forward.5} parent=5 // pred_check
      _
    $region10: #{codinet_forward.5} parent=5 // pred_check_branch
      %210 = sbr.rel (%p207) target = $region12
    $region11: #{codinet_forward.5} parent=5 // pred_region
      %s211 = ssub.s32 %s14, 1
      // Predicated region
      $region13: #{codinet_forward.5} parent=11 // pred_check
        %p212 = pneg %p61
      $region14: #{codinet_forward.5} parent=11 // pred_check_branch
        %214 = sbr.rel (%p212) target = $region16
      $region15: #{codinet_forward.5} parent=11 // pred_region
        _
      $region16: #{codinet_forward.5} parent=11 // pred_fallthru
        _
      // Predicated region
      $region17: #{codinet_forward.5} parent=11 // pred_check
        %p215 = pneg %p82
      $region18: #{codinet_forward.5} parent=11 // pred_check_branch
        %217 = sbr.rel (%p215) target = $region20
      $region19: #{codinet_forward.5} parent=11 // pred_region
        _
      $region20: #{codinet_forward.5} parent=11 // pred_fallthru
        _
      // Predicated region
      $region21: #{codinet_forward.5} parent=11 // pred_check
        %p218 = pneg %p103
      $region22: #{codinet_forward.5} parent=11 // pred_check_branch
        %220 = sbr.rel (%p218) target = $region24
      $region23: #{codinet_forward.5} parent=11 // pred_region
        _
      $region24: #{codinet_forward.5} parent=11 // pred_fallthru
        _
      // Predicated region
      $region25: #{codinet_forward.5} parent=11 // pred_check
        %p221 = pneg %p124
      $region26: #{codinet_forward.5} parent=11 // pred_check_branch
        %223 = sbr.rel (%p221) target = $region28
      $region27: #{codinet_forward.5} parent=11 // pred_region
        _
      $region28: #{codinet_forward.5} parent=11 // pred_fallthru
        _
      // Predicated region
      $region29: #{codinet_forward.5} parent=11 // pred_check
        %p224 = pneg %p145
      $region30: #{codinet_forward.5} parent=11 // pred_check_branch
        %226 = sbr.rel (%p224) target = $region32
      $region31: #{codinet_forward.5} parent=11 // pred_region
        _
      $region32: #{codinet_forward.5} parent=11 // pred_fallthru
        _
    $region12: #{codinet_forward.5} parent=5 // pred_fallthru
      _
    %p227 = scmp.lt.s32.totalorder %s14, 2
    // Predicated region
    $region33: #{codinet_forward.5} parent=5 // pred_check
      %p228 = pneg %p227
    $region34: #{codinet_forward.5} parent=5 // pred_check_branch
      %230 = sbr.rel (%p228) target = $region36
    $region35: #{codinet_forward.5} parent=5 // pred_region
      // Predicated region
      $region37: #{codinet_forward.5} parent=35 // pred_check
        %p231 = pneg %p34
      $region38: #{codinet_forward.5} parent=35 // pred_check_branch
        %233 = sbr.rel (%p231) target = $region40
      $region39: #{codinet_forward.5} parent=35 // pred_region
        %p234 = scmp.lt.s32.totalorder %s14, 1
        %s235 = scalar_select %p234, %s14, 1
        %s236 = smul.addr %s235, 10
        %s237 = smul.addr %s236, 4
        %s238 = scalar_lea.vmem %s0, %s237
      $region40: #{codinet_forward.5} parent=35 // pred_fallthru
        _
    $region36: #{codinet_forward.5} parent=5 // pred_fallthru
      _
    %p239 = scmp.le.s32.totalorder 1, %s14
    %p240 = scmp.lt.s32.totalorder %s14, 3
    %p241 = pnand %p239, %p240
    %p242 = pneg %p241
    // Predicated region
    $region41: #{codinet_forward.5} parent=5 // pred_check
      _
    $region42: #{codinet_forward.5} parent=5 // pred_check_branch
      %244 = sbr.rel (%p241) target = $region44
    $region43: #{codinet_forward.5} parent=5 // pred_region
      %s245 = ssub.s32 %s14, 1
      %p246 = scmp.lt.s32.totalorder %s19, 1
      %s247 = scalar_select %p246, %s19, 1
      %s248 = smul.addr %s247, 10
      %s249 = smul.addr %s248, 4
      %s250 = scalar_lea.vmem %s0, %s249
      %p251 = pneg %p40
      %p252 = pneg %p37
      %p253 = pneg %p61
      %p254 = pneg %p58
      %p255 = pneg %p82
      %p256 = pneg %p79
      %p257 = pneg %p103
      %p258 = pneg %p100
      %p259 = pneg %p124
      %p260 = pneg %p121
      %p261 = pneg %p145
      %p262 = pneg %p142
      %p263 = pneg %p171
      %p264 = pneg %p168
      %p265 = scmp.lt.s32.totalorder %s19, 1
      %s266 = scalar_select %p265, %s19, 1
      %s267 = smul.addr %s266, 10
      %s268 = smul.addr %s267, 4
      %s269 = scalar_lea.vmem %s6, %s268
      %p270 = pneg %p197
      %p271 = pneg %p194
      %p272 = scmp.lt.s32.totalorder %s19, 1
      %s273 = scalar_select %p272, %s19, 1
      %s274 = smul.addr %s273, 2
      %s275 = smul.addr %s274, 8
      %s276 = scalar_lea.vmem %s7, %s275
      %p277 = scmp.lt.s32.totalorder %s19, 1
      %s278 = scalar_select %p277, %s19, 1
      %s279 = smul.addr %s278, 10
      %s280 = smul.addr %s279, 4
      %s281 = scalar_lea.vmem %s0, %s280
      %p282 = scmp.lt.s32.totalorder %s19, 1
      %s283 = scalar_select %p282, %s19, 1
      %s284 = smul.addr %s283, 10
      %s285 = smul.addr %s284, 4
      %s286 = scalar_lea.vmem %s6, %s285
      %p287 = scmp.lt.s32.totalorder %s19, 1
      %s288 = scalar_select %p287, %s19, 1
      %s289 = smul.addr %s288, 2
      %s290 = smul.addr %s289, 8
      %s291 = scalar_lea.vmem %s7, %s290
      %v293 = vld [vmem:[%s281] sm:$0xff]
      %v294 = vld [vmem:[%s281 + $0x8] sm:$0xff]
      %v295 = vld [vmem:[%s281 + $0x14] sm:$0xff]
      %v296 = vld [vmem:[%s281 + $0x1c] sm:$0xff]
      %v301 = vunpack.c.l.b16 %v293
      %v302 = vunpack.c.h.b16 %v293
      %v303 = vunpack.c.l.b16 %v294
      %v304 = vunpack.c.h.b16 %v294
      %v305 = vunpack.c.l.b16 %v295
      %v306 = vunpack.c.h.b16 %v295
      %v307 = vunpack.c.l.b16 %v296
      %v308 = vunpack.c.h.b16 %v296
      %v309 = vpack.c.b16 %v305, %v301
      %v310 = vpack.c.b16 %v306, %v302
      %v311 = vpack.c.b16 %v307, %v303
      %v312 = vpack.c.b16 %v308, %v304
      %313 = vrot.lane.b32.xlu0 %v309, 19
      %v314 = vpop.permute.xlu0 %313
      %315 = vrot.lane.b32.xlu0 %v310, 19
      %v316 = vpop.permute.xlu0 %315
      %317 = vrot.lane.b32.xlu0 %v311, 19
      %v318 = vpop.permute.xlu0 %317
      %319 = vrot.lane.b32.xlu0 %v312, 19
      %v320 = vpop.permute.xlu0 %319
      %vm321 = vcmask 154624
      %v322 = vsel %vm321, %v314, %v316
      %v323 = vsel %vm321, %v316, %v318
      %v324 = vsel %vm321, %v318, %v320
      %328 = vst [vmem:[#allocation2] sm:$0xff] %v322
      %329 = vst [vmem:[#allocation2 + $0x8] sm:$0xff] %v323
      %330 = vst [vmem:[#allocation2 + $0x10] sm:$0xff] %v324
      %v331 = vld [vmem:[%s281] sm:$0xff]
      %v332 = vld [vmem:[%s281 + $0x8] sm:$0xff]
      %v333 = vld [vmem:[%s281 + $0x14] sm:$0xff]
      %v334 = vld [vmem:[%s281 + $0x1c] sm:$0xff]
      %v339 = vunpack.c.l.b16 %v331
      %v340 = vunpack.c.h.b16 %v331
      %v341 = vunpack.c.l.b16 %v332
      %v342 = vunpack.c.h.b16 %v332
      %v343 = vunpack.c.l.b16 %v333
      %v344 = vunpack.c.h.b16 %v333
      %v345 = vunpack.c.l.b16 %v334
      %v346 = vunpack.c.h.b16 %v334
      %v347 = vpack.c.b16 %v343, %v339
      %v348 = vpack.c.b16 %v344, %v340
      %v349 = vpack.c.b16 %v345, %v341
      %v350 = vpack.c.b16 %v346, %v342
      %351 = vrot.lane.b32.xlu0 %v347, 18
      %v352 = vpop.permute.xlu0 %351
      %353 = vrot.lane.b32.xlu0 %v348, 18
      %v354 = vpop.permute.xlu0 %353
      %355 = vrot.lane.b32.xlu0 %v349, 18
      %v356 = vpop.permute.xlu0 %355
      %357 = vrot.lane.b32.xlu0 %v350, 18
      %v358 = vpop.permute.xlu0 %357
      %vm359 = vcmask 146432
      %v360 = vsel %vm359, %v352, %v354
      %v361 = vsel %vm359, %v354, %v356
      %v362 = vsel %vm359, %v356, %v358
      %366 = vst [vmem:[#allocation2 + $0x18] sm:$0xff] %v360
      %367 = vst [vmem:[#allocation2 + $0x20] sm:$0xff] %v361
      %368 = vst [vmem:[#allocation2 + $0x28] sm:$0xff] %v362
      %v369 = vld [vmem:[%s281] sm:$0xff]
      %v370 = vld [vmem:[%s281 + $0x8] sm:$0xff]
      %v371 = vld [vmem:[%s281 + $0x14] sm:$0xff]
      %v372 = vld [vmem:[%s281 + $0x1c] sm:$0xff]
      %v377 = vunpack.c.l.b16 %v369
      %v378 = vunpack.c.h.b16 %v369
      %v379 = vunpack.c.l.b16 %v370
      %v380 = vunpack.c.h.b16 %v370
      %v381 = vunpack.c.l.b16 %v371
      %v382 = vunpack.c.h.b16 %v371
      %v383 = vunpack.c.l.b16 %v372
      %v384 = vunpack.c.h.b16 %v372
      %v385 = vpack.c.b16 %v381, %v377
      %v386 = vpack.c.b16 %v382, %v378
      %v387 = vpack.c.b16 %v383, %v379
      %v388 = vpack.c.b16 %v384, %v380
      %389 = vrot.lane.b32.xlu0 %v385, 17
      %v390 = vpop.permute.xlu0 %389
      %391 = vrot.lane.b32.xlu0 %v386, 17
      %v392 = vpop.permute.xlu0 %391
      %393 = vrot.lane.b32.xlu0 %v387, 17
      %v394 = vpop.permute.xlu0 %393
      %395 = vrot.lane.b32.xlu0 %v388, 17
      %v396 = vpop.permute.xlu0 %395
      %vm397 = vcmask 138240
      %v398 = vsel %vm397, %v390, %v392
      %v399 = vsel %vm397, %v392, %v394
      %v400 = vsel %vm397, %v394, %v396
      %404 = vst [vmem:[#allocation2 + $0x30] sm:$0xff] %v398
      %405 = vst [vmem:[#allocation2 + $0x38] sm:$0xff] %v399
      %406 = vst [vmem:[#allocation2 + $0x40] sm:$0xff] %v400
      %v407 = vld [vmem:[%s281] sm:$0xff]
      %v408 = vld [vmem:[%s281 + $0x8] sm:$0xff]
      %v409 = vld [vmem:[%s281 + $0x14] sm:$0xff]
      %v410 = vld [vmem:[%s281 + $0x1c] sm:$0xff]
      %v415 = vunpack.c.l.b16 %v407
      %v416 = vunpack.c.h.b16 %v407
      %v417 = vunpack.c.l.b16 %v408
      %v418 = vunpack.c.h.b16 %v408
      %v419 = vunpack.c.l.b16 %v409
      %v420 = vunpack.c.h.b16 %v409
      %v421 = vunpack.c.l.b16 %v410
      %v422 = vunpack.c.h.b16 %v410
      %v423 = vpack.c.b16 %v419, %v415
      %v424 = vpack.c.b16 %v420, %v416
      %v425 = vpack.c.b16 %v421, %v417
      %v426 = vpack.c.b16 %v422, %v418
      %427 = vrot.lane.b32.xlu0 %v423, 1
      %v428 = vpop.permute.xlu0 %427
      %429 = vrot.lane.b32.xlu0 %v424, 1
      %v430 = vpop.permute.xlu0 %429
      %431 = vrot.lane.b32.xlu0 %v425, 1
      %v432 = vpop.permute.xlu0 %431
      %433 = vrot.lane.b32.xlu0 %v426, 1
      %v434 = vpop.permute.xlu0 %433
      %vm435 = vcmask 7168
      %v436 = vsel %vm435, %v428, %v430
      %v437 = vsel %vm435, %v430, %v432
      %v438 = vsel %vm435, %v432, %v434
      %442 = vst [vmem:[#allocation2 + $0x48] sm:$0xff] %v436
      %443 = vst [vmem:[#allocation2 + $0x50] sm:$0xff] %v437
      %444 = vst [vmem:[#allocation2 + $0x58] sm:$0xff] %v438
      %v445 = vld [vmem:[%s281 + $0x4] sm:$0xff]
      %v446 = vld [vmem:[%s281 + $0xc] sm:$0xf]
      %v447 = vld [vmem:[%s281 + $0x18] sm:$0xff]
      %v448 = vld [vmem:[%s281 + $0x20] sm:$0xf]
      %v453 = vunpack.c.l.b16 %v445
      %v454 = vunpack.c.h.b16 %v445
      %v455 = vunpack.c.l.b16 %v446
      %v456 = vunpack.c.l.b16 %v447
      %v457 = vunpack.c.h.b16 %v447
      %v458 = vunpack.c.l.b16 %v448
      %v459 = vpack.c.b16 %v456, %v453
      %v460 = vpack.c.b16 %v457, %v454
      %v461 = vpack.c.b16 %v458, %v455
      %465 = vst [vmem:[#allocation2 + $0x60] sm:$0xff] %v459
      %466 = vst [vmem:[#allocation2 + $0x68] sm:$0xff] %v460
      %467 = vst [vmem:[#allocation2 + $0x70] sm:$0xff] %v461
      %v468 = vld [vmem:[%s281 + $0x4] sm:$0xff]
      %v469 = vld [vmem:[%s281 + $0xc] sm:$0xff]
      %v470 = vld [vmem:[%s281 + $0x18] sm:$0xff]
      %v471 = vld [vmem:[%s281 + $0x20] sm:$0xff]
      %v476 = vunpack.c.l.b16 %v468
      %v477 = vunpack.c.h.b16 %v468
      %v478 = vunpack.c.l.b16 %v469
      %v479 = vunpack.c.h.b16 %v469
      %v480 = vunpack.c.l.b16 %v470
      %v481 = vunpack.c.h.b16 %v470
      %v482 = vunpack.c.l.b16 %v471
      %v483 = vunpack.c.h.b16 %v471
      %v484 = vpack.c.b16 %v480, %v476
      %v485 = vpack.c.b16 %v481, %v477
      %v486 = vpack.c.b16 %v482, %v478
      %v487 = vpack.c.b16 %v483, %v479
      %488 = vrot.lane.b32.xlu0 %v484, 127
      %v489 = vpop.permute.xlu0 %488
      %490 = vrot.lane.b32.xlu0 %v485, 127
      %v491 = vpop.permute.xlu0 %490
      %492 = vrot.lane.b32.xlu0 %v486, 127
      %v493 = vpop.permute.xlu0 %492
      %494 = vrot.lane.b32.xlu0 %v487, 127
      %v495 = vpop.permute.xlu0 %494
      %vm496 = vcmask 1039360
      %v497 = vsel %vm496, %v489, %v491
      %v498 = vsel %vm496, %v491, %v493
      %v499 = vsel %vm496, %v493, %v495
      %503 = vst [vmem:[#allocation2 + $0x78] sm:$0xff] %v497
      %504 = vst [vmem:[#allocation2 + $0x80] sm:$0xff] %v498
      %505 = vst [vmem:[#allocation2 + $0x88] sm:$0xff] %v499
      %v506 = vld [vmem:[%s281 + $0x4] sm:$0xff]
      %v507 = vld [vmem:[%s281 + $0xc] sm:$0xff]
      %v508 = vld [vmem:[%s281 + $0x18] sm:$0xff]
      %v509 = vld [vmem:[%s281 + $0x20] sm:$0xff]
      %v514 = vunpack.c.l.b16 %v506
      %v515 = vunpack.c.h.b16 %v506
      %v516 = vunpack.c.l.b16 %v507
      %v517 = vunpack.c.h.b16 %v507
      %v518 = vunpack.c.l.b16 %v508
      %v519 = vunpack.c.h.b16 %v508
      %v520 = vunpack.c.l.b16 %v509
      %v521 = vunpack.c.h.b16 %v509
      %v522 = vpack.c.b16 %v518, %v514
      %v523 = vpack.c.b16 %v519, %v515
      %v524 = vpack.c.b16 %v520, %v516
      %v525 = vpack.c.b16 %v521, %v517
      %526 = vrot.lane.b32.xlu0 %v522, 111
      %v527 = vpop.permute.xlu0 %526
      %528 = vrot.lane.b32.xlu0 %v523, 111
      %v529 = vpop.permute.xlu0 %528
      %530 = vrot.lane.b32.xlu0 %v524, 111
      %v531 = vpop.permute.xlu0 %530
      %532 = vrot.lane.b32.xlu0 %v525, 111
      %v533 = vpop.permute.xlu0 %532
      %vm534 = vcmask 908288
      %v535 = vsel %vm534, %v527, %v529
      %v536 = vsel %vm534, %v529, %v531
      %v537 = vsel %vm534, %v531, %v533
      %541 = vst [vmem:[#allocation2 + $0x90] sm:$0xff] %v535
      %542 = vst [vmem:[#allocation2 + $0x98] sm:$0xff] %v536
      %543 = vst [vmem:[#allocation2 + $0xa0] sm:$0xff] %v537
      %v544 = vld [vmem:[%s281 + $0x4] sm:$0xff]
      %v545 = vld [vmem:[%s281 + $0xc] sm:$0xff]
      %v546 = vld [vmem:[%s281 + $0x18] sm:$0xff]
      %v547 = vld [vmem:[%s281 + $0x20] sm:$0xff]
      %v552 = vunpack.c.l.b16 %v544
      %v553 = vunpack.c.h.b16 %v544
      %v554 = vunpack.c.l.b16 %v545
      %v555 = vunpack.c.h.b16 %v545
      %v556 = vunpack.c.l.b16 %v546
      %v557 = vunpack.c.h.b16 %v546
      %v558 = vunpack.c.l.b16 %v547
      %v559 = vunpack.c.h.b16 %v547
      %v560 = vpack.c.b16 %v556, %v552
      %v561 = vpack.c.b16 %v557, %v553
      %v562 = vpack.c.b16 %v558, %v554
      %v563 = vpack.c.b16 %v559, %v555
      %564 = vrot.lane.b32.xlu0 %v560, 110
      %v565 = vpop.permute.xlu0 %564
      %566 = vrot.lane.b32.xlu0 %v561, 110
      %v567 = vpop.permute.xlu0 %566
      %568 = vrot.lane.b32.xlu0 %v562, 110
      %v569 = vpop.permute.xlu0 %568
      %570 = vrot.lane.b32.xlu0 %v563, 110
      %v571 = vpop.permute.xlu0 %570
      %vm572 = vcmask 900096
      %v573 = vsel %vm572, %v565, %v567
      %v574 = vsel %vm572, %v567, %v569
      %v575 = vsel %vm572, %v569, %v571
      %579 = vst [vmem:[#allocation2 + $0xa8] sm:$0xff] %v573
      %580 = vst [vmem:[#allocation2 + $0xb0] sm:$0xff] %v574
      %581 = vst [vmem:[#allocation2 + $0xb8] sm:$0xff] %v575
      %v582 = vld [vmem:[%s281 + $0x4] sm:$0xff]
      %v583 = vld [vmem:[%s281 + $0xc] sm:$0xff]
      %v584 = vld [vmem:[%s281 + $0x18] sm:$0xff]
      %v585 = vld [vmem:[%s281 + $0x20] sm:$0xff]
      %v590 = vunpack.c.l.b16 %v582
      %v591 = vunpack.c.h.b16 %v582
      %v592 = vunpack.c.l.b16 %v583
      %v593 = vunpack.c.h.b16 %v583
      %v594 = vunpack.c.l.b16 %v584
      %v595 = vunpack.c.h.b16 %v584
      %v596 = vunpack.c.l.b16 %v585
      %v597 = vunpack.c.h.b16 %v585
      %v598 = vpack.c.b16 %v594, %v590
      %v599 = vpack.c.b16 %v595, %v591
      %v600 = vpack.c.b16 %v596, %v592
      %v601 = vpack.c.b16 %v597, %v593
      %602 = vrot.lane.b32.xlu0 %v598, 109
      %v603 = vpop.permute.xlu0 %602
      %604 = vrot.lane.b32.xlu0 %v599, 109
      %v605 = vpop.permute.xlu0 %604
      %606 = vrot.lane.b32.xlu0 %v600, 109
      %v607 = vpop.permute.xlu0 %606
      %608 = vrot.lane.b32.xlu0 %v601, 109
      %v609 = vpop.permute.xlu0 %608
      %vm610 = vcmask 891904
      %v611 = vsel %vm610, %v603, %v605
      %v612 = vsel %vm610, %v605, %v607
      %v613 = vsel %vm610, %v607, %v609
      %617 = vst [vmem:[#allocation2 + $0xc0] sm:$0xff] %v611
      %618 = vst [vmem:[#allocation2 + $0xc8] sm:$0xff] %v612
      %619 = vst [vmem:[#allocation2 + $0xd0] sm:$0xff] %v613
      %v620 = vld [vmem:[%s1] sm:$0xff]
      %v621 = vld [vmem:[%s1 + $0x8] sm:$0xff]
      %v622 = vld [vmem:[#allocation2] sm:$0xff]
      %v623 = vld [vmem:[#allocation2 + $0x8] sm:$0xff]
      %v624 = vld [vmem:[#allocation2 + $0x10] sm:$0xff]
      %v625 = vld [vmem:[#allocation2 + $0x18] sm:$0xff]
      %v626 = vld [vmem:[#allocation2 + $0x20] sm:$0xff]
      %v627 = vld [vmem:[#allocation2 + $0x28] sm:$0xff]
      %v628 = vld [vmem:[#allocation2 + $0x30] sm:$0xff]
      %v629 = vld [vmem:[#allocation2 + $0x38] sm:$0xff]
      %v630 = vld [vmem:[#allocation2 + $0x40] sm:$0xff]
      %v631 = vld [vmem:[#allocation2 + $0x48] sm:$0xff]
      %v632 = vld [vmem:[#allocation2 + $0x50] sm:$0xff]
      %v633 = vld [vmem:[#allocation2 + $0x58] sm:$0xff]
      %v634 = vld [vmem:[#allocation2 + $0x60] sm:$0xff]
      %v635 = vld [vmem:[#allocation2 + $0x68] sm:$0xff]
      %v636 = vld [vmem:[#allocation2 + $0x70] sm:$0xff]
      %v637 = vld [vmem:[#allocation2 + $0x78] sm:$0xff]
      %v638 = vld [vmem:[#allocation2 + $0x80] sm:$0xff]
      %v639 = vld [vmem:[#allocation2 + $0x88] sm:$0xff]
      %v640 = vld [vmem:[#allocation2 + $0x90] sm:$0xff]
      %v641 = vld [vmem:[#allocation2 + $0x98] sm:$0xff]
      %v642 = vld [vmem:[#allocation2 + $0xa0] sm:$0xff]
      %v643 = vld [vmem:[#allocation2 + $0xa8] sm:$0xff]
      %v644 = vld [vmem:[#allocation2 + $0xb0] sm:$0xff]
      %v645 = vld [vmem:[#allocation2 + $0xb8] sm:$0xff]
      %v646 = vld [vmem:[#allocation2 + $0xc0] sm:$0xff]
      %v647 = vld [vmem:[#allocation2 + $0xc8] sm:$0xff]
      %v648 = vld [vmem:[#allocation2 + $0xd0] sm:$0xff]
      %v649 = vld [vmem:[%s2] sm:$0xff]
      %v650 = vld [vmem:[%s2 + $0x8] sm:$0xff]
      %652 = vset.pattern.permute.xlu0 0
      %653 = vperm.xlu0 %652, %v649
      %v654 = vpop.permute.xlu0 %653
      %657 = vset.pattern.permute.xlu0 0
      %658 = vperm.xlu0 %657, %v650
      %v659 = vpop.permute.xlu0 %658
      %v663 = vunpack.c.l.b16 %v620
      %v664 = vunpack.c.h.b16 %v620
      %v665 = vunpack.c.l.b16 %v621
      %v666 = vunpack.c.h.b16 %v621
      %v667 = vpack.c.b16 %v665, %v663
      %v668 = vpack.c.b16 %v666, %v664
      %vm670 = vcmask 130048
      %v672 = vsel %vm670, %v668, 0
      %674 = vmatprep.subr.bf16.mxu0 %v623
      %675 = vmatpush1.bf16.msra.mxu0 %v622
      %676 = vmatprep.subr.bf16.mxu0 %v626
      %677 = vmatpush1.bf16.msra.mxu0 %v625
      %678 = vmatprep.subr.bf16.mxu0 %v629
      %679 = vmatpush1.bf16.msra.mxu0 %v628
      %680 = vmatprep.subr.bf16.mxu0 %v632
      %681 = vmatpush1.bf16.msra.mxu0 %v631
      %682 = vmatprep.subr.bf16.mxu0 %v635
      %683 = vmatpush1.bf16.msra.mxu0 %v634
      %684 = vmatprep.subr.bf16.mxu0 %v638
      %685 = vmatpush1.bf16.msra.mxu0 %v637
      %686 = vmatprep.subr.bf16.mxu0 %v641
      %687 = vmatpush1.bf16.msra.mxu0 %v640
      %688 = vmatprep.subr.bf16.mxu0 %v644
      %689 = vmatpush1.bf16.msra.mxu0 %v643
      %690 = vmatprep.subr.bf16.mxu0 %v647
      %691 = vmatpush1.bf16.msra.mxu0 %v646
      %692 = vmatprep.subr.bf16.mxu0 0
      %693 = vmatpush1.bf16.msra.mxu0 0
      %694 = vmatprep.subr.bf16.mxu0 0
      %695 = vmatpush1.bf16.msra.mxu0 0
      %696 = vmatprep.subr.bf16.mxu0 0
      %697 = vmatpush1.bf16.msra.mxu0 0
      %698 = vmatprep.subr.bf16.mxu0 0
      %699 = vmatpush1.bf16.msra.mxu0 0
      %700 = vmatprep.subr.bf16.mxu0 0
      %701 = vmatpush1.bf16.msra.mxu0 0
      %702 = vmatprep.subr.bf16.mxu0 0
      %703 = vmatpush1.bf16.msra.mxu0 0
      %704 = vmatprep.subr.bf16.mxu0 0
      %705 = vmatpush1.bf16.msra.mxu0 0
      %706 = vmatprep.mubr.bf16.mxu0 %v672
      %707 = vmatmul.mubr.bf16.gmra.mrb[0].mxu0 %v667
      %v708 = vpop.f32.mrb[0].mxu0
      %v709 = vadd.f32 %v654, %v708
      %v710 = vpop.f32.mrb[0].mxu0
      %v711 = vadd.f32 %v654, %v710
      %v712 = vpop.f32.mrb[0].mxu0
      %v713 = vadd.f32 %v659, %v712
      %v714 = vpop.f32.mrb[0].mxu0
      %v715 = vadd.f32 %v659, %v714
      %716 = vdwg.mxu0
      %717 = vmatprep.subr.bf16.mxu0 0
      %718 = vmatpush1.bf16.msra.mxu0 %v624
      %719 = vmatprep.subr.bf16.mxu0 0
      %720 = vmatpush1.bf16.msra.mxu0 %v627
      %721 = vmatprep.subr.bf16.mxu0 0
      %722 = vmatpush1.bf16.msra.mxu0 %v630
      %723 = vmatprep.subr.bf16.mxu0 0
      %724 = vmatpush1.bf16.msra.mxu0 %v633
      %725 = vmatprep.subr.bf16.mxu0 0
      %726 = vmatpush1.bf16.msra.mxu0 %v636
      %727 = vmatprep.subr.bf16.mxu0 0
      %728 = vmatpush1.bf16.msra.mxu0 %v639
      %729 = vmatprep.subr.bf16.mxu0 0
      %730 = vmatpush1.bf16.msra.mxu0 %v642
      %731 = vmatprep.subr.bf16.mxu0 0
      %732 = vmatpush1.bf16.msra.mxu0 %v645
      %733 = vmatprep.subr.bf16.mxu0 0
      %734 = vmatpush1.bf16.msra.mxu0 %v648
      %735 = vmatprep.subr.bf16.mxu0 0
      %736 = vmatpush1.bf16.msra.mxu0 0
      %737 = vmatprep.subr.bf16.mxu0 0
      %738 = vmatpush1.bf16.msra.mxu0 0
      %739 = vmatprep.subr.bf16.mxu0 0
      %740 = vmatpush1.bf16.msra.mxu0 0
      %741 = vmatprep.subr.bf16.mxu0 0
      %742 = vmatpush1.bf16.msra.mxu0 0
      %743 = vmatprep.subr.bf16.mxu0 0
      %744 = vmatpush1.bf16.msra.mxu0 0
      %745 = vmatprep.subr.bf16.mxu0 0
      %746 = vmatpush1.bf16.msra.mxu0 0
      %747 = vmatprep.subr.bf16.mxu0 0
      %748 = vmatpush1.bf16.msra.mxu0 0
      %749 = vmatprep.mubr.bf16.mxu0 %v672
      %750 = vmatmul.mubr.bf16.gmra.mrb[0].mxu0 %v667
      %v751 = vpop.f32.mrb[0].mxu0
      %v752 = vadd.f32 %v654, %v751
      %v753 = vpop.f32.mrb[0].mxu0
      %v754 = vpop.f32.mrb[0].mxu0
      %v755 = vadd.f32 %v659, %v754
      %v756 = vpop.f32.mrb[0].mxu0
      %757 = vdwg.mxu0
      %v758 = vmax.f32 %v709, 0.0
      %v759 = vmax.f32 %v711, 0.0
      %v760 = vmax.f32 %v752, 0.0
      %v761 = vmax.f32 %v713, 0.0
      %v762 = vmax.f32 %v715, 0.0
      %v763 = vmax.f32 %v755, 0.0
      %v764 = vld [vmem:[%s5] sm:$0x7]
      %v766 = vlaneseq
      %v767 = vshrl.u32 %v766, 7
      %v768 = vsub.s32 0, %v767
      %v769 = vrot.slane %v764, %v768
      %v770 = vlaneseq
      %v771 = vshrl.u32 %v770, 7
      %v772 = vsub.s32 1, %v771
      %v773 = vrot.slane %v764, %v772
      %v774 = vlaneseq
      %v775 = vshrl.u32 %v774, 7
      %v776 = vsub.s32 2, %v775
      %v777 = vrot.slane %v764, %v776
      %v781 = vmul.f32 %v758, %v769
      %v782 = vmul.f32 %v759, %v773
      %v783 = vmul.f32 %v760, %v777
      %v784 = vmul.f32 %v761, %v769
      %v785 = vmul.f32 %v762, %v773
      %v786 = vmul.f32 %v763, %v777
      %787 = vst [vmem:[#allocation3] sm:$0xff] 0
      %788 = vst [vmem:[#allocation3 + $0x20] sm:$0xff] 0
      %v789 = vpack.c.bf16 %v784, %v781
      %v790 = vpack.c.bf16 %v785, %v782
      %v791 = vpack.c.bf16 %v786, %v783
      %792 = vst [vmem:[#allocation3 + $0x8] sm:$0xff] %v789
      %793 = vst [vmem:[#allocation3 + $0x10] sm:$0xff] %v790
      %794 = vst [vmem:[#allocation3 + $0x18] sm:$0xff] %v791
      %v795 = vld [vmem:[#allocation3] sm:$0xff]
      %v796 = vld [vmem:[#allocation3 + $0x8] sm:$0xff]
      %v797 = vld [vmem:[#allocation3 + $0x10] sm:$0xff]
      %v798 = vld [vmem:[#allocation3 + $0x18] sm:$0xff]
      %803 = vrot.lane.b32.xlu0 %v795, 19
      %v804 = vpop.permute.xlu0 %803
      %805 = vrot.lane.b32.xlu0 %v796, 19
      %v806 = vpop.permute.xlu0 %805
      %807 = vrot.lane.b32.xlu0 %v797, 19
      %v808 = vpop.permute.xlu0 %807
      %809 = vrot.lane.b32.xlu0 %v798, 19
      %v810 = vpop.permute.xlu0 %809
      %v811 = vsel %vm321, %v804, %v806
      %v812 = vsel %vm321, %v806, %v808
      %v813 = vsel %vm321, %v808, %v810
      %817 = vst [vmem:[#allocation4] sm:$0xff] %v811
      %818 = vst [vmem:[#allocation4 + $0x8] sm:$0xff] %v812
      %819 = vst [vmem:[#allocation4 + $0x10] sm:$0xff] %v813
      %v820 = vld [vmem:[#allocation3] sm:$0xff]
      %v821 = vld [vmem:[#allocation3 + $0x8] sm:$0xff]
      %v822 = vld [vmem:[#allocation3 + $0x10] sm:$0xff]
      %v823 = vld [vmem:[#allocation3 + $0x18] sm:$0xff]
      %828 = vrot.lane.b32.xlu0 %v820, 18
      %v829 = vpop.permute.xlu0 %828
      %830 = vrot.lane.b32.xlu0 %v821, 18
      %v831 = vpop.permute.xlu0 %830
      %832 = vrot.lane.b32.xlu0 %v822, 18
      %v833 = vpop.permute.xlu0 %832
      %834 = vrot.lane.b32.xlu0 %v823, 18
      %v835 = vpop.permute.xlu0 %834
      %v836 = vsel %vm359, %v829, %v831
      %v837 = vsel %vm359, %v831, %v833
      %v838 = vsel %vm359, %v833, %v835
      %842 = vst [vmem:[#allocation4 + $0x18] sm:$0xff] %v836
      %843 = vst [vmem:[#allocation4 + $0x20] sm:$0xff] %v837
      %844 = vst [vmem:[#allocation4 + $0x28] sm:$0xff] %v838
      %v845 = vld [vmem:[#allocation3] sm:$0xff]
      %v846 = vld [vmem:[#allocation3 + $0x8] sm:$0xff]
      %v847 = vld [vmem:[#allocation3 + $0x10] sm:$0xff]
      %v848 = vld [vmem:[#allocation3 + $0x18] sm:$0xff]
      %853 = vrot.lane.b32.xlu0 %v845, 17
      %v854 = vpop.permute.xlu0 %853
      %855 = vrot.lane.b32.xlu0 %v846, 17
      %v856 = vpop.permute.xlu0 %855
      %857 = vrot.lane.b32.xlu0 %v847, 17
      %v858 = vpop.permute.xlu0 %857
      %859 = vrot.lane.b32.xlu0 %v848, 17
      %v860 = vpop.permute.xlu0 %859
      %v861 = vsel %vm397, %v854, %v856
      %v862 = vsel %vm397, %v856, %v858
      %v863 = vsel %vm397, %v858, %v860
      %867 = vst [vmem:[#allocation4 + $0x30] sm:$0xff] %v861
      %868 = vst [vmem:[#allocation4 + $0x38] sm:$0xff] %v862
      %869 = vst [vmem:[#allocation4 + $0x40] sm:$0xff] %v863
      %v870 = vld [vmem:[#allocation3] sm:$0xff]
      %v871 = vld [vmem:[#allocation3 + $0x8] sm:$0xff]
      %v872 = vld [vmem:[#allocation3 + $0x10] sm:$0xff]
      %v873 = vld [vmem:[#allocation3 + $0x18] sm:$0xff]
      %878 = vrot.lane.b32.xlu0 %v870, 1
      %v879 = vpop.permute.xlu0 %878
      %880 = vrot.lane.b32.xlu0 %v871, 1
      %v881 = vpop.permute.xlu0 %880
      %882 = vrot.lane.b32.xlu0 %v872, 1
      %v883 = vpop.permute.xlu0 %882
      %884 = vrot.lane.b32.xlu0 %v873, 1
      %v885 = vpop.permute.xlu0 %884
      %v886 = vsel %vm435, %v879, %v881
      %v887 = vsel %vm435, %v881, %v883
      %v888 = vsel %vm435, %v883, %v885
      %892 = vst [vmem:[#allocation4 + $0x48] sm:$0xff] %v886
      %893 = vst [vmem:[#allocation4 + $0x50] sm:$0xff] %v887
      %894 = vst [vmem:[#allocation4 + $0x58] sm:$0xff] %v888
      %v895 = vld [vmem:[#allocation3 + $0x8] sm:$0xff]
      %v896 = vld [vmem:[#allocation3 + $0x10] sm:$0xff]
      %v897 = vld [vmem:[#allocation3 + $0x18] sm:$0xff]
      %898 = vst [vmem:[#allocation4 + $0x60] sm:$0xff] %v895
      %899 = vst [vmem:[#allocation4 + $0x68] sm:$0xff] %v896
      %900 = vst [vmem:[#allocation4 + $0x70] sm:$0xff] %v897
      %v901 = vld [vmem:[#allocation3 + $0x8] sm:$0xff]
      %v902 = vld [vmem:[#allocation3 + $0x10] sm:$0xff]
      %v903 = vld [vmem:[#allocation3 + $0x18] sm:$0xff]
      %v904 = vld [vmem:[#allocation3 + $0x20] sm:$0xff]
      %909 = vrot.lane.b32.xlu0 %v901, 127
      %v910 = vpop.permute.xlu0 %909
      %911 = vrot.lane.b32.xlu0 %v902, 127
      %v912 = vpop.permute.xlu0 %911
      %913 = vrot.lane.b32.xlu0 %v903, 127
      %v914 = vpop.permute.xlu0 %913
      %915 = vrot.lane.b32.xlu0 %v904, 127
      %v916 = vpop.permute.xlu0 %915
      %v917 = vsel %vm496, %v910, %v912
      %v918 = vsel %vm496, %v912, %v914
      %v919 = vsel %vm496, %v914, %v916
      %923 = vst [vmem:[#allocation4 + $0x78] sm:$0xff] %v917
      %924 = vst [vmem:[#allocation4 + $0x80] sm:$0xff] %v918
      %925 = vst [vmem:[#allocation4 + $0x88] sm:$0xff] %v919
      %v926 = vld [vmem:[#allocation3 + $0x8] sm:$0xff]
      %v927 = vld [vmem:[#allocation3 + $0x10] sm:$0xff]
      %v928 = vld [vmem:[#allocation3 + $0x18] sm:$0xff]
      %v929 = vld [vmem:[#allocation3 + $0x20] sm:$0xff]
      %934 = vrot.lane.b32.xlu0 %v926, 111
      %v935 = vpop.permute.xlu0 %934
      %936 = vrot.lane.b32.xlu0 %v927, 111
      %v937 = vpop.permute.xlu0 %936
      %938 = vrot.lane.b32.xlu0 %v928, 111
      %v939 = vpop.permute.xlu0 %938
      %940 = vrot.lane.b32.xlu0 %v929, 111
      %v941 = vpop.permute.xlu0 %940
      %v942 = vsel %vm534, %v935, %v937
      %v943 = vsel %vm534, %v937, %v939
      %v944 = vsel %vm534, %v939, %v941
      %948 = vst [vmem:[#allocation4 + $0x90] sm:$0xff] %v942
      %949 = vst [vmem:[#allocation4 + $0x98] sm:$0xff] %v943
      %950 = vst [vmem:[#allocation4 + $0xa0] sm:$0xff] %v944
      %v951 = vld [vmem:[#allocation3 + $0x8] sm:$0xff]
      %v952 = vld [vmem:[#allocation3 + $0x10] sm:$0xff]
      %v953 = vld [vmem:[#allocation3 + $0x18] sm:$0xff]
      %v954 = vld [vmem:[#allocation3 + $0x20] sm:$0xff]
      %959 = vrot.lane.b32.xlu0 %v951, 110
      %v960 = vpop.permute.xlu0 %959
      %961 = vrot.lane.b32.xlu0 %v952, 110
      %v962 = vpop.permute.xlu0 %961
      %963 = vrot.lane.b32.xlu0 %v953, 110
      %v964 = vpop.permute.xlu0 %963
      %965 = vrot.lane.b32.xlu0 %v954, 110
      %v966 = vpop.permute.xlu0 %965
      %v967 = vsel %vm572, %v960, %v962
      %v968 = vsel %vm572, %v962, %v964
      %v969 = vsel %vm572, %v964, %v966
      %973 = vst [vmem:[#allocation4 + $0xa8] sm:$0xff] %v967
      %974 = vst [vmem:[#allocation4 + $0xb0] sm:$0xff] %v968
      %975 = vst [vmem:[#allocation4 + $0xb8] sm:$0xff] %v969
      %v976 = vld [vmem:[#allocation3 + $0x8] sm:$0xff]
      %v977 = vld [vmem:[#allocation3 + $0x10] sm:$0xff]
      %v978 = vld [vmem:[#allocation3 + $0x18] sm:$0xff]
      %v979 = vld [vmem:[#allocation3 + $0x20] sm:$0xff]
      %984 = vrot.lane.b32.xlu0 %v976, 109
      %v985 = vpop.permute.xlu0 %984
      %986 = vrot.lane.b32.xlu0 %v977, 109
      %v987 = vpop.permute.xlu0 %986
      %988 = vrot.lane.b32.xlu0 %v978, 109
      %v989 = vpop.permute.xlu0 %988
      %990 = vrot.lane.b32.xlu0 %v979, 109
      %v991 = vpop.permute.xlu0 %990
      %v992 = vsel %vm610, %v985, %v987
      %v993 = vsel %vm610, %v987, %v989
      %v994 = vsel %vm610, %v989, %v991
      %998 = vst [vmem:[#allocation4 + $0xc0] sm:$0xff] %v992
      %999 = vst [vmem:[#allocation4 + $0xc8] sm:$0xff] %v993
      %1000 = vst [vmem:[#allocation4 + $0xd0] sm:$0xff] %v994
      %v1001 = vld [vmem:[%s3] sm:$0xff]
      %v1002 = vld [vmem:[%s3 + $0x8] sm:$0xff]
      %v1003 = vld [vmem:[#allocation4] sm:$0xff]
      %v1004 = vld [vmem:[#allocation4 + $0x8] sm:$0xff]
      %v1005 = vld [vmem:[#allocation4 + $0x10] sm:$0xff]
      %v1006 = vld [vmem:[#allocation4 + $0x18] sm:$0xff]
      %v1007 = vld [vmem:[#allocation4 + $0x20] sm:$0xff]
      %v1008 = vld [vmem:[#allocation4 + $0x28] sm:$0xff]
      %v1009 = vld [vmem:[#allocation4 + $0x30] sm:$0xff]
      %v1010 = vld [vmem:[#allocation4 + $0x38] sm:$0xff]
      %v1011 = vld [vmem:[#allocation4 + $0x40] sm:$0xff]
      %v1012 = vld [vmem:[#allocation4 + $0x48] sm:$0xff]
      %v1013 = vld [vmem:[#allocation4 + $0x50] sm:$0xff]
      %v1014 = vld [vmem:[#allocation4 + $0x58] sm:$0xff]
      %v1015 = vld [vmem:[#allocation4 + $0x60] sm:$0xff]
      %v1016 = vld [vmem:[#allocation4 + $0x68] sm:$0xff]
      %v1017 = vld [vmem:[#allocation4 + $0x70] sm:$0xff]
      %v1018 = vld [vmem:[#allocation4 + $0x78] sm:$0xff]
      %v1019 = vld [vmem:[#allocation4 + $0x80] sm:$0xff]
      %v1020 = vld [vmem:[#allocation4 + $0x88] sm:$0xff]
      %v1021 = vld [vmem:[#allocation4 + $0x90] sm:$0xff]
      %v1022 = vld [vmem:[#allocation4 + $0x98] sm:$0xff]
      %v1023 = vld [vmem:[#allocation4 + $0xa0] sm:$0xff]
      %v1024 = vld [vmem:[#allocation4 + $0xa8] sm:$0xff]
      %v1025 = vld [vmem:[#allocation4 + $0xb0] sm:$0xff]
      %v1026 = vld [vmem:[#allocation4 + $0xb8] sm:$0xff]
      %v1027 = vld [vmem:[#allocation4 + $0xc0] sm:$0xff]
      %v1028 = vld [vmem:[#allocation4 + $0xc8] sm:$0xff]
      %v1029 = vld [vmem:[#allocation4 + $0xd0] sm:$0xff]
      %v1030 = vld [vmem:[%s281 + $0x4] sm:$0xff]
      %v1031 = vld [vmem:[%s281 + $0xc] sm:$0xf]
      %v1032 = vld [vmem:[%s281 + $0x18] sm:$0xff]
      %v1033 = vld [vmem:[%s281 + $0x20] sm:$0xf]
      %v1034 = vunpack.c.l.bf16 %v1030
      %v1035 = vunpack.c.h.bf16 %v1030
      %v1036 = vunpack.c.l.bf16 %v1031
      %v1037 = vunpack.c.l.bf16 %v1032
      %v1038 = vunpack.c.h.bf16 %v1032
      %v1039 = vunpack.c.l.bf16 %v1033
      %v1040 = vld [vmem:[%s4] sm:$0xff]
      %v1041 = vld [vmem:[%s4 + $0x8] sm:$0xff]
      %1043 = vset.pattern.permute.xlu0 0
      %1044 = vperm.xlu0 %1043, %v1040
      %v1045 = vpop.permute.xlu0 %1044
      %1048 = vset.pattern.permute.xlu0 0
      %1049 = vperm.xlu0 %1048, %v1041
      %v1050 = vpop.permute.xlu0 %1049
      %v1054 = vunpack.c.l.b16 %v1001
      %v1055 = vunpack.c.h.b16 %v1001
      %v1056 = vunpack.c.l.b16 %v1002
      %v1057 = vunpack.c.h.b16 %v1002
      %v1058 = vpack.c.b16 %v1056, %v1054
      %v1059 = vpack.c.b16 %v1057, %v1055
      %v1062 = vsel %vm670, %v1059, 0
      %1064 = vmatprep.subr.bf16.mxu0 %v1004
      %1065 = vmatpush1.bf16.msra.mxu0 %v1003
      %1066 = vmatprep.subr.bf16.mxu0 %v1007
      %1067 = vmatpush1.bf16.msra.mxu0 %v1006
      %1068 = vmatprep.subr.bf16.mxu0 %v1010
      %1069 = vmatpush1.bf16.msra.mxu0 %v1009
      %1070 = vmatprep.subr.bf16.mxu0 %v1013
      %1071 = vmatpush1.bf16.msra.mxu0 %v1012
      %1072 = vmatprep.subr.bf16.mxu0 %v1016
      %1073 = vmatpush1.bf16.msra.mxu0 %v1015
      %1074 = vmatprep.subr.bf16.mxu0 %v1019
      %1075 = vmatpush1.bf16.msra.mxu0 %v1018
      %1076 = vmatprep.subr.bf16.mxu0 %v1022
      %1077 = vmatpush1.bf16.msra.mxu0 %v1021
      %1078 = vmatprep.subr.bf16.mxu0 %v1025
      %1079 = vmatpush1.bf16.msra.mxu0 %v1024
      %1080 = vmatprep.subr.bf16.mxu0 %v1028
      %1081 = vmatpush1.bf16.msra.mxu0 %v1027
      %1082 = vmatprep.subr.bf16.mxu0 0
      %1083 = vmatpush1.bf16.msra.mxu0 0
      %1084 = vmatprep.subr.bf16.mxu0 0
      %1085 = vmatpush1.bf16.msra.mxu0 0
      %1086 = vmatprep.subr.bf16.mxu0 0
      %1087 = vmatpush1.bf16.msra.mxu0 0
      %1088 = vmatprep.subr.bf16.mxu0 0
      %1089 = vmatpush1.bf16.msra.mxu0 0
      %1090 = vmatprep.subr.bf16.mxu0 0
      %1091 = vmatpush1.bf16.msra.mxu0 0
      %1092 = vmatprep.subr.bf16.mxu0 0
      %1093 = vmatpush1.bf16.msra.mxu0 0
      %1094 = vmatprep.subr.bf16.mxu0 0
      %1095 = vmatpush1.bf16.msra.mxu0 0
      %1096 = vmatprep.mubr.bf16.mxu0 %v1062
      %1097 = vmatmul.mubr.bf16.gmra.mrb[0].mxu0 %v1058
      %v1098 = vpop.f32.mrb[0].mxu0
      %v1099 = vadd.f32 %v1045, %v1098
      %v1100 = vpop.f32.mrb[0].mxu0
      %v1101 = vadd.f32 %v1045, %v1100
      %v1102 = vpop.f32.mrb[0].mxu0
      %v1103 = vadd.f32 %v1050, %v1102
      %v1104 = vpop.f32.mrb[0].mxu0
      %v1105 = vadd.f32 %v1050, %v1104
      %1106 = vdwg.mxu0
      %1107 = vmatprep.subr.bf16.mxu0 0
      %1108 = vmatpush1.bf16.msra.mxu0 %v1005
      %1109 = vmatprep.subr.bf16.mxu0 0
      %1110 = vmatpush1.bf16.msra.mxu0 %v1008
      %1111 = vmatprep.subr.bf16.mxu0 0
      %1112 = vmatpush1.bf16.msra.mxu0 %v1011
      %1113 = vmatprep.subr.bf16.mxu0 0
      %1114 = vmatpush1.bf16.msra.mxu0 %v1014
      %1115 = vmatprep.subr.bf16.mxu0 0
      %1116 = vmatpush1.bf16.msra.mxu0 %v1017
      %1117 = vmatprep.subr.bf16.mxu0 0
      %1118 = vmatpush1.bf16.msra.mxu0 %v1020
      %1119 = vmatprep.subr.bf16.mxu0 0
      %1120 = vmatpush1.bf16.msra.mxu0 %v1023
      %1121 = vmatprep.subr.bf16.mxu0 0
      %1122 = vmatpush1.bf16.msra.mxu0 %v1026
      %1123 = vmatprep.subr.bf16.mxu0 0
      %1124 = vmatpush1.bf16.msra.mxu0 %v1029
      %1125 = vmatprep.subr.bf16.mxu0 0
      %1126 = vmatpush1.bf16.msra.mxu0 0
      %1127 = vmatprep.subr.bf16.mxu0 0
      %1128 = vmatpush1.bf16.msra.mxu0 0
      %1129 = vmatprep.subr.bf16.mxu0 0
      %1130 = vmatpush1.bf16.msra.mxu0 0
      %1131 = vmatprep.subr.bf16.mxu0 0
      %1132 = vmatpush1.bf16.msra.mxu0 0
      %1133 = vmatprep.subr.bf16.mxu0 0
      %1134 = vmatpush1.bf16.msra.mxu0 0
      %1135 = vmatprep.subr.bf16.mxu0 0
      %1136 = vmatpush1.bf16.msra.mxu0 0
      %1137 = vmatprep.subr.bf16.mxu0 0
      %1138 = vmatpush1.bf16.msra.mxu0 0
      %1139 = vmatprep.mubr.bf16.mxu0 %v1062
      %1140 = vmatmul.mubr.bf16.gmra.mrb[0].mxu0 %v1058
      %v1141 = vpop.f32.mrb[0].mxu0
      %v1142 = vadd.f32 %v1045, %v1141
      %v1143 = vpop.f32.mrb[0].mxu0
      %v1144 = vpop.f32.mrb[0].mxu0
      %v1145 = vadd.f32 %v1050, %v1144
      %v1146 = vpop.f32.mrb[0].mxu0
      %1147 = vdwg.mxu0
      %v1148 = vadd.f32 %v1099, %v1034
      %v1149 = vadd.f32 %v1101, %v1035
      %v1150 = vadd.f32 %v1142, %v1036
      %v1151 = vadd.f32 %v1103, %v1037
      %v1152 = vadd.f32 %v1105, %v1038
      %v1153 = vadd.f32 %v1145, %v1039
      %v1154 = vmax.f32 %v1148, 0.0
      %v1155 = vmax.f32 %v1149, 0.0
      %v1156 = vmax.f32 %v1150, 0.0
      %v1157 = vmax.f32 %v1151, 0.0
      %v1158 = vmax.f32 %v1152, 0.0
      %v1159 = vmax.f32 %v1153, 0.0
      %v1160 = vld [vmem:[%s5] sm:$0x7]
      %v1162 = vlaneseq
      %v1163 = vshrl.u32 %v1162, 7
      %v1164 = vsub.s32 0, %v1163
      %v1165 = vrot.slane %v1160, %v1164
      %v1166 = vlaneseq
      %v1167 = vshrl.u32 %v1166, 7
      %v1168 = vsub.s32 1, %v1167
      %v1169 = vrot.slane %v1160, %v1168
      %v1170 = vlaneseq
      %v1171 = vshrl.u32 %v1170, 7
      %v1172 = vsub.s32 2, %v1171
      %v1173 = vrot.slane %v1160, %v1172
      %v1177 = vmul.f32 %v1154, %v1165
      %v1178 = vmul.f32 %v1155, %v1169
      %v1179 = vmul.f32 %v1156, %v1173
      %v1180 = vmul.f32 %v1157, %v1165
      %v1181 = vmul.f32 %v1158, %v1169
      %v1182 = vmul.f32 %v1159, %v1173
      %v1183 = vadd.f32 %v1177, %v1178
      %v1184 = vadd.f32 %v1183, %v1179
      %1185 = vadd.xlane.f32.xlu0 %v1184
      %v1186 = vpop.xlane.xlu0 %1185
      %v1187 = vadd.f32 %v1180, %v1181
      %v1188 = vadd.f32 %v1187, %v1182
      %1189 = vadd.xlane.f32.xlu0 %v1188
      %v1190 = vpop.xlane.xlu0 %1189
      %vm1191 = vcmask 7168
      %1192 = vst.msk [vmem:[%s291] sm:$0xff] %vm1191, %v1186
      %1193 = vst.msk [vmem:[%s291 + $0x8] sm:$0xff] %vm1191, %v1190
      %1194 = vst [vmem:[%s286] sm:$0xf] 0
      %1195 = vst [vmem:[%s286 + $0x14] sm:$0xf] 0
      %1196 = vst [vmem:[%s286 + $0x10] sm:$0xf] 0
      %1197 = vst [vmem:[%s286 + $0x24] sm:$0xf] 0
      %v1198 = vpack.c.bf16 %v1180, %v1177
      %v1199 = vpack.c.bf16 %v1181, %v1178
      %v1200 = vpack.c.bf16 %v1182, %v1179
      %v1204 = vunpack.c.l.b16 %v1198
      %v1205 = vunpack.c.l.b16 %v1199
      %v1206 = vunpack.c.l.b16 %v1200
      %v1207 = vunpack.c.h.b16 %v1198
      %v1208 = vunpack.c.h.b16 %v1199
      %v1209 = vunpack.c.h.b16 %v1200
      %v1210 = vpack.c.b16 %v1205, %v1204
      %v1211 = vpack.c.b16 %v1206, %v1206
      %v1212 = vpack.c.b16 %v1208, %v1207
      %v1213 = vpack.c.b16 %v1209, %v1209
      %1218 = vst [vmem:[%s286 + $0x4] sm:$0xff] %v1210
      %1219 = vst [vmem:[%s286 + $0xc] sm:$0xf] %v1211
      %1220 = vst [vmem:[%s286 + $0x18] sm:$0xff] %v1212
      %1221 = vst [vmem:[%s286 + $0x20] sm:$0xf] %v1213
      %p1222 = scmp.lt.s32.totalorder %s19, 1
      %s1223 = scalar_select %p1222, %s19, 1
      %s1224 = smul.addr %s1223, 10
      %s1225 = smul.addr %s1224, 4
      %s1226 = scalar_lea.vmem %s6, %s1225
      %p1227 = scmp.lt.s32.totalorder %s19, 1
      %s1228 = scalar_select %p1227, %s19, 1
      %s1229 = smul.addr %s1228, 2
      %s1230 = smul.addr %s1229, 8
      %s1231 = scalar_lea.vmem %s7, %s1230
      // Predicated region
      $region45: #{codinet_forward.5} parent=43 // pred_check
        %p1232 = pneg %p168
      $region46: #{codinet_forward.5} parent=43 // pred_check_branch
        %1234 = sbr.rel (%p1232) target = $region48
      $region47: #{codinet_forward.5} parent=43 // pred_region
        _
      $region48: #{codinet_forward.5} parent=43 // pred_fallthru
        _
      // Predicated region
      $region49: #{codinet_forward.5} parent=43 // pred_check
        %p1235 = pneg %p194
      $region50: #{codinet_forward.5} parent=43 // pred_check_branch
        %1237 = sbr.rel (%p1235) target = $region52
      $region51: #{codinet_forward.5} parent=43 // pred_region
        _
      $region52: #{codinet_forward.5} parent=43 // pred_fallthru
        _
    $region44: #{codinet_forward.5} parent=5 // pred_fallthru
      _
    %p1238 = scmp.le.s32.totalorder 2, %s14
    // Predicated region
    $region53: #{codinet_forward.5} parent=5 // pred_check
      %p1239 = pneg %p1238
    $region54: #{codinet_forward.5} parent=5 // pred_check_branch
      %1241 = sbr.rel (%p1239) target = $region56
    $region55: #{codinet_forward.5} parent=5 // pred_region
      %s1242 = ssub.s32 %s14, 2
      // Predicated region
      $region57: #{codinet_forward.5} parent=55 // pred_check
        %p1243 = pneg %p174
      $region58: #{codinet_forward.5} parent=55 // pred_check_branch
        %1245 = sbr.rel (%p1243) target = $region60
      $region59: #{codinet_forward.5} parent=55 // pred_region
        %p1246 = scmp.lt.s32.totalorder %s20, 1
        %s1247 = scalar_select %p1246, %s20, 1
        %s1248 = smul.addr %s1247, 10
        %s1249 = smul.addr %s1248, 4
        %s1250 = scalar_lea.vmem %s6, %s1249
      $region60: #{codinet_forward.5} parent=55 // pred_fallthru
        _
      // Predicated region
      $region61: #{codinet_forward.5} parent=55 // pred_check
        %p1251 = pneg %p200
      $region62: #{codinet_forward.5} parent=55 // pred_check_branch
        %1253 = sbr.rel (%p1251) target = $region64
      $region63: #{codinet_forward.5} parent=55 // pred_region
        %p1254 = scmp.lt.s32.totalorder %s20, 1
        %s1255 = scalar_select %p1254, %s20, 1
        %s1256 = smul.addr %s1255, 2
        %s1257 = smul.addr %s1256, 8
        %s1258 = scalar_lea.vmem %s7, %s1257
      $region64: #{codinet_forward.5} parent=55 // pred_fallthru
        _
    $region56: #{codinet_forward.5} parent=5 // pred_fallthru
      _
  $region6: #{codinet_forward.5} parent=0 // loop_footer
    %s18 = sadd.s32 1, %s14
  $region7: #{codinet_forward.5} parent=0 // loop_footer_branch
    %13 = sbr.rel target = $region3
  $region8: #{codinet_forward.5} parent=0 // loop_exit
    _

// kernel: codinet_forward.6
$region0: #{codinet_forward.6}
  #allocation0 [shape = 'u32[]', space=smem, size = 0x4, offset = 0x4, fixed_abs, tag = 'smem constant byte address 0x4 - core index']
  #allocation1 [shape = 'u32[144,128]{1,0:T(1,128)}', space=vmem, size = 0x12000, scoped, tag = 'internal scratch']
  #allocation2 [shape = 'bf16[144,384]{1,0:T(16,128)(2,1)}', space=vmem, size = 0x1b000, scoped, tag = 'scratch operand']
  #allocation3 [shape = 'bf16[32,384]{1,0:T(16,128)(2,1)}', space=vmem, size = 0x6000, scoped, tag = 'scratch operand']
  #allocation4 [shape = 'bf16[288,128]{1,0:T(16,128)(2,1)}', space=vmem, size = 0x12000, scoped, tag = 'scratch operand']
  %s0 = inlined_call_operand.vmem [shape: bf16[2,16,640], index: 0, kind: input, shape index: {}]
  %s1 = inlined_call_operand.vmem [shape: bf16[32,144], index: 1, kind: input, shape index: {}]
  %s2 = inlined_call_operand.vmem [shape: f32[32,1], index: 2, kind: input, shape index: {}]
  %s3 = inlined_call_operand.vmem [shape: bf16[32,288], index: 3, kind: input, shape index: {}]
  %s4 = inlined_call_operand.vmem [shape: f32[32,1], index: 4, kind: input, shape index: {}]
  %s5 = inlined_call_operand.vmem [shape: bf16[384,128], index: 5, kind: input, shape index: {}]
  %s6 = inlined_call_operand.vmem [shape: bf16[32,16], index: 6, kind: input, shape index: {}]
  %s7 = inlined_call_operand.vmem [shape: f32[1,128], index: 7, kind: input, shape index: {}]
  %s8 = inlined_call_operand.vmem [shape: bf16[2,32,384], index: 8, kind: output, shape index: {0}]
  %s9 = inlined_call_operand.vmem [shape: f32[2,32,1], index: 9, kind: output, shape index: {1}]
  %10 = xla_tuple %s8, %s9
  %s11 = sld [smem:[#allocation0]]
  $region73: #{codinet_forward.6} parent=0
    _
  %s13 = ssub.s32 1, %s11
  %s14 = scalar_select 0, %s13, %s11
  loop: start=0, step=1, limit=4
  $region2: #{codinet_forward.6} parent=0 // loop_pre_header
    _
  $region3: #{codinet_forward.6} parent=0 // loop_header
    %s16 = sphi 0, %s20
    %p17 = scmp.ge.s32.totalorder %s16, 4
    %s26 = sphi 0, %s28
    %s29 = sphi 0, %s26
    %s30 = sphi 0, %s29
    %s46 = sphi 0, %s30
    %s50 = sphi 0, %s50
    %s52 = sphi 0, %s50
    %s53 = sphi 0, %s52
    %s67 = sphi 0, %s53
    %s71 = sphi 0, %s71
    %s73 = sphi 0, %s71
    %s74 = sphi 0, %s73
    %s88 = sphi 0, %s74
    %s92 = sphi 0, %s92
    %s94 = sphi 0, %s92
    %s95 = sphi 0, %s94
    %s109 = sphi 0, %s95
    %s113 = sphi 0, %s113
    %s115 = sphi 0, %s113
    %s116 = sphi 0, %s115
    %s130 = sphi 0, %s116
    %s134 = sphi 0, %s134
    %s136 = sphi 0, %s134
    %s137 = sphi 0, %s136
    %s151 = sphi 0, %s137
    %s155 = sphi 0, %s155
    %s157 = sphi 0, %s155
    %s158 = sphi 0, %s157
    %s172 = sphi 0, %s158
    %s176 = sphi 0, %s176
    %s178 = sphi 0, %s176
    %s179 = sphi 0, %s178
    %s193 = sphi 0, %s179
    %s199 = sphi 0, %s201
    %s202 = sphi 0, %s199
    %s203 = sphi 0, %s202
    %s219 = sphi 0, %s203
    %s225 = sphi 0, %s227
    %s228 = sphi 0, %s225
    %s229 = sphi 0, %s228
    %s245 = sphi 0, %s229
  $region4: #{codinet_forward.6} parent=0 // loop_header_branch
    %19 = sbr.rel (%p17) target = $region8
  $region5: #{codinet_forward.6} parent=0 // loop_body
    %s21 = ssub.s32 %s16, 1
    %s22 = ssub.s32 %s16, 2
    %s23 = sadd.s32 %s16, 1
    %s24 = ssub.s32 %s16, %s23
    %p25 = scmp.eq.s32.totalorder %s24, 0
    %s27 = sadd.s32 %s26, 1
    %s28 = scalar_select %p25, %s26, %s27
    %p31 = pneg %p25
    %p32 = scmp.eq.s32.totalorder %s16, 1
    %p33 = por %p31, %p32
    %p34 = scmp.ne.s32.totalorder %s26, %s29
    %p35 = scmp.eq.s32.totalorder %s16, 0
    %p36 = por %p34, %p35
    %p37 = scmp.ne.s32.totalorder %s26, %s29
    %p38 = scmp.eq.s32.totalorder %s21, 1
    %p39 = por %p37, %p38
    %p40 = scmp.ne.s32.totalorder %s29, %s30
    %p41 = scmp.eq.s32.totalorder %s21, 0
    %p42 = por %p40, %p41
    %p43 = scmp.ne.s32.totalorder %s29, %s30
    %p44 = scmp.eq.s32.totalorder %s22, 1
    %p45 = por %p43, %p44
    %p47 = scmp.ne.s32.totalorder %s30, %s46
    %p48 = scmp.eq.s32.totalorder %s22, 0
    %p49 = por %p47, %p48
    %s51 = sadd.s32 %s50, 1
    %p54 = scmp.eq.s32.totalorder %s16, 1
    %p55 = scmp.ne.s32.totalorder %s50, %s52
    %p56 = scmp.eq.s32.totalorder %s16, 0
    %p57 = por %p55, %p56
    %p58 = scmp.ne.s32.totalorder %s50, %s52
    %p59 = scmp.eq.s32.totalorder %s21, 1
    %p60 = por %p58, %p59
    %p61 = scmp.ne.s32.totalorder %s52, %s53
    %p62 = scmp.eq.s32.totalorder %s21, 0
    %p63 = por %p61, %p62
    %p64 = scmp.ne.s32.totalorder %s52, %s53
    %p65 = scmp.eq.s32.totalorder %s22, 1
    %p66 = por %p64, %p65
    %p68 = scmp.ne.s32.totalorder %s53, %s67
    %p69 = scmp.eq.s32.totalorder %s22, 0
    %p70 = por %p68, %p69
    %s72 = sadd.s32 %s71, 1
    %p75 = scmp.eq.s32.totalorder %s16, 1
    %p76 = scmp.ne.s32.totalorder %s71, %s73
    %p77 = scmp.eq.s32.totalorder %s16, 0
    %p78 = por %p76, %p77
    %p79 = scmp.ne.s32.totalorder %s71, %s73
    %p80 = scmp.eq.s32.totalorder %s21, 1
    %p81 = por %p79, %p80
    %p82 = scmp.ne.s32.totalorder %s73, %s74
    %p83 = scmp.eq.s32.totalorder %s21, 0
    %p84 = por %p82, %p83
    %p85 = scmp.ne.s32.totalorder %s73, %s74
    %p86 = scmp.eq.s32.totalorder %s22, 1
    %p87 = por %p85, %p86
    %p89 = scmp.ne.s32.totalorder %s74, %s88
    %p90 = scmp.eq.s32.totalorder %s22, 0
    %p91 = por %p89, %p90
    %s93 = sadd.s32 %s92, 1
    %p96 = scmp.eq.s32.totalorder %s16, 1
    %p97 = scmp.ne.s32.totalorder %s92, %s94
    %p98 = scmp.eq.s32.totalorder %s16, 0
    %p99 = por %p97, %p98
    %p100 = scmp.ne.s32.totalorder %s92, %s94
    %p101 = scmp.eq.s32.totalorder %s21, 1
    %p102 = por %p100, %p101
    %p103 = scmp.ne.s32.totalorder %s94, %s95
    %p104 = scmp.eq.s32.totalorder %s21, 0
    %p105 = por %p103, %p104
    %p106 = scmp.ne.s32.totalorder %s94, %s95
    %p107 = scmp.eq.s32.totalorder %s22, 1
    %p108 = por %p106, %p107
    %p110 = scmp.ne.s32.totalorder %s95, %s109
    %p111 = scmp.eq.s32.totalorder %s22, 0
    %p112 = por %p110, %p111
    %s114 = sadd.s32 %s113, 1
    %p117 = scmp.eq.s32.totalorder %s16, 1
    %p118 = scmp.ne.s32.totalorder %s113, %s115
    %p119 = scmp.eq.s32.totalorder %s16, 0
    %p120 = por %p118, %p119
    %p121 = scmp.ne.s32.totalorder %s113, %s115
    %p122 = scmp.eq.s32.totalorder %s21, 1
    %p123 = por %p121, %p122
    %p124 = scmp.ne.s32.totalorder %s115, %s116
    %p125 = scmp.eq.s32.totalorder %s21, 0
    %p126 = por %p124, %p125
    %p127 = scmp.ne.s32.totalorder %s115, %s116
    %p128 = scmp.eq.s32.totalorder %s22, 1
    %p129 = por %p127, %p128
    %p131 = scmp.ne.s32.totalorder %s116, %s130
    %p132 = scmp.eq.s32.totalorder %s22, 0
    %p133 = por %p131, %p132
    %s135 = sadd.s32 %s134, 1
    %p138 = scmp.eq.s32.totalorder %s16, 1
    %p139 = scmp.ne.s32.totalorder %s134, %s136
    %p140 = scmp.eq.s32.totalorder %s16, 0
    %p141 = por %p139, %p140
    %p142 = scmp.ne.s32.totalorder %s134, %s136
    %p143 = scmp.eq.s32.totalorder %s21, 1
    %p144 = por %p142, %p143
    %p145 = scmp.ne.s32.totalorder %s136, %s137
    %p146 = scmp.eq.s32.totalorder %s21, 0
    %p147 = por %p145, %p146
    %p148 = scmp.ne.s32.totalorder %s136, %s137
    %p149 = scmp.eq.s32.totalorder %s22, 1
    %p150 = por %p148, %p149
    %p152 = scmp.ne.s32.totalorder %s137, %s151
    %p153 = scmp.eq.s32.totalorder %s22, 0
    %p154 = por %p152, %p153
    %s156 = sadd.s32 %s155, 1
    %p159 = scmp.eq.s32.totalorder %s16, 1
    %p160 = scmp.ne.s32.totalorder %s155, %s157
    %p161 = scmp.eq.s32.totalorder %s16, 0
    %p162 = por %p160, %p161
    %p163 = scmp.ne.s32.totalorder %s155, %s157
    %p164 = scmp.eq.s32.totalorder %s21, 1
    %p165 = por %p163, %p164
    %p166 = scmp.ne.s32.totalorder %s157, %s158
    %p167 = scmp.eq.s32.totalorder %s21, 0
    %p168 = por %p166, %p167
    %p169 = scmp.ne.s32.totalorder %s157, %s158
    %p170 = scmp.eq.s32.totalorder %s22, 1
    %p171 = por %p169, %p170
    %p173 = scmp.ne.s32.totalorder %s158, %s172
    %p174 = scmp.eq.s32.totalorder %s22, 0
    %p175 = por %p173, %p174
    %s177 = sadd.s32 %s176, 1
    %p180 = scmp.eq.s32.totalorder %s16, 1
    %p181 = scmp.ne.s32.totalorder %s176, %s178
    %p182 = scmp.eq.s32.totalorder %s16, 0
    %p183 = por %p181, %p182
    %p184 = scmp.ne.s32.totalorder %s176, %s178
    %p185 = scmp.eq.s32.totalorder %s21, 1
    %p186 = por %p184, %p185
    %p187 = scmp.ne.s32.totalorder %s178, %s179
    %p188 = scmp.eq.s32.totalorder %s21, 0
    %p189 = por %p187, %p188
    %p190 = scmp.ne.s32.totalorder %s178, %s179
    %p191 = scmp.eq.s32.totalorder %s22, 1
    %p192 = por %p190, %p191
    %p194 = scmp.ne.s32.totalorder %s179, %s193
    %p195 = scmp.eq.s32.totalorder %s22, 0
    %p196 = por %p194, %p195
    %s197 = ssub.s32 %s16, %s23
    %p198 = scmp.eq.s32.totalorder %s197, 0
    %s200 = sadd.s32 %s199, 1
    %s201 = scalar_select %p198, %s199, %s200
    %p204 = pneg %p198
    %p205 = scmp.eq.s32.totalorder %s16, 1
    %p206 = por %p204, %p205
    %p207 = scmp.ne.s32.totalorder %s199, %s202
    %p208 = scmp.eq.s32.totalorder %s16, 0
    %p209 = por %p207, %p208
    %p210 = scmp.ne.s32.totalorder %s199, %s202
    %p211 = scmp.eq.s32.totalorder %s21, 1
    %p212 = por %p210, %p211
    %p213 = scmp.ne.s32.totalorder %s202, %s203
    %p214 = scmp.eq.s32.totalorder %s21, 0
    %p215 = por %p213, %p214
    %p216 = scmp.ne.s32.totalorder %s202, %s203
    %p217 = scmp.eq.s32.totalorder %s22, 1
    %p218 = por %p216, %p217
    %p220 = scmp.ne.s32.totalorder %s203, %s219
    %p221 = scmp.eq.s32.totalorder %s22, 0
    %p222 = por %p220, %p221
    %s223 = ssub.s32 %s16, %s23
    %p224 = scmp.eq.s32.totalorder %s223, 0
    %s226 = sadd.s32 %s225, 1
    %s227 = scalar_select %p224, %s225, %s226
    %p230 = pneg %p224
    %p231 = scmp.eq.s32.totalorder %s16, 1
    %p232 = por %p230, %p231
    %p233 = scmp.ne.s32.totalorder %s225, %s228
    %p234 = scmp.eq.s32.totalorder %s16, 0
    %p235 = por %p233, %p234
    %p236 = scmp.ne.s32.totalorder %s225, %s228
    %p237 = scmp.eq.s32.totalorder %s21, 1
    %p238 = por %p236, %p237
    %p239 = scmp.ne.s32.totalorder %s228, %s229
    %p240 = scmp.eq.s32.totalorder %s21, 0
    %p241 = por %p239, %p240
    %p242 = scmp.ne.s32.totalorder %s228, %s229
    %p243 = scmp.eq.s32.totalorder %s22, 1
    %p244 = por %p242, %p243
    %p246 = scmp.ne.s32.totalorder %s229, %s245
    %p247 = scmp.eq.s32.totalorder %s22, 0
    %p248 = por %p246, %p247
    %p249 = scmp.le.s32.totalorder 1, %s16
    %p250 = scmp.lt.s32.totalorder %s16, 3
    %p251 = pnand %p249, %p250
    %p252 = pneg %p251
    // Predicated region
    $region9: #{codinet_forward.6} parent=5 // pred_check
      _
    $region10: #{codinet_forward.6} parent=5 // pred_check_branch
      %254 = sbr.rel (%p251) target = $region12
    $region11: #{codinet_forward.6} parent=5 // pred_region
      %s255 = ssub.s32 %s16, 1
      // Predicated region
      $region13: #{codinet_forward.6} parent=11 // pred_check
        %p256 = pneg %p63
      $region14: #{codinet_forward.6} parent=11 // pred_check_branch
        %258 = sbr.rel (%p256) target = $region16
      $region15: #{codinet_forward.6} parent=11 // pred_region
        _
      $region16: #{codinet_forward.6} parent=11 // pred_fallthru
        _
      // Predicated region
      $region17: #{codinet_forward.6} parent=11 // pred_check
        %p259 = pneg %p84
      $region18: #{codinet_forward.6} parent=11 // pred_check_branch
        %261 = sbr.rel (%p259) target = $region20
      $region19: #{codinet_forward.6} parent=11 // pred_region
        _
      $region20: #{codinet_forward.6} parent=11 // pred_fallthru
        _
      // Predicated region
      $region21: #{codinet_forward.6} parent=11 // pred_check
        %p262 = pneg %p105
      $region22: #{codinet_forward.6} parent=11 // pred_check_branch
        %264 = sbr.rel (%p262) target = $region24
      $region23: #{codinet_forward.6} parent=11 // pred_region
        _
      $region24: #{codinet_forward.6} parent=11 // pred_fallthru
        _
      // Predicated region
      $region25: #{codinet_forward.6} parent=11 // pred_check
        %p265 = pneg %p126
      $region26: #{codinet_forward.6} parent=11 // pred_check_branch
        %267 = sbr.rel (%p265) target = $region28
      $region27: #{codinet_forward.6} parent=11 // pred_region
        _
      $region28: #{codinet_forward.6} parent=11 // pred_fallthru
        _
      // Predicated region
      $region29: #{codinet_forward.6} parent=11 // pred_check
        %p268 = pneg %p147
      $region30: #{codinet_forward.6} parent=11 // pred_check_branch
        %270 = sbr.rel (%p268) target = $region32
      $region31: #{codinet_forward.6} parent=11 // pred_region
        _
      $region32: #{codinet_forward.6} parent=11 // pred_fallthru
        _
      // Predicated region
      $region33: #{codinet_forward.6} parent=11 // pred_check
        %p271 = pneg %p168
      $region34: #{codinet_forward.6} parent=11 // pred_check_branch
        %273 = sbr.rel (%p271) target = $region36
      $region35: #{codinet_forward.6} parent=11 // pred_region
        _
      $region36: #{codinet_forward.6} parent=11 // pred_fallthru
        _
      // Predicated region
      $region37: #{codinet_forward.6} parent=11 // pred_check
        %p274 = pneg %p189
      $region38: #{codinet_forward.6} parent=11 // pred_check_branch
        %276 = sbr.rel (%p274) target = $region40
      $region39: #{codinet_forward.6} parent=11 // pred_region
        _
      $region40: #{codinet_forward.6} parent=11 // pred_fallthru
        _
    $region12: #{codinet_forward.6} parent=5 // pred_fallthru
      _
    %p277 = scmp.lt.s32.totalorder %s16, 2
    // Predicated region
    $region41: #{codinet_forward.6} parent=5 // pred_check
      %p278 = pneg %p277
    $region42: #{codinet_forward.6} parent=5 // pred_check_branch
      %280 = sbr.rel (%p278) target = $region44
    $region43: #{codinet_forward.6} parent=5 // pred_region
      // Predicated region
      $region45: #{codinet_forward.6} parent=43 // pred_check
        %p281 = pneg %p36
      $region46: #{codinet_forward.6} parent=43 // pred_check_branch
        %283 = sbr.rel (%p281) target = $region48
      $region47: #{codinet_forward.6} parent=43 // pred_region
        %p284 = scmp.lt.s32.totalorder %s16, 1
        %s285 = scalar_select %p284, %s16, 1
        %s286 = smul.addr %s285, 10
        %s287 = smul.addr %s286, 4
        %s288 = scalar_lea.vmem %s0, %s287
      $region48: #{codinet_forward.6} parent=43 // pred_fallthru
        _
    $region44: #{codinet_forward.6} parent=5 // pred_fallthru
      _
    %p289 = scmp.le.s32.totalorder 1, %s16
    %p290 = scmp.lt.s32.totalorder %s16, 3
    %p291 = pnand %p289, %p290
    %p292 = pneg %p291
    // Predicated region
    $region49: #{codinet_forward.6} parent=5 // pred_check
      _
    $region50: #{codinet_forward.6} parent=5 // pred_check_branch
      %294 = sbr.rel (%p291) target = $region52
    $region51: #{codinet_forward.6} parent=5 // pred_region
      %s295 = ssub.s32 %s16, 1
      %p296 = scmp.lt.s32.totalorder %s21, 1
      %s297 = scalar_select %p296, %s21, 1
      %s298 = smul.addr %s297, 10
      %s299 = smul.addr %s298, 4
      %s300 = scalar_lea.vmem %s0, %s299
      %p301 = pneg %p42
      %p302 = pneg %p39
      %p303 = pneg %p63
      %p304 = pneg %p60
      %p305 = pneg %p84
      %p306 = pneg %p81
      %p307 = pneg %p105
      %p308 = pneg %p102
      %p309 = pneg %p126
      %p310 = pneg %p123
      %p311 = pneg %p147
      %p312 = pneg %p144
      %p313 = pneg %p168
      %p314 = pneg %p165
      %p315 = pneg %p189
      %p316 = pneg %p186
      %p317 = pneg %p215
      %p318 = pneg %p212
      %p319 = scmp.lt.s32.totalorder %s21, 1
      %s320 = scalar_select %p319, %s21, 1
      %s321 = smul.addr %s320, 12
      %s322 = smul.addr %s321, 4
      %s323 = scalar_lea.vmem %s8, %s322
      %p324 = pneg %p241
      %p325 = pneg %p238
      %p326 = scmp.lt.s32.totalorder %s21, 1
      %s327 = scalar_select %p326, %s21, 1
      %s328 = smul.addr %s327, 4
      %s329 = smul.addr %s328, 8
      %s330 = scalar_lea.vmem %s9, %s329
      %p331 = scmp.lt.s32.totalorder %s21, 1
      %s332 = scalar_select %p331, %s21, 1
      %s333 = smul.addr %s332, 10
      %s334 = smul.addr %s333, 4
      %s335 = scalar_lea.vmem %s0, %s334
      %p336 = scmp.lt.s32.totalorder %s21, 1
      %s337 = scalar_select %p336, %s21, 1
      %s338 = smul.addr %s337, 12
      %s339 = smul.addr %s338, 4
      %s340 = scalar_lea.vmem %s8, %s339
      %p341 = scmp.lt.s32.totalorder %s21, 1
      %s342 = scalar_select %p341, %s21, 1
      %s343 = smul.addr %s342, 4
      %s344 = smul.addr %s343, 8
      %s345 = scalar_lea.vmem %s9, %s344
      %v347 = vld [vmem:[%s335] sm:$0xff]
      %v348 = vld [vmem:[%s335 + $0x8] sm:$0xff]
      %v349 = vld [vmem:[%s335 + $0x14] sm:$0xff]
      %v350 = vld [vmem:[%s335 + $0x1c] sm:$0xff]
      %v355 = vunpack.c.l.b16 %v347
      %v356 = vunpack.c.h.b16 %v347
      %v357 = vunpack.c.l.b16 %v348
      %v358 = vunpack.c.h.b16 %v348
      %v359 = vunpack.c.l.b16 %v349
      %v360 = vunpack.c.h.b16 %v349
      %v361 = vunpack.c.l.b16 %v350
      %v362 = vunpack.c.h.b16 %v350
      %v363 = vpack.c.b16 %v359, %v355
      %v364 = vpack.c.b16 %v360, %v356
      %v365 = vpack.c.b16 %v361, %v357
      %v366 = vpack.c.b16 %v362, %v358
      %367 = vrot.lane.b32.xlu0 %v363, 19
      %v368 = vpop.permute.xlu0 %367
      %369 = vrot.lane.b32.xlu0 %v364, 19
      %v370 = vpop.permute.xlu0 %369
      %371 = vrot.lane.b32.xlu0 %v365, 19
      %v372 = vpop.permute.xlu0 %371
      %373 = vrot.lane.b32.xlu0 %v366, 19
      %v374 = vpop.permute.xlu0 %373
      %vm375 = vcmask 154624
      %v376 = vsel %vm375, %v368, %v370
      %v377 = vsel %vm375, %v370, %v372
      %v378 = vsel %vm375, %v372, %v374
      %382 = vst [vmem:[#allocation2] sm:$0xff] %v376
      %383 = vst [vmem:[#allocation2 + $0x8] sm:$0xff] %v377
      %384 = vst [vmem:[#allocation2 + $0x10] sm:$0xff] %v378
      %v385 = vld [vmem:[%s335] sm:$0xff]
      %v386 = vld [vmem:[%s335 + $0x8] sm:$0xff]
      %v387 = vld [vmem:[%s335 + $0x14] sm:$0xff]
      %v388 = vld [vmem:[%s335 + $0x1c] sm:$0xff]
      %v393 = vunpack.c.l.b16 %v385
      %v394 = vunpack.c.h.b16 %v385
      %v395 = vunpack.c.l.b16 %v386
      %v396 = vunpack.c.h.b16 %v386
      %v397 = vunpack.c.l.b16 %v387
      %v398 = vunpack.c.h.b16 %v387
      %v399 = vunpack.c.l.b16 %v388
      %v400 = vunpack.c.h.b16 %v388
      %v401 = vpack.c.b16 %v397, %v393
      %v402 = vpack.c.b16 %v398, %v394
      %v403 = vpack.c.b16 %v399, %v395
      %v404 = vpack.c.b16 %v400, %v396
      %405 = vrot.lane.b32.xlu0 %v401, 18
      %v406 = vpop.permute.xlu0 %405
      %407 = vrot.lane.b32.xlu0 %v402, 18
      %v408 = vpop.permute.xlu0 %407
      %409 = vrot.lane.b32.xlu0 %v403, 18
      %v410 = vpop.permute.xlu0 %409
      %411 = vrot.lane.b32.xlu0 %v404, 18
      %v412 = vpop.permute.xlu0 %411
      %vm413 = vcmask 146432
      %v414 = vsel %vm413, %v406, %v408
      %v415 = vsel %vm413, %v408, %v410
      %v416 = vsel %vm413, %v410, %v412
      %420 = vst [vmem:[#allocation2 + $0x18] sm:$0xff] %v414
      %421 = vst [vmem:[#allocation2 + $0x20] sm:$0xff] %v415
      %422 = vst [vmem:[#allocation2 + $0x28] sm:$0xff] %v416
      %v423 = vld [vmem:[%s335] sm:$0xff]
      %v424 = vld [vmem:[%s335 + $0x8] sm:$0xff]
      %v425 = vld [vmem:[%s335 + $0x14] sm:$0xff]
      %v426 = vld [vmem:[%s335 + $0x1c] sm:$0xff]
      %v431 = vunpack.c.l.b16 %v423
      %v432 = vunpack.c.h.b16 %v423
      %v433 = vunpack.c.l.b16 %v424
      %v434 = vunpack.c.h.b16 %v424
      %v435 = vunpack.c.l.b16 %v425
      %v436 = vunpack.c.h.b16 %v425
      %v437 = vunpack.c.l.b16 %v426
      %v438 = vunpack.c.h.b16 %v426
      %v439 = vpack.c.b16 %v435, %v431
      %v440 = vpack.c.b16 %v436, %v432
      %v441 = vpack.c.b16 %v437, %v433
      %v442 = vpack.c.b16 %v438, %v434
      %443 = vrot.lane.b32.xlu0 %v439, 17
      %v444 = vpop.permute.xlu0 %443
      %445 = vrot.lane.b32.xlu0 %v440, 17
      %v446 = vpop.permute.xlu0 %445
      %447 = vrot.lane.b32.xlu0 %v441, 17
      %v448 = vpop.permute.xlu0 %447
      %449 = vrot.lane.b32.xlu0 %v442, 17
      %v450 = vpop.permute.xlu0 %449
      %vm451 = vcmask 138240
      %v452 = vsel %vm451, %v444, %v446
      %v453 = vsel %vm451, %v446, %v448
      %v454 = vsel %vm451, %v448, %v450
      %458 = vst [vmem:[#allocation2 + $0x30] sm:$0xff] %v452
      %459 = vst [vmem:[#allocation2 + $0x38] sm:$0xff] %v453
      %460 = vst [vmem:[#allocation2 + $0x40] sm:$0xff] %v454
      %v461 = vld [vmem:[%s335] sm:$0xff]
      %v462 = vld [vmem:[%s335 + $0x8] sm:$0xff]
      %v463 = vld [vmem:[%s335 + $0x14] sm:$0xff]
      %v464 = vld [vmem:[%s335 + $0x1c] sm:$0xff]
      %v469 = vunpack.c.l.b16 %v461
      %v470 = vunpack.c.h.b16 %v461
      %v471 = vunpack.c.l.b16 %v462
      %v472 = vunpack.c.h.b16 %v462
      %v473 = vunpack.c.l.b16 %v463
      %v474 = vunpack.c.h.b16 %v463
      %v475 = vunpack.c.l.b16 %v464
      %v476 = vunpack.c.h.b16 %v464
      %v477 = vpack.c.b16 %v473, %v469
      %v478 = vpack.c.b16 %v474, %v470
      %v479 = vpack.c.b16 %v475, %v471
      %v480 = vpack.c.b16 %v476, %v472
      %481 = vrot.lane.b32.xlu0 %v477, 1
      %v482 = vpop.permute.xlu0 %481
      %483 = vrot.lane.b32.xlu0 %v478, 1
      %v484 = vpop.permute.xlu0 %483
      %485 = vrot.lane.b32.xlu0 %v479, 1
      %v486 = vpop.permute.xlu0 %485
      %487 = vrot.lane.b32.xlu0 %v480, 1
      %v488 = vpop.permute.xlu0 %487
      %vm489 = vcmask 7168
      %v490 = vsel %vm489, %v482, %v484
      %v491 = vsel %vm489, %v484, %v486
      %v492 = vsel %vm489, %v486, %v488
      %496 = vst [vmem:[#allocation2 + $0x48] sm:$0xff] %v490
      %497 = vst [vmem:[#allocation2 + $0x50] sm:$0xff] %v491
      %498 = vst [vmem:[#allocation2 + $0x58] sm:$0xff] %v492
      %v499 = vld [vmem:[%s335 + $0x4] sm:$0xff]
      %v500 = vld [vmem:[%s335 + $0xc] sm:$0xf]
      %v501 = vld [vmem:[%s335 + $0x18] sm:$0xff]
      %v502 = vld [vmem:[%s335 + $0x20] sm:$0xf]
      %v507 = vunpack.c.l.b16 %v499
      %v508 = vunpack.c.h.b16 %v499
      %v509 = vunpack.c.l.b16 %v500
      %v510 = vunpack.c.l.b16 %v501
      %v511 = vunpack.c.h.b16 %v501
      %v512 = vunpack.c.l.b16 %v502
      %v513 = vpack.c.b16 %v510, %v507
      %v514 = vpack.c.b16 %v511, %v508
      %v515 = vpack.c.b16 %v512, %v509
      %519 = vst [vmem:[#allocation2 + $0x60] sm:$0xff] %v513
      %520 = vst [vmem:[#allocation2 + $0x68] sm:$0xff] %v514
      %521 = vst [vmem:[#allocation2 + $0x70] sm:$0xff] %v515
      %v522 = vld [vmem:[%s335 + $0x4] sm:$0xff]
      %v523 = vld [vmem:[%s335 + $0xc] sm:$0xff]
      %v524 = vld [vmem:[%s335 + $0x18] sm:$0xff]
      %v525 = vld [vmem:[%s335 + $0x20] sm:$0xff]
      %v530 = vunpack.c.l.b16 %v522
      %v531 = vunpack.c.h.b16 %v522
      %v532 = vunpack.c.l.b16 %v523
      %v533 = vunpack.c.h.b16 %v523
      %v534 = vunpack.c.l.b16 %v524
      %v535 = vunpack.c.h.b16 %v524
      %v536 = vunpack.c.l.b16 %v525
      %v537 = vunpack.c.h.b16 %v525
      %v538 = vpack.c.b16 %v534, %v530
      %v539 = vpack.c.b16 %v535, %v531
      %v540 = vpack.c.b16 %v536, %v532
      %v541 = vpack.c.b16 %v537, %v533
      %542 = vrot.lane.b32.xlu0 %v538, 127
      %v543 = vpop.permute.xlu0 %542
      %544 = vrot.lane.b32.xlu0 %v539, 127
      %v545 = vpop.permute.xlu0 %544
      %546 = vrot.lane.b32.xlu0 %v540, 127
      %v547 = vpop.permute.xlu0 %546
      %548 = vrot.lane.b32.xlu0 %v541, 127
      %v549 = vpop.permute.xlu0 %548
      %vm550 = vcmask 1039360
      %v551 = vsel %vm550, %v543, %v545
      %v552 = vsel %vm550, %v545, %v547
      %v553 = vsel %vm550, %v547, %v549
      %557 = vst [vmem:[#allocation2 + $0x78] sm:$0xff] %v551
      %558 = vst [vmem:[#allocation2 + $0x80] sm:$0xff] %v552
      %559 = vst [vmem:[#allocation2 + $0x88] sm:$0xff] %v553
      %v560 = vld [vmem:[%s335 + $0x4] sm:$0xff]
      %v561 = vld [vmem:[%s335 + $0xc] sm:$0xff]
      %v562 = vld [vmem:[%s335 + $0x18] sm:$0xff]
      %v563 = vld [vmem:[%s335 + $0x20] sm:$0xff]
      %v568 = vunpack.c.l.b16 %v560
      %v569 = vunpack.c.h.b16 %v560
      %v570 = vunpack.c.l.b16 %v561
      %v571 = vunpack.c.h.b16 %v561
      %v572 = vunpack.c.l.b16 %v562
      %v573 = vunpack.c.h.b16 %v562
      %v574 = vunpack.c.l.b16 %v563
      %v575 = vunpack.c.h.b16 %v563
      %v576 = vpack.c.b16 %v572, %v568
      %v577 = vpack.c.b16 %v573, %v569
      %v578 = vpack.c.b16 %v574, %v570
      %v579 = vpack.c.b16 %v575, %v571
      %580 = vrot.lane.b32.xlu0 %v576, 111
      %v581 = vpop.permute.xlu0 %580
      %582 = vrot.lane.b32.xlu0 %v577, 111
      %v583 = vpop.permute.xlu0 %582
      %584 = vrot.lane.b32.xlu0 %v578, 111
      %v585 = vpop.permute.xlu0 %584
      %586 = vrot.lane.b32.xlu0 %v579, 111
      %v587 = vpop.permute.xlu0 %586
      %vm588 = vcmask 908288
      %v589 = vsel %vm588, %v581, %v583
      %v590 = vsel %vm588, %v583, %v585
      %v591 = vsel %vm588, %v585, %v587
      %595 = vst [vmem:[#allocation2 + $0x90] sm:$0xff] %v589
      %596 = vst [vmem:[#allocation2 + $0x98] sm:$0xff] %v590
      %597 = vst [vmem:[#allocation2 + $0xa0] sm:$0xff] %v591
      %v598 = vld [vmem:[%s335 + $0x4] sm:$0xff]
      %v599 = vld [vmem:[%s335 + $0xc] sm:$0xff]
      %v600 = vld [vmem:[%s335 + $0x18] sm:$0xff]
      %v601 = vld [vmem:[%s335 + $0x20] sm:$0xff]
      %v606 = vunpack.c.l.b16 %v598
      %v607 = vunpack.c.h.b16 %v598
      %v608 = vunpack.c.l.b16 %v599
      %v609 = vunpack.c.h.b16 %v599
      %v610 = vunpack.c.l.b16 %v600
      %v611 = vunpack.c.h.b16 %v600
      %v612 = vunpack.c.l.b16 %v601
      %v613 = vunpack.c.h.b16 %v601
      %v614 = vpack.c.b16 %v610, %v606
      %v615 = vpack.c.b16 %v611, %v607
      %v616 = vpack.c.b16 %v612, %v608
      %v617 = vpack.c.b16 %v613, %v609
      %618 = vrot.lane.b32.xlu0 %v614, 110
      %v619 = vpop.permute.xlu0 %618
      %620 = vrot.lane.b32.xlu0 %v615, 110
      %v621 = vpop.permute.xlu0 %620
      %622 = vrot.lane.b32.xlu0 %v616, 110
      %v623 = vpop.permute.xlu0 %622
      %624 = vrot.lane.b32.xlu0 %v617, 110
      %v625 = vpop.permute.xlu0 %624
      %vm626 = vcmask 900096
      %v627 = vsel %vm626, %v619, %v621
      %v628 = vsel %vm626, %v621, %v623
      %v629 = vsel %vm626, %v623, %v625
      %633 = vst [vmem:[#allocation2 + $0xa8] sm:$0xff] %v627
      %634 = vst [vmem:[#allocation2 + $0xb0] sm:$0xff] %v628
      %635 = vst [vmem:[#allocation2 + $0xb8] sm:$0xff] %v629
      %v636 = vld [vmem:[%s335 + $0x4] sm:$0xff]
      %v637 = vld [vmem:[%s335 + $0xc] sm:$0xff]
      %v638 = vld [vmem:[%s335 + $0x18] sm:$0xff]
      %v639 = vld [vmem:[%s335 + $0x20] sm:$0xff]
      %v644 = vunpack.c.l.b16 %v636
      %v645 = vunpack.c.h.b16 %v636
      %v646 = vunpack.c.l.b16 %v637
      %v647 = vunpack.c.h.b16 %v637
      %v648 = vunpack.c.l.b16 %v638
      %v649 = vunpack.c.h.b16 %v638
      %v650 = vunpack.c.l.b16 %v639
      %v651 = vunpack.c.h.b16 %v639
      %v652 = vpack.c.b16 %v648, %v644
      %v653 = vpack.c.b16 %v649, %v645
      %v654 = vpack.c.b16 %v650, %v646
      %v655 = vpack.c.b16 %v651, %v647
      %656 = vrot.lane.b32.xlu0 %v652, 109
      %v657 = vpop.permute.xlu0 %656
      %658 = vrot.lane.b32.xlu0 %v653, 109
      %v659 = vpop.permute.xlu0 %658
      %660 = vrot.lane.b32.xlu0 %v654, 109
      %v661 = vpop.permute.xlu0 %660
      %662 = vrot.lane.b32.xlu0 %v655, 109
      %v663 = vpop.permute.xlu0 %662
      %vm664 = vcmask 891904
      %v665 = vsel %vm664, %v657, %v659
      %v666 = vsel %vm664, %v659, %v661
      %v667 = vsel %vm664, %v661, %v663
      %671 = vst [vmem:[#allocation2 + $0xc0] sm:$0xff] %v665
      %672 = vst [vmem:[#allocation2 + $0xc8] sm:$0xff] %v666
      %673 = vst [vmem:[#allocation2 + $0xd0] sm:$0xff] %v667
      %v674 = vld [vmem:[%s1] sm:$0xff]
      %v675 = vld [vmem:[%s1 + $0x8] sm:$0xff]
      %v676 = vld [vmem:[%s1 + $0x10] sm:$0xff]
      %v677 = vld [vmem:[%s1 + $0x18] sm:$0xff]
      %v678 = vld [vmem:[#allocation2] sm:$0xff]
      %v679 = vld [vmem:[#allocation2 + $0x8] sm:$0xff]
      %v680 = vld [vmem:[#allocation2 + $0x10] sm:$0xff]
      %v681 = vld [vmem:[#allocation2 + $0x18] sm:$0xff]
      %v682 = vld [vmem:[#allocation2 + $0x20] sm:$0xff]
      %v683 = vld [vmem:[#allocation2 + $0x28] sm:$0xff]
      %v684 = vld [vmem:[#allocation2 + $0x30] sm:$0xff]
      %v685 = vld [vmem:[#allocation2 + $0x38] sm:$0xff]
      %v686 = vld [vmem:[#allocation2 + $0x40] sm:$0xff]
      %v687 = vld [vmem:[#allocation2 + $0x48] sm:$0xff]
      %v688 = vld [vmem:[#allocation2 + $0x50] sm:$0xff]
      %v689 = vld [vmem:[#allocation2 + $0x58] sm:$0xff]
      %v690 = vld [vmem:[#allocation2 + $0x60] sm:$0xff]
      %v691 = vld [vmem:[#allocation2 + $0x68] sm:$0xff]
      %v692 = vld [vmem:[#allocation2 + $0x70] sm:$0xff]
      %v693 = vld [vmem:[#allocation2 + $0x78] sm:$0xff]
      %v694 = vld [vmem:[#allocation2 + $0x80] sm:$0xff]
      %v695 = vld [vmem:[#allocation2 + $0x88] sm:$0xff]
      %v696 = vld [vmem:[#allocation2 + $0x90] sm:$0xff]
      %v697 = vld [vmem:[#allocation2 + $0x98] sm:$0xff]
      %v698 = vld [vmem:[#allocation2 + $0xa0] sm:$0xff]
      %v699 = vld [vmem:[#allocation2 + $0xa8] sm:$0xff]
      %v700 = vld [vmem:[#allocation2 + $0xb0] sm:$0xff]
      %v701 = vld [vmem:[#allocation2 + $0xb8] sm:$0xff]
      %v702 = vld [vmem:[#allocation2 + $0xc0] sm:$0xff]
      %v703 = vld [vmem:[#allocation2 + $0xc8] sm:$0xff]
      %v704 = vld [vmem:[#allocation2 + $0xd0] sm:$0xff]
      %v705 = vld [vmem:[%s2] sm:$0xff]
      %v706 = vld [vmem:[%s2 + $0x8] sm:$0xff]
      %v707 = vld [vmem:[%s2 + $0x10] sm:$0xff]
      %v708 = vld [vmem:[%s2 + $0x18] sm:$0xff]
      %710 = vset.pattern.permute.xlu0 0
      %711 = vperm.xlu0 %710, %v705
      %v712 = vpop.permute.xlu0 %711
      %715 = vset.pattern.permute.xlu0 0
      %716 = vperm.xlu0 %715, %v706
      %v717 = vpop.permute.xlu0 %716
      %720 = vset.pattern.permute.xlu0 0
      %721 = vperm.xlu0 %720, %v707
      %v722 = vpop.permute.xlu0 %721
      %725 = vset.pattern.permute.xlu0 0
      %726 = vperm.xlu0 %725, %v708
      %v727 = vpop.permute.xlu0 %726
      %v733 = vunpack.c.l.b16 %v674
      %v734 = vunpack.c.h.b16 %v674
      %v735 = vunpack.c.l.b16 %v675
      %v736 = vunpack.c.h.b16 %v675
      %v737 = vunpack.c.l.b16 %v676
      %v738 = vunpack.c.h.b16 %v676
      %v739 = vunpack.c.l.b16 %v677
      %v740 = vunpack.c.h.b16 %v677
      %v741 = vpack.c.b16 %v735, %v733
      %v742 = vpack.c.b16 %v736, %v734
      %v743 = vpack.c.b16 %v739, %v737
      %v744 = vpack.c.b16 %v740, %v738
      %vm747 = vcmask 130048
      %v749 = vsel %vm747, %v742, 0
      %v752 = vsel %vm747, %v744, 0
      %754 = vmatprep.subr.bf16.mxu0 %v679
      %755 = vmatpush1.bf16.msra.mxu0 %v678
      %756 = vmatprep.subr.bf16.mxu0 %v682
      %757 = vmatpush1.bf16.msra.mxu0 %v681
      %758 = vmatprep.subr.bf16.mxu0 %v685
      %759 = vmatpush1.bf16.msra.mxu0 %v684
      %760 = vmatprep.subr.bf16.mxu0 %v688
      %761 = vmatpush1.bf16.msra.mxu0 %v687
      %762 = vmatprep.subr.bf16.mxu0 %v691
      %763 = vmatpush1.bf16.msra.mxu0 %v690
      %764 = vmatprep.subr.bf16.mxu0 %v694
      %765 = vmatpush1.bf16.msra.mxu0 %v693
      %766 = vmatprep.subr.bf16.mxu0 %v697
      %767 = vmatpush1.bf16.msra.mxu0 %v696
      %768 = vmatprep.subr.bf16.mxu0 %v700
      %769 = vmatpush1.bf16.msra.mxu0 %v699
      %770 = vmatprep.subr.bf16.mxu0 %v703
      %771 = vmatpush1.bf16.msra.mxu0 %v702
      %772 = vmatprep.subr.bf16.mxu0 0
      %773 = vmatpush1.bf16.msra.mxu0 0
      %774 = vmatprep.subr.bf16.mxu0 0
      %775 = vmatpush1.bf16.msra.mxu0 0
      %776 = vmatprep.subr.bf16.mxu0 0
      %777 = vmatpush1.bf16.msra.mxu0 0
      %778 = vmatprep.subr.bf16.mxu0 0
      %779 = vmatpush1.bf16.msra.mxu0 0
      %780 = vmatprep.subr.bf16.mxu0 0
      %781 = vmatpush1.bf16.msra.mxu0 0
      %782 = vmatprep.subr.bf16.mxu0 0
      %783 = vmatpush1.bf16.msra.mxu0 0
      %784 = vmatprep.subr.bf16.mxu0 0
      %785 = vmatpush1.bf16.msra.mxu0 0
      %786 = vmatprep.mubr.bf16.mxu0 %v749
      %787 = vmatmul.mubr.bf16.gmra.mrb[0].mxu0 %v741
      %v788 = vpop.f32.mrb[0].mxu0
      %v789 = vadd.f32 %v712, %v788
      %v790 = vpop.f32.mrb[0].mxu0
      %v791 = vadd.f32 %v712, %v790
      %v792 = vpop.f32.mrb[0].mxu0
      %v793 = vadd.f32 %v717, %v792
      %v794 = vpop.f32.mrb[0].mxu0
      %v795 = vadd.f32 %v717, %v794
      %796 = vmatprep.mubr.bf16.mxu0 %v752
      %797 = vmatmul.mubr.bf16.gmra.mrb[0].mxu0 %v743
      %v798 = vpop.f32.mrb[0].mxu0
      %v799 = vadd.f32 %v722, %v798
      %v800 = vpop.f32.mrb[0].mxu0
      %v801 = vadd.f32 %v722, %v800
      %v802 = vpop.f32.mrb[0].mxu0
      %v803 = vadd.f32 %v727, %v802
      %v804 = vpop.f32.mrb[0].mxu0
      %v805 = vadd.f32 %v727, %v804
      %806 = vdwg.mxu0
      %807 = vmatprep.subr.bf16.mxu0 0
      %808 = vmatpush1.bf16.msra.mxu0 %v680
      %809 = vmatprep.subr.bf16.mxu0 0
      %810 = vmatpush1.bf16.msra.mxu0 %v683
      %811 = vmatprep.subr.bf16.mxu0 0
      %812 = vmatpush1.bf16.msra.mxu0 %v686
      %813 = vmatprep.subr.bf16.mxu0 0
      %814 = vmatpush1.bf16.msra.mxu0 %v689
      %815 = vmatprep.subr.bf16.mxu0 0
      %816 = vmatpush1.bf16.msra.mxu0 %v692
      %817 = vmatprep.subr.bf16.mxu0 0
      %818 = vmatpush1.bf16.msra.mxu0 %v695
      %819 = vmatprep.subr.bf16.mxu0 0
      %820 = vmatpush1.bf16.msra.mxu0 %v698
      %821 = vmatprep.subr.bf16.mxu0 0
      %822 = vmatpush1.bf16.msra.mxu0 %v701
      %823 = vmatprep.subr.bf16.mxu0 0
      %824 = vmatpush1.bf16.msra.mxu0 %v704
      %825 = vmatprep.subr.bf16.mxu0 0
      %826 = vmatpush1.bf16.msra.mxu0 0
      %827 = vmatprep.subr.bf16.mxu0 0
      %828 = vmatpush1.bf16.msra.mxu0 0
      %829 = vmatprep.subr.bf16.mxu0 0
      %830 = vmatpush1.bf16.msra.mxu0 0
      %831 = vmatprep.subr.bf16.mxu0 0
      %832 = vmatpush1.bf16.msra.mxu0 0
      %833 = vmatprep.subr.bf16.mxu0 0
      %834 = vmatpush1.bf16.msra.mxu0 0
      %835 = vmatprep.subr.bf16.mxu0 0
      %836 = vmatpush1.bf16.msra.mxu0 0
      %837 = vmatprep.subr.bf16.mxu0 0
      %838 = vmatpush1.bf16.msra.mxu0 0
      %839 = vmatprep.mubr.bf16.mxu0 %v749
      %840 = vmatmul.mubr.bf16.gmra.mrb[0].mxu0 %v741
      %v841 = vpop.f32.mrb[0].mxu0
      %v842 = vadd.f32 %v712, %v841
      %v843 = vpop.f32.mrb[0].mxu0
      %v844 = vpop.f32.mrb[0].mxu0
      %v845 = vadd.f32 %v717, %v844
      %v846 = vpop.f32.mrb[0].mxu0
      %847 = vmatprep.mubr.bf16.mxu0 %v752
      %848 = vmatmul.mubr.bf16.gmra.mrb[0].mxu0 %v743
      %v849 = vpop.f32.mrb[0].mxu0
      %v850 = vadd.f32 %v722, %v849
      %v851 = vpop.f32.mrb[0].mxu0
      %v852 = vpop.f32.mrb[0].mxu0
      %v853 = vadd.f32 %v727, %v852
      %v854 = vpop.f32.mrb[0].mxu0
      %855 = vdwg.mxu0
      %v856 = vmax.f32 %v789, 0.0
      %v857 = vmax.f32 %v791, 0.0
      %v858 = vmax.f32 %v842, 0.0
      %v859 = vmax.f32 %v793, 0.0
      %v860 = vmax.f32 %v795, 0.0
      %v861 = vmax.f32 %v845, 0.0
      %v862 = vmax.f32 %v799, 0.0
      %v863 = vmax.f32 %v801, 0.0
      %v864 = vmax.f32 %v850, 0.0
      %v865 = vmax.f32 %v803, 0.0
      %v866 = vmax.f32 %v805, 0.0
      %v867 = vmax.f32 %v853, 0.0
      %v868 = vpack.c.bf16 %v859, %v856
      %v869 = vpack.c.bf16 %v860, %v857
      %v870 = vpack.c.bf16 %v861, %v858
      %v871 = vpack.c.bf16 %v865, %v862
      %v872 = vpack.c.bf16 %v866, %v863
      %v873 = vpack.c.bf16 %v867, %v864
      %v874 = vld [vmem:[%s5] sm:$0xf]
      %v875 = vld [vmem:[%s5 + $0x4] sm:$0xf]
      %v876 = vld [vmem:[%s5 + $0x8] sm:$0xf]
      %v877 = vld [vmem:[%s5 + $0xc] sm:$0xf]
      %v878 = vld [vmem:[%s5 + $0x10] sm:$0xf]
      %v879 = vld [vmem:[%s5 + $0x14] sm:$0xf]
      %v880 = vld [vmem:[%s5 + $0x18] sm:$0xf]
      %v881 = vld [vmem:[%s5 + $0x1c] sm:$0xf]
      %v882 = vld [vmem:[%s5 + $0x20] sm:$0xf]
      %v883 = vld [vmem:[%s5 + $0x24] sm:$0xf]
      %v884 = vld [vmem:[%s5 + $0x28] sm:$0xf]
      %v885 = vld [vmem:[%s5 + $0x2c] sm:$0xf]
      %v886 = vld [vmem:[%s5 + $0x30] sm:$0xf]
      %v887 = vld [vmem:[%s5 + $0x34] sm:$0xf]
      %v888 = vld [vmem:[%s5 + $0x38] sm:$0xf]
      %v889 = vld [vmem:[%s5 + $0x3c] sm:$0xf]
      %v890 = vld [vmem:[%s5 + $0x40] sm:$0xf]
      %v891 = vld [vmem:[%s5 + $0x44] sm:$0xf]
      %v892 = vld [vmem:[%s5 + $0x48] sm:$0xf]
      %v893 = vld [vmem:[%s5 + $0x4c] sm:$0xf]
      %v894 = vld [vmem:[%s5 + $0x50] sm:$0xf]
      %v895 = vld [vmem:[%s5 + $0x54] sm:$0xf]
      %v896 = vld [vmem:[%s5 + $0x58] sm:$0xf]
      %v897 = vld [vmem:[%s5 + $0x5c] sm:$0xf]
      %v898 = vld [vmem:[%s5 + $0x60] sm:$0xf]
      %v899 = vld [vmem:[%s5 + $0x64] sm:$0xf]
      %v900 = vld [vmem:[%s5 + $0x68] sm:$0xf]
      %v901 = vld [vmem:[%s5 + $0x6c] sm:$0xf]
      %v902 = vld [vmem:[%s5 + $0x70] sm:$0xf]
      %v903 = vld [vmem:[%s5 + $0x74] sm:$0xf]
      %v904 = vld [vmem:[%s5 + $0x78] sm:$0xf]
      %v905 = vld [vmem:[%s5 + $0x7c] sm:$0xf]
      %v906 = vld [vmem:[%s5 + $0x80] sm:$0xf]
      %v907 = vld [vmem:[%s5 + $0x84] sm:$0xf]
      %v908 = vld [vmem:[%s5 + $0x88] sm:$0xf]
      %v909 = vld [vmem:[%s5 + $0x8c] sm:$0xf]
      %v910 = vld [vmem:[%s5 + $0x90] sm:$0xf]
      %v911 = vld [vmem:[%s5 + $0x94] sm:$0xf]
      %v912 = vld [vmem:[%s5 + $0x98] sm:$0xf]
      %v913 = vld [vmem:[%s5 + $0x9c] sm:$0xf]
      %v914 = vld [vmem:[%s5 + $0xa0] sm:$0xf]
      %v915 = vld [vmem:[%s5 + $0xa4] sm:$0xf]
      %v916 = vld [vmem:[%s5 + $0xa8] sm:$0xf]
      %v917 = vld [vmem:[%s5 + $0xac] sm:$0xf]
      %v918 = vld [vmem:[%s5 + $0xb0] sm:$0xf]
      %v919 = vld [vmem:[%s5 + $0xb4] sm:$0xf]
      %v920 = vld [vmem:[%s5 + $0xb8] sm:$0xf]
      %v921 = vld [vmem:[%s5 + $0xbc] sm:$0xf]
      %v970 = vunpack.c.l.b16 %v874
      %v971 = vunpack.c.l.b16 %v875
      %v972 = vunpack.c.l.b16 %v876
      %v973 = vunpack.c.l.b16 %v877
      %v974 = vunpack.c.l.b16 %v878
      %v975 = vunpack.c.l.b16 %v879
      %v976 = vunpack.c.l.b16 %v880
      %v977 = vunpack.c.l.b16 %v881
      %v978 = vunpack.c.l.b16 %v882
      %v979 = vunpack.c.l.b16 %v883
      %v980 = vunpack.c.l.b16 %v884
      %v981 = vunpack.c.l.b16 %v885
      %v982 = vunpack.c.l.b16 %v886
      %v983 = vunpack.c.l.b16 %v887
      %v984 = vunpack.c.l.b16 %v888
      %v985 = vunpack.c.l.b16 %v889
      %v986 = vunpack.c.l.b16 %v890
      %v987 = vunpack.c.l.b16 %v891
      %v988 = vunpack.c.l.b16 %v892
      %v989 = vunpack.c.l.b16 %v893
      %v990 = vunpack.c.l.b16 %v894
      %v991 = vunpack.c.l.b16 %v895
      %v992 = vunpack.c.l.b16 %v896
      %v993 = vunpack.c.l.b16 %v897
      %v994 = vunpack.c.l.b16 %v898
      %v995 = vunpack.c.l.b16 %v899
      %v996 = vunpack.c.l.b16 %v900
      %v997 = vunpack.c.l.b16 %v901
      %v998 = vunpack.c.l.b16 %v902
      %v999 = vunpack.c.l.b16 %v903
      %v1000 = vunpack.c.l.b16 %v904
      %v1001 = vunpack.c.l.b16 %v905
      %v1002 = vunpack.c.l.b16 %v906
      %v1003 = vunpack.c.l.b16 %v907
      %v1004 = vunpack.c.l.b16 %v908
      %v1005 = vunpack.c.l.b16 %v909
      %v1006 = vunpack.c.l.b16 %v910
      %v1007 = vunpack.c.l.b16 %v911
      %v1008 = vunpack.c.l.b16 %v912
      %v1009 = vunpack.c.l.b16 %v913
      %v1010 = vunpack.c.l.b16 %v914
      %v1011 = vunpack.c.l.b16 %v915
      %v1012 = vunpack.c.l.b16 %v916
      %v1013 = vunpack.c.l.b16 %v917
      %v1014 = vunpack.c.l.b16 %v918
      %v1015 = vunpack.c.l.b16 %v919
      %v1016 = vunpack.c.l.b16 %v920
      %v1017 = vunpack.c.l.b16 %v921
      %v1018 = vpack.c.b16 %v971, %v970
      %v1019 = vpack.c.b16 %v973, %v972
      %v1020 = vpack.c.b16 %v975, %v974
      %v1021 = vpack.c.b16 %v977, %v976
      %v1022 = vpack.c.b16 %v979, %v978
      %v1023 = vpack.c.b16 %v981, %v980
      %v1024 = vpack.c.b16 %v983, %v982
      %v1025 = vpack.c.b16 %v985, %v984
      %v1026 = vpack.c.b16 %v987, %v986
      %v1027 = vpack.c.b16 %v989, %v988
      %v1028 = vpack.c.b16 %v991, %v990
      %v1029 = vpack.c.b16 %v993, %v992
      %v1030 = vpack.c.b16 %v995, %v994
      %v1031 = vpack.c.b16 %v997, %v996
      %v1032 = vpack.c.b16 %v999, %v998
      %v1033 = vpack.c.b16 %v1001, %v1000
      %v1034 = vpack.c.b16 %v1003, %v1002
      %v1035 = vpack.c.b16 %v1005, %v1004
      %v1036 = vpack.c.b16 %v1007, %v1006
      %v1037 = vpack.c.b16 %v1009, %v1008
      %v1038 = vpack.c.b16 %v1011, %v1010
      %v1039 = vpack.c.b16 %v1013, %v1012
      %v1040 = vpack.c.b16 %v1015, %v1014
      %v1041 = vpack.c.b16 %v1017, %v1016
      %1066 = vmatprep.subr.bf16.mxu0 0
      %1067 = vmatpush1.bf16.msra.mxu0 %v1018
      %1068 = vmatprep.subr.bf16.mxu0 0
      %1069 = vmatpush1.bf16.msra.mxu0 %v1019
      %1070 = vmatprep.subr.bf16.mxu0 0
      %1071 = vmatpush1.bf16.msra.mxu0 %v1020
      %1072 = vmatprep.subr.bf16.mxu0 0
      %1073 = vmatpush1.bf16.msra.mxu0 %v1021
      %1074 = vmatprep.subr.bf16.mxu0 0
      %1075 = vmatpush1.bf16.msra.mxu0 %v1022
      %1076 = vmatprep.subr.bf16.mxu0 0
      %1077 = vmatpush1.bf16.msra.mxu0 %v1023
      %1078 = vmatprep.subr.bf16.mxu0 0
      %1079 = vmatpush1.bf16.msra.mxu0 %v1024
      %1080 = vmatprep.subr.bf16.mxu0 0
      %1081 = vmatpush1.bf16.msra.mxu0 %v1025
      %1082 = vmatprep.subr.bf16.mxu0 0
      %1083 = vmatpush1.bf16.msra.mxu0 %v1026
      %1084 = vmatprep.subr.bf16.mxu0 0
      %1085 = vmatpush1.bf16.msra.mxu0 %v1027
      %1086 = vmatprep.subr.bf16.mxu0 0
      %1087 = vmatpush1.bf16.msra.mxu0 %v1028
      %1088 = vmatprep.subr.bf16.mxu0 0
      %1089 = vmatpush1.bf16.msra.mxu0 %v1029
      %1090 = vmatprep.subr.bf16.mxu0 0
      %1091 = vmatpush1.bf16.msra.mxu0 %v1030
      %1092 = vmatprep.subr.bf16.mxu0 0
      %1093 = vmatpush1.bf16.msra.mxu0 %v1031
      %1094 = vmatprep.subr.bf16.mxu0 0
      %1095 = vmatpush1.bf16.msra.mxu0 %v1032
      %1096 = vmatprep.subr.bf16.mxu0 0
      %1097 = vmatpush1.bf16.msra.mxu0 %v1033
      %1098 = vmatprep.mubr.bf16.mxu0 %v869
      %1099 = vmatmul.mubr.bf16.gmra.mrb[0].mxu0 %v868
      %v1100 = vpop.f32.mrb[0].mxu0
      %v1101 = vadd.f32 0.0, %v1100
      %v1102 = vpop.f32.mrb[0].mxu0
      %v1103 = vpop.f32.mrb[0].mxu0
      %v1104 = vadd.f32 0.0, %v1103
      %v1105 = vpop.f32.mrb[0].mxu0
      %1106 = vmatprep.mubr.bf16.mxu0 %v872
      %1107 = vmatmul.mubr.bf16.gmra.mrb[0].mxu0 %v871
      %v1108 = vpop.f32.mrb[0].mxu0
      %v1109 = vadd.f32 0.0, %v1108
      %v1110 = vpop.f32.mrb[0].mxu0
      %v1111 = vpop.f32.mrb[0].mxu0
      %v1112 = vadd.f32 0.0, %v1111
      %v1113 = vpop.f32.mrb[0].mxu0
      %1114 = vdwg.mxu0
      %1115 = vmatprep.subr.bf16.mxu0 0
      %1116 = vmatpush1.bf16.msra.mxu0 %v1034
      %1117 = vmatprep.subr.bf16.mxu0 0
      %1118 = vmatpush1.bf16.msra.mxu0 %v1035
      %1119 = vmatprep.subr.bf16.mxu0 0
      %1120 = vmatpush1.bf16.msra.mxu0 %v1036
      %1121 = vmatprep.subr.bf16.mxu0 0
      %1122 = vmatpush1.bf16.msra.mxu0 %v1037
      %1123 = vmatprep.subr.bf16.mxu0 0
      %1124 = vmatpush1.bf16.msra.mxu0 %v1038
      %1125 = vmatprep.subr.bf16.mxu0 0
      %1126 = vmatpush1.bf16.msra.mxu0 %v1039
      %1127 = vmatprep.subr.bf16.mxu0 0
      %1128 = vmatpush1.bf16.msra.mxu0 %v1040
      %1129 = vmatprep.subr.bf16.mxu0 0
      %1130 = vmatpush1.bf16.msra.mxu0 %v1041
      %1131 = vmatprep.subr.bf16.mxu0 0
      %1132 = vmatpush1.bf16.msra.mxu0 0
      %1133 = vmatprep.subr.bf16.mxu0 0
      %1134 = vmatpush1.bf16.msra.mxu0 0
      %1135 = vmatprep.subr.bf16.mxu0 0
      %1136 = vmatpush1.bf16.msra.mxu0 0
      %1137 = vmatprep.subr.bf16.mxu0 0
      %1138 = vmatpush1.bf16.msra.mxu0 0
      %1139 = vmatprep.subr.bf16.mxu0 0
      %1140 = vmatpush1.bf16.msra.mxu0 0
      %1141 = vmatprep.subr.bf16.mxu0 0
      %1142 = vmatpush1.bf16.msra.mxu0 0
      %1143 = vmatprep.subr.bf16.mxu0 0
      %1144 = vmatpush1.bf16.msra.mxu0 0
      %1145 = vmatprep.subr.bf16.mxu0 0
      %1146 = vmatpush1.bf16.msra.mxu0 0
      %1147 = vmatprep.mubr.bf16.mxu0 0
      %1148 = vmatmul.mubr.bf16.gmra.mrb[0].mxu0 %v870
      %v1149 = vpop.f32.mrb[0].mxu0
      %v1150 = vadd.f32 %v1101, %v1149
      %v1151 = vpop.f32.mrb[0].mxu0
      %v1152 = vpop.f32.mrb[0].mxu0
      %v1153 = vadd.f32 %v1104, %v1152
      %v1154 = vpop.f32.mrb[0].mxu0
      %1155 = vmatprep.mubr.bf16.mxu0 0
      %1156 = vmatmul.mubr.bf16.gmra.mrb[0].mxu0 %v873
      %v1157 = vpop.f32.mrb[0].mxu0
      %v1158 = vadd.f32 %v1109, %v1157
      %v1159 = vpop.f32.mrb[0].mxu0
      %v1160 = vpop.f32.mrb[0].mxu0
      %v1161 = vadd.f32 %v1112, %v1160
      %v1162 = vpop.f32.mrb[0].mxu0
      %1163 = vdwg.mxu0
      %1164 = vst [vmem:[#allocation3] sm:$0xff] 0
      %1165 = vst [vmem:[#allocation3 + $0x18] sm:$0xff] 0
      %1166 = vst [vmem:[#allocation3 + $0x10] sm:$0xff] 0
      %1167 = vst [vmem:[#allocation3 + $0x28] sm:$0xff] 0
      %v1168 = vpack.c.bf16 %v1153, %v1150
      %v1169 = vpack.c.bf16 %v1161, %v1158
      %1170 = vst [vmem:[#allocation3 + $0x8] sm:$0xff] %v1168
      %1171 = vst [vmem:[#allocation3 + $0x20] sm:$0xff] %v1169
      %v1172 = vld [vmem:[#allocation3] sm:$0xff]
      %v1173 = vld [vmem:[#allocation3 + $0x8] sm:$0xff]
      %v1174 = vld [vmem:[#allocation3 + $0x18] sm:$0xff]
      %v1175 = vld [vmem:[#allocation3 + $0x20] sm:$0xff]
      %1180 = vrot.lane.b32.xlu0 %v1172, 11
      %v1181 = vpop.permute.xlu0 %1180
      %1182 = vrot.lane.b32.xlu0 %v1173, 11
      %v1183 = vpop.permute.xlu0 %1182
      %1184 = vrot.lane.b32.xlu0 %v1174, 11
      %v1185 = vpop.permute.xlu0 %1184
      %1186 = vrot.lane.b32.xlu0 %v1175, 11
      %v1187 = vpop.permute.xlu0 %1186
      %vm1188 = vcmask 89088
      %v1189 = vsel %vm1188, %v1181, %v1183
      %v1190 = vsel %vm1188, %v1185, %v1187
      %1193 = vst [vmem:[#allocation4] sm:$0xff] %v1189
      %1194 = vst [vmem:[#allocation4 + $0x8] sm:$0xff] %v1190
      %v1195 = vld [vmem:[#allocation3] sm:$0xff]
      %v1196 = vld [vmem:[#allocation3 + $0x8] sm:$0xff]
      %v1197 = vld [vmem:[#allocation3 + $0x18] sm:$0xff]
      %v1198 = vld [vmem:[#allocation3 + $0x20] sm:$0xff]
      %1203 = vrot.lane.b32.xlu0 %v1195, 10
      %v1204 = vpop.permute.xlu0 %1203
      %1205 = vrot.lane.b32.xlu0 %v1196, 10
      %v1206 = vpop.permute.xlu0 %1205
      %1207 = vrot.lane.b32.xlu0 %v1197, 10
      %v1208 = vpop.permute.xlu0 %1207
      %1209 = vrot.lane.b32.xlu0 %v1198, 10
      %v1210 = vpop.permute.xlu0 %1209
      %vm1211 = vcmask 80896
      %v1212 = vsel %vm1211, %v1204, %v1206
      %v1213 = vsel %vm1211, %v1208, %v1210
      %1216 = vst [vmem:[#allocation4 + $0x10] sm:$0xff] %v1212
      %1217 = vst [vmem:[#allocation4 + $0x18] sm:$0xff] %v1213
      %v1218 = vld [vmem:[#allocation3] sm:$0xff]
      %v1219 = vld [vmem:[#allocation3 + $0x8] sm:$0xff]
      %v1220 = vld [vmem:[#allocation3 + $0x18] sm:$0xff]
      %v1221 = vld [vmem:[#allocation3 + $0x20] sm:$0xff]
      %1226 = vrot.lane.b32.xlu0 %v1218, 9
      %v1227 = vpop.permute.xlu0 %1226
      %1228 = vrot.lane.b32.xlu0 %v1219, 9
      %v1229 = vpop.permute.xlu0 %1228
      %1230 = vrot.lane.b32.xlu0 %v1220, 9
      %v1231 = vpop.permute.xlu0 %1230
      %1232 = vrot.lane.b32.xlu0 %v1221, 9
      %v1233 = vpop.permute.xlu0 %1232
      %vm1234 = vcmask 72704
      %v1235 = vsel %vm1234, %v1227, %v1229
      %v1236 = vsel %vm1234, %v1231, %v1233
      %1239 = vst [vmem:[#allocation4 + $0x20] sm:$0xff] %v1235
      %1240 = vst [vmem:[#allocation4 + $0x28] sm:$0xff] %v1236
      %v1241 = vld [vmem:[#allocation3] sm:$0xff]
      %v1242 = vld [vmem:[#allocation3 + $0x8] sm:$0xff]
      %v1243 = vld [vmem:[#allocation3 + $0x18] sm:$0xff]
      %v1244 = vld [vmem:[#allocation3 + $0x20] sm:$0xff]
      %1249 = vrot.lane.b32.xlu0 %v1241, 1
      %v1250 = vpop.permute.xlu0 %1249
      %1251 = vrot.lane.b32.xlu0 %v1242, 1
      %v1252 = vpop.permute.xlu0 %1251
      %1253 = vrot.lane.b32.xlu0 %v1243, 1
      %v1254 = vpop.permute.xlu0 %1253
      %1255 = vrot.lane.b32.xlu0 %v1244, 1
      %v1256 = vpop.permute.xlu0 %1255
      %v1257 = vsel %vm489, %v1250, %v1252
      %v1258 = vsel %vm489, %v1254, %v1256
      %1261 = vst [vmem:[#allocation4 + $0x30] sm:$0xff] %v1257
      %1262 = vst [vmem:[#allocation4 + $0x38] sm:$0xff] %v1258
      %v1263 = vld [vmem:[#allocation3 + $0x8] sm:$0xff]
      %v1264 = vld [vmem:[#allocation3 + $0x20] sm:$0xff]
      %1265 = vst [vmem:[#allocation4 + $0x40] sm:$0xff] %v1263
      %1266 = vst [vmem:[#allocation4 + $0x48] sm:$0xff] %v1264
      %v1267 = vld [vmem:[#allocation3 + $0x8] sm:$0xff]
      %v1268 = vld [vmem:[#allocation3 + $0x10] sm:$0xff]
      %v1269 = vld [vmem:[#allocation3 + $0x20] sm:$0xff]
      %v1270 = vld [vmem:[#allocation3 + $0x28] sm:$0xff]
      %1275 = vrot.lane.b32.xlu0 %v1267, 127
      %v1276 = vpop.permute.xlu0 %1275
      %1277 = vrot.lane.b32.xlu0 %v1268, 127
      %v1278 = vpop.permute.xlu0 %1277
      %1279 = vrot.lane.b32.xlu0 %v1269, 127
      %v1280 = vpop.permute.xlu0 %1279
      %1281 = vrot.lane.b32.xlu0 %v1270, 127
      %v1282 = vpop.permute.xlu0 %1281
      %v1283 = vsel %vm550, %v1276, %v1278
      %v1284 = vsel %vm550, %v1280, %v1282
      %1287 = vst [vmem:[#allocation4 + $0x50] sm:$0xff] %v1283
      %1288 = vst [vmem:[#allocation4 + $0x58] sm:$0xff] %v1284
      %v1289 = vld [vmem:[#allocation3 + $0x8] sm:$0xff]
      %v1290 = vld [vmem:[#allocation3 + $0x10] sm:$0xff]
      %v1291 = vld [vmem:[#allocation3 + $0x20] sm:$0xff]
      %v1292 = vld [vmem:[#allocation3 + $0x28] sm:$0xff]
      %1297 = vrot.lane.b32.xlu0 %v1289, 119
      %v1298 = vpop.permute.xlu0 %1297
      %1299 = vrot.lane.b32.xlu0 %v1290, 119
      %v1300 = vpop.permute.xlu0 %1299
      %1301 = vrot.lane.b32.xlu0 %v1291, 119
      %v1302 = vpop.permute.xlu0 %1301
      %1303 = vrot.lane.b32.xlu0 %v1292, 119
      %v1304 = vpop.permute.xlu0 %1303
      %vm1305 = vcmask 973824
      %v1306 = vsel %vm1305, %v1298, %v1300
      %v1307 = vsel %vm1305, %v1302, %v1304
      %1310 = vst [vmem:[#allocation4 + $0x60] sm:$0xff] %v1306
      %1311 = vst [vmem:[#allocation4 + $0x68] sm:$0xff] %v1307
      %v1312 = vld [vmem:[#allocation3 + $0x8] sm:$0xff]
      %v1313 = vld [vmem:[#allocation3 + $0x10] sm:$0xff]
      %v1314 = vld [vmem:[#allocation3 + $0x20] sm:$0xff]
      %v1315 = vld [vmem:[#allocation3 + $0x28] sm:$0xff]
      %1320 = vrot.lane.b32.xlu0 %v1312, 118
      %v1321 = vpop.permute.xlu0 %1320
      %1322 = vrot.lane.b32.xlu0 %v1313, 118
      %v1323 = vpop.permute.xlu0 %1322
      %1324 = vrot.lane.b32.xlu0 %v1314, 118
      %v1325 = vpop.permute.xlu0 %1324
      %1326 = vrot.lane.b32.xlu0 %v1315, 118
      %v1327 = vpop.permute.xlu0 %1326
      %vm1328 = vcmask 965632
      %v1329 = vsel %vm1328, %v1321, %v1323
      %v1330 = vsel %vm1328, %v1325, %v1327
      %1333 = vst [vmem:[#allocation4 + $0x70] sm:$0xff] %v1329
      %1334 = vst [vmem:[#allocation4 + $0x78] sm:$0xff] %v1330
      %v1335 = vld [vmem:[#allocation3 + $0x8] sm:$0xff]
      %v1336 = vld [vmem:[#allocation3 + $0x10] sm:$0xff]
      %v1337 = vld [vmem:[#allocation3 + $0x20] sm:$0xff]
      %v1338 = vld [vmem:[#allocation3 + $0x28] sm:$0xff]
      %1343 = vrot.lane.b32.xlu0 %v1335, 117
      %v1344 = vpop.permute.xlu0 %1343
      %1345 = vrot.lane.b32.xlu0 %v1336, 117
      %v1346 = vpop.permute.xlu0 %1345
      %1347 = vrot.lane.b32.xlu0 %v1337, 117
      %v1348 = vpop.permute.xlu0 %1347
      %1349 = vrot.lane.b32.xlu0 %v1338, 117
      %v1350 = vpop.permute.xlu0 %1349
      %vm1351 = vcmask 957440
      %v1352 = vsel %vm1351, %v1344, %v1346
      %v1353 = vsel %vm1351, %v1348, %v1350
      %1356 = vst [vmem:[#allocation4 + $0x80] sm:$0xff] %v1352
      %1357 = vst [vmem:[#allocation4 + $0x88] sm:$0xff] %v1353
      %v1358 = vld [vmem:[%s3] sm:$0xff]
      %v1359 = vld [vmem:[%s3 + $0x8] sm:$0xf]
      %v1360 = vld [vmem:[%s3 + $0xc] sm:$0xff]
      %v1361 = vld [vmem:[%s3 + $0x14] sm:$0xf]
      %v1362 = vld [vmem:[%s3 + $0x18] sm:$0xff]
      %v1363 = vld [vmem:[%s3 + $0x20] sm:$0xf]
      %v1364 = vld [vmem:[%s3 + $0x24] sm:$0xff]
      %v1365 = vld [vmem:[%s3 + $0x2c] sm:$0xf]
      %v1366 = vld [vmem:[#allocation4] sm:$0xff]
      %v1367 = vld [vmem:[#allocation4 + $0x8] sm:$0xff]
      %v1368 = vld [vmem:[#allocation4 + $0x10] sm:$0xff]
      %v1369 = vld [vmem:[#allocation4 + $0x18] sm:$0xff]
      %v1370 = vld [vmem:[#allocation4 + $0x20] sm:$0xff]
      %v1371 = vld [vmem:[#allocation4 + $0x28] sm:$0xff]
      %v1372 = vld [vmem:[#allocation4 + $0x30] sm:$0xff]
      %v1373 = vld [vmem:[#allocation4 + $0x38] sm:$0xff]
      %v1374 = vld [vmem:[#allocation4 + $0x40] sm:$0xff]
      %v1375 = vld [vmem:[#allocation4 + $0x48] sm:$0xff]
      %v1376 = vld [vmem:[#allocation4 + $0x50] sm:$0xff]
      %v1377 = vld [vmem:[#allocation4 + $0x58] sm:$0xff]
      %v1378 = vld [vmem:[#allocation4 + $0x60] sm:$0xff]
      %v1379 = vld [vmem:[#allocation4 + $0x68] sm:$0xff]
      %v1380 = vld [vmem:[#allocation4 + $0x70] sm:$0xff]
      %v1381 = vld [vmem:[#allocation4 + $0x78] sm:$0xff]
      %v1382 = vld [vmem:[#allocation4 + $0x80] sm:$0xff]
      %v1383 = vld [vmem:[#allocation4 + $0x88] sm:$0xff]
      %v1384 = vld [vmem:[%s335 + $0x4] sm:$0xff]
      %v1385 = vld [vmem:[%s335 + $0xc] sm:$0xf]
      %v1386 = vld [vmem:[%s335 + $0x18] sm:$0xff]
      %v1387 = vld [vmem:[%s335 + $0x20] sm:$0xf]
      %v1388 = vld [vmem:[%s5] sm:$0xf]
      %v1389 = vld [vmem:[%s5 + $0x4] sm:$0xf]
      %v1390 = vld [vmem:[%s5 + $0x8] sm:$0xf]
      %v1391 = vld [vmem:[%s5 + $0xc] sm:$0xf]
      %v1392 = vld [vmem:[%s5 + $0x10] sm:$0xf]
      %v1393 = vld [vmem:[%s5 + $0x14] sm:$0xf]
      %v1394 = vld [vmem:[%s5 + $0x18] sm:$0xf]
      %v1395 = vld [vmem:[%s5 + $0x1c] sm:$0xf]
      %v1396 = vld [vmem:[%s5 + $0x20] sm:$0xf]
      %v1397 = vld [vmem:[%s5 + $0x24] sm:$0xf]
      %v1398 = vld [vmem:[%s5 + $0x28] sm:$0xf]
      %v1399 = vld [vmem:[%s5 + $0x2c] sm:$0xf]
      %v1400 = vld [vmem:[%s5 + $0x30] sm:$0xf]
      %v1401 = vld [vmem:[%s5 + $0x34] sm:$0xf]
      %v1402 = vld [vmem:[%s5 + $0x38] sm:$0xf]
      %v1403 = vld [vmem:[%s5 + $0x3c] sm:$0xf]
      %v1404 = vld [vmem:[%s5 + $0x40] sm:$0xf]
      %v1405 = vld [vmem:[%s5 + $0x44] sm:$0xf]
      %v1406 = vld [vmem:[%s5 + $0x48] sm:$0xf]
      %v1407 = vld [vmem:[%s5 + $0x4c] sm:$0xf]
      %v1408 = vld [vmem:[%s5 + $0x50] sm:$0xf]
      %v1409 = vld [vmem:[%s5 + $0x54] sm:$0xf]
      %v1410 = vld [vmem:[%s5 + $0x58] sm:$0xf]
      %v1411 = vld [vmem:[%s5 + $0x5c] sm:$0xf]
      %v1412 = vld [vmem:[%s5 + $0x60] sm:$0xf]
      %v1413 = vld [vmem:[%s5 + $0x64] sm:$0xf]
      %v1414 = vld [vmem:[%s5 + $0x68] sm:$0xf]
      %v1415 = vld [vmem:[%s5 + $0x6c] sm:$0xf]
      %v1416 = vld [vmem:[%s5 + $0x70] sm:$0xf]
      %v1417 = vld [vmem:[%s5 + $0x74] sm:$0xf]
      %v1418 = vld [vmem:[%s5 + $0x78] sm:$0xf]
      %v1419 = vld [vmem:[%s5 + $0x7c] sm:$0xf]
      %v1420 = vld [vmem:[%s5 + $0x80] sm:$0xf]
      %v1421 = vld [vmem:[%s5 + $0x84] sm:$0xf]
      %v1422 = vld [vmem:[%s5 + $0x88] sm:$0xf]
      %v1423 = vld [vmem:[%s5 + $0x8c] sm:$0xf]
      %v1424 = vld [vmem:[%s5 + $0x90] sm:$0xf]
      %v1425 = vld [vmem:[%s5 + $0x94] sm:$0xf]
      %v1426 = vld [vmem:[%s5 + $0x98] sm:$0xf]
      %v1427 = vld [vmem:[%s5 + $0x9c] sm:$0xf]
      %v1428 = vld [vmem:[%s5 + $0xa0] sm:$0xf]
      %v1429 = vld [vmem:[%s5 + $0xa4] sm:$0xf]
      %v1430 = vld [vmem:[%s5 + $0xa8] sm:$0xf]
      %v1431 = vld [vmem:[%s5 + $0xac] sm:$0xf]
      %v1432 = vld [vmem:[%s5 + $0xb0] sm:$0xf]
      %v1433 = vld [vmem:[%s5 + $0xb4] sm:$0xf]
      %v1434 = vld [vmem:[%s5 + $0xb8] sm:$0xf]
      %v1435 = vld [vmem:[%s5 + $0xbc] sm:$0xf]
      %v1440 = vunpack.c.l.b16 %v1384
      %v1441 = vunpack.c.h.b16 %v1384
      %v1442 = vunpack.c.l.b16 %v1385
      %v1443 = vunpack.c.l.b16 %v1386
      %v1444 = vunpack.c.h.b16 %v1386
      %v1445 = vunpack.c.l.b16 %v1387
      %v1446 = vpack.c.b16 %v1443, %v1440
      %v1447 = vpack.c.b16 %v1444, %v1441
      %v1448 = vpack.c.b16 %v1445, %v1442
      %v1500 = vunpack.c.l.b16 %v1388
      %v1501 = vunpack.c.l.b16 %v1389
      %v1502 = vunpack.c.l.b16 %v1390
      %v1503 = vunpack.c.l.b16 %v1391
      %v1504 = vunpack.c.l.b16 %v1392
      %v1505 = vunpack.c.l.b16 %v1393
      %v1506 = vunpack.c.l.b16 %v1394
      %v1507 = vunpack.c.l.b16 %v1395
      %v1508 = vunpack.c.l.b16 %v1396
      %v1509 = vunpack.c.l.b16 %v1397
      %v1510 = vunpack.c.l.b16 %v1398
      %v1511 = vunpack.c.l.b16 %v1399
      %v1512 = vunpack.c.l.b16 %v1400
      %v1513 = vunpack.c.l.b16 %v1401
      %v1514 = vunpack.c.l.b16 %v1402
      %v1515 = vunpack.c.l.b16 %v1403
      %v1516 = vunpack.c.l.b16 %v1404
      %v1517 = vunpack.c.l.b16 %v1405
      %v1518 = vunpack.c.l.b16 %v1406
      %v1519 = vunpack.c.l.b16 %v1407
      %v1520 = vunpack.c.l.b16 %v1408
      %v1521 = vunpack.c.l.b16 %v1409
      %v1522 = vunpack.c.l.b16 %v1410
      %v1523 = vunpack.c.l.b16 %v1411
      %v1524 = vunpack.c.l.b16 %v1412
      %v1525 = vunpack.c.l.b16 %v1413
      %v1526 = vunpack.c.l.b16 %v1414
      %v1527 = vunpack.c.l.b16 %v1415
      %v1528 = vunpack.c.l.b16 %v1416
      %v1529 = vunpack.c.l.b16 %v1417
      %v1530 = vunpack.c.l.b16 %v1418
      %v1531 = vunpack.c.l.b16 %v1419
      %v1532 = vunpack.c.l.b16 %v1420
      %v1533 = vunpack.c.l.b16 %v1421
      %v1534 = vunpack.c.l.b16 %v1422
      %v1535 = vunpack.c.l.b16 %v1423
      %v1536 = vunpack.c.l.b16 %v1424
      %v1537 = vunpack.c.l.b16 %v1425
      %v1538 = vunpack.c.l.b16 %v1426
      %v1539 = vunpack.c.l.b16 %v1427
      %v1540 = vunpack.c.l.b16 %v1428
      %v1541 = vunpack.c.l.b16 %v1429
      %v1542 = vunpack.c.l.b16 %v1430
      %v1543 = vunpack.c.l.b16 %v1431
      %v1544 = vunpack.c.l.b16 %v1432
      %v1545 = vunpack.c.l.b16 %v1433
      %v1546 = vunpack.c.l.b16 %v1434
      %v1547 = vunpack.c.l.b16 %v1435
      %v1548 = vpack.c.b16 %v1501, %v1500
      %v1549 = vpack.c.b16 %v1503, %v1502
      %v1550 = vpack.c.b16 %v1505, %v1504
      %v1551 = vpack.c.b16 %v1507, %v1506
      %v1552 = vpack.c.b16 %v1509, %v1508
      %v1553 = vpack.c.b16 %v1511, %v1510
      %v1554 = vpack.c.b16 %v1513, %v1512
      %v1555 = vpack.c.b16 %v1515, %v1514
      %v1556 = vpack.c.b16 %v1517, %v1516
      %v1557 = vpack.c.b16 %v1519, %v1518
      %v1558 = vpack.c.b16 %v1521, %v1520
      %v1559 = vpack.c.b16 %v1523, %v1522
      %v1560 = vpack.c.b16 %v1525, %v1524
      %v1561 = vpack.c.b16 %v1527, %v1526
      %v1562 = vpack.c.b16 %v1529, %v1528
      %v1563 = vpack.c.b16 %v1531, %v1530
      %v1564 = vpack.c.b16 %v1533, %v1532
      %v1565 = vpack.c.b16 %v1535, %v1534
      %v1566 = vpack.c.b16 %v1537, %v1536
      %v1567 = vpack.c.b16 %v1539, %v1538
      %v1568 = vpack.c.b16 %v1541, %v1540
      %v1569 = vpack.c.b16 %v1543, %v1542
      %v1570 = vpack.c.b16 %v1545, %v1544
      %v1571 = vpack.c.b16 %v1547, %v1546
      %1596 = vmatprep.subr.bf16.mxu0 0
      %1597 = vmatpush1.bf16.msra.mxu0 %v1548
      %1598 = vmatprep.subr.bf16.mxu0 0
      %1599 = vmatpush1.bf16.msra.mxu0 %v1549
      %1600 = vmatprep.subr.bf16.mxu0 0
      %1601 = vmatpush1.bf16.msra.mxu0 %v1550
      %1602 = vmatprep.subr.bf16.mxu0 0
      %1603 = vmatpush1.bf16.msra.mxu0 %v1551
      %1604 = vmatprep.subr.bf16.mxu0 0
      %1605 = vmatpush1.bf16.msra.mxu0 %v1552
      %1606 = vmatprep.subr.bf16.mxu0 0
      %1607 = vmatpush1.bf16.msra.mxu0 %v1553
      %1608 = vmatprep.subr.bf16.mxu0 0
      %1609 = vmatpush1.bf16.msra.mxu0 %v1554
      %1610 = vmatprep.subr.bf16.mxu0 0
      %1611 = vmatpush1.bf16.msra.mxu0 %v1555
      %1612 = vmatprep.subr.bf16.mxu0 0
      %1613 = vmatpush1.bf16.msra.mxu0 %v1556
      %1614 = vmatprep.subr.bf16.mxu0 0
      %1615 = vmatpush1.bf16.msra.mxu0 %v1557
      %1616 = vmatprep.subr.bf16.mxu0 0
      %1617 = vmatpush1.bf16.msra.mxu0 %v1558
      %1618 = vmatprep.subr.bf16.mxu0 0
      %1619 = vmatpush1.bf16.msra.mxu0 %v1559
      %1620 = vmatprep.subr.bf16.mxu0 0
      %1621 = vmatpush1.bf16.msra.mxu0 %v1560
      %1622 = vmatprep.subr.bf16.mxu0 0
      %1623 = vmatpush1.bf16.msra.mxu0 %v1561
      %1624 = vmatprep.subr.bf16.mxu0 0
      %1625 = vmatpush1.bf16.msra.mxu0 %v1562
      %1626 = vmatprep.subr.bf16.mxu0 0
      %1627 = vmatpush1.bf16.msra.mxu0 %v1563
      %1628 = vmatprep.mubr.bf16.mxu0 %v1447
      %1629 = vmatmul.mubr.bf16.gmra.mrb[0].mxu0 %v1446
      %v1630 = vpop.f32.mrb[0].mxu0
      %v1631 = vadd.f32 0.0, %v1630
      %v1632 = vpop.f32.mrb[0].mxu0
      %v1633 = vpop.f32.mrb[0].mxu0
      %v1634 = vadd.f32 0.0, %v1633
      %v1635 = vpop.f32.mrb[0].mxu0
      %1636 = vdwg.mxu0
      %1637 = vmatprep.subr.bf16.mxu0 0
      %1638 = vmatpush1.bf16.msra.mxu0 %v1564
      %1639 = vmatprep.subr.bf16.mxu0 0
      %1640 = vmatpush1.bf16.msra.mxu0 %v1565
      %1641 = vmatprep.subr.bf16.mxu0 0
      %1642 = vmatpush1.bf16.msra.mxu0 %v1566
      %1643 = vmatprep.subr.bf16.mxu0 0
      %1644 = vmatpush1.bf16.msra.mxu0 %v1567
      %1645 = vmatprep.subr.bf16.mxu0 0
      %1646 = vmatpush1.bf16.msra.mxu0 %v1568
      %1647 = vmatprep.subr.bf16.mxu0 0
      %1648 = vmatpush1.bf16.msra.mxu0 %v1569
      %1649 = vmatprep.subr.bf16.mxu0 0
      %1650 = vmatpush1.bf16.msra.mxu0 %v1570
      %1651 = vmatprep.subr.bf16.mxu0 0
      %1652 = vmatpush1.bf16.msra.mxu0 %v1571
      %1653 = vmatprep.subr.bf16.mxu0 0
      %1654 = vmatpush1.bf16.msra.mxu0 0
      %1655 = vmatprep.subr.bf16.mxu0 0
      %1656 = vmatpush1.bf16.msra.mxu0 0
      %1657 = vmatprep.subr.bf16.mxu0 0
      %1658 = vmatpush1.bf16.msra.mxu0 0
      %1659 = vmatprep.subr.bf16.mxu0 0
      %1660 = vmatpush1.bf16.msra.mxu0 0
      %1661 = vmatprep.subr.bf16.mxu0 0
      %1662 = vmatpush1.bf16.msra.mxu0 0
      %1663 = vmatprep.subr.bf16.mxu0 0
      %1664 = vmatpush1.bf16.msra.mxu0 0
      %1665 = vmatprep.subr.bf16.mxu0 0
      %1666 = vmatpush1.bf16.msra.mxu0 0
      %1667 = vmatprep.subr.bf16.mxu0 0
      %1668 = vmatpush1.bf16.msra.mxu0 0
      %1669 = vmatprep.mubr.bf16.mxu0 0
      %1670 = vmatmul.mubr.bf16.gmra.mrb[0].mxu0 %v1448
      %v1671 = vpop.f32.mrb[0].mxu0
      %v1672 = vadd.f32 %v1631, %v1671
      %v1673 = vpop.f32.mrb[0].mxu0
      %v1674 = vpop.f32.mrb[0].mxu0
      %v1675 = vadd.f32 %v1634, %v1674
      %v1676 = vpop.f32.mrb[0].mxu0
      %1677 = vdwg.mxu0
      %v1678 = vld [vmem:[%s6] sm:$0xf]
      %v1679 = vld [vmem:[%s6 + $0x4] sm:$0xf]
      %v1680 = vld [vmem:[%s6 + $0x8] sm:$0xf]
      %v1681 = vld [vmem:[%s6 + $0xc] sm:$0xf]
      %v1682 = vpack.c.bf16 %v1675, %v1672
      %v1687 = vunpack.c.l.b16 %v1678
      %v1688 = vunpack.c.l.b16 %v1679
      %v1689 = vunpack.c.l.b16 %v1680
      %v1690 = vunpack.c.l.b16 %v1681
      %v1691 = vpack.c.b16 %v1688, %v1687
      %v1692 = vpack.c.b16 %v1690, %v1689
      %v1694 = vsel %vm747, %v1691, 0
      %v1697 = vsel %vm747, %v1692, 0
      %1699 = vmatprep.subr.bf16.mxu0 0
      %1700 = vmatpush1.bf16.msra.mxu0 %v1682
      %1701 = vmatprep.subr.bf16.mxu0 0
      %1702 = vmatpush1.bf16.msra.mxu0 0
      %1703 = vmatprep.subr.bf16.mxu0 0
      %1704 = vmatpush1.bf16.msra.mxu0 0
      %1705 = vmatprep.subr.bf16.mxu0 0
      %1706 = vmatpush1.bf16.msra.mxu0 0
      %1707 = vmatprep.subr.bf16.mxu0 0
      %1708 = vmatpush1.bf16.msra.mxu0 0
      %1709 = vmatprep.subr.bf16.mxu0 0
      %1710 = vmatpush1.bf16.msra.mxu0 0
      %1711 = vmatprep.subr.bf16.mxu0 0
      %1712 = vmatpush1.bf16.msra.mxu0 0
      %1713 = vmatprep.subr.bf16.mxu0 0
      %1714 = vmatpush1.bf16.msra.mxu0 0
      %1715 = vmatprep.subr.bf16.mxu0 0
      %1716 = vmatpush1.bf16.msra.mxu0 0
      %1717 = vmatprep.subr.bf16.mxu0 0
      %1718 = vmatpush1.bf16.msra.mxu0 0
      %1719 = vmatprep.subr.bf16.mxu0 0
      %1720 = vmatpush1.bf16.msra.mxu0 0
      %1721 = vmatprep.subr.bf16.mxu0 0
      %1722 = vmatpush1.bf16.msra.mxu0 0
      %1723 = vmatprep.subr.bf16.mxu0 0
      %1724 = vmatpush1.bf16.msra.mxu0 0
      %1725 = vmatprep.subr.bf16.mxu0 0
      %1726 = vmatpush1.bf16.msra.mxu0 0
      %1727 = vmatprep.subr.bf16.mxu0 0
      %1728 = vmatpush1.bf16.msra.mxu0 0
      %1729 = vmatprep.subr.bf16.mxu0 0
      %1730 = vmatpush1.bf16.msra.mxu0 0
      %1731 = vmatprep.mubr.bf16.mxu0 0
      %1732 = vmatmul.mubr.bf16.gmra.mrb[0].mxu0 %v1694
      %v1733 = vpop.f32.mrb[0].mxu0
      %v1734 = vadd.f32 0.0, %v1733
      %v1735 = vpop.f32.mrb[0].mxu0
      %v1736 = vpop.f32.mrb[0].mxu0
      %v1737 = vadd.f32 0.0, %v1736
      %v1738 = vpop.f32.mrb[0].mxu0
      %1739 = vmatprep.mubr.bf16.mxu0 0
      %1740 = vmatmul.mubr.bf16.gmra.mrb[0].mxu0 %v1697
      %v1741 = vpop.f32.mrb[0].mxu0
      %v1742 = vadd.f32 0.0, %v1741
      %v1743 = vpop.f32.mrb[0].mxu0
      %v1744 = vpop.f32.mrb[0].mxu0
      %v1745 = vadd.f32 0.0, %v1744
      %v1746 = vpop.f32.mrb[0].mxu0
      %1747 = vdwg.mxu0
      %v1748 = vld [vmem:[%s4] sm:$0xff]
      %v1749 = vld [vmem:[%s4 + $0x8] sm:$0xff]
      %v1750 = vld [vmem:[%s4 + $0x10] sm:$0xff]
      %v1751 = vld [vmem:[%s4 + $0x18] sm:$0xff]
      %1753 = vset.pattern.permute.xlu0 0
      %1754 = vperm.xlu0 %1753, %v1748
      %v1755 = vpop.permute.xlu0 %1754
      %1758 = vset.pattern.permute.xlu0 0
      %1759 = vperm.xlu0 %1758, %v1749
      %v1760 = vpop.permute.xlu0 %1759
      %1763 = vset.pattern.permute.xlu0 0
      %1764 = vperm.xlu0 %1763, %v1750
      %v1765 = vpop.permute.xlu0 %1764
      %1768 = vset.pattern.permute.xlu0 0
      %1769 = vperm.xlu0 %1768, %v1751
      %v1770 = vpop.permute.xlu0 %1769
      %v1780 = vunpack.c.l.b16 %v1358
      %v1781 = vunpack.c.h.b16 %v1358
      %v1782 = vunpack.c.l.b16 %v1359
      %v1783 = vunpack.c.l.b16 %v1360
      %v1784 = vunpack.c.h.b16 %v1360
      %v1785 = vunpack.c.l.b16 %v1361
      %v1786 = vunpack.c.l.b16 %v1362
      %v1787 = vunpack.c.h.b16 %v1362
      %v1788 = vunpack.c.l.b16 %v1363
      %v1789 = vunpack.c.l.b16 %v1364
      %v1790 = vunpack.c.h.b16 %v1364
      %v1791 = vunpack.c.l.b16 %v1365
      %v1792 = vpack.c.b16 %v1783, %v1780
      %v1793 = vpack.c.b16 %v1784, %v1781
      %v1794 = vpack.c.b16 %v1785, %v1782
      %v1795 = vpack.c.b16 %v1789, %v1786
      %v1796 = vpack.c.b16 %v1790, %v1787
      %v1797 = vpack.c.b16 %v1791, %v1788
      %vm1802 = vcmask 261120
      %v1804 = vsel %vm1802, %v1794, 0
      %v1807 = vsel %vm1802, %v1797, 0
      %1809 = vmatprep.subr.bf16.mxu0 0
      %1810 = vmatpush1.bf16.msra.mxu0 %v1366
      %1811 = vmatprep.subr.bf16.mxu0 0
      %1812 = vmatpush1.bf16.msra.mxu0 %v1367
      %1813 = vmatprep.subr.bf16.mxu0 0
      %1814 = vmatpush1.bf16.msra.mxu0 %v1368
      %1815 = vmatprep.subr.bf16.mxu0 0
      %1816 = vmatpush1.bf16.msra.mxu0 %v1369
      %1817 = vmatprep.subr.bf16.mxu0 0
      %1818 = vmatpush1.bf16.msra.mxu0 %v1370
      %1819 = vmatprep.subr.bf16.mxu0 0
      %1820 = vmatpush1.bf16.msra.mxu0 %v1371
      %1821 = vmatprep.subr.bf16.mxu0 0
      %1822 = vmatpush1.bf16.msra.mxu0 %v1372
      %1823 = vmatprep.subr.bf16.mxu0 0
      %1824 = vmatpush1.bf16.msra.mxu0 %v1373
      %1825 = vmatprep.subr.bf16.mxu0 0
      %1826 = vmatpush1.bf16.msra.mxu0 %v1374
      %1827 = vmatprep.subr.bf16.mxu0 0
      %1828 = vmatpush1.bf16.msra.mxu0 %v1375
      %1829 = vmatprep.subr.bf16.mxu0 0
      %1830 = vmatpush1.bf16.msra.mxu0 %v1376
      %1831 = vmatprep.subr.bf16.mxu0 0
      %1832 = vmatpush1.bf16.msra.mxu0 %v1377
      %1833 = vmatprep.subr.bf16.mxu0 0
      %1834 = vmatpush1.bf16.msra.mxu0 %v1378
      %1835 = vmatprep.subr.bf16.mxu0 0
      %1836 = vmatpush1.bf16.msra.mxu0 %v1379
      %1837 = vmatprep.subr.bf16.mxu0 0
      %1838 = vmatpush1.bf16.msra.mxu0 %v1380
      %1839 = vmatprep.subr.bf16.mxu0 0
      %1840 = vmatpush1.bf16.msra.mxu0 %v1381
      %1841 = vmatprep.mubr.bf16.mxu0 %v1793
      %1842 = vmatmul.mubr.bf16.gmra.mrb[0].mxu0 %v1792
      %v1843 = vpop.f32.mrb[0].mxu0
      %v1844 = vadd.f32 %v1755, %v1843
      %v1845 = vpop.f32.mrb[0].mxu0
      %v1846 = vpop.f32.mrb[0].mxu0
      %v1847 = vadd.f32 %v1760, %v1846
      %v1848 = vpop.f32.mrb[0].mxu0
      %1849 = vmatprep.mubr.bf16.mxu0 %v1796
      %1850 = vmatmul.mubr.bf16.gmra.mrb[0].mxu0 %v1795
      %v1851 = vpop.f32.mrb[0].mxu0
      %v1852 = vadd.f32 %v1765, %v1851
      %v1853 = vpop.f32.mrb[0].mxu0
      %v1854 = vpop.f32.mrb[0].mxu0
      %v1855 = vadd.f32 %v1770, %v1854
      %v1856 = vpop.f32.mrb[0].mxu0
      %1857 = vdwg.mxu0
      %1858 = vmatprep.subr.bf16.mxu0 0
      %1859 = vmatpush1.bf16.msra.mxu0 %v1382
      %1860 = vmatprep.subr.bf16.mxu0 0
      %1861 = vmatpush1.bf16.msra.mxu0 %v1383
      %1862 = vmatprep.subr.bf16.mxu0 0
      %1863 = vmatpush1.bf16.msra.mxu0 0
      %1864 = vmatprep.subr.bf16.mxu0 0
      %1865 = vmatpush1.bf16.msra.mxu0 0
      %1866 = vmatprep.subr.bf16.mxu0 0
      %1867 = vmatpush1.bf16.msra.mxu0 0
      %1868 = vmatprep.subr.bf16.mxu0 0
      %1869 = vmatpush1.bf16.msra.mxu0 0
      %1870 = vmatprep.subr.bf16.mxu0 0
      %1871 = vmatpush1.bf16.msra.mxu0 0
      %1872 = vmatprep.subr.bf16.mxu0 0
      %1873 = vmatpush1.bf16.msra.mxu0 0
      %1874 = vmatprep.subr.bf16.mxu0 0
      %1875 = vmatpush1.bf16.msra.mxu0 0
      %1876 = vmatprep.subr.bf16.mxu0 0
      %1877 = vmatpush1.bf16.msra.mxu0 0
      %1878 = vmatprep.subr.bf16.mxu0 0
      %1879 = vmatpush1.bf16.msra.mxu0 0
      %1880 = vmatprep.subr.bf16.mxu0 0
      %1881 = vmatpush1.bf16.msra.mxu0 0
      %1882 = vmatprep.subr.bf16.mxu0 0
      %1883 = vmatpush1.bf16.msra.mxu0 0
      %1884 = vmatprep.subr.bf16.mxu0 0
      %1885 = vmatpush1.bf16.msra.mxu0 0
      %1886 = vmatprep.subr.bf16.mxu0 0
      %1887 = vmatpush1.bf16.msra.mxu0 0
      %1888 = vmatprep.subr.bf16.mxu0 0
      %1889 = vmatpush1.bf16.msra.mxu0 0
      %1890 = vmatprep.mubr.bf16.mxu0 0
      %1891 = vmatmul.mubr.bf16.gmra.mrb[0].mxu0 %v1804
      %v1892 = vpop.f32.mrb[0].mxu0
      %v1893 = vadd.f32 %v1844, %v1892
      %v1894 = vpop.f32.mrb[0].mxu0
      %v1895 = vpop.f32.mrb[0].mxu0
      %v1896 = vadd.f32 %v1847, %v1895
      %v1897 = vpop.f32.mrb[0].mxu0
      %1898 = vmatprep.mubr.bf16.mxu0 0
      %1899 = vmatmul.mubr.bf16.gmra.mrb[0].mxu0 %v1807
      %v1900 = vpop.f32.mrb[0].mxu0
      %v1901 = vadd.f32 %v1852, %v1900
      %v1902 = vpop.f32.mrb[0].mxu0
      %v1903 = vpop.f32.mrb[0].mxu0
      %v1904 = vadd.f32 %v1855, %v1903
      %v1905 = vpop.f32.mrb[0].mxu0
      %1906 = vdwg.mxu0
      %v1907 = vadd.f32 %v1893, %v1734
      %v1908 = vadd.f32 %v1896, %v1737
      %v1909 = vadd.f32 %v1901, %v1742
      %v1910 = vadd.f32 %v1904, %v1745
      %v1911 = vmax.f32 %v1907, 0.0
      %v1912 = vmax.f32 %v1908, 0.0
      %v1913 = vmax.f32 %v1909, 0.0
      %v1914 = vmax.f32 %v1910, 0.0
      %v1915 = vld [vmem:[%s7] sm:$0x1]
      %v1917 = vlaneseq
      %v1918 = vshrl.u32 %v1917, 7
      %v1919 = vsub.s32 0, %v1918
      %v1920 = vrot.slane %v1915, %v1919
      %v1922 = vmul.f32 %v1911, %v1920
      %v1923 = vmul.f32 %v1912, %v1920
      %v1924 = vmul.f32 %v1913, %v1920
      %v1925 = vmul.f32 %v1914, %v1920
      %1926 = vadd.xlane.f32.xlu0 %v1922
      %v1927 = vpop.xlane.xlu0 %1926
      %1928 = vadd.xlane.f32.xlu0 %v1923
      %v1929 = vpop.xlane.xlu0 %1928
      %1930 = vadd.xlane.f32.xlu0 %v1924
      %v1931 = vpop.xlane.xlu0 %1930
      %1932 = vadd.xlane.f32.xlu0 %v1925
      %v1933 = vpop.xlane.xlu0 %1932
      %vm1934 = vcmask 7168
      %1935 = vst.msk [vmem:[%s345] sm:$0xff] %vm1934, %v1927
      %1936 = vst.msk [vmem:[%s345 + $0x8] sm:$0xff] %vm1934, %v1929
      %1937 = vst.msk [vmem:[%s345 + $0x10] sm:$0xff] %vm1934, %v1931
      %1938 = vst.msk [vmem:[%s345 + $0x18] sm:$0xff] %vm1934, %v1933
      %1939 = vst [vmem:[%s340] sm:$0xf] 0
      %1940 = vst [vmem:[%s340 + $0xc] sm:$0xf] 0
      %1941 = vst [vmem:[%s340 + $0x18] sm:$0xf] 0
      %1942 = vst [vmem:[%s340 + $0x24] sm:$0xf] 0
      %1943 = vst [vmem:[%s340 + $0x8] sm:$0xf] 0
      %1944 = vst [vmem:[%s340 + $0x14] sm:$0xf] 0
      %1945 = vst [vmem:[%s340 + $0x20] sm:$0xf] 0
      %1946 = vst [vmem:[%s340 + $0x2c] sm:$0xf] 0
      %v1947 = vpack.c.bf16 %v1923, %v1922
      %v1948 = vpack.c.bf16 %v1925, %v1924
      %v1951 = vunpack.c.l.b16 %v1947
      %v1952 = vunpack.c.h.b16 %v1947
      %v1953 = vunpack.c.l.b16 %v1948
      %v1954 = vunpack.c.h.b16 %v1948
      %v1955 = vpack.c.b16 %v1951, %v1951
      %v1956 = vpack.c.b16 %v1952, %v1952
      %v1957 = vpack.c.b16 %v1953, %v1953
      %v1958 = vpack.c.b16 %v1954, %v1954
      %1963 = vst [vmem:[%s340 + $0x4] sm:$0xf] %v1955
      %1964 = vst [vmem:[%s340 + $0x10] sm:$0xf] %v1956
      %1965 = vst [vmem:[%s340 + $0x1c] sm:$0xf] %v1957
      %1966 = vst [vmem:[%s340 + $0x28] sm:$0xf] %v1958
      %p1967 = scmp.lt.s32.totalorder %s21, 1
      %s1968 = scalar_select %p1967, %s21, 1
      %s1969 = smul.addr %s1968, 12
      %s1970 = smul.addr %s1969, 4
      %s1971 = scalar_lea.vmem %s8, %s1970
      %p1972 = scmp.lt.s32.totalorder %s21, 1
      %s1973 = scalar_select %p1972, %s21, 1
      %s1974 = smul.addr %s1973, 4
      %s1975 = smul.addr %s1974, 8
      %s1976 = scalar_lea.vmem %s9, %s1975
      // Predicated region
      $region53: #{codinet_forward.6} parent=51 // pred_check
        %p1977 = pneg %p212
      $region54: #{codinet_forward.6} parent=51 // pred_check_branch
        %1979 = sbr.rel (%p1977) target = $region56
      $region55: #{codinet_forward.6} parent=51 // pred_region
        _
      $region56: #{codinet_forward.6} parent=51 // pred_fallthru
        _
      // Predicated region
      $region57: #{codinet_forward.6} parent=51 // pred_check
        %p1980 = pneg %p238
      $region58: #{codinet_forward.6} parent=51 // pred_check_branch
        %1982 = sbr.rel (%p1980) target = $region60
      $region59: #{codinet_forward.6} parent=51 // pred_region
        _
      $region60: #{codinet_forward.6} parent=51 // pred_fallthru
        _
    $region52: #{codinet_forward.6} parent=5 // pred_fallthru
      _
    %p1983 = scmp.le.s32.totalorder 2, %s16
    // Predicated region
    $region61: #{codinet_forward.6} parent=5 // pred_check
      %p1984 = pneg %p1983
    $region62: #{codinet_forward.6} parent=5 // pred_check_branch
      %1986 = sbr.rel (%p1984) target = $region64
    $region63: #{codinet_forward.6} parent=5 // pred_region
      %s1987 = ssub.s32 %s16, 2
      // Predicated region
      $region65: #{codinet_forward.6} parent=63 // pred_check
        %p1988 = pneg %p218
      $region66: #{codinet_forward.6} parent=63 // pred_check_branch
        %1990 = sbr.rel (%p1988) target = $region68
      $region67: #{codinet_forward.6} parent=63 // pred_region
        %p1991 = scmp.lt.s32.totalorder %s22, 1
        %s1992 = scalar_select %p1991, %s22, 1
        %s1993 = smul.addr %s1992, 12
        %s1994 = smul.addr %s1993, 4
        %s1995 = scalar_lea.vmem %s8, %s1994
      $region68: #{codinet_forward.6} parent=63 // pred_fallthru
        _
      // Predicated region
      $region69: #{codinet_forward.6} parent=63 // pred_check
        %p1996 = pneg %p244
      $region70: #{codinet_forward.6} parent=63 // pred_check_branch
        %1998 = sbr.rel (%p1996) target = $region72
      $region71: #{codinet_forward.6} parent=63 // pred_region
        %p1999 = scmp.lt.s32.totalorder %s22, 1
        %s2000 = scalar_select %p1999, %s22, 1
        %s2001 = smul.addr %s2000, 4
        %s2002 = smul.addr %s2001, 8
        %s2003 = scalar_lea.vmem %s9, %s2002
      $region72: #{codinet_forward.6} parent=63 // pred_fallthru
        _
    $region64: #{codinet_forward.6} parent=5 // pred_fallthru
      _
  $region6: #{codinet_forward.6} parent=0 // loop_footer
    %s20 = sadd.s32 1, %s16
  $region7: #{codinet_forward.6} parent=0 // loop_footer_branch
    %15 = sbr.rel target = $region3
  $region8: #{codinet_forward.6} parent=0 // loop_exit
    _

// kernel: codinet_forward.7
$region0: #{codinet_forward.7}
  #allocation0 [shape = 'u32[]', space=smem, size = 0x4, offset = 0x4, fixed_abs, tag = 'smem constant byte address 0x4 - core index']
  #allocation1 [shape = 'u32[144,128]{1,0:T(1,128)}', space=vmem, size = 0x12000, scoped, tag = 'internal scratch']
  #allocation2 [shape = 'bf16[288,128]{1,0:T(16,128)(2,1)}', space=vmem, size = 0x12000, scoped, tag = 'scratch operand']
  #allocation3 [shape = 'bf16[64,384]{1,0:T(16,128)(2,1)}', space=vmem, size = 0xc000, scoped, tag = 'scratch operand']
  #allocation4 [shape = 'bf16[576,128]{1,0:T(16,128)(2,1)}', space=vmem, size = 0x24000, scoped, tag = 'scratch operand']
  %s0 = inlined_call_operand.vmem [shape: bf16[2,32,384], index: 0, kind: input, shape index: {}]
  %s1 = inlined_call_operand.vmem [shape: bf16[64,288], index: 1, kind: input, shape index: {}]
  %s2 = inlined_call_operand.vmem [shape: f32[64,1], index: 2, kind: input, shape index: {}]
  %s3 = inlined_call_operand.vmem [shape: bf16[64,576], index: 3, kind: input, shape index: {}]
  %s4 = inlined_call_operand.vmem [shape: f32[64,1], index: 4, kind: input, shape index: {}]
  %s5 = inlined_call_operand.vmem [shape: bf16[128,128], index: 5, kind: input, shape index: {}]
  %s6 = inlined_call_operand.vmem [shape: bf16[64,32], index: 6, kind: input, shape index: {}]
  %s7 = inlined_call_operand.vmem [shape: f32[1,128], index: 7, kind: input, shape index: {}]
  %s8 = inlined_call_operand.hbm [shape: bf16[2,64,384], index: 8, kind: output, shape index: {0}]
  %s9 = inlined_call_operand.vmem [shape: f32[2,64,1], index: 9, kind: output, shape index: {1}]
  %10 = xla_tuple %s8, %s9
  %s11 = sld [smem:[#allocation0]]
  $region73: #{codinet_forward.7} parent=0
    _
  %s13 = ssub.s32 1, %s11
  %s14 = scalar_select 0, %s13, %s11
  $region1: #{codinet_forward.7} parent=0
    #allocation5 [shape = 'u8[98304]{0}', space=vmem, size = 0x18000, scoped, tag = 'output window, operand 0']
    #allocation6 [shape = 's32[2]{0}', space=sflag, size = 0x8, scoped, tag = 'scoped memory for codinet_forward.7']
    %15 = vsyncpa [#allocation6], 0
    %s16 = scalar_lea.sflag [#allocation6], 1
    %17 = vsyncpa %s16, 0
    loop: start=0, step=1, limit=4
    $region2: #{codinet_forward.7} parent=1 // loop_pre_header
      _
    $region3: #{codinet_forward.7} parent=1 // loop_header
      %s19 = sphi 0, %s23
      %p20 = scmp.ge.s32.totalorder %s19, 4
      %s29 = sphi 0, %s31
      %s32 = sphi 0, %s29
      %s33 = sphi 0, %s32
      %s49 = sphi 0, %s33
      %s53 = sphi 0, %s53
      %s55 = sphi 0, %s53
      %s56 = sphi 0, %s55
      %s70 = sphi 0, %s56
      %s74 = sphi 0, %s74
      %s76 = sphi 0, %s74
      %s77 = sphi 0, %s76
      %s91 = sphi 0, %s77
      %s95 = sphi 0, %s95
      %s97 = sphi 0, %s95
      %s98 = sphi 0, %s97
      %s112 = sphi 0, %s98
      %s116 = sphi 0, %s116
      %s118 = sphi 0, %s116
      %s119 = sphi 0, %s118
      %s133 = sphi 0, %s119
      %s137 = sphi 0, %s137
      %s139 = sphi 0, %s137
      %s140 = sphi 0, %s139
      %s154 = sphi 0, %s140
      %s158 = sphi 0, %s158
      %s160 = sphi 0, %s158
      %s161 = sphi 0, %s160
      %s175 = sphi 0, %s161
      %s179 = sphi 0, %s179
      %s181 = sphi 0, %s179
      %s182 = sphi 0, %s181
      %s196 = sphi 0, %s182
      %s202 = sphi 0, %s204
      %s205 = sphi 0, %s202
      %s206 = sphi 0, %s205
      %s222 = sphi 0, %s206
      %s228 = sphi 0, %s230
      %s231 = sphi 0, %s228
      %s232 = sphi 0, %s231
      %s248 = sphi 0, %s232
    $region4: #{codinet_forward.7} parent=1 // loop_header_branch
      %22 = sbr.rel (%p20) target = $region8
    $region5: #{codinet_forward.7} parent=1 // loop_body
      %s24 = ssub.s32 %s19, 1
      %s25 = ssub.s32 %s19, 2
      %s26 = sadd.s32 %s19, 1
      %s27 = ssub.s32 %s19, %s26
      %p28 = scmp.eq.s32.totalorder %s27, 0
      %s30 = sadd.s32 %s29, 1
      %s31 = scalar_select %p28, %s29, %s30
      %p34 = pneg %p28
      %p35 = scmp.eq.s32.totalorder %s19, 1
      %p36 = por %p34, %p35
      %p37 = scmp.ne.s32.totalorder %s29, %s32
      %p38 = scmp.eq.s32.totalorder %s19, 0
      %p39 = por %p37, %p38
      %p40 = scmp.ne.s32.totalorder %s29, %s32
      %p41 = scmp.eq.s32.totalorder %s24, 1
      %p42 = por %p40, %p41
      %p43 = scmp.ne.s32.totalorder %s32, %s33
      %p44 = scmp.eq.s32.totalorder %s24, 0
      %p45 = por %p43, %p44
      %p46 = scmp.ne.s32.totalorder %s32, %s33
      %p47 = scmp.eq.s32.totalorder %s25, 1
      %p48 = por %p46, %p47
      %p50 = scmp.ne.s32.totalorder %s33, %s49
      %p51 = scmp.eq.s32.totalorder %s25, 0
      %p52 = por %p50, %p51
      %s54 = sadd.s32 %s53, 1
      %p57 = scmp.eq.s32.totalorder %s19, 1
      %p58 = scmp.ne.s32.totalorder %s53, %s55
      %p59 = scmp.eq.s32.totalorder %s19, 0
      %p60 = por %p58, %p59
      %p61 = scmp.ne.s32.totalorder %s53, %s55
      %p62 = scmp.eq.s32.totalorder %s24, 1
      %p63 = por %p61, %p62
      %p64 = scmp.ne.s32.totalorder %s55, %s56
      %p65 = scmp.eq.s32.totalorder %s24, 0
      %p66 = por %p64, %p65
      %p67 = scmp.ne.s32.totalorder %s55, %s56
      %p68 = scmp.eq.s32.totalorder %s25, 1
      %p69 = por %p67, %p68
      %p71 = scmp.ne.s32.totalorder %s56, %s70
      %p72 = scmp.eq.s32.totalorder %s25, 0
      %p73 = por %p71, %p72
      %s75 = sadd.s32 %s74, 1
      %p78 = scmp.eq.s32.totalorder %s19, 1
      %p79 = scmp.ne.s32.totalorder %s74, %s76
      %p80 = scmp.eq.s32.totalorder %s19, 0
      %p81 = por %p79, %p80
      %p82 = scmp.ne.s32.totalorder %s74, %s76
      %p83 = scmp.eq.s32.totalorder %s24, 1
      %p84 = por %p82, %p83
      %p85 = scmp.ne.s32.totalorder %s76, %s77
      %p86 = scmp.eq.s32.totalorder %s24, 0
      %p87 = por %p85, %p86
      %p88 = scmp.ne.s32.totalorder %s76, %s77
      %p89 = scmp.eq.s32.totalorder %s25, 1
      %p90 = por %p88, %p89
      %p92 = scmp.ne.s32.totalorder %s77, %s91
      %p93 = scmp.eq.s32.totalorder %s25, 0
      %p94 = por %p92, %p93
      %s96 = sadd.s32 %s95, 1
      %p99 = scmp.eq.s32.totalorder %s19, 1
      %p100 = scmp.ne.s32.totalorder %s95, %s97
      %p101 = scmp.eq.s32.totalorder %s19, 0
      %p102 = por %p100, %p101
      %p103 = scmp.ne.s32.totalorder %s95, %s97
      %p104 = scmp.eq.s32.totalorder %s24, 1
      %p105 = por %p103, %p104
      %p106 = scmp.ne.s32.totalorder %s97, %s98
      %p107 = scmp.eq.s32.totalorder %s24, 0
      %p108 = por %p106, %p107
      %p109 = scmp.ne.s32.totalorder %s97, %s98
      %p110 = scmp.eq.s32.totalorder %s25, 1
      %p111 = por %p109, %p110
      %p113 = scmp.ne.s32.totalorder %s98, %s112
      %p114 = scmp.eq.s32.totalorder %s25, 0
      %p115 = por %p113, %p114
      %s117 = sadd.s32 %s116, 1
      %p120 = scmp.eq.s32.totalorder %s19, 1
      %p121 = scmp.ne.s32.totalorder %s116, %s118
      %p122 = scmp.eq.s32.totalorder %s19, 0
      %p123 = por %p121, %p122
      %p124 = scmp.ne.s32.totalorder %s116, %s118
      %p125 = scmp.eq.s32.totalorder %s24, 1
      %p126 = por %p124, %p125
      %p127 = scmp.ne.s32.totalorder %s118, %s119
      %p128 = scmp.eq.s32.totalorder %s24, 0
      %p129 = por %p127, %p128
      %p130 = scmp.ne.s32.totalorder %s118, %s119
      %p131 = scmp.eq.s32.totalorder %s25, 1
      %p132 = por %p130, %p131
      %p134 = scmp.ne.s32.totalorder %s119, %s133
      %p135 = scmp.eq.s32.totalorder %s25, 0
      %p136 = por %p134, %p135
      %s138 = sadd.s32 %s137, 1
      %p141 = scmp.eq.s32.totalorder %s19, 1
      %p142 = scmp.ne.s32.totalorder %s137, %s139
      %p143 = scmp.eq.s32.totalorder %s19, 0
      %p144 = por %p142, %p143
      %p145 = scmp.ne.s32.totalorder %s137, %s139
      %p146 = scmp.eq.s32.totalorder %s24, 1
      %p147 = por %p145, %p146
      %p148 = scmp.ne.s32.totalorder %s139, %s140
      %p149 = scmp.eq.s32.totalorder %s24, 0
      %p150 = por %p148, %p149
      %p151 = scmp.ne.s32.totalorder %s139, %s140
      %p152 = scmp.eq.s32.totalorder %s25, 1
      %p153 = por %p151, %p152
      %p155 = scmp.ne.s32.totalorder %s140, %s154
      %p156 = scmp.eq.s32.totalorder %s25, 0
      %p157 = por %p155, %p156
      %s159 = sadd.s32 %s158, 1
      %p162 = scmp.eq.s32.totalorder %s19, 1
      %p163 = scmp.ne.s32.totalorder %s158, %s160
      %p164 = scmp.eq.s32.totalorder %s19, 0
      %p165 = por %p163, %p164
      %p166 = scmp.ne.s32.totalorder %s158, %s160
      %p167 = scmp.eq.s32.totalorder %s24, 1
      %p168 = por %p166, %p167
      %p169 = scmp.ne.s32.totalorder %s160, %s161
      %p170 = scmp.eq.s32.totalorder %s24, 0
      %p171 = por %p169, %p170
      %p172 = scmp.ne.s32.totalorder %s160, %s161
      %p173 = scmp.eq.s32.totalorder %s25, 1
      %p174 = por %p172, %p173
      %p176 = scmp.ne.s32.totalorder %s161, %s175
      %p177 = scmp.eq.s32.totalorder %s25, 0
      %p178 = por %p176, %p177
      %s180 = sadd.s32 %s179, 1
      %p183 = scmp.eq.s32.totalorder %s19, 1
      %p184 = scmp.ne.s32.totalorder %s179, %s181
      %p185 = scmp.eq.s32.totalorder %s19, 0
      %p186 = por %p184, %p185
      %p187 = scmp.ne.s32.totalorder %s179, %s181
      %p188 = scmp.eq.s32.totalorder %s24, 1
      %p189 = por %p187, %p188
      %p190 = scmp.ne.s32.totalorder %s181, %s182
      %p191 = scmp.eq.s32.totalorder %s24, 0
      %p192 = por %p190, %p191
      %p193 = scmp.ne.s32.totalorder %s181, %s182
      %p194 = scmp.eq.s32.totalorder %s25, 1
      %p195 = por %p193, %p194
      %p197 = scmp.ne.s32.totalorder %s182, %s196
      %p198 = scmp.eq.s32.totalorder %s25, 0
      %p199 = por %p197, %p198
      %s200 = ssub.s32 %s19, %s26
      %p201 = scmp.eq.s32.totalorder %s200, 0
      %s203 = sadd.s32 %s202, 1
      %s204 = scalar_select %p201, %s202, %s203
      %p207 = pneg %p201
      %p208 = scmp.eq.s32.totalorder %s19, 1
      %p209 = por %p207, %p208
      %p210 = scmp.ne.s32.totalorder %s202, %s205
      %p211 = scmp.eq.s32.totalorder %s19, 0
      %p212 = por %p210, %p211
      %p213 = scmp.ne.s32.totalorder %s202, %s205
      %p214 = scmp.eq.s32.totalorder %s24, 1
      %p215 = por %p213, %p214
      %p216 = scmp.ne.s32.totalorder %s205, %s206
      %p217 = scmp.eq.s32.totalorder %s24, 0
      %p218 = por %p216, %p217
      %p219 = scmp.ne.s32.totalorder %s205, %s206
      %p220 = scmp.eq.s32.totalorder %s25, 1
      %p221 = por %p219, %p220
      %p223 = scmp.ne.s32.totalorder %s206, %s222
      %p224 = scmp.eq.s32.totalorder %s25, 0
      %p225 = por %p223, %p224
      %s226 = ssub.s32 %s19, %s26
      %p227 = scmp.eq.s32.totalorder %s226, 0
      %s229 = sadd.s32 %s228, 1
      %s230 = scalar_select %p227, %s228, %s229
      %p233 = pneg %p227
      %p234 = scmp.eq.s32.totalorder %s19, 1
      %p235 = por %p233, %p234
      %p236 = scmp.ne.s32.totalorder %s228, %s231
      %p237 = scmp.eq.s32.totalorder %s19, 0
      %p238 = por %p236, %p237
      %p239 = scmp.ne.s32.totalorder %s228, %s231
      %p240 = scmp.eq.s32.totalorder %s24, 1
      %p241 = por %p239, %p240
      %p242 = scmp.ne.s32.totalorder %s231, %s232
      %p243 = scmp.eq.s32.totalorder %s24, 0
      %p244 = por %p242, %p243
      %p245 = scmp.ne.s32.totalorder %s231, %s232
      %p246 = scmp.eq.s32.totalorder %s25, 1
      %p247 = por %p245, %p246
      %p249 = scmp.ne.s32.totalorder %s232, %s248
      %p250 = scmp.eq.s32.totalorder %s25, 0
      %p251 = por %p249, %p250
      %p252 = scmp.le.s32.totalorder 1, %s19
      %p253 = scmp.lt.s32.totalorder %s19, 3
      %p254 = pnand %p252, %p253
      %p255 = pneg %p254
      // Predicated region
      $region9: #{codinet_forward.7} parent=5 // pred_check
        _
      $region10: #{codinet_forward.7} parent=5 // pred_check_branch
        %257 = sbr.rel (%p254) target = $region12
      $region11: #{codinet_forward.7} parent=5 // pred_region
        %s258 = ssub.s32 %s19, 1
        // Predicated region
        $region13: #{codinet_forward.7} parent=11 // pred_check
          %p259 = pneg %p66
        $region14: #{codinet_forward.7} parent=11 // pred_check_branch
          %261 = sbr.rel (%p259) target = $region16
        $region15: #{codinet_forward.7} parent=11 // pred_region
          _
        $region16: #{codinet_forward.7} parent=11 // pred_fallthru
          _
        // Predicated region
        $region17: #{codinet_forward.7} parent=11 // pred_check
          %p262 = pneg %p87
        $region18: #{codinet_forward.7} parent=11 // pred_check_branch
          %264 = sbr.rel (%p262) target = $region20
        $region19: #{codinet_forward.7} parent=11 // pred_region
          _
        $region20: #{codinet_forward.7} parent=11 // pred_fallthru
          _
        // Predicated region
        $region21: #{codinet_forward.7} parent=11 // pred_check
          %p265 = pneg %p108
        $region22: #{codinet_forward.7} parent=11 // pred_check_branch
          %267 = sbr.rel (%p265) target = $region24
        $region23: #{codinet_forward.7} parent=11 // pred_region
          _
        $region24: #{codinet_forward.7} parent=11 // pred_fallthru
          _
        // Predicated region
        $region25: #{codinet_forward.7} parent=11 // pred_check
          %p268 = pneg %p129
        $region26: #{codinet_forward.7} parent=11 // pred_check_branch
          %270 = sbr.rel (%p268) target = $region28
        $region27: #{codinet_forward.7} parent=11 // pred_region
          _
        $region28: #{codinet_forward.7} parent=11 // pred_fallthru
          _
        // Predicated region
        $region29: #{codinet_forward.7} parent=11 // pred_check
          %p271 = pneg %p150
        $region30: #{codinet_forward.7} parent=11 // pred_check_branch
          %273 = sbr.rel (%p271) target = $region32
        $region31: #{codinet_forward.7} parent=11 // pred_region
          _
        $region32: #{codinet_forward.7} parent=11 // pred_fallthru
          _
        // Predicated region
        $region33: #{codinet_forward.7} parent=11 // pred_check
          %p274 = pneg %p171
        $region34: #{codinet_forward.7} parent=11 // pred_check_branch
          %276 = sbr.rel (%p274) target = $region36
        $region35: #{codinet_forward.7} parent=11 // pred_region
          _
        $region36: #{codinet_forward.7} parent=11 // pred_fallthru
          _
        // Predicated region
        $region37: #{codinet_forward.7} parent=11 // pred_check
          %p277 = pneg %p192
        $region38: #{codinet_forward.7} parent=11 // pred_check_branch
          %279 = sbr.rel (%p277) target = $region40
        $region39: #{codinet_forward.7} parent=11 // pred_region
          _
        $region40: #{codinet_forward.7} parent=11 // pred_fallthru
          _
      $region12: #{codinet_forward.7} parent=5 // pred_fallthru
        _
      %p280 = scmp.lt.s32.totalorder %s19, 2
      // Predicated region
      $region41: #{codinet_forward.7} parent=5 // pred_check
        %p281 = pneg %p280
      $region42: #{codinet_forward.7} parent=5 // pred_check_branch
        %283 = sbr.rel (%p281) target = $region44
      $region43: #{codinet_forward.7} parent=5 // pred_region
        // Predicated region
        $region45: #{codinet_forward.7} parent=43 // pred_check
          %p284 = pneg %p39
        $region46: #{codinet_forward.7} parent=43 // pred_check_branch
          %286 = sbr.rel (%p284) target = $region48
        $region47: #{codinet_forward.7} parent=43 // pred_region
          %p287 = scmp.lt.s32.totalorder %s19, 1
          %s288 = scalar_select %p287, %s19, 1
          %s289 = smul.addr %s288, 12
          %s290 = smul.addr %s289, 4
          %s291 = scalar_lea.vmem %s0, %s290
        $region48: #{codinet_forward.7} parent=43 // pred_fallthru
          _
      $region44: #{codinet_forward.7} parent=5 // pred_fallthru
        _
      %p292 = scmp.le.s32.totalorder 1, %s19
      %p293 = scmp.lt.s32.totalorder %s19, 3
      %p294 = pnand %p292, %p293
      %p295 = pneg %p294
      // Predicated region
      $region49: #{codinet_forward.7} parent=5 // pred_check
        _
      $region50: #{codinet_forward.7} parent=5 // pred_check_branch
        %297 = sbr.rel (%p294) target = $region52
      $region51: #{codinet_forward.7} parent=5 // pred_region
        %s298 = ssub.s32 %s19, 1
        %p299 = scmp.lt.s32.totalorder %s24, 1
        %s300 = scalar_select %p299, %s24, 1
        %s301 = smul.addr %s300, 12
        %s302 = smul.addr %s301, 4
        %s303 = scalar_lea.vmem %s0, %s302
        %p304 = pneg %p45
        %p305 = pneg %p42
        %p306 = pneg %p66
        %p307 = pneg %p63
        %p308 = pneg %p87
        %p309 = pneg %p84
        %p310 = pneg %p108
        %p311 = pneg %p105
        %p312 = pneg %p129
        %p313 = pneg %p126
        %p314 = pneg %p150
        %p315 = pneg %p147
        %p316 = pneg %p171
        %p317 = pneg %p168
        %p318 = pneg %p192
        %p319 = pneg %p189
        %p320 = pneg %p218
        %p321 = pneg %p215
        %s322 = sand.u32 %s205, 1
        %s323 = scalar_lea.sflag [#allocation6], %s322
        %s324 = sand.u32 %s205, 1
        %s325 = smul.addr %s324, 96
        %s326 = scalar_lea.vmem [#allocation5], %s325
        %p327 = pneg %p244
        %p328 = pneg %p241
        %p329 = scmp.lt.s32.totalorder %s24, 1
        %s330 = scalar_select %p329, %s24, 1
        %s331 = smul.addr %s330, 8
        %s332 = smul.addr %s331, 8
        %s333 = scalar_lea.vmem %s9, %s332
        %p334 = scmp.lt.s32.totalorder %s24, 1
        %s335 = scalar_select %p334, %s24, 1
        %s336 = smul.addr %s335, 12
        %s337 = smul.addr %s336, 4
        %s338 = scalar_lea.vmem %s0, %s337
        %p339 = scmp.lt.s32.totalorder %s24, 1
        %s340 = scalar_select %p339, %s24, 1
        %s341 = smul.addr %s340, 8
        %s342 = smul.addr %s341, 8
        %s343 = scalar_lea.vmem %s9, %s342
        %v345 = vld [vmem:[%s338] sm:$0xff]
        %v346 = vld [vmem:[%s338 + $0xc] sm:$0xff]
        %v347 = vld [vmem:[%s338 + $0x18] sm:$0xff]
        %v348 = vld [vmem:[%s338 + $0x24] sm:$0xff]
        %v353 = vunpack.c.l.b16 %v345
        %v354 = vunpack.c.h.b16 %v345
        %v355 = vunpack.c.l.b16 %v346
        %v356 = vunpack.c.h.b16 %v346
        %v357 = vunpack.c.l.b16 %v347
        %v358 = vunpack.c.h.b16 %v347
        %v359 = vunpack.c.l.b16 %v348
        %v360 = vunpack.c.h.b16 %v348
        %v361 = vpack.c.b16 %v355, %v353
        %v362 = vpack.c.b16 %v356, %v354
        %v363 = vpack.c.b16 %v359, %v357
        %v364 = vpack.c.b16 %v360, %v358
        %365 = vrot.lane.b32.xlu0 %v361, 11
        %v366 = vpop.permute.xlu0 %365
        %367 = vrot.lane.b32.xlu0 %v362, 11
        %v368 = vpop.permute.xlu0 %367
        %369 = vrot.lane.b32.xlu0 %v363, 11
        %v370 = vpop.permute.xlu0 %369
        %371 = vrot.lane.b32.xlu0 %v364, 11
        %v372 = vpop.permute.xlu0 %371
        %vm373 = vcmask 89088
        %v374 = vsel %vm373, %v366, %v368
        %v375 = vsel %vm373, %v370, %v372
        %378 = vst [vmem:[#allocation2] sm:$0xff] %v374
        %379 = vst [vmem:[#allocation2 + $0x8] sm:$0xff] %v375
        %v380 = vld [vmem:[%s338] sm:$0xff]
        %v381 = vld [vmem:[%s338 + $0xc] sm:$0xff]
        %v382 = vld [vmem:[%s338 + $0x18] sm:$0xff]
        %v383 = vld [vmem:[%s338 + $0x24] sm:$0xff]
        %v388 = vunpack.c.l.b16 %v380
        %v389 = vunpack.c.h.b16 %v380
        %v390 = vunpack.c.l.b16 %v381
        %v391 = vunpack.c.h.b16 %v381
        %v392 = vunpack.c.l.b16 %v382
        %v393 = vunpack.c.h.b16 %v382
        %v394 = vunpack.c.l.b16 %v383
        %v395 = vunpack.c.h.b16 %v383
        %v396 = vpack.c.b16 %v390, %v388
        %v397 = vpack.c.b16 %v391, %v389
        %v398 = vpack.c.b16 %v394, %v392
        %v399 = vpack.c.b16 %v395, %v393
        %400 = vrot.lane.b32.xlu0 %v396, 10
        %v401 = vpop.permute.xlu0 %400
        %402 = vrot.lane.b32.xlu0 %v397, 10
        %v403 = vpop.permute.xlu0 %402
        %404 = vrot.lane.b32.xlu0 %v398, 10
        %v405 = vpop.permute.xlu0 %404
        %406 = vrot.lane.b32.xlu0 %v399, 10
        %v407 = vpop.permute.xlu0 %406
        %vm408 = vcmask 80896
        %v409 = vsel %vm408, %v401, %v403
        %v410 = vsel %vm408, %v405, %v407
        %413 = vst [vmem:[#allocation2 + $0x10] sm:$0xff] %v409
        %414 = vst [vmem:[#allocation2 + $0x18] sm:$0xff] %v410
        %v415 = vld [vmem:[%s338] sm:$0xff]
        %v416 = vld [vmem:[%s338 + $0xc] sm:$0xff]
        %v417 = vld [vmem:[%s338 + $0x18] sm:$0xff]
        %v418 = vld [vmem:[%s338 + $0x24] sm:$0xff]
        %v423 = vunpack.c.l.b16 %v415
        %v424 = vunpack.c.h.b16 %v415
        %v425 = vunpack.c.l.b16 %v416
        %v426 = vunpack.c.h.b16 %v416
        %v427 = vunpack.c.l.b16 %v417
        %v428 = vunpack.c.h.b16 %v417
        %v429 = vunpack.c.l.b16 %v418
        %v430 = vunpack.c.h.b16 %v418
        %v431 = vpack.c.b16 %v425, %v423
        %v432 = vpack.c.b16 %v426, %v424
        %v433 = vpack.c.b16 %v429, %v427
        %v434 = vpack.c.b16 %v430, %v428
        %435 = vrot.lane.b32.xlu0 %v431, 9
        %v436 = vpop.permute.xlu0 %435
        %437 = vrot.lane.b32.xlu0 %v432, 9
        %v438 = vpop.permute.xlu0 %437
        %439 = vrot.lane.b32.xlu0 %v433, 9
        %v440 = vpop.permute.xlu0 %439
        %441 = vrot.lane.b32.xlu0 %v434, 9
        %v442 = vpop.permute.xlu0 %441
        %vm443 = vcmask 72704
        %v444 = vsel %vm443, %v436, %v438
        %v445 = vsel %vm443, %v440, %v442
        %448 = vst [vmem:[#allocation2 + $0x20] sm:$0xff] %v444
        %449 = vst [vmem:[#allocation2 + $0x28] sm:$0xff] %v445
        %v450 = vld [vmem:[%s338] sm:$0xff]
        %v451 = vld [vmem:[%s338 + $0xc] sm:$0xff]
        %v452 = vld [vmem:[%s338 + $0x18] sm:$0xff]
        %v453 = vld [vmem:[%s338 + $0x24] sm:$0xff]
        %v458 = vunpack.c.l.b16 %v450
        %v459 = vunpack.c.h.b16 %v450
        %v460 = vunpack.c.l.b16 %v451
        %v461 = vunpack.c.h.b16 %v451
        %v462 = vunpack.c.l.b16 %v452
        %v463 = vunpack.c.h.b16 %v452
        %v464 = vunpack.c.l.b16 %v453
        %v465 = vunpack.c.h.b16 %v453
        %v466 = vpack.c.b16 %v460, %v458
        %v467 = vpack.c.b16 %v461, %v459
        %v468 = vpack.c.b16 %v464, %v462
        %v469 = vpack.c.b16 %v465, %v463
        %470 = vrot.lane.b32.xlu0 %v466, 1
        %v471 = vpop.permute.xlu0 %470
        %472 = vrot.lane.b32.xlu0 %v467, 1
        %v473 = vpop.permute.xlu0 %472
        %474 = vrot.lane.b32.xlu0 %v468, 1
        %v475 = vpop.permute.xlu0 %474
        %476 = vrot.lane.b32.xlu0 %v469, 1
        %v477 = vpop.permute.xlu0 %476
        %vm478 = vcmask 7168
        %v479 = vsel %vm478, %v471, %v473
        %v480 = vsel %vm478, %v475, %v477
        %483 = vst [vmem:[#allocation2 + $0x30] sm:$0xff] %v479
        %484 = vst [vmem:[#allocation2 + $0x38] sm:$0xff] %v480
        %v485 = vld [vmem:[%s338 + $0x4] sm:$0xf]
        %v486 = vld [vmem:[%s338 + $0x10] sm:$0xf]
        %v487 = vld [vmem:[%s338 + $0x1c] sm:$0xf]
        %v488 = vld [vmem:[%s338 + $0x28] sm:$0xf]
        %v493 = vunpack.c.l.b16 %v485
        %v494 = vunpack.c.l.b16 %v486
        %v495 = vunpack.c.l.b16 %v487
        %v496 = vunpack.c.l.b16 %v488
        %v497 = vpack.c.b16 %v494, %v493
        %v498 = vpack.c.b16 %v496, %v495
        %501 = vst [vmem:[#allocation2 + $0x40] sm:$0xff] %v497
        %502 = vst [vmem:[#allocation2 + $0x48] sm:$0xff] %v498
        %v503 = vld [vmem:[%s338 + $0x4] sm:$0xff]
        %v504 = vld [vmem:[%s338 + $0x10] sm:$0xff]
        %v505 = vld [vmem:[%s338 + $0x1c] sm:$0xff]
        %v506 = vld [vmem:[%s338 + $0x28] sm:$0xff]
        %v511 = vunpack.c.l.b16 %v503
        %v512 = vunpack.c.h.b16 %v503
        %v513 = vunpack.c.l.b16 %v504
        %v514 = vunpack.c.h.b16 %v504
        %v515 = vunpack.c.l.b16 %v505
        %v516 = vunpack.c.h.b16 %v505
        %v517 = vunpack.c.l.b16 %v506
        %v518 = vunpack.c.h.b16 %v506
        %v519 = vpack.c.b16 %v513, %v511
        %v520 = vpack.c.b16 %v514, %v512
        %v521 = vpack.c.b16 %v517, %v515
        %v522 = vpack.c.b16 %v518, %v516
        %523 = vrot.lane.b32.xlu0 %v519, 127
        %v524 = vpop.permute.xlu0 %523
        %525 = vrot.lane.b32.xlu0 %v520, 127
        %v526 = vpop.permute.xlu0 %525
        %527 = vrot.lane.b32.xlu0 %v521, 127
        %v528 = vpop.permute.xlu0 %527
        %529 = vrot.lane.b32.xlu0 %v522, 127
        %v530 = vpop.permute.xlu0 %529
        %vm531 = vcmask 1039360
        %v532 = vsel %vm531, %v524, %v526
        %v533 = vsel %vm531, %v528, %v530
        %536 = vst [vmem:[#allocation2 + $0x50] sm:$0xff] %v532
        %537 = vst [vmem:[#allocation2 + $0x58] sm:$0xff] %v533
        %v538 = vld [vmem:[%s338 + $0x4] sm:$0xff]
        %v539 = vld [vmem:[%s338 + $0x10] sm:$0xff]
        %v540 = vld [vmem:[%s338 + $0x1c] sm:$0xff]
        %v541 = vld [vmem:[%s338 + $0x28] sm:$0xff]
        %v546 = vunpack.c.l.b16 %v538
        %v547 = vunpack.c.h.b16 %v538
        %v548 = vunpack.c.l.b16 %v539
        %v549 = vunpack.c.h.b16 %v539
        %v550 = vunpack.c.l.b16 %v540
        %v551 = vunpack.c.h.b16 %v540
        %v552 = vunpack.c.l.b16 %v541
        %v553 = vunpack.c.h.b16 %v541
        %v554 = vpack.c.b16 %v548, %v546
        %v555 = vpack.c.b16 %v549, %v547
        %v556 = vpack.c.b16 %v552, %v550
        %v557 = vpack.c.b16 %v553, %v551
        %558 = vrot.lane.b32.xlu0 %v554, 119
        %v559 = vpop.permute.xlu0 %558
        %560 = vrot.lane.b32.xlu0 %v555, 119
        %v561 = vpop.permute.xlu0 %560
        %562 = vrot.lane.b32.xlu0 %v556, 119
        %v563 = vpop.permute.xlu0 %562
        %564 = vrot.lane.b32.xlu0 %v557, 119
        %v565 = vpop.permute.xlu0 %564
        %vm566 = vcmask 973824
        %v567 = vsel %vm566, %v559, %v561
        %v568 = vsel %vm566, %v563, %v565
        %571 = vst [vmem:[#allocation2 + $0x60] sm:$0xff] %v567
        %572 = vst [vmem:[#allocation2 + $0x68] sm:$0xff] %v568
        %v573 = vld [vmem:[%s338 + $0x4] sm:$0xff]
        %v574 = vld [vmem:[%s338 + $0x10] sm:$0xff]
        %v575 = vld [vmem:[%s338 + $0x1c] sm:$0xff]
        %v576 = vld [vmem:[%s338 + $0x28] sm:$0xff]
        %v581 = vunpack.c.l.b16 %v573
        %v582 = vunpack.c.h.b16 %v573
        %v583 = vunpack.c.l.b16 %v574
        %v584 = vunpack.c.h.b16 %v574
        %v585 = vunpack.c.l.b16 %v575
        %v586 = vunpack.c.h.b16 %v575
        %v587 = vunpack.c.l.b16 %v576
        %v588 = vunpack.c.h.b16 %v576
        %v589 = vpack.c.b16 %v583, %v581
        %v590 = vpack.c.b16 %v584, %v582
        %v591 = vpack.c.b16 %v587, %v585
        %v592 = vpack.c.b16 %v588, %v586
        %593 = vrot.lane.b32.xlu0 %v589, 118
        %v594 = vpop.permute.xlu0 %593
        %595 = vrot.lane.b32.xlu0 %v590, 118
        %v596 = vpop.permute.xlu0 %595
        %597 = vrot.lane.b32.xlu0 %v591, 118
        %v598 = vpop.permute.xlu0 %597
        %599 = vrot.lane.b32.xlu0 %v592, 118
        %v600 = vpop.permute.xlu0 %599
        %vm601 = vcmask 965632
        %v602 = vsel %vm601, %v594, %v596
        %v603 = vsel %vm601, %v598, %v600
        %606 = vst [vmem:[#allocation2 + $0x70] sm:$0xff] %v602
        %607 = vst [vmem:[#allocation2 + $0x78] sm:$0xff] %v603
        %v608 = vld [vmem:[%s338 + $0x4] sm:$0xff]
        %v609 = vld [vmem:[%s338 + $0x10] sm:$0xff]
        %v610 = vld [vmem:[%s338 + $0x1c] sm:$0xff]
        %v611 = vld [vmem:[%s338 + $0x28] sm:$0xff]
        %v616 = vunpack.c.l.b16 %v608
        %v617 = vunpack.c.h.b16 %v608
        %v618 = vunpack.c.l.b16 %v609
        %v619 = vunpack.c.h.b16 %v609
        %v620 = vunpack.c.l.b16 %v610
        %v621 = vunpack.c.h.b16 %v610
        %v622 = vunpack.c.l.b16 %v611
        %v623 = vunpack.c.h.b16 %v611
        %v624 = vpack.c.b16 %v618, %v616
        %v625 = vpack.c.b16 %v619, %v617
        %v626 = vpack.c.b16 %v622, %v620
        %v627 = vpack.c.b16 %v623, %v621
        %628 = vrot.lane.b32.xlu0 %v624, 117
        %v629 = vpop.permute.xlu0 %628
        %630 = vrot.lane.b32.xlu0 %v625, 117
        %v631 = vpop.permute.xlu0 %630
        %632 = vrot.lane.b32.xlu0 %v626, 117
        %v633 = vpop.permute.xlu0 %632
        %634 = vrot.lane.b32.xlu0 %v627, 117
        %v635 = vpop.permute.xlu0 %634
        %vm636 = vcmask 957440
        %v637 = vsel %vm636, %v629, %v631
        %v638 = vsel %vm636, %v633, %v635
        %641 = vst [vmem:[#allocation2 + $0x80] sm:$0xff] %v637
        %642 = vst [vmem:[#allocation2 + $0x88] sm:$0xff] %v638
        %v643 = vld [vmem:[%s1] sm:$0xff]
        %v644 = vld [vmem:[%s1 + $0x8] sm:$0xf]
        %v645 = vld [vmem:[%s1 + $0xc] sm:$0xff]
        %v646 = vld [vmem:[%s1 + $0x14] sm:$0xf]
        %v647 = vld [vmem:[%s1 + $0x18] sm:$0xff]
        %v648 = vld [vmem:[%s1 + $0x20] sm:$0xf]
        %v649 = vld [vmem:[%s1 + $0x24] sm:$0xff]
        %v650 = vld [vmem:[%s1 + $0x2c] sm:$0xf]
        %v651 = vld [vmem:[%s1 + $0x30] sm:$0xff]
        %v652 = vld [vmem:[%s1 + $0x38] sm:$0xf]
        %v653 = vld [vmem:[%s1 + $0x3c] sm:$0xff]
        %v654 = vld [vmem:[%s1 + $0x44] sm:$0xf]
        %v655 = vld [vmem:[%s1 + $0x48] sm:$0xff]
        %v656 = vld [vmem:[%s1 + $0x50] sm:$0xf]
        %v657 = vld [vmem:[%s1 + $0x54] sm:$0xff]
        %v658 = vld [vmem:[%s1 + $0x5c] sm:$0xf]
        %v659 = vld [vmem:[#allocation2] sm:$0xff]
        %v660 = vld [vmem:[#allocation2 + $0x8] sm:$0xff]
        %v661 = vld [vmem:[#allocation2 + $0x10] sm:$0xff]
        %v662 = vld [vmem:[#allocation2 + $0x18] sm:$0xff]
        %v663 = vld [vmem:[#allocation2 + $0x20] sm:$0xff]
        %v664 = vld [vmem:[#allocation2 + $0x28] sm:$0xff]
        %v665 = vld [vmem:[#allocation2 + $0x30] sm:$0xff]
        %v666 = vld [vmem:[#allocation2 + $0x38] sm:$0xff]
        %v667 = vld [vmem:[#allocation2 + $0x40] sm:$0xff]
        %v668 = vld [vmem:[#allocation2 + $0x48] sm:$0xff]
        %v669 = vld [vmem:[#allocation2 + $0x50] sm:$0xff]
        %v670 = vld [vmem:[#allocation2 + $0x58] sm:$0xff]
        %v671 = vld [vmem:[#allocation2 + $0x60] sm:$0xff]
        %v672 = vld [vmem:[#allocation2 + $0x68] sm:$0xff]
        %v673 = vld [vmem:[#allocation2 + $0x70] sm:$0xff]
        %v674 = vld [vmem:[#allocation2 + $0x78] sm:$0xff]
        %v675 = vld [vmem:[#allocation2 + $0x80] sm:$0xff]
        %v676 = vld [vmem:[#allocation2 + $0x88] sm:$0xff]
        %v677 = vld [vmem:[%s2] sm:$0xff]
        %v678 = vld [vmem:[%s2 + $0x8] sm:$0xff]
        %v679 = vld [vmem:[%s2 + $0x10] sm:$0xff]
        %v680 = vld [vmem:[%s2 + $0x18] sm:$0xff]
        %v681 = vld [vmem:[%s2 + $0x20] sm:$0xff]
        %v682 = vld [vmem:[%s2 + $0x28] sm:$0xff]
        %v683 = vld [vmem:[%s2 + $0x30] sm:$0xff]
        %v684 = vld [vmem:[%s2 + $0x38] sm:$0xff]
        %686 = vset.pattern.permute.xlu0 0
        %687 = vperm.xlu0 %686, %v677
        %v688 = vpop.permute.xlu0 %687
        %691 = vset.pattern.permute.xlu0 0
        %692 = vperm.xlu0 %691, %v678
        %v693 = vpop.permute.xlu0 %692
        %696 = vset.pattern.permute.xlu0 0
        %697 = vperm.xlu0 %696, %v679
        %v698 = vpop.permute.xlu0 %697
        %701 = vset.pattern.permute.xlu0 0
        %702 = vperm.xlu0 %701, %v680
        %v703 = vpop.permute.xlu0 %702
        %706 = vset.pattern.permute.xlu0 0
        %707 = vperm.xlu0 %706, %v681
        %v708 = vpop.permute.xlu0 %707
        %711 = vset.pattern.permute.xlu0 0
        %712 = vperm.xlu0 %711, %v682
        %v713 = vpop.permute.xlu0 %712
        %716 = vset.pattern.permute.xlu0 0
        %717 = vperm.xlu0 %716, %v683
        %v718 = vpop.permute.xlu0 %717
        %721 = vset.pattern.permute.xlu0 0
        %722 = vperm.xlu0 %721, %v684
        %v723 = vpop.permute.xlu0 %722
        %v741 = vunpack.c.l.b16 %v643
        %v742 = vunpack.c.h.b16 %v643
        %v743 = vunpack.c.l.b16 %v644
        %v744 = vunpack.c.l.b16 %v645
        %v745 = vunpack.c.h.b16 %v645
        %v746 = vunpack.c.l.b16 %v646
        %v747 = vunpack.c.l.b16 %v647
        %v748 = vunpack.c.h.b16 %v647
        %v749 = vunpack.c.l.b16 %v648
        %v750 = vunpack.c.l.b16 %v649
        %v751 = vunpack.c.h.b16 %v649
        %v752 = vunpack.c.l.b16 %v650
        %v753 = vunpack.c.l.b16 %v651
        %v754 = vunpack.c.h.b16 %v651
        %v755 = vunpack.c.l.b16 %v652
        %v756 = vunpack.c.l.b16 %v653
        %v757 = vunpack.c.h.b16 %v653
        %v758 = vunpack.c.l.b16 %v654
        %v759 = vunpack.c.l.b16 %v655
        %v760 = vunpack.c.h.b16 %v655
        %v761 = vunpack.c.l.b16 %v656
        %v762 = vunpack.c.l.b16 %v657
        %v763 = vunpack.c.h.b16 %v657
        %v764 = vunpack.c.l.b16 %v658
        %v765 = vpack.c.b16 %v744, %v741
        %v766 = vpack.c.b16 %v745, %v742
        %v767 = vpack.c.b16 %v746, %v743
        %v768 = vpack.c.b16 %v750, %v747
        %v769 = vpack.c.b16 %v751, %v748
        %v770 = vpack.c.b16 %v752, %v749
        %v771 = vpack.c.b16 %v756, %v753
        %v772 = vpack.c.b16 %v757, %v754
        %v773 = vpack.c.b16 %v758, %v755
        %v774 = vpack.c.b16 %v762, %v759
        %v775 = vpack.c.b16 %v763, %v760
        %v776 = vpack.c.b16 %v764, %v761
        %vm785 = vcmask 261120
        %v787 = vsel %vm785, %v767, 0
        %v790 = vsel %vm785, %v770, 0
        %v793 = vsel %vm785, %v773, 0
        %v796 = vsel %vm785, %v776, 0
        %798 = vmatprep.subr.bf16.mxu0 0
        %799 = vmatpush1.bf16.msra.mxu0 %v659
        %800 = vmatprep.subr.bf16.mxu0 0
        %801 = vmatpush1.bf16.msra.mxu0 %v660
        %802 = vmatprep.subr.bf16.mxu0 0
        %803 = vmatpush1.bf16.msra.mxu0 %v661
        %804 = vmatprep.subr.bf16.mxu0 0
        %805 = vmatpush1.bf16.msra.mxu0 %v662
        %806 = vmatprep.subr.bf16.mxu0 0
        %807 = vmatpush1.bf16.msra.mxu0 %v663
        %808 = vmatprep.subr.bf16.mxu0 0
        %809 = vmatpush1.bf16.msra.mxu0 %v664
        %810 = vmatprep.subr.bf16.mxu0 0
        %811 = vmatpush1.bf16.msra.mxu0 %v665
        %812 = vmatprep.subr.bf16.mxu0 0
        %813 = vmatpush1.bf16.msra.mxu0 %v666
        %814 = vmatprep.subr.bf16.mxu0 0
        %815 = vmatpush1.bf16.msra.mxu0 %v667
        %816 = vmatprep.subr.bf16.mxu0 0
        %817 = vmatpush1.bf16.msra.mxu0 %v668
        %818 = vmatprep.subr.bf16.mxu0 0
        %819 = vmatpush1.bf16.msra.mxu0 %v669
        %820 = vmatprep.subr.bf16.mxu0 0
        %821 = vmatpush1.bf16.msra.mxu0 %v670
        %822 = vmatprep.subr.bf16.mxu0 0
        %823 = vmatpush1.bf16.msra.mxu0 %v671
        %824 = vmatprep.subr.bf16.mxu0 0
        %825 = vmatpush1.bf16.msra.mxu0 %v672
        %826 = vmatprep.subr.bf16.mxu0 0
        %827 = vmatpush1.bf16.msra.mxu0 %v673
        %828 = vmatprep.subr.bf16.mxu0 0
        %829 = vmatpush1.bf16.msra.mxu0 %v674
        %830 = vmatprep.mubr.bf16.mxu0 %v766
        %831 = vmatmul.mubr.bf16.gmra.mrb[0].mxu0 %v765
        %v832 = vpop.f32.mrb[0].mxu0
        %v833 = vadd.f32 %v688, %v832
        %v834 = vpop.f32.mrb[0].mxu0
        %v835 = vpop.f32.mrb[0].mxu0
        %v836 = vadd.f32 %v693, %v835
        %v837 = vpop.f32.mrb[0].mxu0
        %838 = vmatprep.mubr.bf16.mxu0 %v769
        %839 = vmatmul.mubr.bf16.gmra.mrb[0].mxu0 %v768
        %v840 = vpop.f32.mrb[0].mxu0
        %v841 = vadd.f32 %v698, %v840
        %v842 = vpop.f32.mrb[0].mxu0
        %v843 = vpop.f32.mrb[0].mxu0
        %v844 = vadd.f32 %v703, %v843
        %v845 = vpop.f32.mrb[0].mxu0
        %846 = vmatprep.mubr.bf16.mxu0 %v772
        %847 = vmatmul.mubr.bf16.gmra.mrb[0].mxu0 %v771
        %v848 = vpop.f32.mrb[0].mxu0
        %v849 = vadd.f32 %v708, %v848
        %v850 = vpop.f32.mrb[0].mxu0
        %v851 = vpop.f32.mrb[0].mxu0
        %v852 = vadd.f32 %v713, %v851
        %v853 = vpop.f32.mrb[0].mxu0
        %854 = vmatprep.mubr.bf16.mxu0 %v775
        %855 = vmatmul.mubr.bf16.gmra.mrb[0].mxu0 %v774
        %v856 = vpop.f32.mrb[0].mxu0
        %v857 = vadd.f32 %v718, %v856
        %v858 = vpop.f32.mrb[0].mxu0
        %v859 = vpop.f32.mrb[0].mxu0
        %v860 = vadd.f32 %v723, %v859
        %v861 = vpop.f32.mrb[0].mxu0
        %862 = vdwg.mxu0
        %863 = vmatprep.subr.bf16.mxu0 0
        %864 = vmatpush1.bf16.msra.mxu0 %v675
        %865 = vmatprep.subr.bf16.mxu0 0
        %866 = vmatpush1.bf16.msra.mxu0 %v676
        %867 = vmatprep.subr.bf16.mxu0 0
        %868 = vmatpush1.bf16.msra.mxu0 0
        %869 = vmatprep.subr.bf16.mxu0 0
        %870 = vmatpush1.bf16.msra.mxu0 0
        %871 = vmatprep.subr.bf16.mxu0 0
        %872 = vmatpush1.bf16.msra.mxu0 0
        %873 = vmatprep.subr.bf16.mxu0 0
        %874 = vmatpush1.bf16.msra.mxu0 0
        %875 = vmatprep.subr.bf16.mxu0 0
        %876 = vmatpush1.bf16.msra.mxu0 0
        %877 = vmatprep.subr.bf16.mxu0 0
        %878 = vmatpush1.bf16.msra.mxu0 0
        %879 = vmatprep.subr.bf16.mxu0 0
        %880 = vmatpush1.bf16.msra.mxu0 0
        %881 = vmatprep.subr.bf16.mxu0 0
        %882 = vmatpush1.bf16.msra.mxu0 0
        %883 = vmatprep.subr.bf16.mxu0 0
        %884 = vmatpush1.bf16.msra.mxu0 0
        %885 = vmatprep.subr.bf16.mxu0 0
        %886 = vmatpush1.bf16.msra.mxu0 0
        %887 = vmatprep.subr.bf16.mxu0 0
        %888 = vmatpush1.bf16.msra.mxu0 0
        %889 = vmatprep.subr.bf16.mxu0 0
        %890 = vmatpush1.bf16.msra.mxu0 0
        %891 = vmatprep.subr.bf16.mxu0 0
        %892 = vmatpush1.bf16.msra.mxu0 0
        %893 = vmatprep.subr.bf16.mxu0 0
        %894 = vmatpush1.bf16.msra.mxu0 0
        %895 = vmatprep.mubr.bf16.mxu0 0
        %896 = vmatmul.mubr.bf16.gmra.mrb[0].mxu0 %v787
        %v897 = vpop.f32.mrb[0].mxu0
        %v898 = vadd.f32 %v833, %v897
        %v899 = vpop.f32.mrb[0].mxu0
        %v900 = vpop.f32.mrb[0].mxu0
        %v901 = vadd.f32 %v836, %v900
        %v902 = vpop.f32.mrb[0].mxu0
        %903 = vmatprep.mubr.bf16.mxu0 0
        %904 = vmatmul.mubr.bf16.gmra.mrb[0].mxu0 %v790
        %v905 = vpop.f32.mrb[0].mxu0
        %v906 = vadd.f32 %v841, %v905
        %v907 = vpop.f32.mrb[0].mxu0
        %v908 = vpop.f32.mrb[0].mxu0
        %v909 = vadd.f32 %v844, %v908
        %v910 = vpop.f32.mrb[0].mxu0
        %911 = vmatprep.mubr.bf16.mxu0 0
        %912 = vmatmul.mubr.bf16.gmra.mrb[0].mxu0 %v793
        %v913 = vpop.f32.mrb[0].mxu0
        %v914 = vadd.f32 %v849, %v913
        %v915 = vpop.f32.mrb[0].mxu0
        %v916 = vpop.f32.mrb[0].mxu0
        %v917 = vadd.f32 %v852, %v916
        %v918 = vpop.f32.mrb[0].mxu0
        %919 = vmatprep.mubr.bf16.mxu0 0
        %920 = vmatmul.mubr.bf16.gmra.mrb[0].mxu0 %v796
        %v921 = vpop.f32.mrb[0].mxu0
        %v922 = vadd.f32 %v857, %v921
        %v923 = vpop.f32.mrb[0].mxu0
        %v924 = vpop.f32.mrb[0].mxu0
        %v925 = vadd.f32 %v860, %v924
        %v926 = vpop.f32.mrb[0].mxu0
        %927 = vdwg.mxu0
        %v928 = vmax.f32 %v898, 0.0
        %v929 = vmax.f32 %v901, 0.0
        %v930 = vmax.f32 %v906, 0.0
        %v931 = vmax.f32 %v909, 0.0
        %v932 = vmax.f32 %v914, 0.0
        %v933 = vmax.f32 %v917, 0.0
        %v934 = vmax.f32 %v922, 0.0
        %v935 = vmax.f32 %v925, 0.0
        %v936 = vpack.c.bf16 %v929, %v928
        %v937 = vpack.c.bf16 %v931, %v930
        %v938 = vpack.c.bf16 %v933, %v932
        %v939 = vpack.c.bf16 %v935, %v934
        %v940 = vld [vmem:[%s5] sm:$0xf]
        %v941 = vld [vmem:[%s5 + $0x4] sm:$0xf]
        %v942 = vld [vmem:[%s5 + $0x8] sm:$0xf]
        %v943 = vld [vmem:[%s5 + $0xc] sm:$0xf]
        %v944 = vld [vmem:[%s5 + $0x10] sm:$0xf]
        %v945 = vld [vmem:[%s5 + $0x14] sm:$0xf]
        %v946 = vld [vmem:[%s5 + $0x18] sm:$0xf]
        %v947 = vld [vmem:[%s5 + $0x1c] sm:$0xf]
        %v948 = vld [vmem:[%s5 + $0x20] sm:$0xf]
        %v949 = vld [vmem:[%s5 + $0x24] sm:$0xf]
        %v950 = vld [vmem:[%s5 + $0x28] sm:$0xf]
        %v951 = vld [vmem:[%s5 + $0x2c] sm:$0xf]
        %v952 = vld [vmem:[%s5 + $0x30] sm:$0xf]
        %v953 = vld [vmem:[%s5 + $0x34] sm:$0xf]
        %v954 = vld [vmem:[%s5 + $0x38] sm:$0xf]
        %v955 = vld [vmem:[%s5 + $0x3c] sm:$0xf]
        %v972 = vunpack.c.l.b16 %v940
        %v973 = vunpack.c.l.b16 %v941
        %v974 = vunpack.c.l.b16 %v942
        %v975 = vunpack.c.l.b16 %v943
        %v976 = vunpack.c.l.b16 %v944
        %v977 = vunpack.c.l.b16 %v945
        %v978 = vunpack.c.l.b16 %v946
        %v979 = vunpack.c.l.b16 %v947
        %v980 = vunpack.c.l.b16 %v948
        %v981 = vunpack.c.l.b16 %v949
        %v982 = vunpack.c.l.b16 %v950
        %v983 = vunpack.c.l.b16 %v951
        %v984 = vunpack.c.l.b16 %v952
        %v985 = vunpack.c.l.b16 %v953
        %v986 = vunpack.c.l.b16 %v954
        %v987 = vunpack.c.l.b16 %v955
        %v988 = vpack.c.b16 %v973, %v972
        %v989 = vpack.c.b16 %v975, %v974
        %v990 = vpack.c.b16 %v977, %v976
        %v991 = vpack.c.b16 %v979, %v978
        %v992 = vpack.c.b16 %v981, %v980
        %v993 = vpack.c.b16 %v983, %v982
        %v994 = vpack.c.b16 %v985, %v984
        %v995 = vpack.c.b16 %v987, %v986
        %1004 = vmatprep.subr.bf16.mxu0 0
        %1005 = vmatpush1.bf16.msra.mxu0 %v988
        %1006 = vmatprep.subr.bf16.mxu0 0
        %1007 = vmatpush1.bf16.msra.mxu0 %v989
        %1008 = vmatprep.subr.bf16.mxu0 0
        %1009 = vmatpush1.bf16.msra.mxu0 %v990
        %1010 = vmatprep.subr.bf16.mxu0 0
        %1011 = vmatpush1.bf16.msra.mxu0 %v991
        %1012 = vmatprep.subr.bf16.mxu0 0
        %1013 = vmatpush1.bf16.msra.mxu0 %v992
        %1014 = vmatprep.subr.bf16.mxu0 0
        %1015 = vmatpush1.bf16.msra.mxu0 %v993
        %1016 = vmatprep.subr.bf16.mxu0 0
        %1017 = vmatpush1.bf16.msra.mxu0 %v994
        %1018 = vmatprep.subr.bf16.mxu0 0
        %1019 = vmatpush1.bf16.msra.mxu0 %v995
        %1020 = vmatprep.subr.bf16.mxu0 0
        %1021 = vmatpush1.bf16.msra.mxu0 0
        %1022 = vmatprep.subr.bf16.mxu0 0
        %1023 = vmatpush1.bf16.msra.mxu0 0
        %1024 = vmatprep.subr.bf16.mxu0 0
        %1025 = vmatpush1.bf16.msra.mxu0 0
        %1026 = vmatprep.subr.bf16.mxu0 0
        %1027 = vmatpush1.bf16.msra.mxu0 0
        %1028 = vmatprep.subr.bf16.mxu0 0
        %1029 = vmatpush1.bf16.msra.mxu0 0
        %1030 = vmatprep.subr.bf16.mxu0 0
        %1031 = vmatpush1.bf16.msra.mxu0 0
        %1032 = vmatprep.subr.bf16.mxu0 0
        %1033 = vmatpush1.bf16.msra.mxu0 0
        %1034 = vmatprep.subr.bf16.mxu0 0
        %1035 = vmatpush1.bf16.msra.mxu0 0
        %1036 = vmatprep.mubr.bf16.mxu0 0
        %1037 = vmatmul.mubr.bf16.gmra.mrb[0].mxu0 %v936
        %v1038 = vpop.f32.mrb[0].mxu0
        %v1039 = vadd.f32 0.0, %v1038
        %v1040 = vpop.f32.mrb[0].mxu0
        %v1041 = vpop.f32.mrb[0].mxu0
        %v1042 = vadd.f32 0.0, %v1041
        %v1043 = vpop.f32.mrb[0].mxu0
        %1044 = vmatprep.mubr.bf16.mxu0 0
        %1045 = vmatmul.mubr.bf16.gmra.mrb[0].mxu0 %v937
        %v1046 = vpop.f32.mrb[0].mxu0
        %v1047 = vadd.f32 0.0, %v1046
        %v1048 = vpop.f32.mrb[0].mxu0
        %v1049 = vpop.f32.mrb[0].mxu0
        %v1050 = vadd.f32 0.0, %v1049
        %v1051 = vpop.f32.mrb[0].mxu0
        %1052 = vmatprep.mubr.bf16.mxu0 0
        %1053 = vmatmul.mubr.bf16.gmra.mrb[0].mxu0 %v938
        %v1054 = vpop.f32.mrb[0].mxu0
        %v1055 = vadd.f32 0.0, %v1054
        %v1056 = vpop.f32.mrb[0].mxu0
        %v1057 = vpop.f32.mrb[0].mxu0
        %v1058 = vadd.f32 0.0, %v1057
        %v1059 = vpop.f32.mrb[0].mxu0
        %1060 = vmatprep.mubr.bf16.mxu0 0
        %1061 = vmatmul.mubr.bf16.gmra.mrb[0].mxu0 %v939
        %v1062 = vpop.f32.mrb[0].mxu0
        %v1063 = vadd.f32 0.0, %v1062
        %v1064 = vpop.f32.mrb[0].mxu0
        %v1065 = vpop.f32.mrb[0].mxu0
        %v1066 = vadd.f32 0.0, %v1065
        %v1067 = vpop.f32.mrb[0].mxu0
        %1068 = vdwg.mxu0
        %1069 = vst [vmem:[#allocation3] sm:$0xff] 0
        %1070 = vst [vmem:[#allocation3 + $0x18] sm:$0xff] 0
        %1071 = vst [vmem:[#allocation3 + $0x30] sm:$0xff] 0
        %1072 = vst [vmem:[#allocation3 + $0x48] sm:$0xff] 0
        %1073 = vst [vmem:[#allocation3 + $0x10] sm:$0xff] 0
        %1074 = vst [vmem:[#allocation3 + $0x28] sm:$0xff] 0
        %1075 = vst [vmem:[#allocation3 + $0x40] sm:$0xff] 0
        %1076 = vst [vmem:[#allocation3 + $0x58] sm:$0xff] 0
        %v1077 = vpack.c.bf16 %v1042, %v1039
        %v1078 = vpack.c.bf16 %v1050, %v1047
        %v1079 = vpack.c.bf16 %v1058, %v1055
        %v1080 = vpack.c.bf16 %v1066, %v1063
        %1081 = vst [vmem:[#allocation3 + $0x8] sm:$0xff] %v1077
        %1082 = vst [vmem:[#allocation3 + $0x20] sm:$0xff] %v1078
        %1083 = vst [vmem:[#allocation3 + $0x38] sm:$0xff] %v1079
        %1084 = vst [vmem:[#allocation3 + $0x50] sm:$0xff] %v1080
        %v1085 = vld [vmem:[#allocation3] sm:$0xff]
        %v1086 = vld [vmem:[#allocation3 + $0x8] sm:$0xff]
        %v1087 = vld [vmem:[#allocation3 + $0x18] sm:$0xff]
        %v1088 = vld [vmem:[#allocation3 + $0x20] sm:$0xff]
        %v1089 = vld [vmem:[#allocation3 + $0x30] sm:$0xff]
        %v1090 = vld [vmem:[#allocation3 + $0x38] sm:$0xff]
        %v1091 = vld [vmem:[#allocation3 + $0x48] sm:$0xff]
        %v1092 = vld [vmem:[#allocation3 + $0x50] sm:$0xff]
        %1101 = vrot.lane.b32.xlu0 %v1085, 7
        %v1102 = vpop.permute.xlu0 %1101
        %1103 = vrot.lane.b32.xlu0 %v1086, 7
        %v1104 = vpop.permute.xlu0 %1103
        %1105 = vrot.lane.b32.xlu0 %v1087, 7
        %v1106 = vpop.permute.xlu0 %1105
        %1107 = vrot.lane.b32.xlu0 %v1088, 7
        %v1108 = vpop.permute.xlu0 %1107
        %1109 = vrot.lane.b32.xlu0 %v1089, 7
        %v1110 = vpop.permute.xlu0 %1109
        %1111 = vrot.lane.b32.xlu0 %v1090, 7
        %v1112 = vpop.permute.xlu0 %1111
        %1113 = vrot.lane.b32.xlu0 %v1091, 7
        %v1114 = vpop.permute.xlu0 %1113
        %1115 = vrot.lane.b32.xlu0 %v1092, 7
        %v1116 = vpop.permute.xlu0 %1115
        %vm1117 = vcmask 56320
        %v1118 = vsel %vm1117, %v1102, %v1104
        %v1119 = vsel %vm1117, %v1106, %v1108
        %v1120 = vsel %vm1117, %v1110, %v1112
        %v1121 = vsel %vm1117, %v1114, %v1116
        %1126 = vst [vmem:[#allocation4] sm:$0xff] %v1118
        %1127 = vst [vmem:[#allocation4 + $0x8] sm:$0xff] %v1119
        %1128 = vst [vmem:[#allocation4 + $0x10] sm:$0xff] %v1120
        %1129 = vst [vmem:[#allocation4 + $0x18] sm:$0xff] %v1121
        %v1130 = vld [vmem:[#allocation3] sm:$0xff]
        %v1131 = vld [vmem:[#allocation3 + $0x8] sm:$0xff]
        %v1132 = vld [vmem:[#allocation3 + $0x18] sm:$0xff]
        %v1133 = vld [vmem:[#allocation3 + $0x20] sm:$0xff]
        %v1134 = vld [vmem:[#allocation3 + $0x30] sm:$0xff]
        %v1135 = vld [vmem:[#allocation3 + $0x38] sm:$0xff]
        %v1136 = vld [vmem:[#allocation3 + $0x48] sm:$0xff]
        %v1137 = vld [vmem:[#allocation3 + $0x50] sm:$0xff]
        %1146 = vrot.lane.b32.xlu0 %v1130, 6
        %v1147 = vpop.permute.xlu0 %1146
        %1148 = vrot.lane.b32.xlu0 %v1131, 6
        %v1149 = vpop.permute.xlu0 %1148
        %1150 = vrot.lane.b32.xlu0 %v1132, 6
        %v1151 = vpop.permute.xlu0 %1150
        %1152 = vrot.lane.b32.xlu0 %v1133, 6
        %v1153 = vpop.permute.xlu0 %1152
        %1154 = vrot.lane.b32.xlu0 %v1134, 6
        %v1155 = vpop.permute.xlu0 %1154
        %1156 = vrot.lane.b32.xlu0 %v1135, 6
        %v1157 = vpop.permute.xlu0 %1156
        %1158 = vrot.lane.b32.xlu0 %v1136, 6
        %v1159 = vpop.permute.xlu0 %1158
        %1160 = vrot.lane.b32.xlu0 %v1137, 6
        %v1161 = vpop.permute.xlu0 %1160
        %vm1162 = vcmask 48128
        %v1163 = vsel %vm1162, %v1147, %v1149
        %v1164 = vsel %vm1162, %v1151, %v1153
        %v1165 = vsel %vm1162, %v1155, %v1157
        %v1166 = vsel %vm1162, %v1159, %v1161
        %1171 = vst [vmem:[#allocation4 + $0x20] sm:$0xff] %v1163
        %1172 = vst [vmem:[#allocation4 + $0x28] sm:$0xff] %v1164
        %1173 = vst [vmem:[#allocation4 + $0x30] sm:$0xff] %v1165
        %1174 = vst [vmem:[#allocation4 + $0x38] sm:$0xff] %v1166
        %v1175 = vld [vmem:[#allocation3] sm:$0xff]
        %v1176 = vld [vmem:[#allocation3 + $0x8] sm:$0xff]
        %v1177 = vld [vmem:[#allocation3 + $0x18] sm:$0xff]
        %v1178 = vld [vmem:[#allocation3 + $0x20] sm:$0xff]
        %v1179 = vld [vmem:[#allocation3 + $0x30] sm:$0xff]
        %v1180 = vld [vmem:[#allocation3 + $0x38] sm:$0xff]
        %v1181 = vld [vmem:[#allocation3 + $0x48] sm:$0xff]
        %v1182 = vld [vmem:[#allocation3 + $0x50] sm:$0xff]
        %1191 = vrot.lane.b32.xlu0 %v1175, 5
        %v1192 = vpop.permute.xlu0 %1191
        %1193 = vrot.lane.b32.xlu0 %v1176, 5
        %v1194 = vpop.permute.xlu0 %1193
        %1195 = vrot.lane.b32.xlu0 %v1177, 5
        %v1196 = vpop.permute.xlu0 %1195
        %1197 = vrot.lane.b32.xlu0 %v1178, 5
        %v1198 = vpop.permute.xlu0 %1197
        %1199 = vrot.lane.b32.xlu0 %v1179, 5
        %v1200 = vpop.permute.xlu0 %1199
        %1201 = vrot.lane.b32.xlu0 %v1180, 5
        %v1202 = vpop.permute.xlu0 %1201
        %1203 = vrot.lane.b32.xlu0 %v1181, 5
        %v1204 = vpop.permute.xlu0 %1203
        %1205 = vrot.lane.b32.xlu0 %v1182, 5
        %v1206 = vpop.permute.xlu0 %1205
        %vm1207 = vcmask 39936
        %v1208 = vsel %vm1207, %v1192, %v1194
        %v1209 = vsel %vm1207, %v1196, %v1198
        %v1210 = vsel %vm1207, %v1200, %v1202
        %v1211 = vsel %vm1207, %v1204, %v1206
        %1216 = vst [vmem:[#allocation4 + $0x40] sm:$0xff] %v1208
        %1217 = vst [vmem:[#allocation4 + $0x48] sm:$0xff] %v1209
        %1218 = vst [vmem:[#allocation4 + $0x50] sm:$0xff] %v1210
        %1219 = vst [vmem:[#allocation4 + $0x58] sm:$0xff] %v1211
        %v1220 = vld [vmem:[#allocation3] sm:$0xff]
        %v1221 = vld [vmem:[#allocation3 + $0x8] sm:$0xff]
        %v1222 = vld [vmem:[#allocation3 + $0x18] sm:$0xff]
        %v1223 = vld [vmem:[#allocation3 + $0x20] sm:$0xff]
        %v1224 = vld [vmem:[#allocation3 + $0x30] sm:$0xff]
        %v1225 = vld [vmem:[#allocation3 + $0x38] sm:$0xff]
        %v1226 = vld [vmem:[#allocation3 + $0x48] sm:$0xff]
        %v1227 = vld [vmem:[#allocation3 + $0x50] sm:$0xff]
        %1236 = vrot.lane.b32.xlu0 %v1220, 1
        %v1237 = vpop.permute.xlu0 %1236
        %1238 = vrot.lane.b32.xlu0 %v1221, 1
        %v1239 = vpop.permute.xlu0 %1238
        %1240 = vrot.lane.b32.xlu0 %v1222, 1
        %v1241 = vpop.permute.xlu0 %1240
        %1242 = vrot.lane.b32.xlu0 %v1223, 1
        %v1243 = vpop.permute.xlu0 %1242
        %1244 = vrot.lane.b32.xlu0 %v1224, 1
        %v1245 = vpop.permute.xlu0 %1244
        %1246 = vrot.lane.b32.xlu0 %v1225, 1
        %v1247 = vpop.permute.xlu0 %1246
        %1248 = vrot.lane.b32.xlu0 %v1226, 1
        %v1249 = vpop.permute.xlu0 %1248
        %1250 = vrot.lane.b32.xlu0 %v1227, 1
        %v1251 = vpop.permute.xlu0 %1250
        %v1252 = vsel %vm478, %v1237, %v1239
        %v1253 = vsel %vm478, %v1241, %v1243
        %v1254 = vsel %vm478, %v1245, %v1247
        %v1255 = vsel %vm478, %v1249, %v1251
        %1260 = vst [vmem:[#allocation4 + $0x60] sm:$0xff] %v1252
        %1261 = vst [vmem:[#allocation4 + $0x68] sm:$0xff] %v1253
        %1262 = vst [vmem:[#allocation4 + $0x70] sm:$0xff] %v1254
        %1263 = vst [vmem:[#allocation4 + $0x78] sm:$0xff] %v1255
        %v1264 = vld [vmem:[#allocation3 + $0x8] sm:$0xff]
        %v1265 = vld [vmem:[#allocation3 + $0x20] sm:$0xff]
        %v1266 = vld [vmem:[#allocation3 + $0x38] sm:$0xff]
        %v1267 = vld [vmem:[#allocation3 + $0x50] sm:$0xff]
        %1268 = vst [vmem:[#allocation4 + $0x80] sm:$0xff] %v1264
        %1269 = vst [vmem:[#allocation4 + $0x88] sm:$0xff] %v1265
        %1270 = vst [vmem:[#allocation4 + $0x90] sm:$0xff] %v1266
        %1271 = vst [vmem:[#allocation4 + $0x98] sm:$0xff] %v1267
        %v1272 = vld [vmem:[#allocation3 + $0x8] sm:$0xff]
        %v1273 = vld [vmem:[#allocation3 + $0x10] sm:$0xff]
        %v1274 = vld [vmem:[#allocation3 + $0x20] sm:$0xff]
        %v1275 = vld [vmem:[#allocation3 + $0x28] sm:$0xff]
        %v1276 = vld [vmem:[#allocation3 + $0x38] sm:$0xff]
        %v1277 = vld [vmem:[#allocation3 + $0x40] sm:$0xff]
        %v1278 = vld [vmem:[#allocation3 + $0x50] sm:$0xff]
        %v1279 = vld [vmem:[#allocation3 + $0x58] sm:$0xff]
        %1288 = vrot.lane.b32.xlu0 %v1272, 127
        %v1289 = vpop.permute.xlu0 %1288
        %1290 = vrot.lane.b32.xlu0 %v1273, 127
        %v1291 = vpop.permute.xlu0 %1290
        %1292 = vrot.lane.b32.xlu0 %v1274, 127
        %v1293 = vpop.permute.xlu0 %1292
        %1294 = vrot.lane.b32.xlu0 %v1275, 127
        %v1295 = vpop.permute.xlu0 %1294
        %1296 = vrot.lane.b32.xlu0 %v1276, 127
        %v1297 = vpop.permute.xlu0 %1296
        %1298 = vrot.lane.b32.xlu0 %v1277, 127
        %v1299 = vpop.permute.xlu0 %1298
        %1300 = vrot.lane.b32.xlu0 %v1278, 127
        %v1301 = vpop.permute.xlu0 %1300
        %1302 = vrot.lane.b32.xlu0 %v1279, 127
        %v1303 = vpop.permute.xlu0 %1302
        %v1304 = vsel %vm531, %v1289, %v1291
        %v1305 = vsel %vm531, %v1293, %v1295
        %v1306 = vsel %vm531, %v1297, %v1299
        %v1307 = vsel %vm531, %v1301, %v1303
        %1312 = vst [vmem:[#allocation4 + $0xa0] sm:$0xff] %v1304
        %1313 = vst [vmem:[#allocation4 + $0xa8] sm:$0xff] %v1305
        %1314 = vst [vmem:[#allocation4 + $0xb0] sm:$0xff] %v1306
        %1315 = vst [vmem:[#allocation4 + $0xb8] sm:$0xff] %v1307
        %v1316 = vld [vmem:[#allocation3 + $0x8] sm:$0xff]
        %v1317 = vld [vmem:[#allocation3 + $0x10] sm:$0xff]
        %v1318 = vld [vmem:[#allocation3 + $0x20] sm:$0xff]
        %v1319 = vld [vmem:[#allocation3 + $0x28] sm:$0xff]
        %v1320 = vld [vmem:[#allocation3 + $0x38] sm:$0xff]
        %v1321 = vld [vmem:[#allocation3 + $0x40] sm:$0xff]
        %v1322 = vld [vmem:[#allocation3 + $0x50] sm:$0xff]
        %v1323 = vld [vmem:[#allocation3 + $0x58] sm:$0xff]
        %1332 = vrot.lane.b32.xlu0 %v1316, 123
        %v1333 = vpop.permute.xlu0 %1332
        %1334 = vrot.lane.b32.xlu0 %v1317, 123
        %v1335 = vpop.permute.xlu0 %1334
        %1336 = vrot.lane.b32.xlu0 %v1318, 123
        %v1337 = vpop.permute.xlu0 %1336
        %1338 = vrot.lane.b32.xlu0 %v1319, 123
        %v1339 = vpop.permute.xlu0 %1338
        %1340 = vrot.lane.b32.xlu0 %v1320, 123
        %v1341 = vpop.permute.xlu0 %1340
        %1342 = vrot.lane.b32.xlu0 %v1321, 123
        %v1343 = vpop.permute.xlu0 %1342
        %1344 = vrot.lane.b32.xlu0 %v1322, 123
        %v1345 = vpop.permute.xlu0 %1344
        %1346 = vrot.lane.b32.xlu0 %v1323, 123
        %v1347 = vpop.permute.xlu0 %1346
        %vm1348 = vcmask 1006592
        %v1349 = vsel %vm1348, %v1333, %v1335
        %v1350 = vsel %vm1348, %v1337, %v1339
        %v1351 = vsel %vm1348, %v1341, %v1343
        %v1352 = vsel %vm1348, %v1345, %v1347
        %1357 = vst [vmem:[#allocation4 + $0xc0] sm:$0xff] %v1349
        %1358 = vst [vmem:[#allocation4 + $0xc8] sm:$0xff] %v1350
        %1359 = vst [vmem:[#allocation4 + $0xd0] sm:$0xff] %v1351
        %1360 = vst [vmem:[#allocation4 + $0xd8] sm:$0xff] %v1352
        %v1361 = vld [vmem:[#allocation3 + $0x8] sm:$0xff]
        %v1362 = vld [vmem:[#allocation3 + $0x10] sm:$0xff]
        %v1363 = vld [vmem:[#allocation3 + $0x20] sm:$0xff]
        %v1364 = vld [vmem:[#allocation3 + $0x28] sm:$0xff]
        %v1365 = vld [vmem:[#allocation3 + $0x38] sm:$0xff]
        %v1366 = vld [vmem:[#allocation3 + $0x40] sm:$0xff]
        %v1367 = vld [vmem:[#allocation3 + $0x50] sm:$0xff]
        %v1368 = vld [vmem:[#allocation3 + $0x58] sm:$0xff]
        %1377 = vrot.lane.b32.xlu0 %v1361, 122
        %v1378 = vpop.permute.xlu0 %1377
        %1379 = vrot.lane.b32.xlu0 %v1362, 122
        %v1380 = vpop.permute.xlu0 %1379
        %1381 = vrot.lane.b32.xlu0 %v1363, 122
        %v1382 = vpop.permute.xlu0 %1381
        %1383 = vrot.lane.b32.xlu0 %v1364, 122
        %v1384 = vpop.permute.xlu0 %1383
        %1385 = vrot.lane.b32.xlu0 %v1365, 122
        %v1386 = vpop.permute.xlu0 %1385
        %1387 = vrot.lane.b32.xlu0 %v1366, 122
        %v1388 = vpop.permute.xlu0 %1387
        %1389 = vrot.lane.b32.xlu0 %v1367, 122
        %v1390 = vpop.permute.xlu0 %1389
        %1391 = vrot.lane.b32.xlu0 %v1368, 122
        %v1392 = vpop.permute.xlu0 %1391
        %vm1393 = vcmask 998400
        %v1394 = vsel %vm1393, %v1378, %v1380
        %v1395 = vsel %vm1393, %v1382, %v1384
        %v1396 = vsel %vm1393, %v1386, %v1388
        %v1397 = vsel %vm1393, %v1390, %v1392
        %1402 = vst [vmem:[#allocation4 + $0xe0] sm:$0xff] %v1394
        %1403 = vst [vmem:[#allocation4 + $0xe8] sm:$0xff] %v1395
        %1404 = vst [vmem:[#allocation4 + $0xf0] sm:$0xff] %v1396
        %1405 = vst [vmem:[#allocation4 + $0xf8] sm:$0xff] %v1397
        %v1406 = vld [vmem:[#allocation3 + $0x8] sm:$0xff]
        %v1407 = vld [vmem:[#allocation3 + $0x10] sm:$0xff]
        %v1408 = vld [vmem:[#allocation3 + $0x20] sm:$0xff]
        %v1409 = vld [vmem:[#allocation3 + $0x28] sm:$0xff]
        %v1410 = vld [vmem:[#allocation3 + $0x38] sm:$0xff]
        %v1411 = vld [vmem:[#allocation3 + $0x40] sm:$0xff]
        %v1412 = vld [vmem:[#allocation3 + $0x50] sm:$0xff]
        %v1413 = vld [vmem:[#allocation3 + $0x58] sm:$0xff]
        %1422 = vrot.lane.b32.xlu0 %v1406, 121
        %v1423 = vpop.permute.xlu0 %1422
        %1424 = vrot.lane.b32.xlu0 %v1407, 121
        %v1425 = vpop.permute.xlu0 %1424
        %1426 = vrot.lane.b32.xlu0 %v1408, 121
        %v1427 = vpop.permute.xlu0 %1426
        %1428 = vrot.lane.b32.xlu0 %v1409, 121
        %v1429 = vpop.permute.xlu0 %1428
        %1430 = vrot.lane.b32.xlu0 %v1410, 121
        %v1431 = vpop.permute.xlu0 %1430
        %1432 = vrot.lane.b32.xlu0 %v1411, 121
        %v1433 = vpop.permute.xlu0 %1432
        %1434 = vrot.lane.b32.xlu0 %v1412, 121
        %v1435 = vpop.permute.xlu0 %1434
        %1436 = vrot.lane.b32.xlu0 %v1413, 121
        %v1437 = vpop.permute.xlu0 %1436
        %vm1438 = vcmask 990208
        %v1439 = vsel %vm1438, %v1423, %v1425
        %v1440 = vsel %vm1438, %v1427, %v1429
        %v1441 = vsel %vm1438, %v1431, %v1433
        %v1442 = vsel %vm1438, %v1435, %v1437
        %1447 = vst [vmem:[#allocation4 + $0x100] sm:$0xff] %v1439
        %1448 = vst [vmem:[#allocation4 + $0x108] sm:$0xff] %v1440
        %1449 = vst [vmem:[#allocation4 + $0x110] sm:$0xff] %v1441
        %1450 = vst [vmem:[#allocation4 + $0x118] sm:$0xff] %v1442
        %v1451 = vld [vmem:[%s3] sm:$0xff]
        %v1452 = vld [vmem:[%s3 + $0x8] sm:$0xff]
        %v1453 = vld [vmem:[%s3 + $0x10] sm:$0xf]
        %v1454 = vld [vmem:[%s3 + $0x14] sm:$0xff]
        %v1455 = vld [vmem:[%s3 + $0x1c] sm:$0xff]
        %v1456 = vld [vmem:[%s3 + $0x24] sm:$0xf]
        %v1457 = vld [vmem:[%s3 + $0x28] sm:$0xff]
        %v1458 = vld [vmem:[%s3 + $0x30] sm:$0xff]
        %v1459 = vld [vmem:[%s3 + $0x38] sm:$0xf]
        %v1460 = vld [vmem:[%s3 + $0x3c] sm:$0xff]
        %v1461 = vld [vmem:[%s3 + $0x44] sm:$0xff]
        %v1462 = vld [vmem:[%s3 + $0x4c] sm:$0xf]
        %v1463 = vld [vmem:[%s3 + $0x50] sm:$0xff]
        %v1464 = vld [vmem:[%s3 + $0x58] sm:$0xff]
        %v1465 = vld [vmem:[%s3 + $0x60] sm:$0xf]
        %v1466 = vld [vmem:[%s3 + $0x64] sm:$0xff]
        %v1467 = vld [vmem:[%s3 + $0x6c] sm:$0xff]
        %v1468 = vld [vmem:[%s3 + $0x74] sm:$0xf]
        %v1469 = vld [vmem:[%s3 + $0x78] sm:$0xff]
        %v1470 = vld [vmem:[%s3 + $0x80] sm:$0xff]
        %v1471 = vld [vmem:[%s3 + $0x88] sm:$0xf]
        %v1472 = vld [vmem:[%s3 + $0x8c] sm:$0xff]
        %v1473 = vld [vmem:[%s3 + $0x94] sm:$0xff]
        %v1474 = vld [vmem:[%s3 + $0x9c] sm:$0xf]
        %v1475 = vld [vmem:[#allocation4] sm:$0xff]
        %v1476 = vld [vmem:[#allocation4 + $0x8] sm:$0xff]
        %v1477 = vld [vmem:[#allocation4 + $0x10] sm:$0xff]
        %v1478 = vld [vmem:[#allocation4 + $0x18] sm:$0xff]
        %v1479 = vld [vmem:[#allocation4 + $0x20] sm:$0xff]
        %v1480 = vld [vmem:[#allocation4 + $0x28] sm:$0xff]
        %v1481 = vld [vmem:[#allocation4 + $0x30] sm:$0xff]
        %v1482 = vld [vmem:[#allocation4 + $0x38] sm:$0xff]
        %v1483 = vld [vmem:[#allocation4 + $0x40] sm:$0xff]
        %v1484 = vld [vmem:[#allocation4 + $0x48] sm:$0xff]
        %v1485 = vld [vmem:[#allocation4 + $0x50] sm:$0xff]
        %v1486 = vld [vmem:[#allocation4 + $0x58] sm:$0xff]
        %v1487 = vld [vmem:[#allocation4 + $0x60] sm:$0xff]
        %v1488 = vld [vmem:[#allocation4 + $0x68] sm:$0xff]
        %v1489 = vld [vmem:[#allocation4 + $0x70] sm:$0xff]
        %v1490 = vld [vmem:[#allocation4 + $0x78] sm:$0xff]
        %v1491 = vld [vmem:[#allocation4 + $0x80] sm:$0xff]
        %v1492 = vld [vmem:[#allocation4 + $0x88] sm:$0xff]
        %v1493 = vld [vmem:[#allocation4 + $0x90] sm:$0xff]
        %v1494 = vld [vmem:[#allocation4 + $0x98] sm:$0xff]
        %v1495 = vld [vmem:[#allocation4 + $0xa0] sm:$0xff]
        %v1496 = vld [vmem:[#allocation4 + $0xa8] sm:$0xff]
        %v1497 = vld [vmem:[#allocation4 + $0xb0] sm:$0xff]
        %v1498 = vld [vmem:[#allocation4 + $0xb8] sm:$0xff]
        %v1499 = vld [vmem:[#allocation4 + $0xc0] sm:$0xff]
        %v1500 = vld [vmem:[#allocation4 + $0xc8] sm:$0xff]
        %v1501 = vld [vmem:[#allocation4 + $0xd0] sm:$0xff]
        %v1502 = vld [vmem:[#allocation4 + $0xd8] sm:$0xff]
        %v1503 = vld [vmem:[#allocation4 + $0xe0] sm:$0xff]
        %v1504 = vld [vmem:[#allocation4 + $0xe8] sm:$0xff]
        %v1505 = vld [vmem:[#allocation4 + $0xf0] sm:$0xff]
        %v1506 = vld [vmem:[#allocation4 + $0xf8] sm:$0xff]
        %v1507 = vld [vmem:[#allocation4 + $0x100] sm:$0xff]
        %v1508 = vld [vmem:[#allocation4 + $0x108] sm:$0xff]
        %v1509 = vld [vmem:[#allocation4 + $0x110] sm:$0xff]
        %v1510 = vld [vmem:[#allocation4 + $0x118] sm:$0xff]
        %v1511 = vld [vmem:[%s338 + $0x4] sm:$0xf]
        %v1512 = vld [vmem:[%s338 + $0x10] sm:$0xf]
        %v1513 = vld [vmem:[%s338 + $0x1c] sm:$0xf]
        %v1514 = vld [vmem:[%s338 + $0x28] sm:$0xf]
        %v1515 = vld [vmem:[%s5] sm:$0xf]
        %v1516 = vld [vmem:[%s5 + $0x4] sm:$0xf]
        %v1517 = vld [vmem:[%s5 + $0x8] sm:$0xf]
        %v1518 = vld [vmem:[%s5 + $0xc] sm:$0xf]
        %v1519 = vld [vmem:[%s5 + $0x10] sm:$0xf]
        %v1520 = vld [vmem:[%s5 + $0x14] sm:$0xf]
        %v1521 = vld [vmem:[%s5 + $0x18] sm:$0xf]
        %v1522 = vld [vmem:[%s5 + $0x1c] sm:$0xf]
        %v1523 = vld [vmem:[%s5 + $0x20] sm:$0xf]
        %v1524 = vld [vmem:[%s5 + $0x24] sm:$0xf]
        %v1525 = vld [vmem:[%s5 + $0x28] sm:$0xf]
        %v1526 = vld [vmem:[%s5 + $0x2c] sm:$0xf]
        %v1527 = vld [vmem:[%s5 + $0x30] sm:$0xf]
        %v1528 = vld [vmem:[%s5 + $0x34] sm:$0xf]
        %v1529 = vld [vmem:[%s5 + $0x38] sm:$0xf]
        %v1530 = vld [vmem:[%s5 + $0x3c] sm:$0xf]
        %v1535 = vunpack.c.l.b16 %v1511
        %v1536 = vunpack.c.l.b16 %v1512
        %v1537 = vunpack.c.l.b16 %v1513
        %v1538 = vunpack.c.l.b16 %v1514
        %v1539 = vpack.c.b16 %v1536, %v1535
        %v1540 = vpack.c.b16 %v1538, %v1537
        %v1559 = vunpack.c.l.b16 %v1515
        %v1560 = vunpack.c.l.b16 %v1516
        %v1561 = vunpack.c.l.b16 %v1517
        %v1562 = vunpack.c.l.b16 %v1518
        %v1563 = vunpack.c.l.b16 %v1519
        %v1564 = vunpack.c.l.b16 %v1520
        %v1565 = vunpack.c.l.b16 %v1521
        %v1566 = vunpack.c.l.b16 %v1522
        %v1567 = vunpack.c.l.b16 %v1523
        %v1568 = vunpack.c.l.b16 %v1524
        %v1569 = vunpack.c.l.b16 %v1525
        %v1570 = vunpack.c.l.b16 %v1526
        %v1571 = vunpack.c.l.b16 %v1527
        %v1572 = vunpack.c.l.b16 %v1528
        %v1573 = vunpack.c.l.b16 %v1529
        %v1574 = vunpack.c.l.b16 %v1530
        %v1575 = vpack.c.b16 %v1560, %v1559
        %v1576 = vpack.c.b16 %v1562, %v1561
        %v1577 = vpack.c.b16 %v1564, %v1563
        %v1578 = vpack.c.b16 %v1566, %v1565
        %v1579 = vpack.c.b16 %v1568, %v1567
        %v1580 = vpack.c.b16 %v1570, %v1569
        %v1581 = vpack.c.b16 %v1572, %v1571
        %v1582 = vpack.c.b16 %v1574, %v1573
        %1591 = vmatprep.subr.bf16.mxu0 0
        %1592 = vmatpush1.bf16.msra.mxu0 %v1575
        %1593 = vmatprep.subr.bf16.mxu0 0
        %1594 = vmatpush1.bf16.msra.mxu0 %v1576
        %1595 = vmatprep.subr.bf16.mxu0 0
        %1596 = vmatpush1.bf16.msra.mxu0 %v1577
        %1597 = vmatprep.subr.bf16.mxu0 0
        %1598 = vmatpush1.bf16.msra.mxu0 %v1578
        %1599 = vmatprep.subr.bf16.mxu0 0
        %1600 = vmatpush1.bf16.msra.mxu0 %v1579
        %1601 = vmatprep.subr.bf16.mxu0 0
        %1602 = vmatpush1.bf16.msra.mxu0 %v1580
        %1603 = vmatprep.subr.bf16.mxu0 0
        %1604 = vmatpush1.bf16.msra.mxu0 %v1581
        %1605 = vmatprep.subr.bf16.mxu0 0
        %1606 = vmatpush1.bf16.msra.mxu0 %v1582
        %1607 = vmatprep.subr.bf16.mxu0 0
        %1608 = vmatpush1.bf16.msra.mxu0 0
        %1609 = vmatprep.subr.bf16.mxu0 0
        %1610 = vmatpush1.bf16.msra.mxu0 0
        %1611 = vmatprep.subr.bf16.mxu0 0
        %1612 = vmatpush1.bf16.msra.mxu0 0
        %1613 = vmatprep.subr.bf16.mxu0 0
        %1614 = vmatpush1.bf16.msra.mxu0 0
        %1615 = vmatprep.subr.bf16.mxu0 0
        %1616 = vmatpush1.bf16.msra.mxu0 0
        %1617 = vmatprep.subr.bf16.mxu0 0
        %1618 = vmatpush1.bf16.msra.mxu0 0
        %1619 = vmatprep.subr.bf16.mxu0 0
        %1620 = vmatpush1.bf16.msra.mxu0 0
        %1621 = vmatprep.subr.bf16.mxu0 0
        %1622 = vmatpush1.bf16.msra.mxu0 0
        %1623 = vmatprep.mubr.bf16.mxu0 0
        %1624 = vmatmul.mubr.bf16.gmra.mrb[0].mxu0 %v1539
        %v1625 = vpop.f32.mrb[0].mxu0
        %v1626 = vadd.f32 0.0, %v1625
        %v1627 = vpop.f32.mrb[0].mxu0
        %v1628 = vpop.f32.mrb[0].mxu0
        %v1629 = vadd.f32 0.0, %v1628
        %v1630 = vpop.f32.mrb[0].mxu0
        %1631 = vmatprep.mubr.bf16.mxu0 0
        %1632 = vmatmul.mubr.bf16.gmra.mrb[0].mxu0 %v1540
        %v1633 = vpop.f32.mrb[0].mxu0
        %v1634 = vadd.f32 0.0, %v1633
        %v1635 = vpop.f32.mrb[0].mxu0
        %v1636 = vpop.f32.mrb[0].mxu0
        %v1637 = vadd.f32 0.0, %v1636
        %v1638 = vpop.f32.mrb[0].mxu0
        %1639 = vdwg.mxu0
        %v1640 = vld [vmem:[%s6] sm:$0xf]
        %v1641 = vld [vmem:[%s6 + $0x4] sm:$0xf]
        %v1642 = vld [vmem:[%s6 + $0x8] sm:$0xf]
        %v1643 = vld [vmem:[%s6 + $0xc] sm:$0xf]
        %v1644 = vld [vmem:[%s6 + $0x10] sm:$0xf]
        %v1645 = vld [vmem:[%s6 + $0x14] sm:$0xf]
        %v1646 = vld [vmem:[%s6 + $0x18] sm:$0xf]
        %v1647 = vld [vmem:[%s6 + $0x1c] sm:$0xf]
        %v1648 = vpack.c.bf16 %v1629, %v1626
        %v1649 = vpack.c.bf16 %v1637, %v1634
        %v1658 = vunpack.c.l.b16 %v1640
        %v1659 = vunpack.c.l.b16 %v1641
        %v1660 = vunpack.c.l.b16 %v1642
        %v1661 = vunpack.c.l.b16 %v1643
        %v1662 = vunpack.c.l.b16 %v1644
        %v1663 = vunpack.c.l.b16 %v1645
        %v1664 = vunpack.c.l.b16 %v1646
        %v1665 = vunpack.c.l.b16 %v1647
        %v1666 = vpack.c.b16 %v1659, %v1658
        %v1667 = vpack.c.b16 %v1661, %v1660
        %v1668 = vpack.c.b16 %v1663, %v1662
        %v1669 = vpack.c.b16 %v1665, %v1664
        %v1671 = vsel %vm785, %v1666, 0
        %v1674 = vsel %vm785, %v1667, 0
        %v1677 = vsel %vm785, %v1668, 0
        %v1680 = vsel %vm785, %v1669, 0
        %1682 = vmatprep.subr.bf16.mxu0 0
        %1683 = vmatpush1.bf16.msra.mxu0 %v1648
        %1684 = vmatprep.subr.bf16.mxu0 0
        %1685 = vmatpush1.bf16.msra.mxu0 %v1649
        %1686 = vmatprep.subr.bf16.mxu0 0
        %1687 = vmatpush1.bf16.msra.mxu0 0
        %1688 = vmatprep.subr.bf16.mxu0 0
        %1689 = vmatpush1.bf16.msra.mxu0 0
        %1690 = vmatprep.subr.bf16.mxu0 0
        %1691 = vmatpush1.bf16.msra.mxu0 0
        %1692 = vmatprep.subr.bf16.mxu0 0
        %1693 = vmatpush1.bf16.msra.mxu0 0
        %1694 = vmatprep.subr.bf16.mxu0 0
        %1695 = vmatpush1.bf16.msra.mxu0 0
        %1696 = vmatprep.subr.bf16.mxu0 0
        %1697 = vmatpush1.bf16.msra.mxu0 0
        %1698 = vmatprep.subr.bf16.mxu0 0
        %1699 = vmatpush1.bf16.msra.mxu0 0
        %1700 = vmatprep.subr.bf16.mxu0 0
        %1701 = vmatpush1.bf16.msra.mxu0 0
        %1702 = vmatprep.subr.bf16.mxu0 0
        %1703 = vmatpush1.bf16.msra.mxu0 0
        %1704 = vmatprep.subr.bf16.mxu0 0
        %1705 = vmatpush1.bf16.msra.mxu0 0
        %1706 = vmatprep.subr.bf16.mxu0 0
        %1707 = vmatpush1.bf16.msra.mxu0 0
        %1708 = vmatprep.subr.bf16.mxu0 0
        %1709 = vmatpush1.bf16.msra.mxu0 0
        %1710 = vmatprep.subr.bf16.mxu0 0
        %1711 = vmatpush1.bf16.msra.mxu0 0
        %1712 = vmatprep.subr.bf16.mxu0 0
        %1713 = vmatpush1.bf16.msra.mxu0 0
        %1714 = vmatprep.mubr.bf16.mxu0 0
        %1715 = vmatmul.mubr.bf16.gmra.mrb[0].mxu0 %v1671
        %v1716 = vpop.f32.mrb[0].mxu0
        %v1717 = vadd.f32 0.0, %v1716
        %v1718 = vpop.f32.mrb[0].mxu0
        %v1719 = vpop.f32.mrb[0].mxu0
        %v1720 = vadd.f32 0.0, %v1719
        %v1721 = vpop.f32.mrb[0].mxu0
        %1722 = vmatprep.mubr.bf16.mxu0 0
        %1723 = vmatmul.mubr.bf16.gmra.mrb[0].mxu0 %v1674
        %v1724 = vpop.f32.mrb[0].mxu0
        %v1725 = vadd.f32 0.0, %v1724
        %v1726 = vpop.f32.mrb[0].mxu0
        %v1727 = vpop.f32.mrb[0].mxu0
        %v1728 = vadd.f32 0.0, %v1727
        %v1729 = vpop.f32.mrb[0].mxu0
        %1730 = vmatprep.mubr.bf16.mxu0 0
        %1731 = vmatmul.mubr.bf16.gmra.mrb[0].mxu0 %v1677
        %v1732 = vpop.f32.mrb[0].mxu0
        %v1733 = vadd.f32 0.0, %v1732
        %v1734 = vpop.f32.mrb[0].mxu0
        %v1735 = vpop.f32.mrb[0].mxu0
        %v1736 = vadd.f32 0.0, %v1735
        %v1737 = vpop.f32.mrb[0].mxu0
        %1738 = vmatprep.mubr.bf16.mxu0 0
        %1739 = vmatmul.mubr.bf16.gmra.mrb[0].mxu0 %v1680
        %v1740 = vpop.f32.mrb[0].mxu0
        %v1741 = vadd.f32 0.0, %v1740
        %v1742 = vpop.f32.mrb[0].mxu0
        %v1743 = vpop.f32.mrb[0].mxu0
        %v1744 = vadd.f32 0.0, %v1743
        %v1745 = vpop.f32.mrb[0].mxu0
        %1746 = vdwg.mxu0
        %v1747 = vld [vmem:[%s4] sm:$0xff]
        %v1748 = vld [vmem:[%s4 + $0x8] sm:$0xff]
        %v1749 = vld [vmem:[%s4 + $0x10] sm:$0xff]
        %v1750 = vld [vmem:[%s4 + $0x18] sm:$0xff]
        %v1751 = vld [vmem:[%s4 + $0x20] sm:$0xff]
        %v1752 = vld [vmem:[%s4 + $0x28] sm:$0xff]
        %v1753 = vld [vmem:[%s4 + $0x30] sm:$0xff]
        %v1754 = vld [vmem:[%s4 + $0x38] sm:$0xff]
        %1756 = vset.pattern.permute.xlu0 0
        %1757 = vperm.xlu0 %1756, %v1747
        %v1758 = vpop.permute.xlu0 %1757
        %1761 = vset.pattern.permute.xlu0 0
        %1762 = vperm.xlu0 %1761, %v1748
        %v1763 = vpop.permute.xlu0 %1762
        %1766 = vset.pattern.permute.xlu0 0
        %1767 = vperm.xlu0 %1766, %v1749
        %v1768 = vpop.permute.xlu0 %1767
        %1771 = vset.pattern.permute.xlu0 0
        %1772 = vperm.xlu0 %1771, %v1750
        %v1773 = vpop.permute.xlu0 %1772
        %1776 = vset.pattern.permute.xlu0 0
        %1777 = vperm.xlu0 %1776, %v1751
        %v1778 = vpop.permute.xlu0 %1777
        %1781 = vset.pattern.permute.xlu0 0
        %1782 = vperm.xlu0 %1781, %v1752
        %v1783 = vpop.permute.xlu0 %1782
        %1786 = vset.pattern.permute.xlu0 0
        %1787 = vperm.xlu0 %1786, %v1753
        %v1788 = vpop.permute.xlu0 %1787
        %1791 = vset.pattern.permute.xlu0 0
        %1792 = vperm.xlu0 %1791, %v1754
        %v1793 = vpop.permute.xlu0 %1792
        %v1819 = vunpack.c.l.b16 %v1451
        %v1820 = vunpack.c.h.b16 %v1451
        %v1821 = vunpack.c.l.b16 %v1452
        %v1822 = vunpack.c.h.b16 %v1452
        %v1823 = vunpack.c.l.b16 %v1453
        %v1824 = vunpack.c.l.b16 %v1454
        %v1825 = vunpack.c.h.b16 %v1454
        %v1826 = vunpack.c.l.b16 %v1455
        %v1827 = vunpack.c.h.b16 %v1455
        %v1828 = vunpack.c.l.b16 %v1456
        %v1829 = vunpack.c.l.b16 %v1457
        %v1830 = vunpack.c.h.b16 %v1457
        %v1831 = vunpack.c.l.b16 %v1458
        %v1832 = vunpack.c.h.b16 %v1458
        %v1833 = vunpack.c.l.b16 %v1459
        %v1834 = vunpack.c.l.b16 %v1460
        %v1835 = vunpack.c.h.b16 %v1460
        %v1836 = vunpack.c.l.b16 %v1461
        %v1837 = vunpack.c.h.b16 %v1461
        %v1838 = vunpack.c.l.b16 %v1462
        %v1839 = vunpack.c.l.b16 %v1463
        %v1840 = vunpack.c.h.b16 %v1463
        %v1841 = vunpack.c.l.b16 %v1464
        %v1842 = vunpack.c.h.b16 %v1464
        %v1843 = vunpack.c.l.b16 %v1465
        %v1844 = vunpack.c.l.b16 %v1466
        %v1845 = vunpack.c.h.b16 %v1466
        %v1846 = vunpack.c.l.b16 %v1467
        %v1847 = vunpack.c.h.b16 %v1467
        %v1848 = vunpack.c.l.b16 %v1468
        %v1849 = vunpack.c.l.b16 %v1469
        %v1850 = vunpack.c.h.b16 %v1469
        %v1851 = vunpack.c.l.b16 %v1470
        %v1852 = vunpack.c.h.b16 %v1470
        %v1853 = vunpack.c.l.b16 %v1471
        %v1854 = vunpack.c.l.b16 %v1472
        %v1855 = vunpack.c.h.b16 %v1472
        %v1856 = vunpack.c.l.b16 %v1473
        %v1857 = vunpack.c.h.b16 %v1473
        %v1858 = vunpack.c.l.b16 %v1474
        %v1859 = vpack.c.b16 %v1824, %v1819
        %v1860 = vpack.c.b16 %v1825, %v1820
        %v1861 = vpack.c.b16 %v1826, %v1821
        %v1862 = vpack.c.b16 %v1827, %v1822
        %v1863 = vpack.c.b16 %v1828, %v1823
        %v1864 = vpack.c.b16 %v1834, %v1829
        %v1865 = vpack.c.b16 %v1835, %v1830
        %v1866 = vpack.c.b16 %v1836, %v1831
        %v1867 = vpack.c.b16 %v1837, %v1832
        %v1868 = vpack.c.b16 %v1838, %v1833
        %v1869 = vpack.c.b16 %v1844, %v1839
        %v1870 = vpack.c.b16 %v1845, %v1840
        %v1871 = vpack.c.b16 %v1846, %v1841
        %v1872 = vpack.c.b16 %v1847, %v1842
        %v1873 = vpack.c.b16 %v1848, %v1843
        %v1874 = vpack.c.b16 %v1854, %v1849
        %v1875 = vpack.c.b16 %v1855, %v1850
        %v1876 = vpack.c.b16 %v1856, %v1851
        %v1877 = vpack.c.b16 %v1857, %v1852
        %v1878 = vpack.c.b16 %v1858, %v1853
        %vm1895 = vcmask 523264
        %v1897 = vsel %vm1895, %v1863, 0
        %v1900 = vsel %vm1895, %v1868, 0
        %v1903 = vsel %vm1895, %v1873, 0
        %v1906 = vsel %vm1895, %v1878, 0
        %1908 = vmatprep.subr.bf16.mxu0 0
        %1909 = vmatpush1.bf16.msra.mxu0 %v1475
        %1910 = vmatprep.subr.bf16.mxu0 0
        %1911 = vmatpush1.bf16.msra.mxu0 %v1476
        %1912 = vmatprep.subr.bf16.mxu0 0
        %1913 = vmatpush1.bf16.msra.mxu0 %v1477
        %1914 = vmatprep.subr.bf16.mxu0 0
        %1915 = vmatpush1.bf16.msra.mxu0 %v1478
        %1916 = vmatprep.subr.bf16.mxu0 0
        %1917 = vmatpush1.bf16.msra.mxu0 %v1479
        %1918 = vmatprep.subr.bf16.mxu0 0
        %1919 = vmatpush1.bf16.msra.mxu0 %v1480
        %1920 = vmatprep.subr.bf16.mxu0 0
        %1921 = vmatpush1.bf16.msra.mxu0 %v1481
        %1922 = vmatprep.subr.bf16.mxu0 0
        %1923 = vmatpush1.bf16.msra.mxu0 %v1482
        %1924 = vmatprep.subr.bf16.mxu0 0
        %1925 = vmatpush1.bf16.msra.mxu0 %v1483
        %1926 = vmatprep.subr.bf16.mxu0 0
        %1927 = vmatpush1.bf16.msra.mxu0 %v1484
        %1928 = vmatprep.subr.bf16.mxu0 0
        %1929 = vmatpush1.bf16.msra.mxu0 %v1485
        %1930 = vmatprep.subr.bf16.mxu0 0
        %1931 = vmatpush1.bf16.msra.mxu0 %v1486
        %1932 = vmatprep.subr.bf16.mxu0 0
        %1933 = vmatpush1.bf16.msra.mxu0 %v1487
        %1934 = vmatprep.subr.bf16.mxu0 0
        %1935 = vmatpush1.bf16.msra.mxu0 %v1488
        %1936 = vmatprep.subr.bf16.mxu0 0
        %1937 = vmatpush1.bf16.msra.mxu0 %v1489
        %1938 = vmatprep.subr.bf16.mxu0 0
        %1939 = vmatpush1.bf16.msra.mxu0 %v1490
        %1940 = vmatprep.mubr.bf16.mxu0 %v1860
        %1941 = vmatmul.mubr.bf16.gmra.mrb[0].mxu0 %v1859
        %v1942 = vpop.f32.mrb[0].mxu0
        %v1943 = vadd.f32 %v1758, %v1942
        %v1944 = vpop.f32.mrb[0].mxu0
        %v1945 = vpop.f32.mrb[0].mxu0
        %v1946 = vadd.f32 %v1763, %v1945
        %v1947 = vpop.f32.mrb[0].mxu0
        %1948 = vmatprep.mubr.bf16.mxu0 %v1865
        %1949 = vmatmul.mubr.bf16.gmra.mrb[0].mxu0 %v1864
        %v1950 = vpop.f32.mrb[0].mxu0
        %v1951 = vadd.f32 %v1768, %v1950
        %v1952 = vpop.f32.mrb[0].mxu0
        %v1953 = vpop.f32.mrb[0].mxu0
        %v1954 = vadd.f32 %v1773, %v1953
        %v1955 = vpop.f32.mrb[0].mxu0
        %1956 = vmatprep.mubr.bf16.mxu0 %v1870
        %1957 = vmatmul.mubr.bf16.gmra.mrb[0].mxu0 %v1869
        %v1958 = vpop.f32.mrb[0].mxu0
        %v1959 = vadd.f32 %v1778, %v1958
        %v1960 = vpop.f32.mrb[0].mxu0
        %v1961 = vpop.f32.mrb[0].mxu0
        %v1962 = vadd.f32 %v1783, %v1961
        %v1963 = vpop.f32.mrb[0].mxu0
        %1964 = vmatprep.mubr.bf16.mxu0 %v1875
        %1965 = vmatmul.mubr.bf16.gmra.mrb[0].mxu0 %v1874
        %v1966 = vpop.f32.mrb[0].mxu0
        %v1967 = vadd.f32 %v1788, %v1966
        %v1968 = vpop.f32.mrb[0].mxu0
        %v1969 = vpop.f32.mrb[0].mxu0
        %v1970 = vadd.f32 %v1793, %v1969
        %v1971 = vpop.f32.mrb[0].mxu0
        %1972 = vdwg.mxu0
        %1973 = vmatprep.subr.bf16.mxu0 0
        %1974 = vmatpush1.bf16.msra.mxu0 %v1491
        %1975 = vmatprep.subr.bf16.mxu0 0
        %1976 = vmatpush1.bf16.msra.mxu0 %v1492
        %1977 = vmatprep.subr.bf16.mxu0 0
        %1978 = vmatpush1.bf16.msra.mxu0 %v1493
        %1979 = vmatprep.subr.bf16.mxu0 0
        %1980 = vmatpush1.bf16.msra.mxu0 %v1494
        %1981 = vmatprep.subr.bf16.mxu0 0
        %1982 = vmatpush1.bf16.msra.mxu0 %v1495
        %1983 = vmatprep.subr.bf16.mxu0 0
        %1984 = vmatpush1.bf16.msra.mxu0 %v1496
        %1985 = vmatprep.subr.bf16.mxu0 0
        %1986 = vmatpush1.bf16.msra.mxu0 %v1497
        %1987 = vmatprep.subr.bf16.mxu0 0
        %1988 = vmatpush1.bf16.msra.mxu0 %v1498
        %1989 = vmatprep.subr.bf16.mxu0 0
        %1990 = vmatpush1.bf16.msra.mxu0 %v1499
        %1991 = vmatprep.subr.bf16.mxu0 0
        %1992 = vmatpush1.bf16.msra.mxu0 %v1500
        %1993 = vmatprep.subr.bf16.mxu0 0
        %1994 = vmatpush1.bf16.msra.mxu0 %v1501
        %1995 = vmatprep.subr.bf16.mxu0 0
        %1996 = vmatpush1.bf16.msra.mxu0 %v1502
        %1997 = vmatprep.subr.bf16.mxu0 0
        %1998 = vmatpush1.bf16.msra.mxu0 %v1503
        %1999 = vmatprep.subr.bf16.mxu0 0
        %2000 = vmatpush1.bf16.msra.mxu0 %v1504
        %2001 = vmatprep.subr.bf16.mxu0 0
        %2002 = vmatpush1.bf16.msra.mxu0 %v1505
        %2003 = vmatprep.subr.bf16.mxu0 0
        %2004 = vmatpush1.bf16.msra.mxu0 %v1506
        %2005 = vmatprep.mubr.bf16.mxu0 %v1862
        %2006 = vmatmul.mubr.bf16.gmra.mrb[0].mxu0 %v1861
        %v2007 = vpop.f32.mrb[0].mxu0
        %v2008 = vadd.f32 %v1943, %v2007
        %v2009 = vpop.f32.mrb[0].mxu0
        %v2010 = vpop.f32.mrb[0].mxu0
        %v2011 = vadd.f32 %v1946, %v2010
        %v2012 = vpop.f32.mrb[0].mxu0
        %2013 = vmatprep.mubr.bf16.mxu0 %v1867
        %2014 = vmatmul.mubr.bf16.gmra.mrb[0].mxu0 %v1866
        %v2015 = vpop.f32.mrb[0].mxu0
        %v2016 = vadd.f32 %v1951, %v2015
        %v2017 = vpop.f32.mrb[0].mxu0
        %v2018 = vpop.f32.mrb[0].mxu0
        %v2019 = vadd.f32 %v1954, %v2018
        %v2020 = vpop.f32.mrb[0].mxu0
        %2021 = vmatprep.mubr.bf16.mxu0 %v1872
        %2022 = vmatmul.mubr.bf16.gmra.mrb[0].mxu0 %v1871
        %v2023 = vpop.f32.mrb[0].mxu0
        %v2024 = vadd.f32 %v1959, %v2023
        %v2025 = vpop.f32.mrb[0].mxu0
        %v2026 = vpop.f32.mrb[0].mxu0
        %v2027 = vadd.f32 %v1962, %v2026
        %v2028 = vpop.f32.mrb[0].mxu0
        %2029 = vmatprep.mubr.bf16.mxu0 %v1877
        %2030 = vmatmul.mubr.bf16.gmra.mrb[0].mxu0 %v1876
        %v2031 = vpop.f32.mrb[0].mxu0
        %v2032 = vadd.f32 %v1967, %v2031
        %v2033 = vpop.f32.mrb[0].mxu0
        %v2034 = vpop.f32.mrb[0].mxu0
        %v2035 = vadd.f32 %v1970, %v2034
        %v2036 = vpop.f32.mrb[0].mxu0
        %2037 = vdwg.mxu0
        %2038 = vmatprep.subr.bf16.mxu0 0
        %2039 = vmatpush1.bf16.msra.mxu0 %v1507
        %2040 = vmatprep.subr.bf16.mxu0 0
        %2041 = vmatpush1.bf16.msra.mxu0 %v1508
        %2042 = vmatprep.subr.bf16.mxu0 0
        %2043 = vmatpush1.bf16.msra.mxu0 %v1509
        %2044 = vmatprep.subr.bf16.mxu0 0
        %2045 = vmatpush1.bf16.msra.mxu0 %v1510
        %2046 = vmatprep.subr.bf16.mxu0 0
        %2047 = vmatpush1.bf16.msra.mxu0 0
        %2048 = vmatprep.subr.bf16.mxu0 0
        %2049 = vmatpush1.bf16.msra.mxu0 0
        %2050 = vmatprep.subr.bf16.mxu0 0
        %2051 = vmatpush1.bf16.msra.mxu0 0
        %2052 = vmatprep.subr.bf16.mxu0 0
        %2053 = vmatpush1.bf16.msra.mxu0 0
        %2054 = vmatprep.subr.bf16.mxu0 0
        %2055 = vmatpush1.bf16.msra.mxu0 0
        %2056 = vmatprep.subr.bf16.mxu0 0
        %2057 = vmatpush1.bf16.msra.mxu0 0
        %2058 = vmatprep.subr.bf16.mxu0 0
        %2059 = vmatpush1.bf16.msra.mxu0 0
        %2060 = vmatprep.subr.bf16.mxu0 0
        %2061 = vmatpush1.bf16.msra.mxu0 0
        %2062 = vmatprep.subr.bf16.mxu0 0
        %2063 = vmatpush1.bf16.msra.mxu0 0
        %2064 = vmatprep.subr.bf16.mxu0 0
        %2065 = vmatpush1.bf16.msra.mxu0 0
        %2066 = vmatprep.subr.bf16.mxu0 0
        %2067 = vmatpush1.bf16.msra.mxu0 0
        %2068 = vmatprep.subr.bf16.mxu0 0
        %2069 = vmatpush1.bf16.msra.mxu0 0
        %2070 = vmatprep.mubr.bf16.mxu0 0
        %2071 = vmatmul.mubr.bf16.gmra.mrb[0].mxu0 %v1897
        %v2072 = vpop.f32.mrb[0].mxu0
        %v2073 = vadd.f32 %v2008, %v2072
        %v2074 = vpop.f32.mrb[0].mxu0
        %v2075 = vpop.f32.mrb[0].mxu0
        %v2076 = vadd.f32 %v2011, %v2075
        %v2077 = vpop.f32.mrb[0].mxu0
        %2078 = vmatprep.mubr.bf16.mxu0 0
        %2079 = vmatmul.mubr.bf16.gmra.mrb[0].mxu0 %v1900
        %v2080 = vpop.f32.mrb[0].mxu0
        %v2081 = vadd.f32 %v2016, %v2080
        %v2082 = vpop.f32.mrb[0].mxu0
        %v2083 = vpop.f32.mrb[0].mxu0
        %v2084 = vadd.f32 %v2019, %v2083
        %v2085 = vpop.f32.mrb[0].mxu0
        %2086 = vmatprep.mubr.bf16.mxu0 0
        %2087 = vmatmul.mubr.bf16.gmra.mrb[0].mxu0 %v1903
        %v2088 = vpop.f32.mrb[0].mxu0
        %v2089 = vadd.f32 %v2024, %v2088
        %v2090 = vpop.f32.mrb[0].mxu0
        %v2091 = vpop.f32.mrb[0].mxu0
        %v2092 = vadd.f32 %v2027, %v2091
        %v2093 = vpop.f32.mrb[0].mxu0
        %2094 = vmatprep.mubr.bf16.mxu0 0
        %2095 = vmatmul.mubr.bf16.gmra.mrb[0].mxu0 %v1906
        %v2096 = vpop.f32.mrb[0].mxu0
        %v2097 = vadd.f32 %v2032, %v2096
        %v2098 = vpop.f32.mrb[0].mxu0
        %v2099 = vpop.f32.mrb[0].mxu0
        %v2100 = vadd.f32 %v2035, %v2099
        %v2101 = vpop.f32.mrb[0].mxu0
        %2102 = vdwg.mxu0
        %v2103 = vadd.f32 %v2073, %v1717
        %v2104 = vadd.f32 %v2076, %v1720
        %v2105 = vadd.f32 %v2081, %v1725
        %v2106 = vadd.f32 %v2084, %v1728
        %v2107 = vadd.f32 %v2089, %v1733
        %v2108 = vadd.f32 %v2092, %v1736
        %v2109 = vadd.f32 %v2097, %v1741
        %v2110 = vadd.f32 %v2100, %v1744
        %v2111 = vmax.f32 %v2103, 0.0
        %v2112 = vmax.f32 %v2104, 0.0
        %v2113 = vmax.f32 %v2105, 0.0
        %v2114 = vmax.f32 %v2106, 0.0
        %v2115 = vmax.f32 %v2107, 0.0
        %v2116 = vmax.f32 %v2108, 0.0
        %v2117 = vmax.f32 %v2109, 0.0
        %v2118 = vmax.f32 %v2110, 0.0
        %v2119 = vld [vmem:[%s7] sm:$0x1]
        %v2121 = vlaneseq
        %v2122 = vshrl.u32 %v2121, 7
        %v2123 = vsub.s32 0, %v2122
        %v2124 = vrot.slane %v2119, %v2123
        %v2126 = vmul.f32 %v2111, %v2124
        %v2127 = vmul.f32 %v2112, %v2124
        %v2128 = vmul.f32 %v2113, %v2124
        %v2129 = vmul.f32 %v2114, %v2124
        %v2130 = vmul.f32 %v2115, %v2124
        %v2131 = vmul.f32 %v2116, %v2124
        %v2132 = vmul.f32 %v2117, %v2124
        %v2133 = vmul.f32 %v2118, %v2124
        %2134 = vadd.xlane.f32.xlu0 %v2126
        %v2135 = vpop.xlane.xlu0 %2134
        %2136 = vadd.xlane.f32.xlu0 %v2127
        %v2137 = vpop.xlane.xlu0 %2136
        %2138 = vadd.xlane.f32.xlu0 %v2128
        %v2139 = vpop.xlane.xlu0 %2138
        %2140 = vadd.xlane.f32.xlu0 %v2129
        %v2141 = vpop.xlane.xlu0 %2140
        %2142 = vadd.xlane.f32.xlu0 %v2130
        %v2143 = vpop.xlane.xlu0 %2142
        %2144 = vadd.xlane.f32.xlu0 %v2131
        %v2145 = vpop.xlane.xlu0 %2144
        %2146 = vadd.xlane.f32.xlu0 %v2132
        %v2147 = vpop.xlane.xlu0 %2146
        %2148 = vadd.xlane.f32.xlu0 %v2133
        %v2149 = vpop.xlane.xlu0 %2148
        %vm2150 = vcmask 7168
        %2151 = vst.msk [vmem:[%s343] sm:$0xff] %vm2150, %v2135
        %2152 = vst.msk [vmem:[%s343 + $0x8] sm:$0xff] %vm2150, %v2137
        %2153 = vst.msk [vmem:[%s343 + $0x10] sm:$0xff] %vm2150, %v2139
        %2154 = vst.msk [vmem:[%s343 + $0x18] sm:$0xff] %vm2150, %v2141
        %2155 = vst.msk [vmem:[%s343 + $0x20] sm:$0xff] %vm2150, %v2143
        %2156 = vst.msk [vmem:[%s343 + $0x28] sm:$0xff] %vm2150, %v2145
        %2157 = vst.msk [vmem:[%s343 + $0x30] sm:$0xff] %vm2150, %v2147
        %2158 = vst.msk [vmem:[%s343 + $0x38] sm:$0xff] %vm2150, %v2149
        %2159 = vst [vmem:[%s326] sm:$0xf] 0
        %2160 = vst [vmem:[%s326 + $0xc] sm:$0xf] 0
        %2161 = vst [vmem:[%s326 + $0x18] sm:$0xf] 0
        %2162 = vst [vmem:[%s326 + $0x24] sm:$0xf] 0
        %2163 = vst [vmem:[%s326 + $0x30] sm:$0xf] 0
        %2164 = vst [vmem:[%s326 + $0x3c] sm:$0xf] 0
        %2165 = vst [vmem:[%s326 + $0x48] sm:$0xf] 0
        %2166 = vst [vmem:[%s326 + $0x54] sm:$0xf] 0
        %2167 = vst [vmem:[%s326 + $0x8] sm:$0xf] 0
        %2168 = vst [vmem:[%s326 + $0x14] sm:$0xf] 0
        %2169 = vst [vmem:[%s326 + $0x20] sm:$0xf] 0
        %2170 = vst [vmem:[%s326 + $0x2c] sm:$0xf] 0
        %2171 = vst [vmem:[%s326 + $0x38] sm:$0xf] 0
        %2172 = vst [vmem:[%s326 + $0x44] sm:$0xf] 0
        %2173 = vst [vmem:[%s326 + $0x50] sm:$0xf] 0
        %2174 = vst [vmem:[%s326 + $0x5c] sm:$0xf] 0
        %v2175 = vpack.c.bf16 %v2127, %v2126
        %v2176 = vpack.c.bf16 %v2129, %v2128
        %v2177 = vpack.c.bf16 %v2131, %v2130
        %v2178 = vpack.c.bf16 %v2133, %v2132
        %v2183 = vunpack.c.l.b16 %v2175
        %v2184 = vunpack.c.h.b16 %v2175
        %v2185 = vunpack.c.l.b16 %v2176
        %v2186 = vunpack.c.h.b16 %v2176
        %v2187 = vunpack.c.l.b16 %v2177
        %v2188 = vunpack.c.h.b16 %v2177
        %v2189 = vunpack.c.l.b16 %v2178
        %v2190 = vunpack.c.h.b16 %v2178
        %v2191 = vpack.c.b16 %v2183, %v2183
        %v2192 = vpack.c.b16 %v2184, %v2184
        %v2193 = vpack.c.b16 %v2185, %v2185
        %v2194 = vpack.c.b16 %v2186, %v2186
        %v2195 = vpack.c.b16 %v2187, %v2187
        %v2196 = vpack.c.b16 %v2188, %v2188
        %v2197 = vpack.c.b16 %v2189, %v2189
        %v2198 = vpack.c.b16 %v2190, %v2190
        %2207 = vst [vmem:[%s326 + $0x4] sm:$0xf] %v2191
        %2208 = vst [vmem:[%s326 + $0x10] sm:$0xf] %v2192
        %2209 = vst [vmem:[%s326 + $0x1c] sm:$0xf] %v2193
        %2210 = vst [vmem:[%s326 + $0x28] sm:$0xf] %v2194
        %2211 = vst [vmem:[%s326 + $0x34] sm:$0xf] %v2195
        %2212 = vst [vmem:[%s326 + $0x40] sm:$0xf] %v2196
        %2213 = vst [vmem:[%s326 + $0x4c] sm:$0xf] %v2197
        %2214 = vst [vmem:[%s326 + $0x58] sm:$0xf] %v2198
        %s2215 = sand.u32 %s205, 1
        %s2216 = scalar_lea.sflag [#allocation6], %s2215
        %s2217 = sand.u32 %s205, 1
        %s2218 = smul.addr %s2217, 96
        %s2219 = scalar_lea.vmem [#allocation5], %s2218
        %p2220 = scmp.lt.s32.totalorder %s24, 1
        %s2221 = scalar_select %p2220, %s24, 1
        %s2222 = smul.addr %s2221, 8
        %s2223 = smul.addr %s2222, 8
        %s2224 = scalar_lea.vmem %s9, %s2223
        // Predicated region
        $region53: #{codinet_forward.7} parent=51 // pred_check
          %p2225 = pneg %p215
        $region54: #{codinet_forward.7} parent=51 // pred_check_branch
          %2227 = sbr.rel (%p2225) target = $region56
        $region55: #{codinet_forward.7} parent=51 // pred_region
          %s2229 = ssub.s32 1536, 1536
          %2230 = vsyncadd %s2216, %s2229
          %s2231 = smul.addr %s24, 24
          %s2232 = smul.addr %s2231, 64
          %s2233 = scalar_lea.hbm %s8, %s2232
          %s2234 = sshll.u32 %s2219, 4
          %s2235 = int_to_ptr.vmem [resolvable:$true] %s2234
          %2240 = dma.vmem_to_hbm [thread:$0]  %s2235, 1536, %s2233, %s2216, 192, 192, 12
        $region56: #{codinet_forward.7} parent=51 // pred_fallthru
          _
        // Predicated region
        $region57: #{codinet_forward.7} parent=51 // pred_check
          %p2241 = pneg %p241
        $region58: #{codinet_forward.7} parent=51 // pred_check_branch
          %2243 = sbr.rel (%p2241) target = $region60
        $region59: #{codinet_forward.7} parent=51 // pred_region
          _
        $region60: #{codinet_forward.7} parent=51 // pred_fallthru
          _
      $region52: #{codinet_forward.7} parent=5 // pred_fallthru
        _
      %p2244 = scmp.le.s32.totalorder 2, %s19
      // Predicated region
      $region61: #{codinet_forward.7} parent=5 // pred_check
        %p2245 = pneg %p2244
      $region62: #{codinet_forward.7} parent=5 // pred_check_branch
        %2247 = sbr.rel (%p2245) target = $region64
      $region63: #{codinet_forward.7} parent=5 // pred_region
        %s2248 = ssub.s32 %s19, 2
        // Predicated region
        $region65: #{codinet_forward.7} parent=63 // pred_check
          %p2249 = pneg %p221
        $region66: #{codinet_forward.7} parent=63 // pred_check_branch
          %2251 = sbr.rel (%p2249) target = $region68
        $region67: #{codinet_forward.7} parent=63 // pred_region
          %s2252 = sand.u32 %s206, 1
          %s2253 = scalar_lea.sflag [#allocation6], %s2252
          %s2254 = sand.u32 %s206, 1
          %s2255 = smul.addr %s2254, 96
          %s2256 = scalar_lea.vmem [#allocation5], %s2255
          %2257 = dma.done %s2253, 1536
        $region68: #{codinet_forward.7} parent=63 // pred_fallthru
          _
        // Predicated region
        $region69: #{codinet_forward.7} parent=63 // pred_check
          %p2258 = pneg %p247
        $region70: #{codinet_forward.7} parent=63 // pred_check_branch
          %2260 = sbr.rel (%p2258) target = $region72
        $region71: #{codinet_forward.7} parent=63 // pred_region
          %p2261 = scmp.lt.s32.totalorder %s25, 1
          %s2262 = scalar_select %p2261, %s25, 1
          %s2263 = smul.addr %s2262, 8
          %s2264 = smul.addr %s2263, 8
          %s2265 = scalar_lea.vmem %s9, %s2264
        $region72: #{codinet_forward.7} parent=63 // pred_fallthru
          _
      $region64: #{codinet_forward.7} parent=5 // pred_fallthru
        _
    $region6: #{codinet_forward.7} parent=1 // loop_footer
      %s23 = sadd.s32 1, %s19
    $region7: #{codinet_forward.7} parent=1 // loop_footer_branch
      %18 = sbr.rel target = $region3
    $region8: #{codinet_forward.7} parent=1 // loop_exit
      _
    %2266 = vsyncpa [#allocation6], 1
    %s2267 = scalar_lea.sflag [#allocation6], 1
    %2268 = vsyncpa %s2267, 1

</llo_original>
